<compile_context>
chip_gen: v7x
topology: tpu7x:2x2x1
jax: 0.10.0
libtpu: 0.0.40
codegen_flags: <defaults>
</compile_context>

<pallas_src>
import jax
import jax.numpy as jnp
from jax.experimental import pallas as pl
from jax.experimental.pallas import tpu as pltpu


_VMEM = pl.BlockSpec(memory_space=pltpu.MemorySpace.VMEM)
_BP = 8  # batch padded to the f32 sublane count


# ----------------------------- fused kernel ---------------------------------

def fused_kernel(gi0t_ref, gi0c_ref,
                 whh0t_ref, bn0t_ref, whh0c_ref, bn0c_ref,
                 wih1t_ref, bi1t_ref, whh1t_ref, bn1t_ref,
                 wih1c_ref, bi1c_ref, whh1c_ref, bn1c_ref,
                 watt_ref, fc1w_ref, fc1b_ref, fccpw_ref, fccpb_ref,
                 fcw_ref, fcb_ref,
                 o_ref,
                 x1t_ref, x1c_ref):
    """Whole Model_cons forward in one kernel.

    gi0{t,c}_ref: (2*L, Bp, 3H)  layer-0 gate pre-activations (embedding gather
                  pre-projected through W_ih0 with b_ih0 + b_hh0_{r,z} folded);
                  rows [0, L) = fwd timesteps, rows [L, 2L) = bwd timesteps.
    whh*_ref:     (2, H, 3H) bf16  recurrent weights, [0]=fwd, [1]=bwd.
    bn*_ref:      (2, 1, H)  f32   b_hh_n (the only recurrent bias not folded).
    wih1*_ref:    (2, 2H, 3H) bf16 layer-1 input weights.
    bi1*_ref:     (2, 1, 3H) f32   layer-1 input bias (b_hh1_{r,z} folded in).
    o_ref:        (Bp, C) logits.
    x1{t,c}_ref:  VMEM scratch (L*Bp, 2H): layer-0 output, time-major.
    """
    f32, bf16 = jnp.float32, jnp.bfloat16
    Lt2, Bp, Gt = gi0t_ref.shape
    Lc2, _, Gc = gi0c_ref.shape
    Lt, Lc = Lt2 // 2, Lc2 // 2
    Ht, Hc = Gt // 3, Gc // 3

    def cell(gi, gh, bn, h, H):
        # PyTorch gate order [r | z | n]; gi already contains b_ih (+ folded
        # b_hh_r, b_hh_z); gh = h @ W_hh with no bias.
        r = jax.nn.sigmoid(gi[:, :H] + gh[:, :H])
        z = jax.nn.sigmoid(gi[:, H:2 * H] + gh[:, H:2 * H])
        n = jnp.tanh(gi[:, 2 * H:] + r * (gh[:, 2 * H:] + bn))
        return (1.0 - z) * n + z * h

    def rdot(h, w):
        # bf16 MXU operands, f32 accumulation.
        return jnp.dot(h.astype(bf16), w, preferred_element_type=f32)

    # ---------------- phase 1: layer 0, both branches interleaved ------------
    w0tf, w0tb = whh0t_ref[0], whh0t_ref[1]
    w0cf, w0cb = whh0c_ref[0], whh0c_ref[1]
    # b_hh_n broadcast hoisted out of the loop (JAX does not CSE broadcasts).
    bn0tf = jnp.broadcast_to(bn0t_ref[0], (Bp, Ht))
    bn0tb = jnp.broadcast_to(bn0t_ref[1], (Bp, Ht))
    bn0cf = jnp.broadcast_to(bn0c_ref[0], (Bp, Hc))
    bn0cb = jnp.broadcast_to(bn0c_ref[1], (Bp, Hc))

    htf = jnp.zeros((Bp, Ht), f32)
    htb = jnp.zeros((Bp, Ht), f32)
    hcf = jnp.zeros((Bp, Hc), f32)
    hcb = jnp.zeros((Bp, Hc), f32)
    # Fully unrolled: L is small & static, all slices/stores are static and
    # (8, x) sublane-aligned.
    # TODO(synk): for long sequences or B > 8 switch to lax.fori_loop +
    # a batch grid axis ("parallel") instead of full unrolling.
    for s in range(max(Lt, Lc)):
        if s < Lt:
            a, b = s, Lt - 1 - s
            ghf = rdot(htf, w0tf)
            ghb = rdot(htb, w0tb)
            htf = cell(gi0t_ref[a], ghf, bn0tf, htf, Ht)
            htb = cell(gi0t_ref[Lt + b], ghb, bn0tb, htb, Ht)
            x1t_ref[a * Bp:(a + 1) * Bp, 0:Ht] = htf
            x1t_ref[b * Bp:(b + 1) * Bp, Ht:2 * Ht] = htb
        if s < Lc:
            a, b = s, Lc - 1 - s
            ghf = rdot(hcf, w0cf)
            ghb = rdot(hcb, w0cb)
            hcf = cell(gi0c_ref[a], ghf, bn0cf, hcf, Hc)
            hcb = cell(gi0c_ref[Lc + b], ghb, bn0cb, hcb, Hc)
            x1c_ref[a * Bp:(a + 1) * Bp, 0:Hc] = hcf
            x1c_ref[b * Bp:(b + 1) * Bp, Hc:2 * Hc] = hcb

    # TODO(synk): inter-layer GRU dropout skipped (inference semantics).

    # ------- hoisted layer-1 input projections (off the serial chain) --------
    x1t = x1t_ref[...].astype(bf16)                        # (Lt*Bp, 2Ht)
    gi1tf = jnp.dot(x1t, wih1t_ref[0], preferred_element_type=f32) + bi1t_ref[0]
    gi1tb = jnp.dot(x1t, wih1t_ref[1], preferred_element_type=f32) + bi1t_ref[1]
    x1c = x1c_ref[...].astype(bf16)                        # (Lc*Bp, 2Hc)
    gi1cf = jnp.dot(x1c, wih1c_ref[0], preferred_element_type=f32) + bi1c_ref[0]
    gi1cb = jnp.dot(x1c, wih1c_ref[1], preferred_element_type=f32) + bi1c_ref[1]

    # ---------------- phase 2: layer 1, both branches interleaved ------------
    w1tf, w1tb = whh1t_ref[0], whh1t_ref[1]
    w1cf, w1cb = whh1c_ref[0], whh1c_ref[1]
    bn1tf = jnp.broadcast_to(bn1t_ref[0], (Bp, Ht))
    bn1tb = jnp.broadcast_to(bn1t_ref[1], (Bp, Ht))
    bn1cf = jnp.broadcast_to(bn1c_ref[0], (Bp, Hc))
    bn1cb = jnp.broadcast_to(bn1c_ref[1], (Bp, Hc))

    htf = jnp.zeros((Bp, Ht), f32)
    htb = jnp.zeros((Bp, Ht), f32)
    hcf = jnp.zeros((Bp, Hc), f32)
    hcb = jnp.zeros((Bp, Hc), f32)
    outs_f = [None] * Lt
    outs_b = [None] * Lt
    for s in range(max(Lt, Lc)):
        if s < Lt:
            a, b = s, Lt - 1 - s
            ghf = rdot(htf, w1tf)
            ghb = rdot(htb, w1tb)
            htf = cell(gi1tf[a * Bp:(a + 1) * Bp], ghf, bn1tf, htf, Ht)
            htb = cell(gi1tb[b * Bp:(b + 1) * Bp], ghb, bn1tb, htb, Ht)
            outs_f[a] = htf
            outs_b[b] = htb
        if s < Lc:
            a = s
            ghf = rdot(hcf, w1cf)
            hcf = cell(gi1cf[a * Bp:(a + 1) * Bp], ghf, bn1cf, hcf, Hc)
            if s == 0:
                # Only the backward state at the LAST timestep is live
                # downstream (gru_cons[:, -1, Hc:]), i.e. one bwd step.
                b = Lc - 1
                ghb = rdot(hcb, w1cb)
                hcb = cell(gi1cb[b * Bp:(b + 1) * Bp], ghb, bn1cb, hcb, Hc)

    # ---------------- head: attention + tail linears -------------------------
    w_att = watt_ref[...]                                   # (1, 2Ht)
    hs = []
    score_cols = []
    for t in range(Lt):
        h_t = jnp.concatenate([outs_f[t], outs_b[t]], axis=1)   # (Bp, 2Ht)
        hs.append(h_t)
        score_cols.append(jnp.sum(jnp.tanh(h_t) * w_att, axis=1, keepdims=True))
    scores = jnp.concatenate(score_cols, axis=1)            # (Bp, Lt)
    mx = jnp.max(scores, axis=1, keepdims=True)             # stable softmax over time
    e = jnp.exp(scores - mx)
    alpha = e / jnp.sum(e, axis=1, keepdims=True)           # (Bp, Lt)
    ctx = jnp.zeros((Bp, 2 * Ht), f32)
    for t in range(Lt):
        ctx = ctx + alpha[:, t:t + 1] * hs[t]
    ctx = jnp.maximum(ctx, 0.0)                             # relu
    out1 = jnp.dot(ctx, fc1w_ref[...], preferred_element_type=f32) + fc1b_ref[...]
    cons_last = jnp.concatenate([hcf, hcb], axis=1)         # gru_cons[:, -1, :]
    cp = jnp.dot(cons_last, fccpw_ref[...], preferred_element_type=f32) + fccpb_ref[...]
    feat = jnp.concatenate([out1, cp], axis=1)              # [fc1 | cons_out | pros_out]
    o_ref[...] = jnp.dot(feat, fcw_ref[...], preferred_element_type=f32) + fcb_ref[...]


# ----------------------------- wrapper ---------------------------------------

def fused_forward(gi0t, gi0c, params):
    pt, pc, ph = params["text"], params["cons"], params["head"]
    Bp = gi0t.shape[1]
    Lt = gi0t.shape[0] // 2
    Lc = gi0c.shape[0] // 2
    Ht = pt["whh0"].shape[1]
    Hc = pc["whh0"].shape[1]
    C = ph["fc_b"].shape[1]
    return pl.pallas_call(
        fused_kernel,
        out_shape=jax.ShapeDtypeStruct((Bp, C), jnp.float32),
        in_specs=[_VMEM] * 21,
        out_specs=_VMEM,
        scratch_shapes=[
            pltpu.VMEM((Lt * Bp, 2 * Ht), jnp.float32),   # layer-0 output, text
            pltpu.VMEM((Lc * Bp, 2 * Hc), jnp.float32),   # layer-0 output, cons
        ],
    )(gi0t, gi0c,
      pt["whh0"], pt["bn0"], pc["whh0"], pc["bn0"],
      pt["wih1"], pt["bi1"], pt["whh1"], pt["bn1"],
      pc["wih1"], pc["bi1"], pc["whh1"], pc["bn1"],
      ph["w_att"], ph["fc1_w"], ph["fc1_b"], ph["fc_cp_w"], ph["fc_cp_b"],
      ph["fc_w"], ph["fc_b"])


def _gather_gi0(tab, ids, bp):
    """Gather pre-projected layer-0 gate pre-activations, time-major, batch-padded.

    tab: (V, 2, 3H) = emb @ W_ih0_dir + folded bias, per direction.
    ids: (B, L) int32.  Returns (2*L, bp, 3H): rows [0,L)=fwd, [L,2L)=bwd.
    """
    B, L = ids.shape
    g = jnp.take(tab, ids.T, axis=0)                        # (L, B, 2, 3H)
    g = jnp.pad(g, ((0, 0), (0, bp - B), (0, 0), (0, 0)))   # (L, bp, 2, 3H)
    g = jnp.transpose(g, (2, 0, 1, 3))                      # (2, L, bp, 3H)
    return g.reshape(2 * L, bp, g.shape[-1])


def model_forward(params, x_tokens, x_cons, x_pros):
    # x_pros is intentionally unused: in the reference, gru_pros' output is
    # dead (pros_out = fc_pros(gru_cons[:, -1, :])), so that branch is elided
    # without changing the forward output.
    del x_pros
    B = x_tokens.shape[0]
    assert B <= _BP  # TODO(synk): add a batch grid axis for B > 8.
    # Embedding gathers stay in XLA, but the layer-0 input projection and all
    # layer-0 input/recurrent(r,z) biases are pre-folded into the tables, so
    # the gather directly yields layer-0 gate pre-activations.
    gi0t = _gather_gi0(params["text"]["tab0"], x_tokens, _BP)   # (2L,  8, 3Ht)
    gi0c = _gather_gi0(params["cons"]["tab0"], x_cons, _BP)     # (2Lc, 8, 3Hc)
    logits = fused_forward(gi0t, gi0c, params)                  # (8, C)
    return logits[:B]


# ----------------------------- param init ------------------------------------

def _init_gru_raw(key, input_size, hidden_size, num_layers):
    layers = []
    for l in range(num_layers):
        in_sz = input_size if l == 0 else 2 * hidden_size
        dirs = []
        for _d in range(2):
            key, k1, k2, k3, k4 = jax.random.split(key, 5)
            dirs.append(dict(
                wih=0.1 * jax.random.normal(k1, (in_sz, 3 * hidden_size), jnp.float32),
                whh=0.1 * jax.random.normal(k2, (hidden_size, 3 * hidden_size), jnp.float32),
                bih=0.1 * jax.random.normal(k3, (1, 3 * hidden_size), jnp.float32),
                bhh=0.1 * jax.random.normal(k4, (1, 3 * hidden_size), jnp.float32),
            ))
        layers.append(dirs)
    return layers, key


def _fold_bias(bih, bhh, H):
    # b_hh_r / b_hh_z fold into the input bias; b_hh_n must stay separate
    # because of the r * (h @ W_hn + b_hn) term.
    return bih.at[:, :2 * H].add(bhh[:, :2 * H]), bhh[:, 2 * H:]


def _pack_branch(emb, gru_layers, H):
    l0, l1 = gru_layers
    tabs, whh0, bn0 = [], [], []
    for d in range(2):
        bf, bn = _fold_bias(l0[d]["bih"], l0[d]["bhh"], H)
        # Fold embedding + layer-0 input projection + folded bias into a table.
        tabs.append(jnp.dot(emb, l0[d]["wih"]) + bf)        # (V, 3H)
        whh0.append(l0[d]["whh"])
        bn0.append(bn)
    wih1, bi1, whh1, bn1 = [], [], [], []
    for d in range(2):
        bf, bn = _fold_bias(l1[d]["bih"], l1[d]["bhh"], H)
        wih1.append(l1[d]["wih"])
        bi1.append(bf)
        whh1.append(l1[d]["whh"])
        bn1.append(bn)
    return dict(
        tab0=jnp.stack(tabs, axis=1),                        # (V, 2, 3H) f32
        whh0=jnp.stack(whh0, 0).astype(jnp.bfloat16),        # (2, H, 3H)
        bn0=jnp.stack(bn0, 0),                               # (2, 1, H)
        wih1=jnp.stack(wih1, 0).astype(jnp.bfloat16),        # (2, 2H, 3H)
        bi1=jnp.stack(bi1, 0),                               # (2, 1, 3H)
        whh1=jnp.stack(whh1, 0).astype(jnp.bfloat16),        # (2, H, 3H)
        bn1=jnp.stack(bn1, 0),                               # (2, 1, H)
    )


def _init_linear(key, in_sz, out_sz):
    key, k1, k2 = jax.random.split(key, 3)
    w = 0.1 * jax.random.normal(k1, (in_sz, out_sz), jnp.float32)
    b = 0.1 * jax.random.normal(k2, (1, out_sz), jnp.float32)
    return w, b, key


def init_params(key, cfg):
    assert cfg["num_layers"] == 2  # reference fc_cons sizing assumes this
    key, k = jax.random.split(key)
    emb = 0.1 * jax.random.normal(k, (cfg["n_vocab"], cfg["embed"]), jnp.float32)
    emb = emb.at[cfg["n_vocab"] - 1].set(0.0)                # padding_idx row
    key, k = jax.random.split(key)
    emb_c = 0.1 * jax.random.normal(k, (cfg["n_vocab_cons"], cfg["embed_cons"]), jnp.float32)
    emb_c = emb_c.at[cfg["n_vocab_cons"] - 1].set(0.0)
    # embedding_pros / gru_pros omitted: their output is dead in the reference forward.

    gru_t, key = _init_gru_raw(key, cfg["embed"], cfg["hidden_size"], cfg["num_layers"])
    gru_c, key = _init_gru_raw(key, cfg["embed_cons"], cfg["hidden_size_cons"], cfg["num_layers"])
    params = dict(
        text=_pack_branch(emb, gru_t, cfg["hidden_size"]),
        cons=_pack_branch(emb_c, gru_c, cfg["hidden_size_cons"]),
    )

    head = {}
    # Attention vector (reference inits to zeros; small random here to exercise softmax).
    key, k = jax.random.split(key)
    head["w_att"] = 0.1 * jax.random.normal(k, (1, 2 * cfg["hidden_size"]), jnp.float32)
    head["fc1_w"], head["fc1_b"], key = _init_linear(key, 2 * cfg["hidden_size"],
                                                     cfg["hidden_size2"])
    # NOTE: reference sizes fc_cons/fc_pros as hidden_size_cons*num_layers; this equals
    # the 2*hidden_size_cons bi-GRU feature width only because num_layers == 2.
    fcc_w, fcc_b, key = _init_linear(key, cfg["hidden_size_cons"] * cfg["num_layers"],
                                     cfg["hidden_size_cons"])
    fcp_w, fcp_b, key = _init_linear(key, cfg["hidden_size_cons"] * cfg["num_layers"],
                                     cfg["hidden_size_cons"])
    head["fc_cp_w"] = jnp.concatenate([fcc_w, fcp_w], axis=1)   # merged [cons | pros]
    head["fc_cp_b"] = jnp.concatenate([fcc_b, fcp_b], axis=1)
    head["fc_w"], head["fc_b"], key = _init_linear(
        key, cfg["hidden_size2"] + 2 * cfg["hidden_size_cons"], cfg["num_classes"])
    params["head"] = head
    return params


# ----------------------------- main ------------------------------------------

if __name__ == "__main__":
    cfg = dict(
        n_vocab=50, embed=32,
        hidden_size=32, num_layers=2, hidden_size2=16,
        n_vocab_cons=20, embed_cons=16, hidden_size_cons=16,
        num_classes=4,
    )
    B, L, Lc, Lp = 2, 8, 6, 6

    params = init_params(jax.random.PRNGKey(0), cfg)

    _, k0, k2, k3 = jax.random.split(jax.random.PRNGKey(0), 4)
    x_tokens = jax.random.randint(k0, (B, L), 0, cfg["n_vocab"], dtype=jnp.int32)
    x_cons = jax.random.randint(k2, (B, Lc), 0, cfg["n_vocab_cons"], dtype=jnp.int32)
    x_pros = jax.random.randint(k3, (B, Lp), 0, cfg["n_vocab_cons"], dtype=jnp.int32)

    fwd = jax.jit(model_forward)
    out = jax.block_until_ready(fwd(params, x_tokens, x_cons, x_pros))
    assert out.shape == (B, cfg["num_classes"]), out.shape
    assert bool(jnp.all(jnp.isfinite(out)))
    print("KERNEL_OK")
</pallas_src>

<mosaic_0001>
module attributes {stable_mosaic.version = 11 : i64} {
  func.func @fused_kernel(%arg0: memref<16x8x96xf32, #tpu.memory_space<vmem>>, %arg1: memref<12x8x48xf32, #tpu.memory_space<vmem>>, %arg2: memref<2x32x96xbf16, #tpu.memory_space<vmem>>, %arg3: memref<2x1x32xf32, #tpu.memory_space<vmem>>, %arg4: memref<2x16x48xbf16, #tpu.memory_space<vmem>>, %arg5: memref<2x1x16xf32, #tpu.memory_space<vmem>>, %arg6: memref<2x64x96xbf16, #tpu.memory_space<vmem>>, %arg7: memref<2x1x96xf32, #tpu.memory_space<vmem>>, %arg8: memref<2x32x96xbf16, #tpu.memory_space<vmem>>, %arg9: memref<2x1x32xf32, #tpu.memory_space<vmem>>, %arg10: memref<2x32x48xbf16, #tpu.memory_space<vmem>>, %arg11: memref<2x1x48xf32, #tpu.memory_space<vmem>>, %arg12: memref<2x16x48xbf16, #tpu.memory_space<vmem>>, %arg13: memref<2x1x16xf32, #tpu.memory_space<vmem>>, %arg14: memref<1x64xf32, #tpu.memory_space<vmem>>, %arg15: memref<64x16xf32, #tpu.memory_space<vmem>>, %arg16: memref<1x16xf32, #tpu.memory_space<vmem>>, %arg17: memref<32x32xf32, #tpu.memory_space<vmem>>, %arg18: memref<1x32xf32, #tpu.memory_space<vmem>>, %arg19: memref<48x4xf32, #tpu.memory_space<vmem>>, %arg20: memref<1x4xf32, #tpu.memory_space<vmem>>, %arg21: memref<8x4xf32, #tpu.memory_space<vmem>>, %arg22: memref<64x64xf32, #tpu.memory_space<vmem>>, %arg23: memref<48x32xf32, #tpu.memory_space<vmem>>) attributes {dimension_semantics = [], scalar_prefetch = 0 : i64, scratch_operands = 2 : i64, tpu.core_type = #tpu.core_type<tc>} {
    %c0 = arith.constant 0 : index
    %c0_0 = arith.constant 0 : index
    %c0_1 = arith.constant 0 : index
    %0 = vector.load %arg2[%c0, %c0_0, %c0_1] : memref<2x32x96xbf16, #tpu.memory_space<vmem>>, vector<1x32x96xbf16>
    %1 = vector.shape_cast %0 : vector<1x32x96xbf16> to vector<32x96xbf16>
    %c1 = arith.constant 1 : index
    %c0_2 = arith.constant 0 : index
    %c0_3 = arith.constant 0 : index
    %2 = vector.load %arg2[%c1, %c0_2, %c0_3] : memref<2x32x96xbf16, #tpu.memory_space<vmem>>, vector<1x32x96xbf16>
    %3 = vector.shape_cast %2 : vector<1x32x96xbf16> to vector<32x96xbf16>
    %c0_4 = arith.constant 0 : index
    %c0_5 = arith.constant 0 : index
    %c0_6 = arith.constant 0 : index
    %4 = vector.load %arg4[%c0_4, %c0_5, %c0_6] : memref<2x16x48xbf16, #tpu.memory_space<vmem>>, vector<1x16x48xbf16>
    %5 = vector.shape_cast %4 : vector<1x16x48xbf16> to vector<16x48xbf16>
    %c1_7 = arith.constant 1 : index
    %c0_8 = arith.constant 0 : index
    %c0_9 = arith.constant 0 : index
    %6 = vector.load %arg4[%c1_7, %c0_8, %c0_9] : memref<2x16x48xbf16, #tpu.memory_space<vmem>>, vector<1x16x48xbf16>
    %7 = vector.shape_cast %6 : vector<1x16x48xbf16> to vector<16x48xbf16>
    %c0_10 = arith.constant 0 : index
    %c0_11 = arith.constant 0 : index
    %c0_12 = arith.constant 0 : index
    %8 = vector.load %arg3[%c0_10, %c0_11, %c0_12] : memref<2x1x32xf32, #tpu.memory_space<vmem>>, vector<1x1x32xf32>
    %9 = vector.shape_cast %8 : vector<1x1x32xf32> to vector<1x32xf32>
    %10 = vector.shape_cast %9 : vector<1x32xf32> to vector<1x32xf32>
    %11 = vector.broadcast %10 : vector<1x32xf32> to vector<8x32xf32>
    %c1_13 = arith.constant 1 : index
    %c0_14 = arith.constant 0 : index
    %c0_15 = arith.constant 0 : index
    %12 = vector.load %arg3[%c1_13, %c0_14, %c0_15] : memref<2x1x32xf32, #tpu.memory_space<vmem>>, vector<1x1x32xf32>
    %13 = vector.shape_cast %12 : vector<1x1x32xf32> to vector<1x32xf32>
    %14 = vector.shape_cast %13 : vector<1x32xf32> to vector<1x32xf32>
    %15 = vector.broadcast %14 : vector<1x32xf32> to vector<8x32xf32>
    %c0_16 = arith.constant 0 : index
    %c0_17 = arith.constant 0 : index
    %c0_18 = arith.constant 0 : index
    %16 = vector.load %arg5[%c0_16, %c0_17, %c0_18] : memref<2x1x16xf32, #tpu.memory_space<vmem>>, vector<1x1x16xf32>
    %17 = vector.shape_cast %16 : vector<1x1x16xf32> to vector<1x16xf32>
    %18 = vector.shape_cast %17 : vector<1x16xf32> to vector<1x16xf32>
    %19 = vector.broadcast %18 : vector<1x16xf32> to vector<8x16xf32>
    %c1_19 = arith.constant 1 : index
    %c0_20 = arith.constant 0 : index
    %c0_21 = arith.constant 0 : index
    %20 = vector.load %arg5[%c1_19, %c0_20, %c0_21] : memref<2x1x16xf32, #tpu.memory_space<vmem>>, vector<1x1x16xf32>
    %21 = vector.shape_cast %20 : vector<1x1x16xf32> to vector<1x16xf32>
    %22 = vector.shape_cast %21 : vector<1x16xf32> to vector<1x16xf32>
    %23 = vector.broadcast %22 : vector<1x16xf32> to vector<8x16xf32>
    %cst = arith.constant 0.000000e+00 : f32
    %24 = vector.broadcast %cst : f32 to vector<8x32xf32>
    %cst_22 = arith.constant 0.000000e+00 : f32
    %25 = vector.broadcast %cst_22 : f32 to vector<8x32xf32>
    %cst_23 = arith.constant 0.000000e+00 : f32
    %26 = vector.broadcast %cst_23 : f32 to vector<8x16xf32>
    %cst_24 = arith.constant 0.000000e+00 : f32
    %27 = vector.broadcast %cst_24 : f32 to vector<8x16xf32>
    %28 = arith.truncf %24 : vector<8x32xf32> to vector<8x32xbf16>
    %cst_25 = arith.constant dense<0.000000e+00> : vector<8x96xf32>
    %29 = tpu.matmul %28, %1, %cst_25 {dimension_numbers = #tpu.dot_dimension_numbers<[1], [0], [0], [1], [0, 0, 1, 1], [], []>} : vector<8x32xbf16>, vector<32x96xbf16>, vector<8x96xf32> -> vector<8x96xf32>
    %30 = arith.truncf %25 : vector<8x32xf32> to vector<8x32xbf16>
    %cst_26 = arith.constant dense<0.000000e+00> : vector<8x96xf32>
    %31 = tpu.matmul %30, %3, %cst_26 {dimension_numbers = #tpu.dot_dimension_numbers<[1], [0], [0], [1], [0, 0, 1, 1], [], []>} : vector<8x32xbf16>, vector<32x96xbf16>, vector<8x96xf32> -> vector<8x96xf32>
    %c0_27 = arith.constant 0 : index
    %c0_28 = arith.constant 0 : index
    %c0_29 = arith.constant 0 : index
    %32 = vector.load %arg0[%c0_27, %c0_28, %c0_29] : memref<16x8x96xf32, #tpu.memory_space<vmem>>, vector<1x8x96xf32>
    %33 = vector.shape_cast %32 : vector<1x8x96xf32> to vector<8x96xf32>
    %34 = vector.extract_strided_slice %33 {offsets = [0, 0], sizes = [8, 32], strides = [1, 1]} : vector<8x96xf32> to vector<8x32xf32>
    %35 = vector.extract_strided_slice %29 {offsets = [0, 0], sizes = [8, 32], strides = [1, 1]} : vector<8x96xf32> to vector<8x32xf32>
    %36 = arith.addf %34, %35 : vector<8x32xf32>
    %37 = arith.negf %36 : vector<8x32xf32>
    %38 = math.exp %37 : vector<8x32xf32>
    %cst_30 = arith.constant 1.000000e+00 : f32
    %39 = vector.broadcast %cst_30 : f32 to vector<8x32xf32>
    %40 = arith.addf %39, %38 : vector<8x32xf32>
    %41 = arith.divf %39, %40 : vector<8x32xf32>
    %42 = vector.extract_strided_slice %33 {offsets = [0, 32], sizes = [8, 32], strides = [1, 1]} : vector<8x96xf32> to vector<8x32xf32>
    %43 = vector.extract_strided_slice %29 {offsets = [0, 32], sizes = [8, 32], strides = [1, 1]} : vector<8x96xf32> to vector<8x32xf32>
    %44 = arith.addf %42, %43 : vector<8x32xf32>
    %45 = arith.negf %44 : vector<8x32xf32>
    %46 = math.exp %45 : vector<8x32xf32>
    %cst_31 = arith.constant 1.000000e+00 : f32
    %47 = vector.broadcast %cst_31 : f32 to vector<8x32xf32>
    %48 = arith.addf %47, %46 : vector<8x32xf32>
    %49 = arith.divf %47, %48 : vector<8x32xf32>
    %50 = vector.extract_strided_slice %33 {offsets = [0, 64], sizes = [8, 32], strides = [1, 1]} : vector<8x96xf32> to vector<8x32xf32>
    %51 = vector.extract_strided_slice %29 {offsets = [0, 64], sizes = [8, 32], strides = [1, 1]} : vector<8x96xf32> to vector<8x32xf32>
    %52 = arith.addf %51, %11 : vector<8x32xf32>
    %53 = arith.mulf %41, %52 : vector<8x32xf32>
    %54 = arith.addf %50, %53 : vector<8x32xf32>
    %55 = math.tanh %54 : vector<8x32xf32>
    %cst_32 = arith.constant 1.000000e+00 : f32
    %56 = vector.broadcast %cst_32 : f32 to vector<8x32xf32>
    %57 = arith.subf %56, %49 : vector<8x32xf32>
    %58 = arith.mulf %57, %55 : vector<8x32xf32>
    %59 = arith.mulf %49, %24 : vector<8x32xf32>
    %60 = arith.addf %58, %59 : vector<8x32xf32>
    %c15 = arith.constant 15 : index
    %c0_33 = arith.constant 0 : index
    %c0_34 = arith.constant 0 : index
    %61 = vector.load %arg0[%c15, %c0_33, %c0_34] : memref<16x8x96xf32, #tpu.memory_space<vmem>>, vector<1x8x96xf32>
    %62 = vector.shape_cast %61 : vector<1x8x96xf32> to vector<8x96xf32>
    %63 = vector.extract_strided_slice %62 {offsets = [0, 0], sizes = [8, 32], strides = [1, 1]} : vector<8x96xf32> to vector<8x32xf32>
    %64 = vector.extract_strided_slice %31 {offsets = [0, 0], sizes = [8, 32], strides = [1, 1]} : vector<8x96xf32> to vector<8x32xf32>
    %65 = arith.addf %63, %64 : vector<8x32xf32>
    %66 = arith.negf %65 : vector<8x32xf32>
    %67 = math.exp %66 : vector<8x32xf32>
    %cst_35 = arith.constant 1.000000e+00 : f32
    %68 = vector.broadcast %cst_35 : f32 to vector<8x32xf32>
    %69 = arith.addf %68, %67 : vector<8x32xf32>
    %70 = arith.divf %68, %69 : vector<8x32xf32>
    %71 = vector.extract_strided_slice %62 {offsets = [0, 32], sizes = [8, 32], strides = [1, 1]} : vector<8x96xf32> to vector<8x32xf32>
    %72 = vector.extract_strided_slice %31 {offsets = [0, 32], sizes = [8, 32], strides = [1, 1]} : vector<8x96xf32> to vector<8x32xf32>
    %73 = arith.addf %71, %72 : vector<8x32xf32>
    %74 = arith.negf %73 : vector<8x32xf32>
    %75 = math.exp %74 : vector<8x32xf32>
    %cst_36 = arith.constant 1.000000e+00 : f32
    %76 = vector.broadcast %cst_36 : f32 to vector<8x32xf32>
    %77 = arith.addf %76, %75 : vector<8x32xf32>
    %78 = arith.divf %76, %77 : vector<8x32xf32>
    %79 = vector.extract_strided_slice %62 {offsets = [0, 64], sizes = [8, 32], strides = [1, 1]} : vector<8x96xf32> to vector<8x32xf32>
    %80 = vector.extract_strided_slice %31 {offsets = [0, 64], sizes = [8, 32], strides = [1, 1]} : vector<8x96xf32> to vector<8x32xf32>
    %81 = arith.addf %80, %15 : vector<8x32xf32>
    %82 = arith.mulf %70, %81 : vector<8x32xf32>
    %83 = arith.addf %79, %82 : vector<8x32xf32>
    %84 = math.tanh %83 : vector<8x32xf32>
    %cst_37 = arith.constant 1.000000e+00 : f32
    %85 = vector.broadcast %cst_37 : f32 to vector<8x32xf32>
    %86 = arith.subf %85, %78 : vector<8x32xf32>
    %87 = arith.mulf %86, %84 : vector<8x32xf32>
    %88 = arith.mulf %78, %25 : vector<8x32xf32>
    %89 = arith.addf %87, %88 : vector<8x32xf32>
    %c0_38 = arith.constant 0 : index
    %c0_39 = arith.constant 0 : index
    %90 = vector.load %arg22[%c0_38, %c0_39] : memref<64x64xf32, #tpu.memory_space<vmem>>, vector<8x32xf32>
    tpu.vector_store %arg22[%c0_38, %c0_39], %60 {strides = array<i32>} : memref<64x64xf32, #tpu.memory_space<vmem>>, vector<8x32xf32>,
    %c56 = arith.constant 56 : index
    %c32 = arith.constant 32 : index
    %91 = vector.load %arg22[%c56, %c32] : memref<64x64xf32, #tpu.memory_space<vmem>>, vector<8x32xf32>
    tpu.vector_store %arg22[%c56, %c32], %89 {strides = array<i32>} : memref<64x64xf32, #tpu.memory_space<vmem>>, vector<8x32xf32>,
    %92 = arith.truncf %26 : vector<8x16xf32> to vector<8x16xbf16>
    %cst_40 = arith.constant dense<0.000000e+00> : vector<8x48xf32>
    %93 = tpu.matmul %92, %5, %cst_40 {dimension_numbers = #tpu.dot_dimension_numbers<[1], [0], [0], [1], [0, 0, 1, 1], [], []>} : vector<8x16xbf16>, vector<16x48xbf16>, vector<8x48xf32> -> vector<8x48xf32>
    %94 = arith.truncf %27 : vector<8x16xf32> to vector<8x16xbf16>
    %cst_41 = arith.constant dense<0.000000e+00> : vector<8x48xf32>
    %95 = tpu.matmul %94, %7, %cst_41 {dimension_numbers = #tpu.dot_dimension_numbers<[1], [0], [0], [1], [0, 0, 1, 1], [], []>} : vector<8x16xbf16>, vector<16x48xbf16>, vector<8x48xf32> -> vector<8x48xf32>
    %c0_42 = arith.constant 0 : index
    %c0_43 = arith.constant 0 : index
    %c0_44 = arith.constant 0 : index
    %96 = vector.load %arg1[%c0_42, %c0_43, %c0_44] : memref<12x8x48xf32, #tpu.memory_space<vmem>>, vector<1x8x48xf32>
    %97 = vector.shape_cast %96 : vector<1x8x48xf32> to vector<8x48xf32>
    %98 = vector.extract_strided_slice %97 {offsets = [0, 0], sizes = [8, 16], strides = [1, 1]} : vector<8x48xf32> to vector<8x16xf32>
    %99 = vector.extract_strided_slice %93 {offsets = [0, 0], sizes = [8, 16], strides = [1, 1]} : vector<8x48xf32> to vector<8x16xf32>
    %100 = arith.addf %98, %99 : vector<8x16xf32>
    %101 = arith.negf %100 : vector<8x16xf32>
    %102 = math.exp %101 : vector<8x16xf32>
    %cst_45 = arith.constant 1.000000e+00 : f32
    %103 = vector.broadcast %cst_45 : f32 to vector<8x16xf32>
    %104 = arith.addf %103, %102 : vector<8x16xf32>
    %105 = arith.divf %103, %104 : vector<8x16xf32>
    %106 = vector.extract_strided_slice %97 {offsets = [0, 16], sizes = [8, 16], strides = [1, 1]} : vector<8x48xf32> to vector<8x16xf32>
    %107 = vector.extract_strided_slice %93 {offsets = [0, 16], sizes = [8, 16], strides = [1, 1]} : vector<8x48xf32> to vector<8x16xf32>
    %108 = arith.addf %106, %107 : vector<8x16xf32>
    %109 = arith.negf %108 : vector<8x16xf32>
    %110 = math.exp %109 : vector<8x16xf32>
    %cst_46 = arith.constant 1.000000e+00 : f32
    %111 = vector.broadcast %cst_46 : f32 to vector<8x16xf32>
    %112 = arith.addf %111, %110 : vector<8x16xf32>
    %113 = arith.divf %111, %112 : vector<8x16xf32>
    %114 = vector.extract_strided_slice %97 {offsets = [0, 32], sizes = [8, 16], strides = [1, 1]} : vector<8x48xf32> to vector<8x16xf32>
    %115 = vector.extract_strided_slice %93 {offsets = [0, 32], sizes = [8, 16], strides = [1, 1]} : vector<8x48xf32> to vector<8x16xf32>
    %116 = arith.addf %115, %19 : vector<8x16xf32>
    %117 = arith.mulf %105, %116 : vector<8x16xf32>
    %118 = arith.addf %114, %117 : vector<8x16xf32>
    %119 = math.tanh %118 : vector<8x16xf32>
    %cst_47 = arith.constant 1.000000e+00 : f32
    %120 = vector.broadcast %cst_47 : f32 to vector<8x16xf32>
    %121 = arith.subf %120, %113 : vector<8x16xf32>
    %122 = arith.mulf %121, %119 : vector<8x16xf32>
    %123 = arith.mulf %113, %26 : vector<8x16xf32>
    %124 = arith.addf %122, %123 : vector<8x16xf32>
    %c11 = arith.constant 11 : index
    %c0_48 = arith.constant 0 : index
    %c0_49 = arith.constant 0 : index
    %125 = vector.load %arg1[%c11, %c0_48, %c0_49] : memref<12x8x48xf32, #tpu.memory_space<vmem>>, vector<1x8x48xf32>
    %126 = vector.shape_cast %125 : vector<1x8x48xf32> to vector<8x48xf32>
    %127 = vector.extract_strided_slice %126 {offsets = [0, 0], sizes = [8, 16], strides = [1, 1]} : vector<8x48xf32> to vector<8x16xf32>
    %128 = vector.extract_strided_slice %95 {offsets = [0, 0], sizes = [8, 16], strides = [1, 1]} : vector<8x48xf32> to vector<8x16xf32>
    %129 = arith.addf %127, %128 : vector<8x16xf32>
    %130 = arith.negf %129 : vector<8x16xf32>
    %131 = math.exp %130 : vector<8x16xf32>
    %cst_50 = arith.constant 1.000000e+00 : f32
    %132 = vector.broadcast %cst_50 : f32 to vector<8x16xf32>
    %133 = arith.addf %132, %131 : vector<8x16xf32>
    %134 = arith.divf %132, %133 : vector<8x16xf32>
    %135 = vector.extract_strided_slice %126 {offsets = [0, 16], sizes = [8, 16], strides = [1, 1]} : vector<8x48xf32> to vector<8x16xf32>
    %136 = vector.extract_strided_slice %95 {offsets = [0, 16], sizes = [8, 16], strides = [1, 1]} : vector<8x48xf32> to vector<8x16xf32>
    %137 = arith.addf %135, %136 : vector<8x16xf32>
    %138 = arith.negf %137 : vector<8x16xf32>
    %139 = math.exp %138 : vector<8x16xf32>
    %cst_51 = arith.constant 1.000000e+00 : f32
    %140 = vector.broadcast %cst_51 : f32 to vector<8x16xf32>
    %141 = arith.addf %140, %139 : vector<8x16xf32>
    %142 = arith.divf %140, %141 : vector<8x16xf32>
    %143 = vector.extract_strided_slice %126 {offsets = [0, 32], sizes = [8, 16], strides = [1, 1]} : vector<8x48xf32> to vector<8x16xf32>
    %144 = vector.extract_strided_slice %95 {offsets = [0, 32], sizes = [8, 16], strides = [1, 1]} : vector<8x48xf32> to vector<8x16xf32>
    %145 = arith.addf %144, %23 : vector<8x16xf32>
    %146 = arith.mulf %134, %145 : vector<8x16xf32>
    %147 = arith.addf %143, %146 : vector<8x16xf32>
    %148 = math.tanh %147 : vector<8x16xf32>
    %cst_52 = arith.constant 1.000000e+00 : f32
    %149 = vector.broadcast %cst_52 : f32 to vector<8x16xf32>
    %150 = arith.subf %149, %142 : vector<8x16xf32>
    %151 = arith.mulf %150, %148 : vector<8x16xf32>
    %152 = arith.mulf %142, %27 : vector<8x16xf32>
    %153 = arith.addf %151, %152 : vector<8x16xf32>
    %c0_53 = arith.constant 0 : index
    %c0_54 = arith.constant 0 : index
    %154 = vector.load %arg23[%c0_53, %c0_54] : memref<48x32xf32, #tpu.memory_space<vmem>>, vector<8x16xf32>
    tpu.vector_store %arg23[%c0_53, %c0_54], %124 {strides = array<i32>} : memref<48x32xf32, #tpu.memory_space<vmem>>, vector<8x16xf32>,
    %c40 = arith.constant 40 : index
    %c16 = arith.constant 16 : index
    %155 = vector.load %arg23[%c40, %c16] : memref<48x32xf32, #tpu.memory_space<vmem>>, vector<8x16xf32>
    tpu.vector_store %arg23[%c40, %c16], %153 {strides = array<i32>} : memref<48x32xf32, #tpu.memory_space<vmem>>, vector<8x16xf32>,
    %156 = arith.truncf %60 : vector<8x32xf32> to vector<8x32xbf16>
    %cst_55 = arith.constant dense<0.000000e+00> : vector<8x96xf32>
    %157 = tpu.matmul %156, %1, %cst_55 {dimension_numbers = #tpu.dot_dimension_numbers<[1], [0], [0], [1], [0, 0, 1, 1], [], []>} : vector<8x32xbf16>, vector<32x96xbf16>, vector<8x96xf32> -> vector<8x96xf32>
    %158 = arith.truncf %89 : vector<8x32xf32> to vector<8x32xbf16>
    %cst_56 = arith.constant dense<0.000000e+00> : vector<8x96xf32>
    %159 = tpu.matmul %158, %3, %cst_56 {dimension_numbers = #tpu.dot_dimension_numbers<[1], [0], [0], [1], [0, 0, 1, 1], [], []>} : vector<8x32xbf16>, vector<32x96xbf16>, vector<8x96xf32> -> vector<8x96xf32>
    %c1_57 = arith.constant 1 : index
    %c0_58 = arith.constant 0 : index
    %c0_59 = arith.constant 0 : index
    %160 = vector.load %arg0[%c1_57, %c0_58, %c0_59] : memref<16x8x96xf32, #tpu.memory_space<vmem>>, vector<1x8x96xf32>
    %161 = vector.shape_cast %160 : vector<1x8x96xf32> to vector<8x96xf32>
    %162 = vector.extract_strided_slice %161 {offsets = [0, 0], sizes = [8, 32], strides = [1, 1]} : vector<8x96xf32> to vector<8x32xf32>
    %163 = vector.extract_strided_slice %157 {offsets = [0, 0], sizes = [8, 32], strides = [1, 1]} : vector<8x96xf32> to vector<8x32xf32>
    %164 = arith.addf %162, %163 : vector<8x32xf32>
    %165 = arith.negf %164 : vector<8x32xf32>
    %166 = math.exp %165 : vector<8x32xf32>
    %cst_60 = arith.constant 1.000000e+00 : f32
    %167 = vector.broadcast %cst_60 : f32 to vector<8x32xf32>
    %168 = arith.addf %167, %166 : vector<8x32xf32>
    %169 = arith.divf %167, %168 : vector<8x32xf32>
    %170 = vector.extract_strided_slice %161 {offsets = [0, 32], sizes = [8, 32], strides = [1, 1]} : vector<8x96xf32> to vector<8x32xf32>
    %171 = vector.extract_strided_slice %157 {offsets = [0, 32], sizes = [8, 32], strides = [1, 1]} : vector<8x96xf32> to vector<8x32xf32>
    %172 = arith.addf %170, %171 : vector<8x32xf32>
    %173 = arith.negf %172 : vector<8x32xf32>
    %174 = math.exp %173 : vector<8x32xf32>
    %cst_61 = arith.constant 1.000000e+00 : f32
    %175 = vector.broadcast %cst_61 : f32 to vector<8x32xf32>
    %176 = arith.addf %175, %174 : vector<8x32xf32>
    %177 = arith.divf %175, %176 : vector<8x32xf32>
    %178 = vector.extract_strided_slice %161 {offsets = [0, 64], sizes = [8, 32], strides = [1, 1]} : vector<8x96xf32> to vector<8x32xf32>
    %179 = vector.extract_strided_slice %157 {offsets = [0, 64], sizes = [8, 32], strides = [1, 1]} : vector<8x96xf32> to vector<8x32xf32>
    %180 = arith.addf %179, %11 : vector<8x32xf32>
    %181 = arith.mulf %169, %180 : vector<8x32xf32>
    %182 = arith.addf %178, %181 : vector<8x32xf32>
    %183 = math.tanh %182 : vector<8x32xf32>
    %cst_62 = arith.constant 1.000000e+00 : f32
    %184 = vector.broadcast %cst_62 : f32 to vector<8x32xf32>
    %185 = arith.subf %184, %177 : vector<8x32xf32>
    %186 = arith.mulf %185, %183 : vector<8x32xf32>
    %187 = arith.mulf %177, %60 : vector<8x32xf32>
    %188 = arith.addf %186, %187 : vector<8x32xf32>
    %c14 = arith.constant 14 : index
    %c0_63 = arith.constant 0 : index
    %c0_64 = arith.constant 0 : index
    %189 = vector.load %arg0[%c14, %c0_63, %c0_64] : memref<16x8x96xf32, #tpu.memory_space<vmem>>, vector<1x8x96xf32>
    %190 = vector.shape_cast %189 : vector<1x8x96xf32> to vector<8x96xf32>
    %191 = vector.extract_strided_slice %190 {offsets = [0, 0], sizes = [8, 32], strides = [1, 1]} : vector<8x96xf32> to vector<8x32xf32>
    %192 = vector.extract_strided_slice %159 {offsets = [0, 0], sizes = [8, 32], strides = [1, 1]} : vector<8x96xf32> to vector<8x32xf32>
    %193 = arith.addf %191, %192 : vector<8x32xf32>
    %194 = arith.negf %193 : vector<8x32xf32>
    %195 = math.exp %194 : vector<8x32xf32>
    %cst_65 = arith.constant 1.000000e+00 : f32
    %196 = vector.broadcast %cst_65 : f32 to vector<8x32xf32>
    %197 = arith.addf %196, %195 : vector<8x32xf32>
    %198 = arith.divf %196, %197 : vector<8x32xf32>
    %199 = vector.extract_strided_slice %190 {offsets = [0, 32], sizes = [8, 32], strides = [1, 1]} : vector<8x96xf32> to vector<8x32xf32>
    %200 = vector.extract_strided_slice %159 {offsets = [0, 32], sizes = [8, 32], strides = [1, 1]} : vector<8x96xf32> to vector<8x32xf32>
    %201 = arith.addf %199, %200 : vector<8x32xf32>
    %202 = arith.negf %201 : vector<8x32xf32>
    %203 = math.exp %202 : vector<8x32xf32>
    %cst_66 = arith.constant 1.000000e+00 : f32
    %204 = vector.broadcast %cst_66 : f32 to vector<8x32xf32>
    %205 = arith.addf %204, %203 : vector<8x32xf32>
    %206 = arith.divf %204, %205 : vector<8x32xf32>
    %207 = vector.extract_strided_slice %190 {offsets = [0, 64], sizes = [8, 32], strides = [1, 1]} : vector<8x96xf32> to vector<8x32xf32>
    %208 = vector.extract_strided_slice %159 {offsets = [0, 64], sizes = [8, 32], strides = [1, 1]} : vector<8x96xf32> to vector<8x32xf32>
    %209 = arith.addf %208, %15 : vector<8x32xf32>
    %210 = arith.mulf %198, %209 : vector<8x32xf32>
    %211 = arith.addf %207, %210 : vector<8x32xf32>
    %212 = math.tanh %211 : vector<8x32xf32>
    %cst_67 = arith.constant 1.000000e+00 : f32
    %213 = vector.broadcast %cst_67 : f32 to vector<8x32xf32>
    %214 = arith.subf %213, %206 : vector<8x32xf32>
    %215 = arith.mulf %214, %212 : vector<8x32xf32>
    %216 = arith.mulf %206, %89 : vector<8x32xf32>
    %217 = arith.addf %215, %216 : vector<8x32xf32>
    %c8 = arith.constant 8 : index
    %c0_68 = arith.constant 0 : index
    %218 = vector.load %arg22[%c8, %c0_68] : memref<64x64xf32, #tpu.memory_space<vmem>>, vector<8x32xf32>
    tpu.vector_store %arg22[%c8, %c0_68], %188 {strides = array<i32>} : memref<64x64xf32, #tpu.memory_space<vmem>>, vector<8x32xf32>,
    %c48 = arith.constant 48 : index
    %c32_69 = arith.constant 32 : index
    %219 = vector.load %arg22[%c48, %c32_69] : memref<64x64xf32, #tpu.memory_space<vmem>>, vector<8x32xf32>
    tpu.vector_store %arg22[%c48, %c32_69], %217 {strides = array<i32>} : memref<64x64xf32, #tpu.memory_space<vmem>>, vector<8x32xf32>,
    %220 = arith.truncf %124 : vector<8x16xf32> to vector<8x16xbf16>
    %cst_70 = arith.constant dense<0.000000e+00> : vector<8x48xf32>
    %221 = tpu.matmul %220, %5, %cst_70 {dimension_numbers = #tpu.dot_dimension_numbers<[1], [0], [0], [1], [0, 0, 1, 1], [], []>} : vector<8x16xbf16>, vector<16x48xbf16>, vector<8x48xf32> -> vector<8x48xf32>
    %222 = arith.truncf %153 : vector<8x16xf32> to vector<8x16xbf16>
    %cst_71 = arith.constant dense<0.000000e+00> : vector<8x48xf32>
    %223 = tpu.matmul %222, %7, %cst_71 {dimension_numbers = #tpu.dot_dimension_numbers<[1], [0], [0], [1], [0, 0, 1, 1], [], []>} : vector<8x16xbf16>, vector<16x48xbf16>, vector<8x48xf32> -> vector<8x48xf32>
    %c1_72 = arith.constant 1 : index
    %c0_73 = arith.constant 0 : index
    %c0_74 = arith.constant 0 : index
    %224 = vector.load %arg1[%c1_72, %c0_73, %c0_74] : memref<12x8x48xf32, #tpu.memory_space<vmem>>, vector<1x8x48xf32>
    %225 = vector.shape_cast %224 : vector<1x8x48xf32> to vector<8x48xf32>
    %226 = vector.extract_strided_slice %225 {offsets = [0, 0], sizes = [8, 16], strides = [1, 1]} : vector<8x48xf32> to vector<8x16xf32>
    %227 = vector.extract_strided_slice %221 {offsets = [0, 0], sizes = [8, 16], strides = [1, 1]} : vector<8x48xf32> to vector<8x16xf32>
    %228 = arith.addf %226, %227 : vector<8x16xf32>
    %229 = arith.negf %228 : vector<8x16xf32>
    %230 = math.exp %229 : vector<8x16xf32>
    %cst_75 = arith.constant 1.000000e+00 : f32
    %231 = vector.broadcast %cst_75 : f32 to vector<8x16xf32>
    %232 = arith.addf %231, %230 : vector<8x16xf32>
    %233 = arith.divf %231, %232 : vector<8x16xf32>
    %234 = vector.extract_strided_slice %225 {offsets = [0, 16], sizes = [8, 16], strides = [1, 1]} : vector<8x48xf32> to vector<8x16xf32>
    %235 = vector.extract_strided_slice %221 {offsets = [0, 16], sizes = [8, 16], strides = [1, 1]} : vector<8x48xf32> to vector<8x16xf32>
    %236 = arith.addf %234, %235 : vector<8x16xf32>
    %237 = arith.negf %236 : vector<8x16xf32>
    %238 = math.exp %237 : vector<8x16xf32>
    %cst_76 = arith.constant 1.000000e+00 : f32
    %239 = vector.broadcast %cst_76 : f32 to vector<8x16xf32>
    %240 = arith.addf %239, %238 : vector<8x16xf32>
    %241 = arith.divf %239, %240 : vector<8x16xf32>
    %242 = vector.extract_strided_slice %225 {offsets = [0, 32], sizes = [8, 16], strides = [1, 1]} : vector<8x48xf32> to vector<8x16xf32>
    %243 = vector.extract_strided_slice %221 {offsets = [0, 32], sizes = [8, 16], strides = [1, 1]} : vector<8x48xf32> to vector<8x16xf32>
    %244 = arith.addf %243, %19 : vector<8x16xf32>
    %245 = arith.mulf %233, %244 : vector<8x16xf32>
    %246 = arith.addf %242, %245 : vector<8x16xf32>
    %247 = math.tanh %246 : vector<8x16xf32>
    %cst_77 = arith.constant 1.000000e+00 : f32
    %248 = vector.broadcast %cst_77 : f32 to vector<8x16xf32>
    %249 = arith.subf %248, %241 : vector<8x16xf32>
    %250 = arith.mulf %249, %247 : vector<8x16xf32>
    %251 = arith.mulf %241, %124 : vector<8x16xf32>
    %252 = arith.addf %250, %251 : vector<8x16xf32>
    %c10 = arith.constant 10 : index
    %c0_78 = arith.constant 0 : index
    %c0_79 = arith.constant 0 : index
    %253 = vector.load %arg1[%c10, %c0_78, %c0_79] : memref<12x8x48xf32, #tpu.memory_space<vmem>>, vector<1x8x48xf32>
    %254 = vector.shape_cast %253 : vector<1x8x48xf32> to vector<8x48xf32>
    %255 = vector.extract_strided_slice %254 {offsets = [0, 0], sizes = [8, 16], strides = [1, 1]} : vector<8x48xf32> to vector<8x16xf32>
    %256 = vector.extract_strided_slice %223 {offsets = [0, 0], sizes = [8, 16], strides = [1, 1]} : vector<8x48xf32> to vector<8x16xf32>
    %257 = arith.addf %255, %256 : vector<8x16xf32>
    %258 = arith.negf %257 : vector<8x16xf32>
    %259 = math.exp %258 : vector<8x16xf32>
    %cst_80 = arith.constant 1.000000e+00 : f32
    %260 = vector.broadcast %cst_80 : f32 to vector<8x16xf32>
    %261 = arith.addf %260, %259 : vector<8x16xf32>
    %262 = arith.divf %260, %261 : vector<8x16xf32>
    %263 = vector.extract_strided_slice %254 {offsets = [0, 16], sizes = [8, 16], strides = [1, 1]} : vector<8x48xf32> to vector<8x16xf32>
    %264 = vector.extract_strided_slice %223 {offsets = [0, 16], sizes = [8, 16], strides = [1, 1]} : vector<8x48xf32> to vector<8x16xf32>
    %265 = arith.addf %263, %264 : vector<8x16xf32>
    %266 = arith.negf %265 : vector<8x16xf32>
    %267 = math.exp %266 : vector<8x16xf32>
    %cst_81 = arith.constant 1.000000e+00 : f32
    %268 = vector.broadcast %cst_81 : f32 to vector<8x16xf32>
    %269 = arith.addf %268, %267 : vector<8x16xf32>
    %270 = arith.divf %268, %269 : vector<8x16xf32>
    %271 = vector.extract_strided_slice %254 {offsets = [0, 32], sizes = [8, 16], strides = [1, 1]} : vector<8x48xf32> to vector<8x16xf32>
    %272 = vector.extract_strided_slice %223 {offsets = [0, 32], sizes = [8, 16], strides = [1, 1]} : vector<8x48xf32> to vector<8x16xf32>
    %273 = arith.addf %272, %23 : vector<8x16xf32>
    %274 = arith.mulf %262, %273 : vector<8x16xf32>
    %275 = arith.addf %271, %274 : vector<8x16xf32>
    %276 = math.tanh %275 : vector<8x16xf32>
    %cst_82 = arith.constant 1.000000e+00 : f32
    %277 = vector.broadcast %cst_82 : f32 to vector<8x16xf32>
    %278 = arith.subf %277, %270 : vector<8x16xf32>
    %279 = arith.mulf %278, %276 : vector<8x16xf32>
    %280 = arith.mulf %270, %153 : vector<8x16xf32>
    %281 = arith.addf %279, %280 : vector<8x16xf32>
    %c8_83 = arith.constant 8 : index
    %c0_84 = arith.constant 0 : index
    %282 = vector.load %arg23[%c8_83, %c0_84] : memref<48x32xf32, #tpu.memory_space<vmem>>, vector<8x16xf32>
    tpu.vector_store %arg23[%c8_83, %c0_84], %252 {strides = array<i32>} : memref<48x32xf32, #tpu.memory_space<vmem>>, vector<8x16xf32>,
    %c32_85 = arith.constant 32 : index
    %c16_86 = arith.constant 16 : index
    %283 = vector.load %arg23[%c32_85, %c16_86] : memref<48x32xf32, #tpu.memory_space<vmem>>, vector<8x16xf32>
    tpu.vector_store %arg23[%c32_85, %c16_86], %281 {strides = array<i32>} : memref<48x32xf32, #tpu.memory_space<vmem>>, vector<8x16xf32>,
    %284 = arith.truncf %188 : vector<8x32xf32> to vector<8x32xbf16>
    %cst_87 = arith.constant dense<0.000000e+00> : vector<8x96xf32>
    %285 = tpu.matmul %284, %1, %cst_87 {dimension_numbers = #tpu.dot_dimension_numbers<[1], [0], [0], [1], [0, 0, 1, 1], [], []>} : vector<8x32xbf16>, vector<32x96xbf16>, vector<8x96xf32> -> vector<8x96xf32>
    %286 = arith.truncf %217 : vector<8x32xf32> to vector<8x32xbf16>
    %cst_88 = arith.constant dense<0.000000e+00> : vector<8x96xf32>
    %287 = tpu.matmul %286, %3, %cst_88 {dimension_numbers = #tpu.dot_dimension_numbers<[1], [0], [0], [1], [0, 0, 1, 1], [], []>} : vector<8x32xbf16>, vector<32x96xbf16>, vector<8x96xf32> -> vector<8x96xf32>
    %c2 = arith.constant 2 : index
    %c0_89 = arith.constant 0 : index
    %c0_90 = arith.constant 0 : index
    %288 = vector.load %arg0[%c2, %c0_89, %c0_90] : memref<16x8x96xf32, #tpu.memory_space<vmem>>, vector<1x8x96xf32>
    %289 = vector.shape_cast %288 : vector<1x8x96xf32> to vector<8x96xf32>
    %290 = vector.extract_strided_slice %289 {offsets = [0, 0], sizes = [8, 32], strides = [1, 1]} : vector<8x96xf32> to vector<8x32xf32>
    %291 = vector.extract_strided_slice %285 {offsets = [0, 0], sizes = [8, 32], strides = [1, 1]} : vector<8x96xf32> to vector<8x32xf32>
    %292 = arith.addf %290, %291 : vector<8x32xf32>
    %293 = arith.negf %292 : vector<8x32xf32>
    %294 = math.exp %293 : vector<8x32xf32>
    %cst_91 = arith.constant 1.000000e+00 : f32
    %295 = vector.broadcast %cst_91 : f32 to vector<8x32xf32>
    %296 = arith.addf %295, %294 : vector<8x32xf32>
    %297 = arith.divf %295, %296 : vector<8x32xf32>
    %298 = vector.extract_strided_slice %289 {offsets = [0, 32], sizes = [8, 32], strides = [1, 1]} : vector<8x96xf32> to vector<8x32xf32>
    %299 = vector.extract_strided_slice %285 {offsets = [0, 32], sizes = [8, 32], strides = [1, 1]} : vector<8x96xf32> to vector<8x32xf32>
    %300 = arith.addf %298, %299 : vector<8x32xf32>
    %301 = arith.negf %300 : vector<8x32xf32>
    %302 = math.exp %301 : vector<8x32xf32>
    %cst_92 = arith.constant 1.000000e+00 : f32
    %303 = vector.broadcast %cst_92 : f32 to vector<8x32xf32>
    %304 = arith.addf %303, %302 : vector<8x32xf32>
    %305 = arith.divf %303, %304 : vector<8x32xf32>
    %306 = vector.extract_strided_slice %289 {offsets = [0, 64], sizes = [8, 32], strides = [1, 1]} : vector<8x96xf32> to vector<8x32xf32>
    %307 = vector.extract_strided_slice %285 {offsets = [0, 64], sizes = [8, 32], strides = [1, 1]} : vector<8x96xf32> to vector<8x32xf32>
    %308 = arith.addf %307, %11 : vector<8x32xf32>
    %309 = arith.mulf %297, %308 : vector<8x32xf32>
    %310 = arith.addf %306, %309 : vector<8x32xf32>
    %311 = math.tanh %310 : vector<8x32xf32>
    %cst_93 = arith.constant 1.000000e+00 : f32
    %312 = vector.broadcast %cst_93 : f32 to vector<8x32xf32>
    %313 = arith.subf %312, %305 : vector<8x32xf32>
    %314 = arith.mulf %313, %311 : vector<8x32xf32>
    %315 = arith.mulf %305, %188 : vector<8x32xf32>
    %316 = arith.addf %314, %315 : vector<8x32xf32>
    %c13 = arith.constant 13 : index
    %c0_94 = arith.constant 0 : index
    %c0_95 = arith.constant 0 : index
    %317 = vector.load %arg0[%c13, %c0_94, %c0_95] : memref<16x8x96xf32, #tpu.memory_space<vmem>>, vector<1x8x96xf32>
    %318 = vector.shape_cast %317 : vector<1x8x96xf32> to vector<8x96xf32>
    %319 = vector.extract_strided_slice %318 {offsets = [0, 0], sizes = [8, 32], strides = [1, 1]} : vector<8x96xf32> to vector<8x32xf32>
    %320 = vector.extract_strided_slice %287 {offsets = [0, 0], sizes = [8, 32], strides = [1, 1]} : vector<8x96xf32> to vector<8x32xf32>
    %321 = arith.addf %319, %320 : vector<8x32xf32>
    %322 = arith.negf %321 : vector<8x32xf32>
    %323 = math.exp %322 : vector<8x32xf32>
    %cst_96 = arith.constant 1.000000e+00 : f32
    %324 = vector.broadcast %cst_96 : f32 to vector<8x32xf32>
    %325 = arith.addf %324, %323 : vector<8x32xf32>
    %326 = arith.divf %324, %325 : vector<8x32xf32>
    %327 = vector.extract_strided_slice %318 {offsets = [0, 32], sizes = [8, 32], strides = [1, 1]} : vector<8x96xf32> to vector<8x32xf32>
    %328 = vector.extract_strided_slice %287 {offsets = [0, 32], sizes = [8, 32], strides = [1, 1]} : vector<8x96xf32> to vector<8x32xf32>
    %329 = arith.addf %327, %328 : vector<8x32xf32>
    %330 = arith.negf %329 : vector<8x32xf32>
    %331 = math.exp %330 : vector<8x32xf32>
    %cst_97 = arith.constant 1.000000e+00 : f32
    %332 = vector.broadcast %cst_97 : f32 to vector<8x32xf32>
    %333 = arith.addf %332, %331 : vector<8x32xf32>
    %334 = arith.divf %332, %333 : vector<8x32xf32>
    %335 = vector.extract_strided_slice %318 {offsets = [0, 64], sizes = [8, 32], strides = [1, 1]} : vector<8x96xf32> to vector<8x32xf32>
    %336 = vector.extract_strided_slice %287 {offsets = [0, 64], sizes = [8, 32], strides = [1, 1]} : vector<8x96xf32> to vector<8x32xf32>
    %337 = arith.addf %336, %15 : vector<8x32xf32>
    %338 = arith.mulf %326, %337 : vector<8x32xf32>
    %339 = arith.addf %335, %338 : vector<8x32xf32>
    %340 = math.tanh %339 : vector<8x32xf32>
    %cst_98 = arith.constant 1.000000e+00 : f32
    %341 = vector.broadcast %cst_98 : f32 to vector<8x32xf32>
    %342 = arith.subf %341, %334 : vector<8x32xf32>
    %343 = arith.mulf %342, %340 : vector<8x32xf32>
    %344 = arith.mulf %334, %217 : vector<8x32xf32>
    %345 = arith.addf %343, %344 : vector<8x32xf32>
    %c16_99 = arith.constant 16 : index
    %c0_100 = arith.constant 0 : index
    %346 = vector.load %arg22[%c16_99, %c0_100] : memref<64x64xf32, #tpu.memory_space<vmem>>, vector<8x32xf32>
    tpu.vector_store %arg22[%c16_99, %c0_100], %316 {strides = array<i32>} : memref<64x64xf32, #tpu.memory_space<vmem>>, vector<8x32xf32>,
    %c40_101 = arith.constant 40 : index
    %c32_102 = arith.constant 32 : index
    %347 = vector.load %arg22[%c40_101, %c32_102] : memref<64x64xf32, #tpu.memory_space<vmem>>, vector<8x32xf32>
    tpu.vector_store %arg22[%c40_101, %c32_102], %345 {strides = array<i32>} : memref<64x64xf32, #tpu.memory_space<vmem>>, vector<8x32xf32>,
    %348 = arith.truncf %252 : vector<8x16xf32> to vector<8x16xbf16>
    %cst_103 = arith.constant dense<0.000000e+00> : vector<8x48xf32>
    %349 = tpu.matmul %348, %5, %cst_103 {dimension_numbers = #tpu.dot_dimension_numbers<[1], [0], [0], [1], [0, 0, 1, 1], [], []>} : vector<8x16xbf16>, vector<16x48xbf16>, vector<8x48xf32> -> vector<8x48xf32>
    %350 = arith.truncf %281 : vector<8x16xf32> to vector<8x16xbf16>
    %cst_104 = arith.constant dense<0.000000e+00> : vector<8x48xf32>
    %351 = tpu.matmul %350, %7, %cst_104 {dimension_numbers = #tpu.dot_dimension_numbers<[1], [0], [0], [1], [0, 0, 1, 1], [], []>} : vector<8x16xbf16>, vector<16x48xbf16>, vector<8x48xf32> -> vector<8x48xf32>
    %c2_105 = arith.constant 2 : index
    %c0_106 = arith.constant 0 : index
    %c0_107 = arith.constant 0 : index
    %352 = vector.load %arg1[%c2_105, %c0_106, %c0_107] : memref<12x8x48xf32, #tpu.memory_space<vmem>>, vector<1x8x48xf32>
    %353 = vector.shape_cast %352 : vector<1x8x48xf32> to vector<8x48xf32>
    %354 = vector.extract_strided_slice %353 {offsets = [0, 0], sizes = [8, 16], strides = [1, 1]} : vector<8x48xf32> to vector<8x16xf32>
    %355 = vector.extract_strided_slice %349 {offsets = [0, 0], sizes = [8, 16], strides = [1, 1]} : vector<8x48xf32> to vector<8x16xf32>
    %356 = arith.addf %354, %355 : vector<8x16xf32>
    %357 = arith.negf %356 : vector<8x16xf32>
    %358 = math.exp %357 : vector<8x16xf32>
    %cst_108 = arith.constant 1.000000e+00 : f32
    %359 = vector.broadcast %cst_108 : f32 to vector<8x16xf32>
    %360 = arith.addf %359, %358 : vector<8x16xf32>
    %361 = arith.divf %359, %360 : vector<8x16xf32>
    %362 = vector.extract_strided_slice %353 {offsets = [0, 16], sizes = [8, 16], strides = [1, 1]} : vector<8x48xf32> to vector<8x16xf32>
    %363 = vector.extract_strided_slice %349 {offsets = [0, 16], sizes = [8, 16], strides = [1, 1]} : vector<8x48xf32> to vector<8x16xf32>
    %364 = arith.addf %362, %363 : vector<8x16xf32>
    %365 = arith.negf %364 : vector<8x16xf32>
    %366 = math.exp %365 : vector<8x16xf32>
    %cst_109 = arith.constant 1.000000e+00 : f32
    %367 = vector.broadcast %cst_109 : f32 to vector<8x16xf32>
    %368 = arith.addf %367, %366 : vector<8x16xf32>
    %369 = arith.divf %367, %368 : vector<8x16xf32>
    %370 = vector.extract_strided_slice %353 {offsets = [0, 32], sizes = [8, 16], strides = [1, 1]} : vector<8x48xf32> to vector<8x16xf32>
    %371 = vector.extract_strided_slice %349 {offsets = [0, 32], sizes = [8, 16], strides = [1, 1]} : vector<8x48xf32> to vector<8x16xf32>
    %372 = arith.addf %371, %19 : vector<8x16xf32>
    %373 = arith.mulf %361, %372 : vector<8x16xf32>
    %374 = arith.addf %370, %373 : vector<8x16xf32>
    %375 = math.tanh %374 : vector<8x16xf32>
    %cst_110 = arith.constant 1.000000e+00 : f32
    %376 = vector.broadcast %cst_110 : f32 to vector<8x16xf32>
    %377 = arith.subf %376, %369 : vector<8x16xf32>
    %378 = arith.mulf %377, %375 : vector<8x16xf32>
    %379 = arith.mulf %369, %252 : vector<8x16xf32>
    %380 = arith.addf %378, %379 : vector<8x16xf32>
    %c9 = arith.constant 9 : index
    %c0_111 = arith.constant 0 : index
    %c0_112 = arith.constant 0 : index
    %381 = vector.load %arg1[%c9, %c0_111, %c0_112] : memref<12x8x48xf32, #tpu.memory_space<vmem>>, vector<1x8x48xf32>
    %382 = vector.shape_cast %381 : vector<1x8x48xf32> to vector<8x48xf32>
    %383 = vector.extract_strided_slice %382 {offsets = [0, 0], sizes = [8, 16], strides = [1, 1]} : vector<8x48xf32> to vector<8x16xf32>
    %384 = vector.extract_strided_slice %351 {offsets = [0, 0], sizes = [8, 16], strides = [1, 1]} : vector<8x48xf32> to vector<8x16xf32>
    %385 = arith.addf %383, %384 : vector<8x16xf32>
    %386 = arith.negf %385 : vector<8x16xf32>
    %387 = math.exp %386 : vector<8x16xf32>
    %cst_113 = arith.constant 1.000000e+00 : f32
    %388 = vector.broadcast %cst_113 : f32 to vector<8x16xf32>
    %389 = arith.addf %388, %387 : vector<8x16xf32>
    %390 = arith.divf %388, %389 : vector<8x16xf32>
    %391 = vector.extract_strided_slice %382 {offsets = [0, 16], sizes = [8, 16], strides = [1, 1]} : vector<8x48xf32> to vector<8x16xf32>
    %392 = vector.extract_strided_slice %351 {offsets = [0, 16], sizes = [8, 16], strides = [1, 1]} : vector<8x48xf32> to vector<8x16xf32>
    %393 = arith.addf %391, %392 : vector<8x16xf32>
    %394 = arith.negf %393 : vector<8x16xf32>
    %395 = math.exp %394 : vector<8x16xf32>
    %cst_114 = arith.constant 1.000000e+00 : f32
    %396 = vector.broadcast %cst_114 : f32 to vector<8x16xf32>
    %397 = arith.addf %396, %395 : vector<8x16xf32>
    %398 = arith.divf %396, %397 : vector<8x16xf32>
    %399 = vector.extract_strided_slice %382 {offsets = [0, 32], sizes = [8, 16], strides = [1, 1]} : vector<8x48xf32> to vector<8x16xf32>
    %400 = vector.extract_strided_slice %351 {offsets = [0, 32], sizes = [8, 16], strides = [1, 1]} : vector<8x48xf32> to vector<8x16xf32>
    %401 = arith.addf %400, %23 : vector<8x16xf32>
    %402 = arith.mulf %390, %401 : vector<8x16xf32>
    %403 = arith.addf %399, %402 : vector<8x16xf32>
    %404 = math.tanh %403 : vector<8x16xf32>
    %cst_115 = arith.constant 1.000000e+00 : f32
    %405 = vector.broadcast %cst_115 : f32 to vector<8x16xf32>
    %406 = arith.subf %405, %398 : vector<8x16xf32>
    %407 = arith.mulf %406, %404 : vector<8x16xf32>
    %408 = arith.mulf %398, %281 : vector<8x16xf32>
    %409 = arith.addf %407, %408 : vector<8x16xf32>
    %c16_116 = arith.constant 16 : index
    %c0_117 = arith.constant 0 : index
    %410 = vector.load %arg23[%c16_116, %c0_117] : memref<48x32xf32, #tpu.memory_space<vmem>>, vector<8x16xf32>
    tpu.vector_store %arg23[%c16_116, %c0_117], %380 {strides = array<i32>} : memref<48x32xf32, #tpu.memory_space<vmem>>, vector<8x16xf32>,
    %c24 = arith.constant 24 : index
    %c16_118 = arith.constant 16 : index
    %411 = vector.load %arg23[%c24, %c16_118] : memref<48x32xf32, #tpu.memory_space<vmem>>, vector<8x16xf32>
    tpu.vector_store %arg23[%c24, %c16_118], %409 {strides = array<i32>} : memref<48x32xf32, #tpu.memory_space<vmem>>, vector<8x16xf32>,
    %412 = arith.truncf %316 : vector<8x32xf32> to vector<8x32xbf16>
    %cst_119 = arith.constant dense<0.000000e+00> : vector<8x96xf32>
    %413 = tpu.matmul %412, %1, %cst_119 {dimension_numbers = #tpu.dot_dimension_numbers<[1], [0], [0], [1], [0, 0, 1, 1], [], []>} : vector<8x32xbf16>, vector<32x96xbf16>, vector<8x96xf32> -> vector<8x96xf32>
    %414 = arith.truncf %345 : vector<8x32xf32> to vector<8x32xbf16>
    %cst_120 = arith.constant dense<0.000000e+00> : vector<8x96xf32>
    %415 = tpu.matmul %414, %3, %cst_120 {dimension_numbers = #tpu.dot_dimension_numbers<[1], [0], [0], [1], [0, 0, 1, 1], [], []>} : vector<8x32xbf16>, vector<32x96xbf16>, vector<8x96xf32> -> vector<8x96xf32>
    %c3 = arith.constant 3 : index
    %c0_121 = arith.constant 0 : index
    %c0_122 = arith.constant 0 : index
    %416 = vector.load %arg0[%c3, %c0_121, %c0_122] : memref<16x8x96xf32, #tpu.memory_space<vmem>>, vector<1x8x96xf32>
    %417 = vector.shape_cast %416 : vector<1x8x96xf32> to vector<8x96xf32>
    %418 = vector.extract_strided_slice %417 {offsets = [0, 0], sizes = [8, 32], strides = [1, 1]} : vector<8x96xf32> to vector<8x32xf32>
    %419 = vector.extract_strided_slice %413 {offsets = [0, 0], sizes = [8, 32], strides = [1, 1]} : vector<8x96xf32> to vector<8x32xf32>
    %420 = arith.addf %418, %419 : vector<8x32xf32>
    %421 = arith.negf %420 : vector<8x32xf32>
    %422 = math.exp %421 : vector<8x32xf32>
    %cst_123 = arith.constant 1.000000e+00 : f32
    %423 = vector.broadcast %cst_123 : f32 to vector<8x32xf32>
    %424 = arith.addf %423, %422 : vector<8x32xf32>
    %425 = arith.divf %423, %424 : vector<8x32xf32>
    %426 = vector.extract_strided_slice %417 {offsets = [0, 32], sizes = [8, 32], strides = [1, 1]} : vector<8x96xf32> to vector<8x32xf32>
    %427 = vector.extract_strided_slice %413 {offsets = [0, 32], sizes = [8, 32], strides = [1, 1]} : vector<8x96xf32> to vector<8x32xf32>
    %428 = arith.addf %426, %427 : vector<8x32xf32>
    %429 = arith.negf %428 : vector<8x32xf32>
    %430 = math.exp %429 : vector<8x32xf32>
    %cst_124 = arith.constant 1.000000e+00 : f32
    %431 = vector.broadcast %cst_124 : f32 to vector<8x32xf32>
    %432 = arith.addf %431, %430 : vector<8x32xf32>
    %433 = arith.divf %431, %432 : vector<8x32xf32>
    %434 = vector.extract_strided_slice %417 {offsets = [0, 64], sizes = [8, 32], strides = [1, 1]} : vector<8x96xf32> to vector<8x32xf32>
    %435 = vector.extract_strided_slice %413 {offsets = [0, 64], sizes = [8, 32], strides = [1, 1]} : vector<8x96xf32> to vector<8x32xf32>
    %436 = arith.addf %435, %11 : vector<8x32xf32>
    %437 = arith.mulf %425, %436 : vector<8x32xf32>
    %438 = arith.addf %434, %437 : vector<8x32xf32>
    %439 = math.tanh %438 : vector<8x32xf32>
    %cst_125 = arith.constant 1.000000e+00 : f32
    %440 = vector.broadcast %cst_125 : f32 to vector<8x32xf32>
    %441 = arith.subf %440, %433 : vector<8x32xf32>
    %442 = arith.mulf %441, %439 : vector<8x32xf32>
    %443 = arith.mulf %433, %316 : vector<8x32xf32>
    %444 = arith.addf %442, %443 : vector<8x32xf32>
    %c12 = arith.constant 12 : index
    %c0_126 = arith.constant 0 : index
    %c0_127 = arith.constant 0 : index
    %445 = vector.load %arg0[%c12, %c0_126, %c0_127] : memref<16x8x96xf32, #tpu.memory_space<vmem>>, vector<1x8x96xf32>
    %446 = vector.shape_cast %445 : vector<1x8x96xf32> to vector<8x96xf32>
    %447 = vector.extract_strided_slice %446 {offsets = [0, 0], sizes = [8, 32], strides = [1, 1]} : vector<8x96xf32> to vector<8x32xf32>
    %448 = vector.extract_strided_slice %415 {offsets = [0, 0], sizes = [8, 32], strides = [1, 1]} : vector<8x96xf32> to vector<8x32xf32>
    %449 = arith.addf %447, %448 : vector<8x32xf32>
    %450 = arith.negf %449 : vector<8x32xf32>
    %451 = math.exp %450 : vector<8x32xf32>
    %cst_128 = arith.constant 1.000000e+00 : f32
    %452 = vector.broadcast %cst_128 : f32 to vector<8x32xf32>
    %453 = arith.addf %452, %451 : vector<8x32xf32>
    %454 = arith.divf %452, %453 : vector<8x32xf32>
    %455 = vector.extract_strided_slice %446 {offsets = [0, 32], sizes = [8, 32], strides = [1, 1]} : vector<8x96xf32> to vector<8x32xf32>
    %456 = vector.extract_strided_slice %415 {offsets = [0, 32], sizes = [8, 32], strides = [1, 1]} : vector<8x96xf32> to vector<8x32xf32>
    %457 = arith.addf %455, %456 : vector<8x32xf32>
    %458 = arith.negf %457 : vector<8x32xf32>
    %459 = math.exp %458 : vector<8x32xf32>
    %cst_129 = arith.constant 1.000000e+00 : f32
    %460 = vector.broadcast %cst_129 : f32 to vector<8x32xf32>
    %461 = arith.addf %460, %459 : vector<8x32xf32>
    %462 = arith.divf %460, %461 : vector<8x32xf32>
    %463 = vector.extract_strided_slice %446 {offsets = [0, 64], sizes = [8, 32], strides = [1, 1]} : vector<8x96xf32> to vector<8x32xf32>
    %464 = vector.extract_strided_slice %415 {offsets = [0, 64], sizes = [8, 32], strides = [1, 1]} : vector<8x96xf32> to vector<8x32xf32>
    %465 = arith.addf %464, %15 : vector<8x32xf32>
    %466 = arith.mulf %454, %465 : vector<8x32xf32>
    %467 = arith.addf %463, %466 : vector<8x32xf32>
    %468 = math.tanh %467 : vector<8x32xf32>
    %cst_130 = arith.constant 1.000000e+00 : f32
    %469 = vector.broadcast %cst_130 : f32 to vector<8x32xf32>
    %470 = arith.subf %469, %462 : vector<8x32xf32>
    %471 = arith.mulf %470, %468 : vector<8x32xf32>
    %472 = arith.mulf %462, %345 : vector<8x32xf32>
    %473 = arith.addf %471, %472 : vector<8x32xf32>
    %c24_131 = arith.constant 24 : index
    %c0_132 = arith.constant 0 : index
    %474 = vector.load %arg22[%c24_131, %c0_132] : memref<64x64xf32, #tpu.memory_space<vmem>>, vector<8x32xf32>
    tpu.vector_store %arg22[%c24_131, %c0_132], %444 {strides = array<i32>} : memref<64x64xf32, #tpu.memory_space<vmem>>, vector<8x32xf32>,
    %c32_133 = arith.constant 32 : index
    %c32_134 = arith.constant 32 : index
    %475 = vector.load %arg22[%c32_133, %c32_134] : memref<64x64xf32, #tpu.memory_space<vmem>>, vector<8x32xf32>
    tpu.vector_store %arg22[%c32_133, %c32_134], %473 {strides = array<i32>} : memref<64x64xf32, #tpu.memory_space<vmem>>, vector<8x32xf32>,
    %476 = arith.truncf %380 : vector<8x16xf32> to vector<8x16xbf16>
    %cst_135 = arith.constant dense<0.000000e+00> : vector<8x48xf32>
    %477 = tpu.matmul %476, %5, %cst_135 {dimension_numbers = #tpu.dot_dimension_numbers<[1], [0], [0], [1], [0, 0, 1, 1], [], []>} : vector<8x16xbf16>, vector<16x48xbf16>, vector<8x48xf32> -> vector<8x48xf32>
    %478 = arith.truncf %409 : vector<8x16xf32> to vector<8x16xbf16>
    %cst_136 = arith.constant dense<0.000000e+00> : vector<8x48xf32>
    %479 = tpu.matmul %478, %7, %cst_136 {dimension_numbers = #tpu.dot_dimension_numbers<[1], [0], [0], [1], [0, 0, 1, 1], [], []>} : vector<8x16xbf16>, vector<16x48xbf16>, vector<8x48xf32> -> vector<8x48xf32>
    %c3_137 = arith.constant 3 : index
    %c0_138 = arith.constant 0 : index
    %c0_139 = arith.constant 0 : index
    %480 = vector.load %arg1[%c3_137, %c0_138, %c0_139] : memref<12x8x48xf32, #tpu.memory_space<vmem>>, vector<1x8x48xf32>
    %481 = vector.shape_cast %480 : vector<1x8x48xf32> to vector<8x48xf32>
    %482 = vector.extract_strided_slice %481 {offsets = [0, 0], sizes = [8, 16], strides = [1, 1]} : vector<8x48xf32> to vector<8x16xf32>
    %483 = vector.extract_strided_slice %477 {offsets = [0, 0], sizes = [8, 16], strides = [1, 1]} : vector<8x48xf32> to vector<8x16xf32>
    %484 = arith.addf %482, %483 : vector<8x16xf32>
    %485 = arith.negf %484 : vector<8x16xf32>
    %486 = math.exp %485 : vector<8x16xf32>
    %cst_140 = arith.constant 1.000000e+00 : f32
    %487 = vector.broadcast %cst_140 : f32 to vector<8x16xf32>
    %488 = arith.addf %487, %486 : vector<8x16xf32>
    %489 = arith.divf %487, %488 : vector<8x16xf32>
    %490 = vector.extract_strided_slice %481 {offsets = [0, 16], sizes = [8, 16], strides = [1, 1]} : vector<8x48xf32> to vector<8x16xf32>
    %491 = vector.extract_strided_slice %477 {offsets = [0, 16], sizes = [8, 16], strides = [1, 1]} : vector<8x48xf32> to vector<8x16xf32>
    %492 = arith.addf %490, %491 : vector<8x16xf32>
    %493 = arith.negf %492 : vector<8x16xf32>
    %494 = math.exp %493 : vector<8x16xf32>
    %cst_141 = arith.constant 1.000000e+00 : f32
    %495 = vector.broadcast %cst_141 : f32 to vector<8x16xf32>
    %496 = arith.addf %495, %494 : vector<8x16xf32>
    %497 = arith.divf %495, %496 : vector<8x16xf32>
    %498 = vector.extract_strided_slice %481 {offsets = [0, 32], sizes = [8, 16], strides = [1, 1]} : vector<8x48xf32> to vector<8x16xf32>
    %499 = vector.extract_strided_slice %477 {offsets = [0, 32], sizes = [8, 16], strides = [1, 1]} : vector<8x48xf32> to vector<8x16xf32>
    %500 = arith.addf %499, %19 : vector<8x16xf32>
    %501 = arith.mulf %489, %500 : vector<8x16xf32>
    %502 = arith.addf %498, %501 : vector<8x16xf32>
    %503 = math.tanh %502 : vector<8x16xf32>
    %cst_142 = arith.constant 1.000000e+00 : f32
    %504 = vector.broadcast %cst_142 : f32 to vector<8x16xf32>
    %505 = arith.subf %504, %497 : vector<8x16xf32>
    %506 = arith.mulf %505, %503 : vector<8x16xf32>
    %507 = arith.mulf %497, %380 : vector<8x16xf32>
    %508 = arith.addf %506, %507 : vector<8x16xf32>
    %c8_143 = arith.constant 8 : index
    %c0_144 = arith.constant 0 : index
    %c0_145 = arith.constant 0 : index
    %509 = vector.load %arg1[%c8_143, %c0_144, %c0_145] : memref<12x8x48xf32, #tpu.memory_space<vmem>>, vector<1x8x48xf32>
    %510 = vector.shape_cast %509 : vector<1x8x48xf32> to vector<8x48xf32>
    %511 = vector.extract_strided_slice %510 {offsets = [0, 0], sizes = [8, 16], strides = [1, 1]} : vector<8x48xf32> to vector<8x16xf32>
    %512 = vector.extract_strided_slice %479 {offsets = [0, 0], sizes = [8, 16], strides = [1, 1]} : vector<8x48xf32> to vector<8x16xf32>
    %513 = arith.addf %511, %512 : vector<8x16xf32>
    %514 = arith.negf %513 : vector<8x16xf32>
    %515 = math.exp %514 : vector<8x16xf32>
    %cst_146 = arith.constant 1.000000e+00 : f32
    %516 = vector.broadcast %cst_146 : f32 to vector<8x16xf32>
    %517 = arith.addf %516, %515 : vector<8x16xf32>
    %518 = arith.divf %516, %517 : vector<8x16xf32>
    %519 = vector.extract_strided_slice %510 {offsets = [0, 16], sizes = [8, 16], strides = [1, 1]} : vector<8x48xf32> to vector<8x16xf32>
    %520 = vector.extract_strided_slice %479 {offsets = [0, 16], sizes = [8, 16], strides = [1, 1]} : vector<8x48xf32> to vector<8x16xf32>
    %521 = arith.addf %519, %520 : vector<8x16xf32>
    %522 = arith.negf %521 : vector<8x16xf32>
    %523 = math.exp %522 : vector<8x16xf32>
    %cst_147 = arith.constant 1.000000e+00 : f32
    %524 = vector.broadcast %cst_147 : f32 to vector<8x16xf32>
    %525 = arith.addf %524, %523 : vector<8x16xf32>
    %526 = arith.divf %524, %525 : vector<8x16xf32>
    %527 = vector.extract_strided_slice %510 {offsets = [0, 32], sizes = [8, 16], strides = [1, 1]} : vector<8x48xf32> to vector<8x16xf32>
    %528 = vector.extract_strided_slice %479 {offsets = [0, 32], sizes = [8, 16], strides = [1, 1]} : vector<8x48xf32> to vector<8x16xf32>
    %529 = arith.addf %528, %23 : vector<8x16xf32>
    %530 = arith.mulf %518, %529 : vector<8x16xf32>
    %531 = arith.addf %527, %530 : vector<8x16xf32>
    %532 = math.tanh %531 : vector<8x16xf32>
    %cst_148 = arith.constant 1.000000e+00 : f32
    %533 = vector.broadcast %cst_148 : f32 to vector<8x16xf32>
    %534 = arith.subf %533, %526 : vector<8x16xf32>
    %535 = arith.mulf %534, %532 : vector<8x16xf32>
    %536 = arith.mulf %526, %409 : vector<8x16xf32>
    %537 = arith.addf %535, %536 : vector<8x16xf32>
    %c24_149 = arith.constant 24 : index
    %c0_150 = arith.constant 0 : index
    %538 = vector.load %arg23[%c24_149, %c0_150] : memref<48x32xf32, #tpu.memory_space<vmem>>, vector<8x16xf32>
    tpu.vector_store %arg23[%c24_149, %c0_150], %508 {strides = array<i32>} : memref<48x32xf32, #tpu.memory_space<vmem>>, vector<8x16xf32>,
    %c16_151 = arith.constant 16 : index
    %c16_152 = arith.constant 16 : index
    %539 = vector.load %arg23[%c16_151, %c16_152] : memref<48x32xf32, #tpu.memory_space<vmem>>, vector<8x16xf32>
    tpu.vector_store %arg23[%c16_151, %c16_152], %537 {strides = array<i32>} : memref<48x32xf32, #tpu.memory_space<vmem>>, vector<8x16xf32>,
    %540 = arith.truncf %444 : vector<8x32xf32> to vector<8x32xbf16>
    %cst_153 = arith.constant dense<0.000000e+00> : vector<8x96xf32>
    %541 = tpu.matmul %540, %1, %cst_153 {dimension_numbers = #tpu.dot_dimension_numbers<[1], [0], [0], [1], [0, 0, 1, 1], [], []>} : vector<8x32xbf16>, vector<32x96xbf16>, vector<8x96xf32> -> vector<8x96xf32>
    %542 = arith.truncf %473 : vector<8x32xf32> to vector<8x32xbf16>
    %cst_154 = arith.constant dense<0.000000e+00> : vector<8x96xf32>
    %543 = tpu.matmul %542, %3, %cst_154 {dimension_numbers = #tpu.dot_dimension_numbers<[1], [0], [0], [1], [0, 0, 1, 1], [], []>} : vector<8x32xbf16>, vector<32x96xbf16>, vector<8x96xf32> -> vector<8x96xf32>
    %c4 = arith.constant 4 : index
    %c0_155 = arith.constant 0 : index
    %c0_156 = arith.constant 0 : index
    %544 = vector.load %arg0[%c4, %c0_155, %c0_156] : memref<16x8x96xf32, #tpu.memory_space<vmem>>, vector<1x8x96xf32>
    %545 = vector.shape_cast %544 : vector<1x8x96xf32> to vector<8x96xf32>
    %546 = vector.extract_strided_slice %545 {offsets = [0, 0], sizes = [8, 32], strides = [1, 1]} : vector<8x96xf32> to vector<8x32xf32>
    %547 = vector.extract_strided_slice %541 {offsets = [0, 0], sizes = [8, 32], strides = [1, 1]} : vector<8x96xf32> to vector<8x32xf32>
    %548 = arith.addf %546, %547 : vector<8x32xf32>
    %549 = arith.negf %548 : vector<8x32xf32>
    %550 = math.exp %549 : vector<8x32xf32>
    %cst_157 = arith.constant 1.000000e+00 : f32
    %551 = vector.broadcast %cst_157 : f32 to vector<8x32xf32>
    %552 = arith.addf %551, %550 : vector<8x32xf32>
    %553 = arith.divf %551, %552 : vector<8x32xf32>
    %554 = vector.extract_strided_slice %545 {offsets = [0, 32], sizes = [8, 32], strides = [1, 1]} : vector<8x96xf32> to vector<8x32xf32>
    %555 = vector.extract_strided_slice %541 {offsets = [0, 32], sizes = [8, 32], strides = [1, 1]} : vector<8x96xf32> to vector<8x32xf32>
    %556 = arith.addf %554, %555 : vector<8x32xf32>
    %557 = arith.negf %556 : vector<8x32xf32>
    %558 = math.exp %557 : vector<8x32xf32>
    %cst_158 = arith.constant 1.000000e+00 : f32
    %559 = vector.broadcast %cst_158 : f32 to vector<8x32xf32>
    %560 = arith.addf %559, %558 : vector<8x32xf32>
    %561 = arith.divf %559, %560 : vector<8x32xf32>
    %562 = vector.extract_strided_slice %545 {offsets = [0, 64], sizes = [8, 32], strides = [1, 1]} : vector<8x96xf32> to vector<8x32xf32>
    %563 = vector.extract_strided_slice %541 {offsets = [0, 64], sizes = [8, 32], strides = [1, 1]} : vector<8x96xf32> to vector<8x32xf32>
    %564 = arith.addf %563, %11 : vector<8x32xf32>
    %565 = arith.mulf %553, %564 : vector<8x32xf32>
    %566 = arith.addf %562, %565 : vector<8x32xf32>
    %567 = math.tanh %566 : vector<8x32xf32>
    %cst_159 = arith.constant 1.000000e+00 : f32
    %568 = vector.broadcast %cst_159 : f32 to vector<8x32xf32>
    %569 = arith.subf %568, %561 : vector<8x32xf32>
    %570 = arith.mulf %569, %567 : vector<8x32xf32>
    %571 = arith.mulf %561, %444 : vector<8x32xf32>
    %572 = arith.addf %570, %571 : vector<8x32xf32>
    %c11_160 = arith.constant 11 : index
    %c0_161 = arith.constant 0 : index
    %c0_162 = arith.constant 0 : index
    %573 = vector.load %arg0[%c11_160, %c0_161, %c0_162] : memref<16x8x96xf32, #tpu.memory_space<vmem>>, vector<1x8x96xf32>
    %574 = vector.shape_cast %573 : vector<1x8x96xf32> to vector<8x96xf32>
    %575 = vector.extract_strided_slice %574 {offsets = [0, 0], sizes = [8, 32], strides = [1, 1]} : vector<8x96xf32> to vector<8x32xf32>
    %576 = vector.extract_strided_slice %543 {offsets = [0, 0], sizes = [8, 32], strides = [1, 1]} : vector<8x96xf32> to vector<8x32xf32>
    %577 = arith.addf %575, %576 : vector<8x32xf32>
    %578 = arith.negf %577 : vector<8x32xf32>
    %579 = math.exp %578 : vector<8x32xf32>
    %cst_163 = arith.constant 1.000000e+00 : f32
    %580 = vector.broadcast %cst_163 : f32 to vector<8x32xf32>
    %581 = arith.addf %580, %579 : vector<8x32xf32>
    %582 = arith.divf %580, %581 : vector<8x32xf32>
    %583 = vector.extract_strided_slice %574 {offsets = [0, 32], sizes = [8, 32], strides = [1, 1]} : vector<8x96xf32> to vector<8x32xf32>
    %584 = vector.extract_strided_slice %543 {offsets = [0, 32], sizes = [8, 32], strides = [1, 1]} : vector<8x96xf32> to vector<8x32xf32>
    %585 = arith.addf %583, %584 : vector<8x32xf32>
    %586 = arith.negf %585 : vector<8x32xf32>
    %587 = math.exp %586 : vector<8x32xf32>
    %cst_164 = arith.constant 1.000000e+00 : f32
    %588 = vector.broadcast %cst_164 : f32 to vector<8x32xf32>
    %589 = arith.addf %588, %587 : vector<8x32xf32>
    %590 = arith.divf %588, %589 : vector<8x32xf32>
    %591 = vector.extract_strided_slice %574 {offsets = [0, 64], sizes = [8, 32], strides = [1, 1]} : vector<8x96xf32> to vector<8x32xf32>
    %592 = vector.extract_strided_slice %543 {offsets = [0, 64], sizes = [8, 32], strides = [1, 1]} : vector<8x96xf32> to vector<8x32xf32>
    %593 = arith.addf %592, %15 : vector<8x32xf32>
    %594 = arith.mulf %582, %593 : vector<8x32xf32>
    %595 = arith.addf %591, %594 : vector<8x32xf32>
    %596 = math.tanh %595 : vector<8x32xf32>
    %cst_165 = arith.constant 1.000000e+00 : f32
    %597 = vector.broadcast %cst_165 : f32 to vector<8x32xf32>
    %598 = arith.subf %597, %590 : vector<8x32xf32>
    %599 = arith.mulf %598, %596 : vector<8x32xf32>
    %600 = arith.mulf %590, %473 : vector<8x32xf32>
    %601 = arith.addf %599, %600 : vector<8x32xf32>
    %c32_166 = arith.constant 32 : index
    %c0_167 = arith.constant 0 : index
    %602 = vector.load %arg22[%c32_166, %c0_167] : memref<64x64xf32, #tpu.memory_space<vmem>>, vector<8x32xf32>
    tpu.vector_store %arg22[%c32_166, %c0_167], %572 {strides = array<i32>} : memref<64x64xf32, #tpu.memory_space<vmem>>, vector<8x32xf32>,
    %c24_168 = arith.constant 24 : index
    %c32_169 = arith.constant 32 : index
    %603 = vector.load %arg22[%c24_168, %c32_169] : memref<64x64xf32, #tpu.memory_space<vmem>>, vector<8x32xf32>
    tpu.vector_store %arg22[%c24_168, %c32_169], %601 {strides = array<i32>} : memref<64x64xf32, #tpu.memory_space<vmem>>, vector<8x32xf32>,
    %604 = arith.truncf %508 : vector<8x16xf32> to vector<8x16xbf16>
    %cst_170 = arith.constant dense<0.000000e+00> : vector<8x48xf32>
    %605 = tpu.matmul %604, %5, %cst_170 {dimension_numbers = #tpu.dot_dimension_numbers<[1], [0], [0], [1], [0, 0, 1, 1], [], []>} : vector<8x16xbf16>, vector<16x48xbf16>, vector<8x48xf32> -> vector<8x48xf32>
    %606 = arith.truncf %537 : vector<8x16xf32> to vector<8x16xbf16>
    %cst_171 = arith.constant dense<0.000000e+00> : vector<8x48xf32>
    %607 = tpu.matmul %606, %7, %cst_171 {dimension_numbers = #tpu.dot_dimension_numbers<[1], [0], [0], [1], [0, 0, 1, 1], [], []>} : vector<8x16xbf16>, vector<16x48xbf16>, vector<8x48xf32> -> vector<8x48xf32>
    %c4_172 = arith.constant 4 : index
    %c0_173 = arith.constant 0 : index
    %c0_174 = arith.constant 0 : index
    %608 = vector.load %arg1[%c4_172, %c0_173, %c0_174] : memref<12x8x48xf32, #tpu.memory_space<vmem>>, vector<1x8x48xf32>
    %609 = vector.shape_cast %608 : vector<1x8x48xf32> to vector<8x48xf32>
    %610 = vector.extract_strided_slice %609 {offsets = [0, 0], sizes = [8, 16], strides = [1, 1]} : vector<8x48xf32> to vector<8x16xf32>
    %611 = vector.extract_strided_slice %605 {offsets = [0, 0], sizes = [8, 16], strides = [1, 1]} : vector<8x48xf32> to vector<8x16xf32>
    %612 = arith.addf %610, %611 : vector<8x16xf32>
    %613 = arith.negf %612 : vector<8x16xf32>
    %614 = math.exp %613 : vector<8x16xf32>
    %cst_175 = arith.constant 1.000000e+00 : f32
    %615 = vector.broadcast %cst_175 : f32 to vector<8x16xf32>
    %616 = arith.addf %615, %614 : vector<8x16xf32>
    %617 = arith.divf %615, %616 : vector<8x16xf32>
    %618 = vector.extract_strided_slice %609 {offsets = [0, 16], sizes = [8, 16], strides = [1, 1]} : vector<8x48xf32> to vector<8x16xf32>
    %619 = vector.extract_strided_slice %605 {offsets = [0, 16], sizes = [8, 16], strides = [1, 1]} : vector<8x48xf32> to vector<8x16xf32>
    %620 = arith.addf %618, %619 : vector<8x16xf32>
    %621 = arith.negf %620 : vector<8x16xf32>
    %622 = math.exp %621 : vector<8x16xf32>
    %cst_176 = arith.constant 1.000000e+00 : f32
    %623 = vector.broadcast %cst_176 : f32 to vector<8x16xf32>
    %624 = arith.addf %623, %622 : vector<8x16xf32>
    %625 = arith.divf %623, %624 : vector<8x16xf32>
    %626 = vector.extract_strided_slice %609 {offsets = [0, 32], sizes = [8, 16], strides = [1, 1]} : vector<8x48xf32> to vector<8x16xf32>
    %627 = vector.extract_strided_slice %605 {offsets = [0, 32], sizes = [8, 16], strides = [1, 1]} : vector<8x48xf32> to vector<8x16xf32>
    %628 = arith.addf %627, %19 : vector<8x16xf32>
    %629 = arith.mulf %617, %628 : vector<8x16xf32>
    %630 = arith.addf %626, %629 : vector<8x16xf32>
    %631 = math.tanh %630 : vector<8x16xf32>
    %cst_177 = arith.constant 1.000000e+00 : f32
    %632 = vector.broadcast %cst_177 : f32 to vector<8x16xf32>
    %633 = arith.subf %632, %625 : vector<8x16xf32>
    %634 = arith.mulf %633, %631 : vector<8x16xf32>
    %635 = arith.mulf %625, %508 : vector<8x16xf32>
    %636 = arith.addf %634, %635 : vector<8x16xf32>
    %c7 = arith.constant 7 : index
    %c0_178 = arith.constant 0 : index
    %c0_179 = arith.constant 0 : index
    %637 = vector.load %arg1[%c7, %c0_178, %c0_179] : memref<12x8x48xf32, #tpu.memory_space<vmem>>, vector<1x8x48xf32>
    %638 = vector.shape_cast %637 : vector<1x8x48xf32> to vector<8x48xf32>
    %639 = vector.extract_strided_slice %638 {offsets = [0, 0], sizes = [8, 16], strides = [1, 1]} : vector<8x48xf32> to vector<8x16xf32>
    %640 = vector.extract_strided_slice %607 {offsets = [0, 0], sizes = [8, 16], strides = [1, 1]} : vector<8x48xf32> to vector<8x16xf32>
    %641 = arith.addf %639, %640 : vector<8x16xf32>
    %642 = arith.negf %641 : vector<8x16xf32>
    %643 = math.exp %642 : vector<8x16xf32>
    %cst_180 = arith.constant 1.000000e+00 : f32
    %644 = vector.broadcast %cst_180 : f32 to vector<8x16xf32>
    %645 = arith.addf %644, %643 : vector<8x16xf32>
    %646 = arith.divf %644, %645 : vector<8x16xf32>
    %647 = vector.extract_strided_slice %638 {offsets = [0, 16], sizes = [8, 16], strides = [1, 1]} : vector<8x48xf32> to vector<8x16xf32>
    %648 = vector.extract_strided_slice %607 {offsets = [0, 16], sizes = [8, 16], strides = [1, 1]} : vector<8x48xf32> to vector<8x16xf32>
    %649 = arith.addf %647, %648 : vector<8x16xf32>
    %650 = arith.negf %649 : vector<8x16xf32>
    %651 = math.exp %650 : vector<8x16xf32>
    %cst_181 = arith.constant 1.000000e+00 : f32
    %652 = vector.broadcast %cst_181 : f32 to vector<8x16xf32>
    %653 = arith.addf %652, %651 : vector<8x16xf32>
    %654 = arith.divf %652, %653 : vector<8x16xf32>
    %655 = vector.extract_strided_slice %638 {offsets = [0, 32], sizes = [8, 16], strides = [1, 1]} : vector<8x48xf32> to vector<8x16xf32>
    %656 = vector.extract_strided_slice %607 {offsets = [0, 32], sizes = [8, 16], strides = [1, 1]} : vector<8x48xf32> to vector<8x16xf32>
    %657 = arith.addf %656, %23 : vector<8x16xf32>
    %658 = arith.mulf %646, %657 : vector<8x16xf32>
    %659 = arith.addf %655, %658 : vector<8x16xf32>
    %660 = math.tanh %659 : vector<8x16xf32>
    %cst_182 = arith.constant 1.000000e+00 : f32
    %661 = vector.broadcast %cst_182 : f32 to vector<8x16xf32>
    %662 = arith.subf %661, %654 : vector<8x16xf32>
    %663 = arith.mulf %662, %660 : vector<8x16xf32>
    %664 = arith.mulf %654, %537 : vector<8x16xf32>
    %665 = arith.addf %663, %664 : vector<8x16xf32>
    %c32_183 = arith.constant 32 : index
    %c0_184 = arith.constant 0 : index
    %666 = vector.load %arg23[%c32_183, %c0_184] : memref<48x32xf32, #tpu.memory_space<vmem>>, vector<8x16xf32>
    tpu.vector_store %arg23[%c32_183, %c0_184], %636 {strides = array<i32>} : memref<48x32xf32, #tpu.memory_space<vmem>>, vector<8x16xf32>,
    %c8_185 = arith.constant 8 : index
    %c16_186 = arith.constant 16 : index
    %667 = vector.load %arg23[%c8_185, %c16_186] : memref<48x32xf32, #tpu.memory_space<vmem>>, vector<8x16xf32>
    tpu.vector_store %arg23[%c8_185, %c16_186], %665 {strides = array<i32>} : memref<48x32xf32, #tpu.memory_space<vmem>>, vector<8x16xf32>,
    %668 = arith.truncf %572 : vector<8x32xf32> to vector<8x32xbf16>
    %cst_187 = arith.constant dense<0.000000e+00> : vector<8x96xf32>
    %669 = tpu.matmul %668, %1, %cst_187 {dimension_numbers = #tpu.dot_dimension_numbers<[1], [0], [0], [1], [0, 0, 1, 1], [], []>} : vector<8x32xbf16>, vector<32x96xbf16>, vector<8x96xf32> -> vector<8x96xf32>
    %670 = arith.truncf %601 : vector<8x32xf32> to vector<8x32xbf16>
    %cst_188 = arith.constant dense<0.000000e+00> : vector<8x96xf32>
    %671 = tpu.matmul %670, %3, %cst_188 {dimension_numbers = #tpu.dot_dimension_numbers<[1], [0], [0], [1], [0, 0, 1, 1], [], []>} : vector<8x32xbf16>, vector<32x96xbf16>, vector<8x96xf32> -> vector<8x96xf32>
    %c5 = arith.constant 5 : index
    %c0_189 = arith.constant 0 : index
    %c0_190 = arith.constant 0 : index
    %672 = vector.load %arg0[%c5, %c0_189, %c0_190] : memref<16x8x96xf32, #tpu.memory_space<vmem>>, vector<1x8x96xf32>
    %673 = vector.shape_cast %672 : vector<1x8x96xf32> to vector<8x96xf32>
    %674 = vector.extract_strided_slice %673 {offsets = [0, 0], sizes = [8, 32], strides = [1, 1]} : vector<8x96xf32> to vector<8x32xf32>
    %675 = vector.extract_strided_slice %669 {offsets = [0, 0], sizes = [8, 32], strides = [1, 1]} : vector<8x96xf32> to vector<8x32xf32>
    %676 = arith.addf %674, %675 : vector<8x32xf32>
    %677 = arith.negf %676 : vector<8x32xf32>
    %678 = math.exp %677 : vector<8x32xf32>
    %cst_191 = arith.constant 1.000000e+00 : f32
    %679 = vector.broadcast %cst_191 : f32 to vector<8x32xf32>
    %680 = arith.addf %679, %678 : vector<8x32xf32>
    %681 = arith.divf %679, %680 : vector<8x32xf32>
    %682 = vector.extract_strided_slice %673 {offsets = [0, 32], sizes = [8, 32], strides = [1, 1]} : vector<8x96xf32> to vector<8x32xf32>
    %683 = vector.extract_strided_slice %669 {offsets = [0, 32], sizes = [8, 32], strides = [1, 1]} : vector<8x96xf32> to vector<8x32xf32>
    %684 = arith.addf %682, %683 : vector<8x32xf32>
    %685 = arith.negf %684 : vector<8x32xf32>
    %686 = math.exp %685 : vector<8x32xf32>
    %cst_192 = arith.constant 1.000000e+00 : f32
    %687 = vector.broadcast %cst_192 : f32 to vector<8x32xf32>
    %688 = arith.addf %687, %686 : vector<8x32xf32>
    %689 = arith.divf %687, %688 : vector<8x32xf32>
    %690 = vector.extract_strided_slice %673 {offsets = [0, 64], sizes = [8, 32], strides = [1, 1]} : vector<8x96xf32> to vector<8x32xf32>
    %691 = vector.extract_strided_slice %669 {offsets = [0, 64], sizes = [8, 32], strides = [1, 1]} : vector<8x96xf32> to vector<8x32xf32>
    %692 = arith.addf %691, %11 : vector<8x32xf32>
    %693 = arith.mulf %681, %692 : vector<8x32xf32>
    %694 = arith.addf %690, %693 : vector<8x32xf32>
    %695 = math.tanh %694 : vector<8x32xf32>
    %cst_193 = arith.constant 1.000000e+00 : f32
    %696 = vector.broadcast %cst_193 : f32 to vector<8x32xf32>
    %697 = arith.subf %696, %689 : vector<8x32xf32>
    %698 = arith.mulf %697, %695 : vector<8x32xf32>
    %699 = arith.mulf %689, %572 : vector<8x32xf32>
    %700 = arith.addf %698, %699 : vector<8x32xf32>
    %c10_194 = arith.constant 10 : index
    %c0_195 = arith.constant 0 : index
    %c0_196 = arith.constant 0 : index
    %701 = vector.load %arg0[%c10_194, %c0_195, %c0_196] : memref<16x8x96xf32, #tpu.memory_space<vmem>>, vector<1x8x96xf32>
    %702 = vector.shape_cast %701 : vector<1x8x96xf32> to vector<8x96xf32>
    %703 = vector.extract_strided_slice %702 {offsets = [0, 0], sizes = [8, 32], strides = [1, 1]} : vector<8x96xf32> to vector<8x32xf32>
    %704 = vector.extract_strided_slice %671 {offsets = [0, 0], sizes = [8, 32], strides = [1, 1]} : vector<8x96xf32> to vector<8x32xf32>
    %705 = arith.addf %703, %704 : vector<8x32xf32>
    %706 = arith.negf %705 : vector<8x32xf32>
    %707 = math.exp %706 : vector<8x32xf32>
    %cst_197 = arith.constant 1.000000e+00 : f32
    %708 = vector.broadcast %cst_197 : f32 to vector<8x32xf32>
    %709 = arith.addf %708, %707 : vector<8x32xf32>
    %710 = arith.divf %708, %709 : vector<8x32xf32>
    %711 = vector.extract_strided_slice %702 {offsets = [0, 32], sizes = [8, 32], strides = [1, 1]} : vector<8x96xf32> to vector<8x32xf32>
    %712 = vector.extract_strided_slice %671 {offsets = [0, 32], sizes = [8, 32], strides = [1, 1]} : vector<8x96xf32> to vector<8x32xf32>
    %713 = arith.addf %711, %712 : vector<8x32xf32>
    %714 = arith.negf %713 : vector<8x32xf32>
    %715 = math.exp %714 : vector<8x32xf32>
    %cst_198 = arith.constant 1.000000e+00 : f32
    %716 = vector.broadcast %cst_198 : f32 to vector<8x32xf32>
    %717 = arith.addf %716, %715 : vector<8x32xf32>
    %718 = arith.divf %716, %717 : vector<8x32xf32>
    %719 = vector.extract_strided_slice %702 {offsets = [0, 64], sizes = [8, 32], strides = [1, 1]} : vector<8x96xf32> to vector<8x32xf32>
    %720 = vector.extract_strided_slice %671 {offsets = [0, 64], sizes = [8, 32], strides = [1, 1]} : vector<8x96xf32> to vector<8x32xf32>
    %721 = arith.addf %720, %15 : vector<8x32xf32>
    %722 = arith.mulf %710, %721 : vector<8x32xf32>
    %723 = arith.addf %719, %722 : vector<8x32xf32>
    %724 = math.tanh %723 : vector<8x32xf32>
    %cst_199 = arith.constant 1.000000e+00 : f32
    %725 = vector.broadcast %cst_199 : f32 to vector<8x32xf32>
    %726 = arith.subf %725, %718 : vector<8x32xf32>
    %727 = arith.mulf %726, %724 : vector<8x32xf32>
    %728 = arith.mulf %718, %601 : vector<8x32xf32>
    %729 = arith.addf %727, %728 : vector<8x32xf32>
    %c40_200 = arith.constant 40 : index
    %c0_201 = arith.constant 0 : index
    %730 = vector.load %arg22[%c40_200, %c0_201] : memref<64x64xf32, #tpu.memory_space<vmem>>, vector<8x32xf32>
    tpu.vector_store %arg22[%c40_200, %c0_201], %700 {strides = array<i32>} : memref<64x64xf32, #tpu.memory_space<vmem>>, vector<8x32xf32>,
    %c16_202 = arith.constant 16 : index
    %c32_203 = arith.constant 32 : index
    %731 = vector.load %arg22[%c16_202, %c32_203] : memref<64x64xf32, #tpu.memory_space<vmem>>, vector<8x32xf32>
    tpu.vector_store %arg22[%c16_202, %c32_203], %729 {strides = array<i32>} : memref<64x64xf32, #tpu.memory_space<vmem>>, vector<8x32xf32>,
    %732 = arith.truncf %636 : vector<8x16xf32> to vector<8x16xbf16>
    %cst_204 = arith.constant dense<0.000000e+00> : vector<8x48xf32>
    %733 = tpu.matmul %732, %5, %cst_204 {dimension_numbers = #tpu.dot_dimension_numbers<[1], [0], [0], [1], [0, 0, 1, 1], [], []>} : vector<8x16xbf16>, vector<16x48xbf16>, vector<8x48xf32> -> vector<8x48xf32>
    %734 = arith.truncf %665 : vector<8x16xf32> to vector<8x16xbf16>
    %cst_205 = arith.constant dense<0.000000e+00> : vector<8x48xf32>
    %735 = tpu.matmul %734, %7, %cst_205 {dimension_numbers = #tpu.dot_dimension_numbers<[1], [0], [0], [1], [0, 0, 1, 1], [], []>} : vector<8x16xbf16>, vector<16x48xbf16>, vector<8x48xf32> -> vector<8x48xf32>
    %c5_206 = arith.constant 5 : index
    %c0_207 = arith.constant 0 : index
    %c0_208 = arith.constant 0 : index
    %736 = vector.load %arg1[%c5_206, %c0_207, %c0_208] : memref<12x8x48xf32, #tpu.memory_space<vmem>>, vector<1x8x48xf32>
    %737 = vector.shape_cast %736 : vector<1x8x48xf32> to vector<8x48xf32>
    %738 = vector.extract_strided_slice %737 {offsets = [0, 0], sizes = [8, 16], strides = [1, 1]} : vector<8x48xf32> to vector<8x16xf32>
    %739 = vector.extract_strided_slice %733 {offsets = [0, 0], sizes = [8, 16], strides = [1, 1]} : vector<8x48xf32> to vector<8x16xf32>
    %740 = arith.addf %738, %739 : vector<8x16xf32>
    %741 = arith.negf %740 : vector<8x16xf32>
    %742 = math.exp %741 : vector<8x16xf32>
    %cst_209 = arith.constant 1.000000e+00 : f32
    %743 = vector.broadcast %cst_209 : f32 to vector<8x16xf32>
    %744 = arith.addf %743, %742 : vector<8x16xf32>
    %745 = arith.divf %743, %744 : vector<8x16xf32>
    %746 = vector.extract_strided_slice %737 {offsets = [0, 16], sizes = [8, 16], strides = [1, 1]} : vector<8x48xf32> to vector<8x16xf32>
    %747 = vector.extract_strided_slice %733 {offsets = [0, 16], sizes = [8, 16], strides = [1, 1]} : vector<8x48xf32> to vector<8x16xf32>
    %748 = arith.addf %746, %747 : vector<8x16xf32>
    %749 = arith.negf %748 : vector<8x16xf32>
    %750 = math.exp %749 : vector<8x16xf32>
    %cst_210 = arith.constant 1.000000e+00 : f32
    %751 = vector.broadcast %cst_210 : f32 to vector<8x16xf32>
    %752 = arith.addf %751, %750 : vector<8x16xf32>
    %753 = arith.divf %751, %752 : vector<8x16xf32>
    %754 = vector.extract_strided_slice %737 {offsets = [0, 32], sizes = [8, 16], strides = [1, 1]} : vector<8x48xf32> to vector<8x16xf32>
    %755 = vector.extract_strided_slice %733 {offsets = [0, 32], sizes = [8, 16], strides = [1, 1]} : vector<8x48xf32> to vector<8x16xf32>
    %756 = arith.addf %755, %19 : vector<8x16xf32>
    %757 = arith.mulf %745, %756 : vector<8x16xf32>
    %758 = arith.addf %754, %757 : vector<8x16xf32>
    %759 = math.tanh %758 : vector<8x16xf32>
    %cst_211 = arith.constant 1.000000e+00 : f32
    %760 = vector.broadcast %cst_211 : f32 to vector<8x16xf32>
    %761 = arith.subf %760, %753 : vector<8x16xf32>
    %762 = arith.mulf %761, %759 : vector<8x16xf32>
    %763 = arith.mulf %753, %636 : vector<8x16xf32>
    %764 = arith.addf %762, %763 : vector<8x16xf32>
    %c6 = arith.constant 6 : index
    %c0_212 = arith.constant 0 : index
    %c0_213 = arith.constant 0 : index
    %765 = vector.load %arg1[%c6, %c0_212, %c0_213] : memref<12x8x48xf32, #tpu.memory_space<vmem>>, vector<1x8x48xf32>
    %766 = vector.shape_cast %765 : vector<1x8x48xf32> to vector<8x48xf32>
    %767 = vector.extract_strided_slice %766 {offsets = [0, 0], sizes = [8, 16], strides = [1, 1]} : vector<8x48xf32> to vector<8x16xf32>
    %768 = vector.extract_strided_slice %735 {offsets = [0, 0], sizes = [8, 16], strides = [1, 1]} : vector<8x48xf32> to vector<8x16xf32>
    %769 = arith.addf %767, %768 : vector<8x16xf32>
    %770 = arith.negf %769 : vector<8x16xf32>
    %771 = math.exp %770 : vector<8x16xf32>
    %cst_214 = arith.constant 1.000000e+00 : f32
    %772 = vector.broadcast %cst_214 : f32 to vector<8x16xf32>
    %773 = arith.addf %772, %771 : vector<8x16xf32>
    %774 = arith.divf %772, %773 : vector<8x16xf32>
    %775 = vector.extract_strided_slice %766 {offsets = [0, 16], sizes = [8, 16], strides = [1, 1]} : vector<8x48xf32> to vector<8x16xf32>
    %776 = vector.extract_strided_slice %735 {offsets = [0, 16], sizes = [8, 16], strides = [1, 1]} : vector<8x48xf32> to vector<8x16xf32>
    %777 = arith.addf %775, %776 : vector<8x16xf32>
    %778 = arith.negf %777 : vector<8x16xf32>
    %779 = math.exp %778 : vector<8x16xf32>
    %cst_215 = arith.constant 1.000000e+00 : f32
    %780 = vector.broadcast %cst_215 : f32 to vector<8x16xf32>
    %781 = arith.addf %780, %779 : vector<8x16xf32>
    %782 = arith.divf %780, %781 : vector<8x16xf32>
    %783 = vector.extract_strided_slice %766 {offsets = [0, 32], sizes = [8, 16], strides = [1, 1]} : vector<8x48xf32> to vector<8x16xf32>
    %784 = vector.extract_strided_slice %735 {offsets = [0, 32], sizes = [8, 16], strides = [1, 1]} : vector<8x48xf32> to vector<8x16xf32>
    %785 = arith.addf %784, %23 : vector<8x16xf32>
    %786 = arith.mulf %774, %785 : vector<8x16xf32>
    %787 = arith.addf %783, %786 : vector<8x16xf32>
    %788 = math.tanh %787 : vector<8x16xf32>
    %cst_216 = arith.constant 1.000000e+00 : f32
    %789 = vector.broadcast %cst_216 : f32 to vector<8x16xf32>
    %790 = arith.subf %789, %782 : vector<8x16xf32>
    %791 = arith.mulf %790, %788 : vector<8x16xf32>
    %792 = arith.mulf %782, %665 : vector<8x16xf32>
    %793 = arith.addf %791, %792 : vector<8x16xf32>
    %c40_217 = arith.constant 40 : index
    %c0_218 = arith.constant 0 : index
    %794 = vector.load %arg23[%c40_217, %c0_218] : memref<48x32xf32, #tpu.memory_space<vmem>>, vector<8x16xf32>
    tpu.vector_store %arg23[%c40_217, %c0_218], %764 {strides = array<i32>} : memref<48x32xf32, #tpu.memory_space<vmem>>, vector<8x16xf32>,
    %c0_219 = arith.constant 0 : index
    %c16_220 = arith.constant 16 : index
    %795 = vector.load %arg23[%c0_219, %c16_220] : memref<48x32xf32, #tpu.memory_space<vmem>>, vector<8x16xf32>
    tpu.vector_store %arg23[%c0_219, %c16_220], %793 {strides = array<i32>} : memref<48x32xf32, #tpu.memory_space<vmem>>, vector<8x16xf32>,
    %796 = arith.truncf %700 : vector<8x32xf32> to vector<8x32xbf16>
    %cst_221 = arith.constant dense<0.000000e+00> : vector<8x96xf32>
    %797 = tpu.matmul %796, %1, %cst_221 {dimension_numbers = #tpu.dot_dimension_numbers<[1], [0], [0], [1], [0, 0, 1, 1], [], []>} : vector<8x32xbf16>, vector<32x96xbf16>, vector<8x96xf32> -> vector<8x96xf32>
    %798 = arith.truncf %729 : vector<8x32xf32> to vector<8x32xbf16>
    %cst_222 = arith.constant dense<0.000000e+00> : vector<8x96xf32>
    %799 = tpu.matmul %798, %3, %cst_222 {dimension_numbers = #tpu.dot_dimension_numbers<[1], [0], [0], [1], [0, 0, 1, 1], [], []>} : vector<8x32xbf16>, vector<32x96xbf16>, vector<8x96xf32> -> vector<8x96xf32>
    %c6_223 = arith.constant 6 : index
    %c0_224 = arith.constant 0 : index
    %c0_225 = arith.constant 0 : index
    %800 = vector.load %arg0[%c6_223, %c0_224, %c0_225] : memref<16x8x96xf32, #tpu.memory_space<vmem>>, vector<1x8x96xf32>
    %801 = vector.shape_cast %800 : vector<1x8x96xf32> to vector<8x96xf32>
    %802 = vector.extract_strided_slice %801 {offsets = [0, 0], sizes = [8, 32], strides = [1, 1]} : vector<8x96xf32> to vector<8x32xf32>
    %803 = vector.extract_strided_slice %797 {offsets = [0, 0], sizes = [8, 32], strides = [1, 1]} : vector<8x96xf32> to vector<8x32xf32>
    %804 = arith.addf %802, %803 : vector<8x32xf32>
    %805 = arith.negf %804 : vector<8x32xf32>
    %806 = math.exp %805 : vector<8x32xf32>
    %cst_226 = arith.constant 1.000000e+00 : f32
    %807 = vector.broadcast %cst_226 : f32 to vector<8x32xf32>
    %808 = arith.addf %807, %806 : vector<8x32xf32>
    %809 = arith.divf %807, %808 : vector<8x32xf32>
    %810 = vector.extract_strided_slice %801 {offsets = [0, 32], sizes = [8, 32], strides = [1, 1]} : vector<8x96xf32> to vector<8x32xf32>
    %811 = vector.extract_strided_slice %797 {offsets = [0, 32], sizes = [8, 32], strides = [1, 1]} : vector<8x96xf32> to vector<8x32xf32>
    %812 = arith.addf %810, %811 : vector<8x32xf32>
    %813 = arith.negf %812 : vector<8x32xf32>
    %814 = math.exp %813 : vector<8x32xf32>
    %cst_227 = arith.constant 1.000000e+00 : f32
    %815 = vector.broadcast %cst_227 : f32 to vector<8x32xf32>
    %816 = arith.addf %815, %814 : vector<8x32xf32>
    %817 = arith.divf %815, %816 : vector<8x32xf32>
    %818 = vector.extract_strided_slice %801 {offsets = [0, 64], sizes = [8, 32], strides = [1, 1]} : vector<8x96xf32> to vector<8x32xf32>
    %819 = vector.extract_strided_slice %797 {offsets = [0, 64], sizes = [8, 32], strides = [1, 1]} : vector<8x96xf32> to vector<8x32xf32>
    %820 = arith.addf %819, %11 : vector<8x32xf32>
    %821 = arith.mulf %809, %820 : vector<8x32xf32>
    %822 = arith.addf %818, %821 : vector<8x32xf32>
    %823 = math.tanh %822 : vector<8x32xf32>
    %cst_228 = arith.constant 1.000000e+00 : f32
    %824 = vector.broadcast %cst_228 : f32 to vector<8x32xf32>
    %825 = arith.subf %824, %817 : vector<8x32xf32>
    %826 = arith.mulf %825, %823 : vector<8x32xf32>
    %827 = arith.mulf %817, %700 : vector<8x32xf32>
    %828 = arith.addf %826, %827 : vector<8x32xf32>
    %c9_229 = arith.constant 9 : index
    %c0_230 = arith.constant 0 : index
    %c0_231 = arith.constant 0 : index
    %829 = vector.load %arg0[%c9_229, %c0_230, %c0_231] : memref<16x8x96xf32, #tpu.memory_space<vmem>>, vector<1x8x96xf32>
    %830 = vector.shape_cast %829 : vector<1x8x96xf32> to vector<8x96xf32>
    %831 = vector.extract_strided_slice %830 {offsets = [0, 0], sizes = [8, 32], strides = [1, 1]} : vector<8x96xf32> to vector<8x32xf32>
    %832 = vector.extract_strided_slice %799 {offsets = [0, 0], sizes = [8, 32], strides = [1, 1]} : vector<8x96xf32> to vector<8x32xf32>
    %833 = arith.addf %831, %832 : vector<8x32xf32>
    %834 = arith.negf %833 : vector<8x32xf32>
    %835 = math.exp %834 : vector<8x32xf32>
    %cst_232 = arith.constant 1.000000e+00 : f32
    %836 = vector.broadcast %cst_232 : f32 to vector<8x32xf32>
    %837 = arith.addf %836, %835 : vector<8x32xf32>
    %838 = arith.divf %836, %837 : vector<8x32xf32>
    %839 = vector.extract_strided_slice %830 {offsets = [0, 32], sizes = [8, 32], strides = [1, 1]} : vector<8x96xf32> to vector<8x32xf32>
    %840 = vector.extract_strided_slice %799 {offsets = [0, 32], sizes = [8, 32], strides = [1, 1]} : vector<8x96xf32> to vector<8x32xf32>
    %841 = arith.addf %839, %840 : vector<8x32xf32>
    %842 = arith.negf %841 : vector<8x32xf32>
    %843 = math.exp %842 : vector<8x32xf32>
    %cst_233 = arith.constant 1.000000e+00 : f32
    %844 = vector.broadcast %cst_233 : f32 to vector<8x32xf32>
    %845 = arith.addf %844, %843 : vector<8x32xf32>
    %846 = arith.divf %844, %845 : vector<8x32xf32>
    %847 = vector.extract_strided_slice %830 {offsets = [0, 64], sizes = [8, 32], strides = [1, 1]} : vector<8x96xf32> to vector<8x32xf32>
    %848 = vector.extract_strided_slice %799 {offsets = [0, 64], sizes = [8, 32], strides = [1, 1]} : vector<8x96xf32> to vector<8x32xf32>
    %849 = arith.addf %848, %15 : vector<8x32xf32>
    %850 = arith.mulf %838, %849 : vector<8x32xf32>
    %851 = arith.addf %847, %850 : vector<8x32xf32>
    %852 = math.tanh %851 : vector<8x32xf32>
    %cst_234 = arith.constant 1.000000e+00 : f32
    %853 = vector.broadcast %cst_234 : f32 to vector<8x32xf32>
    %854 = arith.subf %853, %846 : vector<8x32xf32>
    %855 = arith.mulf %854, %852 : vector<8x32xf32>
    %856 = arith.mulf %846, %729 : vector<8x32xf32>
    %857 = arith.addf %855, %856 : vector<8x32xf32>
    %c48_235 = arith.constant 48 : index
    %c0_236 = arith.constant 0 : index
    %858 = vector.load %arg22[%c48_235, %c0_236] : memref<64x64xf32, #tpu.memory_space<vmem>>, vector<8x32xf32>
    tpu.vector_store %arg22[%c48_235, %c0_236], %828 {strides = array<i32>} : memref<64x64xf32, #tpu.memory_space<vmem>>, vector<8x32xf32>,
    %c8_237 = arith.constant 8 : index
    %c32_238 = arith.constant 32 : index
    %859 = vector.load %arg22[%c8_237, %c32_238] : memref<64x64xf32, #tpu.memory_space<vmem>>, vector<8x32xf32>
    tpu.vector_store %arg22[%c8_237, %c32_238], %857 {strides = array<i32>} : memref<64x64xf32, #tpu.memory_space<vmem>>, vector<8x32xf32>,
    %860 = arith.truncf %828 : vector<8x32xf32> to vector<8x32xbf16>
    %cst_239 = arith.constant dense<0.000000e+00> : vector<8x96xf32>
    %861 = tpu.matmul %860, %1, %cst_239 {dimension_numbers = #tpu.dot_dimension_numbers<[1], [0], [0], [1], [0, 0, 1, 1], [], []>} : vector<8x32xbf16>, vector<32x96xbf16>, vector<8x96xf32> -> vector<8x96xf32>
    %862 = arith.truncf %857 : vector<8x32xf32> to vector<8x32xbf16>
    %cst_240 = arith.constant dense<0.000000e+00> : vector<8x96xf32>
    %863 = tpu.matmul %862, %3, %cst_240 {dimension_numbers = #tpu.dot_dimension_numbers<[1], [0], [0], [1], [0, 0, 1, 1], [], []>} : vector<8x32xbf16>, vector<32x96xbf16>, vector<8x96xf32> -> vector<8x96xf32>
    %c7_241 = arith.constant 7 : index
    %c0_242 = arith.constant 0 : index
    %c0_243 = arith.constant 0 : index
    %864 = vector.load %arg0[%c7_241, %c0_242, %c0_243] : memref<16x8x96xf32, #tpu.memory_space<vmem>>, vector<1x8x96xf32>
    %865 = vector.shape_cast %864 : vector<1x8x96xf32> to vector<8x96xf32>
    %866 = vector.extract_strided_slice %865 {offsets = [0, 0], sizes = [8, 32], strides = [1, 1]} : vector<8x96xf32> to vector<8x32xf32>
    %867 = vector.extract_strided_slice %861 {offsets = [0, 0], sizes = [8, 32], strides = [1, 1]} : vector<8x96xf32> to vector<8x32xf32>
    %868 = arith.addf %866, %867 : vector<8x32xf32>
    %869 = arith.negf %868 : vector<8x32xf32>
    %870 = math.exp %869 : vector<8x32xf32>
    %cst_244 = arith.constant 1.000000e+00 : f32
    %871 = vector.broadcast %cst_244 : f32 to vector<8x32xf32>
    %872 = arith.addf %871, %870 : vector<8x32xf32>
    %873 = arith.divf %871, %872 : vector<8x32xf32>
    %874 = vector.extract_strided_slice %865 {offsets = [0, 32], sizes = [8, 32], strides = [1, 1]} : vector<8x96xf32> to vector<8x32xf32>
    %875 = vector.extract_strided_slice %861 {offsets = [0, 32], sizes = [8, 32], strides = [1, 1]} : vector<8x96xf32> to vector<8x32xf32>
    %876 = arith.addf %874, %875 : vector<8x32xf32>
    %877 = arith.negf %876 : vector<8x32xf32>
    %878 = math.exp %877 : vector<8x32xf32>
    %cst_245 = arith.constant 1.000000e+00 : f32
    %879 = vector.broadcast %cst_245 : f32 to vector<8x32xf32>
    %880 = arith.addf %879, %878 : vector<8x32xf32>
    %881 = arith.divf %879, %880 : vector<8x32xf32>
    %882 = vector.extract_strided_slice %865 {offsets = [0, 64], sizes = [8, 32], strides = [1, 1]} : vector<8x96xf32> to vector<8x32xf32>
    %883 = vector.extract_strided_slice %861 {offsets = [0, 64], sizes = [8, 32], strides = [1, 1]} : vector<8x96xf32> to vector<8x32xf32>
    %884 = arith.addf %883, %11 : vector<8x32xf32>
    %885 = arith.mulf %873, %884 : vector<8x32xf32>
    %886 = arith.addf %882, %885 : vector<8x32xf32>
    %887 = math.tanh %886 : vector<8x32xf32>
    %cst_246 = arith.constant 1.000000e+00 : f32
    %888 = vector.broadcast %cst_246 : f32 to vector<8x32xf32>
    %889 = arith.subf %888, %881 : vector<8x32xf32>
    %890 = arith.mulf %889, %887 : vector<8x32xf32>
    %891 = arith.mulf %881, %828 : vector<8x32xf32>
    %892 = arith.addf %890, %891 : vector<8x32xf32>
    %c8_247 = arith.constant 8 : index
    %c0_248 = arith.constant 0 : index
    %c0_249 = arith.constant 0 : index
    %893 = vector.load %arg0[%c8_247, %c0_248, %c0_249] : memref<16x8x96xf32, #tpu.memory_space<vmem>>, vector<1x8x96xf32>
    %894 = vector.shape_cast %893 : vector<1x8x96xf32> to vector<8x96xf32>
    %895 = vector.extract_strided_slice %894 {offsets = [0, 0], sizes = [8, 32], strides = [1, 1]} : vector<8x96xf32> to vector<8x32xf32>
    %896 = vector.extract_strided_slice %863 {offsets = [0, 0], sizes = [8, 32], strides = [1, 1]} : vector<8x96xf32> to vector<8x32xf32>
    %897 = arith.addf %895, %896 : vector<8x32xf32>
    %898 = arith.negf %897 : vector<8x32xf32>
    %899 = math.exp %898 : vector<8x32xf32>
    %cst_250 = arith.constant 1.000000e+00 : f32
    %900 = vector.broadcast %cst_250 : f32 to vector<8x32xf32>
    %901 = arith.addf %900, %899 : vector<8x32xf32>
    %902 = arith.divf %900, %901 : vector<8x32xf32>
    %903 = vector.extract_strided_slice %894 {offsets = [0, 32], sizes = [8, 32], strides = [1, 1]} : vector<8x96xf32> to vector<8x32xf32>
    %904 = vector.extract_strided_slice %863 {offsets = [0, 32], sizes = [8, 32], strides = [1, 1]} : vector<8x96xf32> to vector<8x32xf32>
    %905 = arith.addf %903, %904 : vector<8x32xf32>
    %906 = arith.negf %905 : vector<8x32xf32>
    %907 = math.exp %906 : vector<8x32xf32>
    %cst_251 = arith.constant 1.000000e+00 : f32
    %908 = vector.broadcast %cst_251 : f32 to vector<8x32xf32>
    %909 = arith.addf %908, %907 : vector<8x32xf32>
    %910 = arith.divf %908, %909 : vector<8x32xf32>
    %911 = vector.extract_strided_slice %894 {offsets = [0, 64], sizes = [8, 32], strides = [1, 1]} : vector<8x96xf32> to vector<8x32xf32>
    %912 = vector.extract_strided_slice %863 {offsets = [0, 64], sizes = [8, 32], strides = [1, 1]} : vector<8x96xf32> to vector<8x32xf32>
    %913 = arith.addf %912, %15 : vector<8x32xf32>
    %914 = arith.mulf %902, %913 : vector<8x32xf32>
    %915 = arith.addf %911, %914 : vector<8x32xf32>
    %916 = math.tanh %915 : vector<8x32xf32>
    %cst_252 = arith.constant 1.000000e+00 : f32
    %917 = vector.broadcast %cst_252 : f32 to vector<8x32xf32>
    %918 = arith.subf %917, %910 : vector<8x32xf32>
    %919 = arith.mulf %918, %916 : vector<8x32xf32>
    %920 = arith.mulf %910, %857 : vector<8x32xf32>
    %921 = arith.addf %919, %920 : vector<8x32xf32>
    %c56_253 = arith.constant 56 : index
    %c0_254 = arith.constant 0 : index
    %922 = vector.load %arg22[%c56_253, %c0_254] : memref<64x64xf32, #tpu.memory_space<vmem>>, vector<8x32xf32>
    tpu.vector_store %arg22[%c56_253, %c0_254], %892 {strides = array<i32>} : memref<64x64xf32, #tpu.memory_space<vmem>>, vector<8x32xf32>,
    %c0_255 = arith.constant 0 : index
    %c32_256 = arith.constant 32 : index
    %923 = vector.load %arg22[%c0_255, %c32_256] : memref<64x64xf32, #tpu.memory_space<vmem>>, vector<8x32xf32>
    tpu.vector_store %arg22[%c0_255, %c32_256], %921 {strides = array<i32>} : memref<64x64xf32, #tpu.memory_space<vmem>>, vector<8x32xf32>,
    %c0_257 = arith.constant 0 : index
    %c0_258 = arith.constant 0 : index
    %924 = vector.load %arg22[%c0_257, %c0_258] : memref<64x64xf32, #tpu.memory_space<vmem>>, vector<64x64xf32>
    %925 = arith.truncf %924 : vector<64x64xf32> to vector<64x64xbf16>
    %c0_259 = arith.constant 0 : index
    %c0_260 = arith.constant 0 : index
    %c0_261 = arith.constant 0 : index
    %926 = vector.load %arg6[%c0_259, %c0_260, %c0_261] : memref<2x64x96xbf16, #tpu.memory_space<vmem>>, vector<1x64x96xbf16>
    %927 = vector.shape_cast %926 : vector<1x64x96xbf16> to vector<64x96xbf16>
    %cst_262 = arith.constant dense<0.000000e+00> : vector<64x96xf32>
    %928 = tpu.matmul %925, %927, %cst_262 {dimension_numbers = #tpu.dot_dimension_numbers<[1], [0], [0], [1], [0, 0, 1, 1], [], []>} : vector<64x64xbf16>, vector<64x96xbf16>, vector<64x96xf32> -> vector<64x96xf32>
    %c0_263 = arith.constant 0 : index
    %c0_264 = arith.constant 0 : index
    %c0_265 = arith.constant 0 : index
    %929 = vector.load %arg7[%c0_263, %c0_264, %c0_265] : memref<2x1x96xf32, #tpu.memory_space<vmem>>, vector<1x1x96xf32>
    %930 = vector.shape_cast %929 : vector<1x1x96xf32> to vector<1x96xf32>
    %931 = vector.broadcast %930 : vector<1x96xf32> to vector<64x96xf32>
    %932 = arith.addf %928, %931 : vector<64x96xf32>
    %c1_266 = arith.constant 1 : index
    %c0_267 = arith.constant 0 : index
    %c0_268 = arith.constant 0 : index
    %933 = vector.load %arg6[%c1_266, %c0_267, %c0_268] : memref<2x64x96xbf16, #tpu.memory_space<vmem>>, vector<1x64x96xbf16>
    %934 = vector.shape_cast %933 : vector<1x64x96xbf16> to vector<64x96xbf16>
    %cst_269 = arith.constant dense<0.000000e+00> : vector<64x96xf32>
    %935 = tpu.matmul %925, %934, %cst_269 {dimension_numbers = #tpu.dot_dimension_numbers<[1], [0], [0], [1], [0, 0, 1, 1], [], []>} : vector<64x64xbf16>, vector<64x96xbf16>, vector<64x96xf32> -> vector<64x96xf32>
    %c1_270 = arith.constant 1 : index
    %c0_271 = arith.constant 0 : index
    %c0_272 = arith.constant 0 : index
    %936 = vector.load %arg7[%c1_270, %c0_271, %c0_272] : memref<2x1x96xf32, #tpu.memory_space<vmem>>, vector<1x1x96xf32>
    %937 = vector.shape_cast %936 : vector<1x1x96xf32> to vector<1x96xf32>
    %938 = vector.broadcast %937 : vector<1x96xf32> to vector<64x96xf32>
    %939 = arith.addf %935, %938 : vector<64x96xf32>
    %c0_273 = arith.constant 0 : index
    %c0_274 = arith.constant 0 : index
    %940 = vector.load %arg23[%c0_273, %c0_274] : memref<48x32xf32, #tpu.memory_space<vmem>>, vector<48x32xf32>
    %941 = arith.truncf %940 : vector<48x32xf32> to vector<48x32xbf16>
    %c0_275 = arith.constant 0 : index
    %c0_276 = arith.constant 0 : index
    %c0_277 = arith.constant 0 : index
    %942 = vector.load %arg10[%c0_275, %c0_276, %c0_277] : memref<2x32x48xbf16, #tpu.memory_space<vmem>>, vector<1x32x48xbf16>
    %943 = vector.shape_cast %942 : vector<1x32x48xbf16> to vector<32x48xbf16>
    %cst_278 = arith.constant dense<0.000000e+00> : vector<48x48xf32>
    %944 = tpu.matmul %941, %943, %cst_278 {dimension_numbers = #tpu.dot_dimension_numbers<[1], [0], [0], [1], [0, 0, 1, 1], [], []>} : vector<48x32xbf16>, vector<32x48xbf16>, vector<48x48xf32> -> vector<48x48xf32>
    %c0_279 = arith.constant 0 : index
    %c0_280 = arith.constant 0 : index
    %c0_281 = arith.constant 0 : index
    %945 = vector.load %arg11[%c0_279, %c0_280, %c0_281] : memref<2x1x48xf32, #tpu.memory_space<vmem>>, vector<1x1x48xf32>
    %946 = vector.shape_cast %945 : vector<1x1x48xf32> to vector<1x48xf32>
    %947 = vector.broadcast %946 : vector<1x48xf32> to vector<48x48xf32>
    %948 = arith.addf %944, %947 : vector<48x48xf32>
    %c1_282 = arith.constant 1 : index
    %c0_283 = arith.constant 0 : index
    %c0_284 = arith.constant 0 : index
    %949 = vector.load %arg10[%c1_282, %c0_283, %c0_284] : memref<2x32x48xbf16, #tpu.memory_space<vmem>>, vector<1x32x48xbf16>
    %950 = vector.shape_cast %949 : vector<1x32x48xbf16> to vector<32x48xbf16>
    %cst_285 = arith.constant dense<0.000000e+00> : vector<48x48xf32>
    %951 = tpu.matmul %941, %950, %cst_285 {dimension_numbers = #tpu.dot_dimension_numbers<[1], [0], [0], [1], [0, 0, 1, 1], [], []>} : vector<48x32xbf16>, vector<32x48xbf16>, vector<48x48xf32> -> vector<48x48xf32>
    %c1_286 = arith.constant 1 : index
    %c0_287 = arith.constant 0 : index
    %c0_288 = arith.constant 0 : index
    %952 = vector.load %arg11[%c1_286, %c0_287, %c0_288] : memref<2x1x48xf32, #tpu.memory_space<vmem>>, vector<1x1x48xf32>
    %953 = vector.shape_cast %952 : vector<1x1x48xf32> to vector<1x48xf32>
    %954 = vector.broadcast %953 : vector<1x48xf32> to vector<48x48xf32>
    %955 = arith.addf %951, %954 : vector<48x48xf32>
    %c0_289 = arith.constant 0 : index
    %c0_290 = arith.constant 0 : index
    %c0_291 = arith.constant 0 : index
    %956 = vector.load %arg8[%c0_289, %c0_290, %c0_291] : memref<2x32x96xbf16, #tpu.memory_space<vmem>>, vector<1x32x96xbf16>
    %957 = vector.shape_cast %956 : vector<1x32x96xbf16> to vector<32x96xbf16>
    %c1_292 = arith.constant 1 : index
    %c0_293 = arith.constant 0 : index
    %c0_294 = arith.constant 0 : index
    %958 = vector.load %arg8[%c1_292, %c0_293, %c0_294] : memref<2x32x96xbf16, #tpu.memory_space<vmem>>, vector<1x32x96xbf16>
    %959 = vector.shape_cast %958 : vector<1x32x96xbf16> to vector<32x96xbf16>
    %c0_295 = arith.constant 0 : index
    %c0_296 = arith.constant 0 : index
    %c0_297 = arith.constant 0 : index
    %960 = vector.load %arg12[%c0_295, %c0_296, %c0_297] : memref<2x16x48xbf16, #tpu.memory_space<vmem>>, vector<1x16x48xbf16>
    %961 = vector.shape_cast %960 : vector<1x16x48xbf16> to vector<16x48xbf16>
    %c1_298 = arith.constant 1 : index
    %c0_299 = arith.constant 0 : index
    %c0_300 = arith.constant 0 : index
    %962 = vector.load %arg12[%c1_298, %c0_299, %c0_300] : memref<2x16x48xbf16, #tpu.memory_space<vmem>>, vector<1x16x48xbf16>
    %963 = vector.shape_cast %962 : vector<1x16x48xbf16> to vector<16x48xbf16>
    %c0_301 = arith.constant 0 : index
    %c0_302 = arith.constant 0 : index
    %c0_303 = arith.constant 0 : index
    %964 = vector.load %arg9[%c0_301, %c0_302, %c0_303] : memref<2x1x32xf32, #tpu.memory_space<vmem>>, vector<1x1x32xf32>
    %965 = vector.shape_cast %964 : vector<1x1x32xf32> to vector<1x32xf32>
    %966 = vector.shape_cast %965 : vector<1x32xf32> to vector<1x32xf32>
    %967 = vector.broadcast %966 : vector<1x32xf32> to vector<8x32xf32>
    %c1_304 = arith.constant 1 : index
    %c0_305 = arith.constant 0 : index
    %c0_306 = arith.constant 0 : index
    %968 = vector.load %arg9[%c1_304, %c0_305, %c0_306] : memref<2x1x32xf32, #tpu.memory_space<vmem>>, vector<1x1x32xf32>
    %969 = vector.shape_cast %968 : vector<1x1x32xf32> to vector<1x32xf32>
    %970 = vector.shape_cast %969 : vector<1x32xf32> to vector<1x32xf32>
    %971 = vector.broadcast %970 : vector<1x32xf32> to vector<8x32xf32>
    %c0_307 = arith.constant 0 : index
    %c0_308 = arith.constant 0 : index
    %c0_309 = arith.constant 0 : index
    %972 = vector.load %arg13[%c0_307, %c0_308, %c0_309] : memref<2x1x16xf32, #tpu.memory_space<vmem>>, vector<1x1x16xf32>
    %973 = vector.shape_cast %972 : vector<1x1x16xf32> to vector<1x16xf32>
    %974 = vector.shape_cast %973 : vector<1x16xf32> to vector<1x16xf32>
    %975 = vector.broadcast %974 : vector<1x16xf32> to vector<8x16xf32>
    %c1_310 = arith.constant 1 : index
    %c0_311 = arith.constant 0 : index
    %c0_312 = arith.constant 0 : index
    %976 = vector.load %arg13[%c1_310, %c0_311, %c0_312] : memref<2x1x16xf32, #tpu.memory_space<vmem>>, vector<1x1x16xf32>
    %977 = vector.shape_cast %976 : vector<1x1x16xf32> to vector<1x16xf32>
    %978 = vector.shape_cast %977 : vector<1x16xf32> to vector<1x16xf32>
    %979 = vector.broadcast %978 : vector<1x16xf32> to vector<8x16xf32>
    %cst_313 = arith.constant 0.000000e+00 : f32
    %980 = vector.broadcast %cst_313 : f32 to vector<8x32xf32>
    %cst_314 = arith.constant 0.000000e+00 : f32
    %981 = vector.broadcast %cst_314 : f32 to vector<8x32xf32>
    %cst_315 = arith.constant 0.000000e+00 : f32
    %982 = vector.broadcast %cst_315 : f32 to vector<8x16xf32>
    %cst_316 = arith.constant 0.000000e+00 : f32
    %983 = vector.broadcast %cst_316 : f32 to vector<8x16xf32>
    %984 = arith.truncf %980 : vector<8x32xf32> to vector<8x32xbf16>
    %cst_317 = arith.constant dense<0.000000e+00> : vector<8x96xf32>
    %985 = tpu.matmul %984, %957, %cst_317 {dimension_numbers = #tpu.dot_dimension_numbers<[1], [0], [0], [1], [0, 0, 1, 1], [], []>} : vector<8x32xbf16>, vector<32x96xbf16>, vector<8x96xf32> -> vector<8x96xf32>
    %986 = arith.truncf %981 : vector<8x32xf32> to vector<8x32xbf16>
    %cst_318 = arith.constant dense<0.000000e+00> : vector<8x96xf32>
    %987 = tpu.matmul %986, %959, %cst_318 {dimension_numbers = #tpu.dot_dimension_numbers<[1], [0], [0], [1], [0, 0, 1, 1], [], []>} : vector<8x32xbf16>, vector<32x96xbf16>, vector<8x96xf32> -> vector<8x96xf32>
    %988 = vector.extract_strided_slice %932 {offsets = [0, 0], sizes = [8, 96], strides = [1, 1]} : vector<64x96xf32> to vector<8x96xf32>
    %989 = vector.extract_strided_slice %988 {offsets = [0, 0], sizes = [8, 32], strides = [1, 1]} : vector<8x96xf32> to vector<8x32xf32>
    %990 = vector.extract_strided_slice %985 {offsets = [0, 0], sizes = [8, 32], strides = [1, 1]} : vector<8x96xf32> to vector<8x32xf32>
    %991 = arith.addf %989, %990 : vector<8x32xf32>
    %992 = arith.negf %991 : vector<8x32xf32>
    %993 = math.exp %992 : vector<8x32xf32>
    %cst_319 = arith.constant 1.000000e+00 : f32
    %994 = vector.broadcast %cst_319 : f32 to vector<8x32xf32>
    %995 = arith.addf %994, %993 : vector<8x32xf32>
    %996 = arith.divf %994, %995 : vector<8x32xf32>
    %997 = vector.extract_strided_slice %988 {offsets = [0, 32], sizes = [8, 32], strides = [1, 1]} : vector<8x96xf32> to vector<8x32xf32>
    %998 = vector.extract_strided_slice %985 {offsets = [0, 32], sizes = [8, 32], strides = [1, 1]} : vector<8x96xf32> to vector<8x32xf32>
    %999 = arith.addf %997, %998 : vector<8x32xf32>
    %1000 = arith.negf %999 : vector<8x32xf32>
    %1001 = math.exp %1000 : vector<8x32xf32>
    %cst_320 = arith.constant 1.000000e+00 : f32
    %1002 = vector.broadcast %cst_320 : f32 to vector<8x32xf32>
    %1003 = arith.addf %1002, %1001 : vector<8x32xf32>
    %1004 = arith.divf %1002, %1003 : vector<8x32xf32>
    %1005 = vector.extract_strided_slice %988 {offsets = [0, 64], sizes = [8, 32], strides = [1, 1]} : vector<8x96xf32> to vector<8x32xf32>
    %1006 = vector.extract_strided_slice %985 {offsets = [0, 64], sizes = [8, 32], strides = [1, 1]} : vector<8x96xf32> to vector<8x32xf32>
    %1007 = arith.addf %1006, %967 : vector<8x32xf32>
    %1008 = arith.mulf %996, %1007 : vector<8x32xf32>
    %1009 = arith.addf %1005, %1008 : vector<8x32xf32>
    %1010 = math.tanh %1009 : vector<8x32xf32>
    %cst_321 = arith.constant 1.000000e+00 : f32
    %1011 = vector.broadcast %cst_321 : f32 to vector<8x32xf32>
    %1012 = arith.subf %1011, %1004 : vector<8x32xf32>
    %1013 = arith.mulf %1012, %1010 : vector<8x32xf32>
    %1014 = arith.mulf %1004, %980 : vector<8x32xf32>
    %1015 = arith.addf %1013, %1014 : vector<8x32xf32>
    %1016 = vector.extract_strided_slice %939 {offsets = [56, 0], sizes = [8, 96], strides = [1, 1]} : vector<64x96xf32> to vector<8x96xf32>
    %1017 = vector.extract_strided_slice %1016 {offsets = [0, 0], sizes = [8, 32], strides = [1, 1]} : vector<8x96xf32> to vector<8x32xf32>
    %1018 = vector.extract_strided_slice %987 {offsets = [0, 0], sizes = [8, 32], strides = [1, 1]} : vector<8x96xf32> to vector<8x32xf32>
    %1019 = arith.addf %1017, %1018 : vector<8x32xf32>
    %1020 = arith.negf %1019 : vector<8x32xf32>
    %1021 = math.exp %1020 : vector<8x32xf32>
    %cst_322 = arith.constant 1.000000e+00 : f32
    %1022 = vector.broadcast %cst_322 : f32 to vector<8x32xf32>
    %1023 = arith.addf %1022, %1021 : vector<8x32xf32>
    %1024 = arith.divf %1022, %1023 : vector<8x32xf32>
    %1025 = vector.extract_strided_slice %1016 {offsets = [0, 32], sizes = [8, 32], strides = [1, 1]} : vector<8x96xf32> to vector<8x32xf32>
    %1026 = vector.extract_strided_slice %987 {offsets = [0, 32], sizes = [8, 32], strides = [1, 1]} : vector<8x96xf32> to vector<8x32xf32>
    %1027 = arith.addf %1025, %1026 : vector<8x32xf32>
    %1028 = arith.negf %1027 : vector<8x32xf32>
    %1029 = math.exp %1028 : vector<8x32xf32>
    %cst_323 = arith.constant 1.000000e+00 : f32
    %1030 = vector.broadcast %cst_323 : f32 to vector<8x32xf32>
    %1031 = arith.addf %1030, %1029 : vector<8x32xf32>
    %1032 = arith.divf %1030, %1031 : vector<8x32xf32>
    %1033 = vector.extract_strided_slice %1016 {offsets = [0, 64], sizes = [8, 32], strides = [1, 1]} : vector<8x96xf32> to vector<8x32xf32>
    %1034 = vector.extract_strided_slice %987 {offsets = [0, 64], sizes = [8, 32], strides = [1, 1]} : vector<8x96xf32> to vector<8x32xf32>
    %1035 = arith.addf %1034, %971 : vector<8x32xf32>
    %1036 = arith.mulf %1024, %1035 : vector<8x32xf32>
    %1037 = arith.addf %1033, %1036 : vector<8x32xf32>
    %1038 = math.tanh %1037 : vector<8x32xf32>
    %cst_324 = arith.constant 1.000000e+00 : f32
    %1039 = vector.broadcast %cst_324 : f32 to vector<8x32xf32>
    %1040 = arith.subf %1039, %1032 : vector<8x32xf32>
    %1041 = arith.mulf %1040, %1038 : vector<8x32xf32>
    %1042 = arith.mulf %1032, %981 : vector<8x32xf32>
    %1043 = arith.addf %1041, %1042 : vector<8x32xf32>
    %1044 = arith.truncf %982 : vector<8x16xf32> to vector<8x16xbf16>
    %cst_325 = arith.constant dense<0.000000e+00> : vector<8x48xf32>
    %1045 = tpu.matmul %1044, %961, %cst_325 {dimension_numbers = #tpu.dot_dimension_numbers<[1], [0], [0], [1], [0, 0, 1, 1], [], []>} : vector<8x16xbf16>, vector<16x48xbf16>, vector<8x48xf32> -> vector<8x48xf32>
    %1046 = vector.extract_strided_slice %948 {offsets = [0, 0], sizes = [8, 48], strides = [1, 1]} : vector<48x48xf32> to vector<8x48xf32>
    %1047 = vector.extract_strided_slice %1046 {offsets = [0, 0], sizes = [8, 16], strides = [1, 1]} : vector<8x48xf32> to vector<8x16xf32>
    %1048 = vector.extract_strided_slice %1045 {offsets = [0, 0], sizes = [8, 16], strides = [1, 1]} : vector<8x48xf32> to vector<8x16xf32>
    %1049 = arith.addf %1047, %1048 : vector<8x16xf32>
    %1050 = arith.negf %1049 : vector<8x16xf32>
    %1051 = math.exp %1050 : vector<8x16xf32>
    %cst_326 = arith.constant 1.000000e+00 : f32
    %1052 = vector.broadcast %cst_326 : f32 to vector<8x16xf32>
    %1053 = arith.addf %1052, %1051 : vector<8x16xf32>
    %1054 = arith.divf %1052, %1053 : vector<8x16xf32>
    %1055 = vector.extract_strided_slice %1046 {offsets = [0, 16], sizes = [8, 16], strides = [1, 1]} : vector<8x48xf32> to vector<8x16xf32>
    %1056 = vector.extract_strided_slice %1045 {offsets = [0, 16], sizes = [8, 16], strides = [1, 1]} : vector<8x48xf32> to vector<8x16xf32>
    %1057 = arith.addf %1055, %1056 : vector<8x16xf32>
    %1058 = arith.negf %1057 : vector<8x16xf32>
    %1059 = math.exp %1058 : vector<8x16xf32>
    %cst_327 = arith.constant 1.000000e+00 : f32
    %1060 = vector.broadcast %cst_327 : f32 to vector<8x16xf32>
    %1061 = arith.addf %1060, %1059 : vector<8x16xf32>
    %1062 = arith.divf %1060, %1061 : vector<8x16xf32>
    %1063 = vector.extract_strided_slice %1046 {offsets = [0, 32], sizes = [8, 16], strides = [1, 1]} : vector<8x48xf32> to vector<8x16xf32>
    %1064 = vector.extract_strided_slice %1045 {offsets = [0, 32], sizes = [8, 16], strides = [1, 1]} : vector<8x48xf32> to vector<8x16xf32>
    %1065 = arith.addf %1064, %975 : vector<8x16xf32>
    %1066 = arith.mulf %1054, %1065 : vector<8x16xf32>
    %1067 = arith.addf %1063, %1066 : vector<8x16xf32>
    %1068 = math.tanh %1067 : vector<8x16xf32>
    %cst_328 = arith.constant 1.000000e+00 : f32
    %1069 = vector.broadcast %cst_328 : f32 to vector<8x16xf32>
    %1070 = arith.subf %1069, %1062 : vector<8x16xf32>
    %1071 = arith.mulf %1070, %1068 : vector<8x16xf32>
    %1072 = arith.mulf %1062, %982 : vector<8x16xf32>
    %1073 = arith.addf %1071, %1072 : vector<8x16xf32>
    %1074 = arith.truncf %983 : vector<8x16xf32> to vector<8x16xbf16>
    %cst_329 = arith.constant dense<0.000000e+00> : vector<8x48xf32>
    %1075 = tpu.matmul %1074, %963, %cst_329 {dimension_numbers = #tpu.dot_dimension_numbers<[1], [0], [0], [1], [0, 0, 1, 1], [], []>} : vector<8x16xbf16>, vector<16x48xbf16>, vector<8x48xf32> -> vector<8x48xf32>
    %1076 = vector.extract_strided_slice %955 {offsets = [40, 0], sizes = [8, 48], strides = [1, 1]} : vector<48x48xf32> to vector<8x48xf32>
    %1077 = vector.extract_strided_slice %1076 {offsets = [0, 0], sizes = [8, 16], strides = [1, 1]} : vector<8x48xf32> to vector<8x16xf32>
    %1078 = vector.extract_strided_slice %1075 {offsets = [0, 0], sizes = [8, 16], strides = [1, 1]} : vector<8x48xf32> to vector<8x16xf32>
    %1079 = arith.addf %1077, %1078 : vector<8x16xf32>
    %1080 = arith.negf %1079 : vector<8x16xf32>
    %1081 = math.exp %1080 : vector<8x16xf32>
    %cst_330 = arith.constant 1.000000e+00 : f32
    %1082 = vector.broadcast %cst_330 : f32 to vector<8x16xf32>
    %1083 = arith.addf %1082, %1081 : vector<8x16xf32>
    %1084 = arith.divf %1082, %1083 : vector<8x16xf32>
    %1085 = vector.extract_strided_slice %1076 {offsets = [0, 16], sizes = [8, 16], strides = [1, 1]} : vector<8x48xf32> to vector<8x16xf32>
    %1086 = vector.extract_strided_slice %1075 {offsets = [0, 16], sizes = [8, 16], strides = [1, 1]} : vector<8x48xf32> to vector<8x16xf32>
    %1087 = arith.addf %1085, %1086 : vector<8x16xf32>
    %1088 = arith.negf %1087 : vector<8x16xf32>
    %1089 = math.exp %1088 : vector<8x16xf32>
    %cst_331 = arith.constant 1.000000e+00 : f32
    %1090 = vector.broadcast %cst_331 : f32 to vector<8x16xf32>
    %1091 = arith.addf %1090, %1089 : vector<8x16xf32>
    %1092 = arith.divf %1090, %1091 : vector<8x16xf32>
    %1093 = vector.extract_strided_slice %1076 {offsets = [0, 32], sizes = [8, 16], strides = [1, 1]} : vector<8x48xf32> to vector<8x16xf32>
    %1094 = vector.extract_strided_slice %1075 {offsets = [0, 32], sizes = [8, 16], strides = [1, 1]} : vector<8x48xf32> to vector<8x16xf32>
    %1095 = arith.addf %1094, %979 : vector<8x16xf32>
    %1096 = arith.mulf %1084, %1095 : vector<8x16xf32>
    %1097 = arith.addf %1093, %1096 : vector<8x16xf32>
    %1098 = math.tanh %1097 : vector<8x16xf32>
    %cst_332 = arith.constant 1.000000e+00 : f32
    %1099 = vector.broadcast %cst_332 : f32 to vector<8x16xf32>
    %1100 = arith.subf %1099, %1092 : vector<8x16xf32>
    %1101 = arith.mulf %1100, %1098 : vector<8x16xf32>
    %1102 = arith.mulf %1092, %983 : vector<8x16xf32>
    %1103 = arith.addf %1101, %1102 : vector<8x16xf32>
    %1104 = arith.truncf %1015 : vector<8x32xf32> to vector<8x32xbf16>
    %cst_333 = arith.constant dense<0.000000e+00> : vector<8x96xf32>
    %1105 = tpu.matmul %1104, %957, %cst_333 {dimension_numbers = #tpu.dot_dimension_numbers<[1], [0], [0], [1], [0, 0, 1, 1], [], []>} : vector<8x32xbf16>, vector<32x96xbf16>, vector<8x96xf32> -> vector<8x96xf32>
    %1106 = arith.truncf %1043 : vector<8x32xf32> to vector<8x32xbf16>
    %cst_334 = arith.constant dense<0.000000e+00> : vector<8x96xf32>
    %1107 = tpu.matmul %1106, %959, %cst_334 {dimension_numbers = #tpu.dot_dimension_numbers<[1], [0], [0], [1], [0, 0, 1, 1], [], []>} : vector<8x32xbf16>, vector<32x96xbf16>, vector<8x96xf32> -> vector<8x96xf32>
    %1108 = vector.extract_strided_slice %932 {offsets = [8, 0], sizes = [8, 96], strides = [1, 1]} : vector<64x96xf32> to vector<8x96xf32>
    %1109 = vector.extract_strided_slice %1108 {offsets = [0, 0], sizes = [8, 32], strides = [1, 1]} : vector<8x96xf32> to vector<8x32xf32>
    %1110 = vector.extract_strided_slice %1105 {offsets = [0, 0], sizes = [8, 32], strides = [1, 1]} : vector<8x96xf32> to vector<8x32xf32>
    %1111 = arith.addf %1109, %1110 : vector<8x32xf32>
    %1112 = arith.negf %1111 : vector<8x32xf32>
    %1113 = math.exp %1112 : vector<8x32xf32>
    %cst_335 = arith.constant 1.000000e+00 : f32
    %1114 = vector.broadcast %cst_335 : f32 to vector<8x32xf32>
    %1115 = arith.addf %1114, %1113 : vector<8x32xf32>
    %1116 = arith.divf %1114, %1115 : vector<8x32xf32>
    %1117 = vector.extract_strided_slice %1108 {offsets = [0, 32], sizes = [8, 32], strides = [1, 1]} : vector<8x96xf32> to vector<8x32xf32>
    %1118 = vector.extract_strided_slice %1105 {offsets = [0, 32], sizes = [8, 32], strides = [1, 1]} : vector<8x96xf32> to vector<8x32xf32>
    %1119 = arith.addf %1117, %1118 : vector<8x32xf32>
    %1120 = arith.negf %1119 : vector<8x32xf32>
    %1121 = math.exp %1120 : vector<8x32xf32>
    %cst_336 = arith.constant 1.000000e+00 : f32
    %1122 = vector.broadcast %cst_336 : f32 to vector<8x32xf32>
    %1123 = arith.addf %1122, %1121 : vector<8x32xf32>
    %1124 = arith.divf %1122, %1123 : vector<8x32xf32>
    %1125 = vector.extract_strided_slice %1108 {offsets = [0, 64], sizes = [8, 32], strides = [1, 1]} : vector<8x96xf32> to vector<8x32xf32>
    %1126 = vector.extract_strided_slice %1105 {offsets = [0, 64], sizes = [8, 32], strides = [1, 1]} : vector<8x96xf32> to vector<8x32xf32>
    %1127 = arith.addf %1126, %967 : vector<8x32xf32>
    %1128 = arith.mulf %1116, %1127 : vector<8x32xf32>
    %1129 = arith.addf %1125, %1128 : vector<8x32xf32>
    %1130 = math.tanh %1129 : vector<8x32xf32>
    %cst_337 = arith.constant 1.000000e+00 : f32
    %1131 = vector.broadcast %cst_337 : f32 to vector<8x32xf32>
    %1132 = arith.subf %1131, %1124 : vector<8x32xf32>
    %1133 = arith.mulf %1132, %1130 : vector<8x32xf32>
    %1134 = arith.mulf %1124, %1015 : vector<8x32xf32>
    %1135 = arith.addf %1133, %1134 : vector<8x32xf32>
    %1136 = vector.extract_strided_slice %939 {offsets = [48, 0], sizes = [8, 96], strides = [1, 1]} : vector<64x96xf32> to vector<8x96xf32>
    %1137 = vector.extract_strided_slice %1136 {offsets = [0, 0], sizes = [8, 32], strides = [1, 1]} : vector<8x96xf32> to vector<8x32xf32>
    %1138 = vector.extract_strided_slice %1107 {offsets = [0, 0], sizes = [8, 32], strides = [1, 1]} : vector<8x96xf32> to vector<8x32xf32>
    %1139 = arith.addf %1137, %1138 : vector<8x32xf32>
    %1140 = arith.negf %1139 : vector<8x32xf32>
    %1141 = math.exp %1140 : vector<8x32xf32>
    %cst_338 = arith.constant 1.000000e+00 : f32
    %1142 = vector.broadcast %cst_338 : f32 to vector<8x32xf32>
    %1143 = arith.addf %1142, %1141 : vector<8x32xf32>
    %1144 = arith.divf %1142, %1143 : vector<8x32xf32>
    %1145 = vector.extract_strided_slice %1136 {offsets = [0, 32], sizes = [8, 32], strides = [1, 1]} : vector<8x96xf32> to vector<8x32xf32>
    %1146 = vector.extract_strided_slice %1107 {offsets = [0, 32], sizes = [8, 32], strides = [1, 1]} : vector<8x96xf32> to vector<8x32xf32>
    %1147 = arith.addf %1145, %1146 : vector<8x32xf32>
    %1148 = arith.negf %1147 : vector<8x32xf32>
    %1149 = math.exp %1148 : vector<8x32xf32>
    %cst_339 = arith.constant 1.000000e+00 : f32
    %1150 = vector.broadcast %cst_339 : f32 to vector<8x32xf32>
    %1151 = arith.addf %1150, %1149 : vector<8x32xf32>
    %1152 = arith.divf %1150, %1151 : vector<8x32xf32>
    %1153 = vector.extract_strided_slice %1136 {offsets = [0, 64], sizes = [8, 32], strides = [1, 1]} : vector<8x96xf32> to vector<8x32xf32>
    %1154 = vector.extract_strided_slice %1107 {offsets = [0, 64], sizes = [8, 32], strides = [1, 1]} : vector<8x96xf32> to vector<8x32xf32>
    %1155 = arith.addf %1154, %971 : vector<8x32xf32>
    %1156 = arith.mulf %1144, %1155 : vector<8x32xf32>
    %1157 = arith.addf %1153, %1156 : vector<8x32xf32>
    %1158 = math.tanh %1157 : vector<8x32xf32>
    %cst_340 = arith.constant 1.000000e+00 : f32
    %1159 = vector.broadcast %cst_340 : f32 to vector<8x32xf32>
    %1160 = arith.subf %1159, %1152 : vector<8x32xf32>
    %1161 = arith.mulf %1160, %1158 : vector<8x32xf32>
    %1162 = arith.mulf %1152, %1043 : vector<8x32xf32>
    %1163 = arith.addf %1161, %1162 : vector<8x32xf32>
    %1164 = arith.truncf %1073 : vector<8x16xf32> to vector<8x16xbf16>
    %cst_341 = arith.constant dense<0.000000e+00> : vector<8x48xf32>
    %1165 = tpu.matmul %1164, %961, %cst_341 {dimension_numbers = #tpu.dot_dimension_numbers<[1], [0], [0], [1], [0, 0, 1, 1], [], []>} : vector<8x16xbf16>, vector<16x48xbf16>, vector<8x48xf32> -> vector<8x48xf32>
    %1166 = vector.extract_strided_slice %948 {offsets = [8, 0], sizes = [8, 48], strides = [1, 1]} : vector<48x48xf32> to vector<8x48xf32>
    %1167 = vector.extract_strided_slice %1166 {offsets = [0, 0], sizes = [8, 16], strides = [1, 1]} : vector<8x48xf32> to vector<8x16xf32>
    %1168 = vector.extract_strided_slice %1165 {offsets = [0, 0], sizes = [8, 16], strides = [1, 1]} : vector<8x48xf32> to vector<8x16xf32>
    %1169 = arith.addf %1167, %1168 : vector<8x16xf32>
    %1170 = arith.negf %1169 : vector<8x16xf32>
    %1171 = math.exp %1170 : vector<8x16xf32>
    %cst_342 = arith.constant 1.000000e+00 : f32
    %1172 = vector.broadcast %cst_342 : f32 to vector<8x16xf32>
    %1173 = arith.addf %1172, %1171 : vector<8x16xf32>
    %1174 = arith.divf %1172, %1173 : vector<8x16xf32>
    %1175 = vector.extract_strided_slice %1166 {offsets = [0, 16], sizes = [8, 16], strides = [1, 1]} : vector<8x48xf32> to vector<8x16xf32>
    %1176 = vector.extract_strided_slice %1165 {offsets = [0, 16], sizes = [8, 16], strides = [1, 1]} : vector<8x48xf32> to vector<8x16xf32>
    %1177 = arith.addf %1175, %1176 : vector<8x16xf32>
    %1178 = arith.negf %1177 : vector<8x16xf32>
    %1179 = math.exp %1178 : vector<8x16xf32>
    %cst_343 = arith.constant 1.000000e+00 : f32
    %1180 = vector.broadcast %cst_343 : f32 to vector<8x16xf32>
    %1181 = arith.addf %1180, %1179 : vector<8x16xf32>
    %1182 = arith.divf %1180, %1181 : vector<8x16xf32>
    %1183 = vector.extract_strided_slice %1166 {offsets = [0, 32], sizes = [8, 16], strides = [1, 1]} : vector<8x48xf32> to vector<8x16xf32>
    %1184 = vector.extract_strided_slice %1165 {offsets = [0, 32], sizes = [8, 16], strides = [1, 1]} : vector<8x48xf32> to vector<8x16xf32>
    %1185 = arith.addf %1184, %975 : vector<8x16xf32>
    %1186 = arith.mulf %1174, %1185 : vector<8x16xf32>
    %1187 = arith.addf %1183, %1186 : vector<8x16xf32>
    %1188 = math.tanh %1187 : vector<8x16xf32>
    %cst_344 = arith.constant 1.000000e+00 : f32
    %1189 = vector.broadcast %cst_344 : f32 to vector<8x16xf32>
    %1190 = arith.subf %1189, %1182 : vector<8x16xf32>
    %1191 = arith.mulf %1190, %1188 : vector<8x16xf32>
    %1192 = arith.mulf %1182, %1073 : vector<8x16xf32>
    %1193 = arith.addf %1191, %1192 : vector<8x16xf32>
    %1194 = arith.truncf %1135 : vector<8x32xf32> to vector<8x32xbf16>
    %cst_345 = arith.constant dense<0.000000e+00> : vector<8x96xf32>
    %1195 = tpu.matmul %1194, %957, %cst_345 {dimension_numbers = #tpu.dot_dimension_numbers<[1], [0], [0], [1], [0, 0, 1, 1], [], []>} : vector<8x32xbf16>, vector<32x96xbf16>, vector<8x96xf32> -> vector<8x96xf32>
    %1196 = arith.truncf %1163 : vector<8x32xf32> to vector<8x32xbf16>
    %cst_346 = arith.constant dense<0.000000e+00> : vector<8x96xf32>
    %1197 = tpu.matmul %1196, %959, %cst_346 {dimension_numbers = #tpu.dot_dimension_numbers<[1], [0], [0], [1], [0, 0, 1, 1], [], []>} : vector<8x32xbf16>, vector<32x96xbf16>, vector<8x96xf32> -> vector<8x96xf32>
    %1198 = vector.extract_strided_slice %932 {offsets = [16, 0], sizes = [8, 96], strides = [1, 1]} : vector<64x96xf32> to vector<8x96xf32>
    %1199 = vector.extract_strided_slice %1198 {offsets = [0, 0], sizes = [8, 32], strides = [1, 1]} : vector<8x96xf32> to vector<8x32xf32>
    %1200 = vector.extract_strided_slice %1195 {offsets = [0, 0], sizes = [8, 32], strides = [1, 1]} : vector<8x96xf32> to vector<8x32xf32>
    %1201 = arith.addf %1199, %1200 : vector<8x32xf32>
    %1202 = arith.negf %1201 : vector<8x32xf32>
    %1203 = math.exp %1202 : vector<8x32xf32>
    %cst_347 = arith.constant 1.000000e+00 : f32
    %1204 = vector.broadcast %cst_347 : f32 to vector<8x32xf32>
    %1205 = arith.addf %1204, %1203 : vector<8x32xf32>
    %1206 = arith.divf %1204, %1205 : vector<8x32xf32>
    %1207 = vector.extract_strided_slice %1198 {offsets = [0, 32], sizes = [8, 32], strides = [1, 1]} : vector<8x96xf32> to vector<8x32xf32>
    %1208 = vector.extract_strided_slice %1195 {offsets = [0, 32], sizes = [8, 32], strides = [1, 1]} : vector<8x96xf32> to vector<8x32xf32>
    %1209 = arith.addf %1207, %1208 : vector<8x32xf32>
    %1210 = arith.negf %1209 : vector<8x32xf32>
    %1211 = math.exp %1210 : vector<8x32xf32>
    %cst_348 = arith.constant 1.000000e+00 : f32
    %1212 = vector.broadcast %cst_348 : f32 to vector<8x32xf32>
    %1213 = arith.addf %1212, %1211 : vector<8x32xf32>
    %1214 = arith.divf %1212, %1213 : vector<8x32xf32>
    %1215 = vector.extract_strided_slice %1198 {offsets = [0, 64], sizes = [8, 32], strides = [1, 1]} : vector<8x96xf32> to vector<8x32xf32>
    %1216 = vector.extract_strided_slice %1195 {offsets = [0, 64], sizes = [8, 32], strides = [1, 1]} : vector<8x96xf32> to vector<8x32xf32>
    %1217 = arith.addf %1216, %967 : vector<8x32xf32>
    %1218 = arith.mulf %1206, %1217 : vector<8x32xf32>
    %1219 = arith.addf %1215, %1218 : vector<8x32xf32>
    %1220 = math.tanh %1219 : vector<8x32xf32>
    %cst_349 = arith.constant 1.000000e+00 : f32
    %1221 = vector.broadcast %cst_349 : f32 to vector<8x32xf32>
    %1222 = arith.subf %1221, %1214 : vector<8x32xf32>
    %1223 = arith.mulf %1222, %1220 : vector<8x32xf32>
    %1224 = arith.mulf %1214, %1135 : vector<8x32xf32>
    %1225 = arith.addf %1223, %1224 : vector<8x32xf32>
    %1226 = vector.extract_strided_slice %939 {offsets = [40, 0], sizes = [8, 96], strides = [1, 1]} : vector<64x96xf32> to vector<8x96xf32>
    %1227 = vector.extract_strided_slice %1226 {offsets = [0, 0], sizes = [8, 32], strides = [1, 1]} : vector<8x96xf32> to vector<8x32xf32>
    %1228 = vector.extract_strided_slice %1197 {offsets = [0, 0], sizes = [8, 32], strides = [1, 1]} : vector<8x96xf32> to vector<8x32xf32>
    %1229 = arith.addf %1227, %1228 : vector<8x32xf32>
    %1230 = arith.negf %1229 : vector<8x32xf32>
    %1231 = math.exp %1230 : vector<8x32xf32>
    %cst_350 = arith.constant 1.000000e+00 : f32
    %1232 = vector.broadcast %cst_350 : f32 to vector<8x32xf32>
    %1233 = arith.addf %1232, %1231 : vector<8x32xf32>
    %1234 = arith.divf %1232, %1233 : vector<8x32xf32>
    %1235 = vector.extract_strided_slice %1226 {offsets = [0, 32], sizes = [8, 32], strides = [1, 1]} : vector<8x96xf32> to vector<8x32xf32>
    %1236 = vector.extract_strided_slice %1197 {offsets = [0, 32], sizes = [8, 32], strides = [1, 1]} : vector<8x96xf32> to vector<8x32xf32>
    %1237 = arith.addf %1235, %1236 : vector<8x32xf32>
    %1238 = arith.negf %1237 : vector<8x32xf32>
    %1239 = math.exp %1238 : vector<8x32xf32>
    %cst_351 = arith.constant 1.000000e+00 : f32
    %1240 = vector.broadcast %cst_351 : f32 to vector<8x32xf32>
    %1241 = arith.addf %1240, %1239 : vector<8x32xf32>
    %1242 = arith.divf %1240, %1241 : vector<8x32xf32>
    %1243 = vector.extract_strided_slice %1226 {offsets = [0, 64], sizes = [8, 32], strides = [1, 1]} : vector<8x96xf32> to vector<8x32xf32>
    %1244 = vector.extract_strided_slice %1197 {offsets = [0, 64], sizes = [8, 32], strides = [1, 1]} : vector<8x96xf32> to vector<8x32xf32>
    %1245 = arith.addf %1244, %971 : vector<8x32xf32>
    %1246 = arith.mulf %1234, %1245 : vector<8x32xf32>
    %1247 = arith.addf %1243, %1246 : vector<8x32xf32>
    %1248 = math.tanh %1247 : vector<8x32xf32>
    %cst_352 = arith.constant 1.000000e+00 : f32
    %1249 = vector.broadcast %cst_352 : f32 to vector<8x32xf32>
    %1250 = arith.subf %1249, %1242 : vector<8x32xf32>
    %1251 = arith.mulf %1250, %1248 : vector<8x32xf32>
    %1252 = arith.mulf %1242, %1163 : vector<8x32xf32>
    %1253 = arith.addf %1251, %1252 : vector<8x32xf32>
    %1254 = arith.truncf %1193 : vector<8x16xf32> to vector<8x16xbf16>
    %cst_353 = arith.constant dense<0.000000e+00> : vector<8x48xf32>
    %1255 = tpu.matmul %1254, %961, %cst_353 {dimension_numbers = #tpu.dot_dimension_numbers<[1], [0], [0], [1], [0, 0, 1, 1], [], []>} : vector<8x16xbf16>, vector<16x48xbf16>, vector<8x48xf32> -> vector<8x48xf32>
    %1256 = vector.extract_strided_slice %948 {offsets = [16, 0], sizes = [8, 48], strides = [1, 1]} : vector<48x48xf32> to vector<8x48xf32>
    %1257 = vector.extract_strided_slice %1256 {offsets = [0, 0], sizes = [8, 16], strides = [1, 1]} : vector<8x48xf32> to vector<8x16xf32>
    %1258 = vector.extract_strided_slice %1255 {offsets = [0, 0], sizes = [8, 16], strides = [1, 1]} : vector<8x48xf32> to vector<8x16xf32>
    %1259 = arith.addf %1257, %1258 : vector<8x16xf32>
    %1260 = arith.negf %1259 : vector<8x16xf32>
    %1261 = math.exp %1260 : vector<8x16xf32>
    %cst_354 = arith.constant 1.000000e+00 : f32
    %1262 = vector.broadcast %cst_354 : f32 to vector<8x16xf32>
    %1263 = arith.addf %1262, %1261 : vector<8x16xf32>
    %1264 = arith.divf %1262, %1263 : vector<8x16xf32>
    %1265 = vector.extract_strided_slice %1256 {offsets = [0, 16], sizes = [8, 16], strides = [1, 1]} : vector<8x48xf32> to vector<8x16xf32>
    %1266 = vector.extract_strided_slice %1255 {offsets = [0, 16], sizes = [8, 16], strides = [1, 1]} : vector<8x48xf32> to vector<8x16xf32>
    %1267 = arith.addf %1265, %1266 : vector<8x16xf32>
    %1268 = arith.negf %1267 : vector<8x16xf32>
    %1269 = math.exp %1268 : vector<8x16xf32>
    %cst_355 = arith.constant 1.000000e+00 : f32
    %1270 = vector.broadcast %cst_355 : f32 to vector<8x16xf32>
    %1271 = arith.addf %1270, %1269 : vector<8x16xf32>
    %1272 = arith.divf %1270, %1271 : vector<8x16xf32>
    %1273 = vector.extract_strided_slice %1256 {offsets = [0, 32], sizes = [8, 16], strides = [1, 1]} : vector<8x48xf32> to vector<8x16xf32>
    %1274 = vector.extract_strided_slice %1255 {offsets = [0, 32], sizes = [8, 16], strides = [1, 1]} : vector<8x48xf32> to vector<8x16xf32>
    %1275 = arith.addf %1274, %975 : vector<8x16xf32>
    %1276 = arith.mulf %1264, %1275 : vector<8x16xf32>
    %1277 = arith.addf %1273, %1276 : vector<8x16xf32>
    %1278 = math.tanh %1277 : vector<8x16xf32>
    %cst_356 = arith.constant 1.000000e+00 : f32
    %1279 = vector.broadcast %cst_356 : f32 to vector<8x16xf32>
    %1280 = arith.subf %1279, %1272 : vector<8x16xf32>
    %1281 = arith.mulf %1280, %1278 : vector<8x16xf32>
    %1282 = arith.mulf %1272, %1193 : vector<8x16xf32>
    %1283 = arith.addf %1281, %1282 : vector<8x16xf32>
    %1284 = arith.truncf %1225 : vector<8x32xf32> to vector<8x32xbf16>
    %cst_357 = arith.constant dense<0.000000e+00> : vector<8x96xf32>
    %1285 = tpu.matmul %1284, %957, %cst_357 {dimension_numbers = #tpu.dot_dimension_numbers<[1], [0], [0], [1], [0, 0, 1, 1], [], []>} : vector<8x32xbf16>, vector<32x96xbf16>, vector<8x96xf32> -> vector<8x96xf32>
    %1286 = arith.truncf %1253 : vector<8x32xf32> to vector<8x32xbf16>
    %cst_358 = arith.constant dense<0.000000e+00> : vector<8x96xf32>
    %1287 = tpu.matmul %1286, %959, %cst_358 {dimension_numbers = #tpu.dot_dimension_numbers<[1], [0], [0], [1], [0, 0, 1, 1], [], []>} : vector<8x32xbf16>, vector<32x96xbf16>, vector<8x96xf32> -> vector<8x96xf32>
    %1288 = vector.extract_strided_slice %932 {offsets = [24, 0], sizes = [8, 96], strides = [1, 1]} : vector<64x96xf32> to vector<8x96xf32>
    %1289 = vector.extract_strided_slice %1288 {offsets = [0, 0], sizes = [8, 32], strides = [1, 1]} : vector<8x96xf32> to vector<8x32xf32>
    %1290 = vector.extract_strided_slice %1285 {offsets = [0, 0], sizes = [8, 32], strides = [1, 1]} : vector<8x96xf32> to vector<8x32xf32>
    %1291 = arith.addf %1289, %1290 : vector<8x32xf32>
    %1292 = arith.negf %1291 : vector<8x32xf32>
    %1293 = math.exp %1292 : vector<8x32xf32>
    %cst_359 = arith.constant 1.000000e+00 : f32
    %1294 = vector.broadcast %cst_359 : f32 to vector<8x32xf32>
    %1295 = arith.addf %1294, %1293 : vector<8x32xf32>
    %1296 = arith.divf %1294, %1295 : vector<8x32xf32>
    %1297 = vector.extract_strided_slice %1288 {offsets = [0, 32], sizes = [8, 32], strides = [1, 1]} : vector<8x96xf32> to vector<8x32xf32>
    %1298 = vector.extract_strided_slice %1285 {offsets = [0, 32], sizes = [8, 32], strides = [1, 1]} : vector<8x96xf32> to vector<8x32xf32>
    %1299 = arith.addf %1297, %1298 : vector<8x32xf32>
    %1300 = arith.negf %1299 : vector<8x32xf32>
    %1301 = math.exp %1300 : vector<8x32xf32>
    %cst_360 = arith.constant 1.000000e+00 : f32
    %1302 = vector.broadcast %cst_360 : f32 to vector<8x32xf32>
    %1303 = arith.addf %1302, %1301 : vector<8x32xf32>
    %1304 = arith.divf %1302, %1303 : vector<8x32xf32>
    %1305 = vector.extract_strided_slice %1288 {offsets = [0, 64], sizes = [8, 32], strides = [1, 1]} : vector<8x96xf32> to vector<8x32xf32>
    %1306 = vector.extract_strided_slice %1285 {offsets = [0, 64], sizes = [8, 32], strides = [1, 1]} : vector<8x96xf32> to vector<8x32xf32>
    %1307 = arith.addf %1306, %967 : vector<8x32xf32>
    %1308 = arith.mulf %1296, %1307 : vector<8x32xf32>
    %1309 = arith.addf %1305, %1308 : vector<8x32xf32>
    %1310 = math.tanh %1309 : vector<8x32xf32>
    %cst_361 = arith.constant 1.000000e+00 : f32
    %1311 = vector.broadcast %cst_361 : f32 to vector<8x32xf32>
    %1312 = arith.subf %1311, %1304 : vector<8x32xf32>
    %1313 = arith.mulf %1312, %1310 : vector<8x32xf32>
    %1314 = arith.mulf %1304, %1225 : vector<8x32xf32>
    %1315 = arith.addf %1313, %1314 : vector<8x32xf32>
    %1316 = vector.extract_strided_slice %939 {offsets = [32, 0], sizes = [8, 96], strides = [1, 1]} : vector<64x96xf32> to vector<8x96xf32>
    %1317 = vector.extract_strided_slice %1316 {offsets = [0, 0], sizes = [8, 32], strides = [1, 1]} : vector<8x96xf32> to vector<8x32xf32>
    %1318 = vector.extract_strided_slice %1287 {offsets = [0, 0], sizes = [8, 32], strides = [1, 1]} : vector<8x96xf32> to vector<8x32xf32>
    %1319 = arith.addf %1317, %1318 : vector<8x32xf32>
    %1320 = arith.negf %1319 : vector<8x32xf32>
    %1321 = math.exp %1320 : vector<8x32xf32>
    %cst_362 = arith.constant 1.000000e+00 : f32
    %1322 = vector.broadcast %cst_362 : f32 to vector<8x32xf32>
    %1323 = arith.addf %1322, %1321 : vector<8x32xf32>
    %1324 = arith.divf %1322, %1323 : vector<8x32xf32>
    %1325 = vector.extract_strided_slice %1316 {offsets = [0, 32], sizes = [8, 32], strides = [1, 1]} : vector<8x96xf32> to vector<8x32xf32>
    %1326 = vector.extract_strided_slice %1287 {offsets = [0, 32], sizes = [8, 32], strides = [1, 1]} : vector<8x96xf32> to vector<8x32xf32>
    %1327 = arith.addf %1325, %1326 : vector<8x32xf32>
    %1328 = arith.negf %1327 : vector<8x32xf32>
    %1329 = math.exp %1328 : vector<8x32xf32>
    %cst_363 = arith.constant 1.000000e+00 : f32
    %1330 = vector.broadcast %cst_363 : f32 to vector<8x32xf32>
    %1331 = arith.addf %1330, %1329 : vector<8x32xf32>
    %1332 = arith.divf %1330, %1331 : vector<8x32xf32>
    %1333 = vector.extract_strided_slice %1316 {offsets = [0, 64], sizes = [8, 32], strides = [1, 1]} : vector<8x96xf32> to vector<8x32xf32>
    %1334 = vector.extract_strided_slice %1287 {offsets = [0, 64], sizes = [8, 32], strides = [1, 1]} : vector<8x96xf32> to vector<8x32xf32>
    %1335 = arith.addf %1334, %971 : vector<8x32xf32>
    %1336 = arith.mulf %1324, %1335 : vector<8x32xf32>
    %1337 = arith.addf %1333, %1336 : vector<8x32xf32>
    %1338 = math.tanh %1337 : vector<8x32xf32>
    %cst_364 = arith.constant 1.000000e+00 : f32
    %1339 = vector.broadcast %cst_364 : f32 to vector<8x32xf32>
    %1340 = arith.subf %1339, %1332 : vector<8x32xf32>
    %1341 = arith.mulf %1340, %1338 : vector<8x32xf32>
    %1342 = arith.mulf %1332, %1253 : vector<8x32xf32>
    %1343 = arith.addf %1341, %1342 : vector<8x32xf32>
    %1344 = arith.truncf %1283 : vector<8x16xf32> to vector<8x16xbf16>
    %cst_365 = arith.constant dense<0.000000e+00> : vector<8x48xf32>
    %1345 = tpu.matmul %1344, %961, %cst_365 {dimension_numbers = #tpu.dot_dimension_numbers<[1], [0], [0], [1], [0, 0, 1, 1], [], []>} : vector<8x16xbf16>, vector<16x48xbf16>, vector<8x48xf32> -> vector<8x48xf32>
    %1346 = vector.extract_strided_slice %948 {offsets = [24, 0], sizes = [8, 48], strides = [1, 1]} : vector<48x48xf32> to vector<8x48xf32>
    %1347 = vector.extract_strided_slice %1346 {offsets = [0, 0], sizes = [8, 16], strides = [1, 1]} : vector<8x48xf32> to vector<8x16xf32>
    %1348 = vector.extract_strided_slice %1345 {offsets = [0, 0], sizes = [8, 16], strides = [1, 1]} : vector<8x48xf32> to vector<8x16xf32>
    %1349 = arith.addf %1347, %1348 : vector<8x16xf32>
    %1350 = arith.negf %1349 : vector<8x16xf32>
    %1351 = math.exp %1350 : vector<8x16xf32>
    %cst_366 = arith.constant 1.000000e+00 : f32
    %1352 = vector.broadcast %cst_366 : f32 to vector<8x16xf32>
    %1353 = arith.addf %1352, %1351 : vector<8x16xf32>
    %1354 = arith.divf %1352, %1353 : vector<8x16xf32>
    %1355 = vector.extract_strided_slice %1346 {offsets = [0, 16], sizes = [8, 16], strides = [1, 1]} : vector<8x48xf32> to vector<8x16xf32>
    %1356 = vector.extract_strided_slice %1345 {offsets = [0, 16], sizes = [8, 16], strides = [1, 1]} : vector<8x48xf32> to vector<8x16xf32>
    %1357 = arith.addf %1355, %1356 : vector<8x16xf32>
    %1358 = arith.negf %1357 : vector<8x16xf32>
    %1359 = math.exp %1358 : vector<8x16xf32>
    %cst_367 = arith.constant 1.000000e+00 : f32
    %1360 = vector.broadcast %cst_367 : f32 to vector<8x16xf32>
    %1361 = arith.addf %1360, %1359 : vector<8x16xf32>
    %1362 = arith.divf %1360, %1361 : vector<8x16xf32>
    %1363 = vector.extract_strided_slice %1346 {offsets = [0, 32], sizes = [8, 16], strides = [1, 1]} : vector<8x48xf32> to vector<8x16xf32>
    %1364 = vector.extract_strided_slice %1345 {offsets = [0, 32], sizes = [8, 16], strides = [1, 1]} : vector<8x48xf32> to vector<8x16xf32>
    %1365 = arith.addf %1364, %975 : vector<8x16xf32>
    %1366 = arith.mulf %1354, %1365 : vector<8x16xf32>
    %1367 = arith.addf %1363, %1366 : vector<8x16xf32>
    %1368 = math.tanh %1367 : vector<8x16xf32>
    %cst_368 = arith.constant 1.000000e+00 : f32
    %1369 = vector.broadcast %cst_368 : f32 to vector<8x16xf32>
    %1370 = arith.subf %1369, %1362 : vector<8x16xf32>
    %1371 = arith.mulf %1370, %1368 : vector<8x16xf32>
    %1372 = arith.mulf %1362, %1283 : vector<8x16xf32>
    %1373 = arith.addf %1371, %1372 : vector<8x16xf32>
    %1374 = arith.truncf %1315 : vector<8x32xf32> to vector<8x32xbf16>
    %cst_369 = arith.constant dense<0.000000e+00> : vector<8x96xf32>
    %1375 = tpu.matmul %1374, %957, %cst_369 {dimension_numbers = #tpu.dot_dimension_numbers<[1], [0], [0], [1], [0, 0, 1, 1], [], []>} : vector<8x32xbf16>, vector<32x96xbf16>, vector<8x96xf32> -> vector<8x96xf32>
    %1376 = arith.truncf %1343 : vector<8x32xf32> to vector<8x32xbf16>
    %cst_370 = arith.constant dense<0.000000e+00> : vector<8x96xf32>
    %1377 = tpu.matmul %1376, %959, %cst_370 {dimension_numbers = #tpu.dot_dimension_numbers<[1], [0], [0], [1], [0, 0, 1, 1], [], []>} : vector<8x32xbf16>, vector<32x96xbf16>, vector<8x96xf32> -> vector<8x96xf32>
    %1378 = vector.extract_strided_slice %932 {offsets = [32, 0], sizes = [8, 96], strides = [1, 1]} : vector<64x96xf32> to vector<8x96xf32>
    %1379 = vector.extract_strided_slice %1378 {offsets = [0, 0], sizes = [8, 32], strides = [1, 1]} : vector<8x96xf32> to vector<8x32xf32>
    %1380 = vector.extract_strided_slice %1375 {offsets = [0, 0], sizes = [8, 32], strides = [1, 1]} : vector<8x96xf32> to vector<8x32xf32>
    %1381 = arith.addf %1379, %1380 : vector<8x32xf32>
    %1382 = arith.negf %1381 : vector<8x32xf32>
    %1383 = math.exp %1382 : vector<8x32xf32>
    %cst_371 = arith.constant 1.000000e+00 : f32
    %1384 = vector.broadcast %cst_371 : f32 to vector<8x32xf32>
    %1385 = arith.addf %1384, %1383 : vector<8x32xf32>
    %1386 = arith.divf %1384, %1385 : vector<8x32xf32>
    %1387 = vector.extract_strided_slice %1378 {offsets = [0, 32], sizes = [8, 32], strides = [1, 1]} : vector<8x96xf32> to vector<8x32xf32>
    %1388 = vector.extract_strided_slice %1375 {offsets = [0, 32], sizes = [8, 32], strides = [1, 1]} : vector<8x96xf32> to vector<8x32xf32>
    %1389 = arith.addf %1387, %1388 : vector<8x32xf32>
    %1390 = arith.negf %1389 : vector<8x32xf32>
    %1391 = math.exp %1390 : vector<8x32xf32>
    %cst_372 = arith.constant 1.000000e+00 : f32
    %1392 = vector.broadcast %cst_372 : f32 to vector<8x32xf32>
    %1393 = arith.addf %1392, %1391 : vector<8x32xf32>
    %1394 = arith.divf %1392, %1393 : vector<8x32xf32>
    %1395 = vector.extract_strided_slice %1378 {offsets = [0, 64], sizes = [8, 32], strides = [1, 1]} : vector<8x96xf32> to vector<8x32xf32>
    %1396 = vector.extract_strided_slice %1375 {offsets = [0, 64], sizes = [8, 32], strides = [1, 1]} : vector<8x96xf32> to vector<8x32xf32>
    %1397 = arith.addf %1396, %967 : vector<8x32xf32>
    %1398 = arith.mulf %1386, %1397 : vector<8x32xf32>
    %1399 = arith.addf %1395, %1398 : vector<8x32xf32>
    %1400 = math.tanh %1399 : vector<8x32xf32>
    %cst_373 = arith.constant 1.000000e+00 : f32
    %1401 = vector.broadcast %cst_373 : f32 to vector<8x32xf32>
    %1402 = arith.subf %1401, %1394 : vector<8x32xf32>
    %1403 = arith.mulf %1402, %1400 : vector<8x32xf32>
    %1404 = arith.mulf %1394, %1315 : vector<8x32xf32>
    %1405 = arith.addf %1403, %1404 : vector<8x32xf32>
    %1406 = vector.extract_strided_slice %939 {offsets = [24, 0], sizes = [8, 96], strides = [1, 1]} : vector<64x96xf32> to vector<8x96xf32>
    %1407 = vector.extract_strided_slice %1406 {offsets = [0, 0], sizes = [8, 32], strides = [1, 1]} : vector<8x96xf32> to vector<8x32xf32>
    %1408 = vector.extract_strided_slice %1377 {offsets = [0, 0], sizes = [8, 32], strides = [1, 1]} : vector<8x96xf32> to vector<8x32xf32>
    %1409 = arith.addf %1407, %1408 : vector<8x32xf32>
    %1410 = arith.negf %1409 : vector<8x32xf32>
    %1411 = math.exp %1410 : vector<8x32xf32>
    %cst_374 = arith.constant 1.000000e+00 : f32
    %1412 = vector.broadcast %cst_374 : f32 to vector<8x32xf32>
    %1413 = arith.addf %1412, %1411 : vector<8x32xf32>
    %1414 = arith.divf %1412, %1413 : vector<8x32xf32>
    %1415 = vector.extract_strided_slice %1406 {offsets = [0, 32], sizes = [8, 32], strides = [1, 1]} : vector<8x96xf32> to vector<8x32xf32>
    %1416 = vector.extract_strided_slice %1377 {offsets = [0, 32], sizes = [8, 32], strides = [1, 1]} : vector<8x96xf32> to vector<8x32xf32>
    %1417 = arith.addf %1415, %1416 : vector<8x32xf32>
    %1418 = arith.negf %1417 : vector<8x32xf32>
    %1419 = math.exp %1418 : vector<8x32xf32>
    %cst_375 = arith.constant 1.000000e+00 : f32
    %1420 = vector.broadcast %cst_375 : f32 to vector<8x32xf32>
    %1421 = arith.addf %1420, %1419 : vector<8x32xf32>
    %1422 = arith.divf %1420, %1421 : vector<8x32xf32>
    %1423 = vector.extract_strided_slice %1406 {offsets = [0, 64], sizes = [8, 32], strides = [1, 1]} : vector<8x96xf32> to vector<8x32xf32>
    %1424 = vector.extract_strided_slice %1377 {offsets = [0, 64], sizes = [8, 32], strides = [1, 1]} : vector<8x96xf32> to vector<8x32xf32>
    %1425 = arith.addf %1424, %971 : vector<8x32xf32>
    %1426 = arith.mulf %1414, %1425 : vector<8x32xf32>
    %1427 = arith.addf %1423, %1426 : vector<8x32xf32>
    %1428 = math.tanh %1427 : vector<8x32xf32>
    %cst_376 = arith.constant 1.000000e+00 : f32
    %1429 = vector.broadcast %cst_376 : f32 to vector<8x32xf32>
    %1430 = arith.subf %1429, %1422 : vector<8x32xf32>
    %1431 = arith.mulf %1430, %1428 : vector<8x32xf32>
    %1432 = arith.mulf %1422, %1343 : vector<8x32xf32>
    %1433 = arith.addf %1431, %1432 : vector<8x32xf32>
    %1434 = arith.truncf %1373 : vector<8x16xf32> to vector<8x16xbf16>
    %cst_377 = arith.constant dense<0.000000e+00> : vector<8x48xf32>
    %1435 = tpu.matmul %1434, %961, %cst_377 {dimension_numbers = #tpu.dot_dimension_numbers<[1], [0], [0], [1], [0, 0, 1, 1], [], []>} : vector<8x16xbf16>, vector<16x48xbf16>, vector<8x48xf32> -> vector<8x48xf32>
    %1436 = vector.extract_strided_slice %948 {offsets = [32, 0], sizes = [8, 48], strides = [1, 1]} : vector<48x48xf32> to vector<8x48xf32>
    %1437 = vector.extract_strided_slice %1436 {offsets = [0, 0], sizes = [8, 16], strides = [1, 1]} : vector<8x48xf32> to vector<8x16xf32>
    %1438 = vector.extract_strided_slice %1435 {offsets = [0, 0], sizes = [8, 16], strides = [1, 1]} : vector<8x48xf32> to vector<8x16xf32>
    %1439 = arith.addf %1437, %1438 : vector<8x16xf32>
    %1440 = arith.negf %1439 : vector<8x16xf32>
    %1441 = math.exp %1440 : vector<8x16xf32>
    %cst_378 = arith.constant 1.000000e+00 : f32
    %1442 = vector.broadcast %cst_378 : f32 to vector<8x16xf32>
    %1443 = arith.addf %1442, %1441 : vector<8x16xf32>
    %1444 = arith.divf %1442, %1443 : vector<8x16xf32>
    %1445 = vector.extract_strided_slice %1436 {offsets = [0, 16], sizes = [8, 16], strides = [1, 1]} : vector<8x48xf32> to vector<8x16xf32>
    %1446 = vector.extract_strided_slice %1435 {offsets = [0, 16], sizes = [8, 16], strides = [1, 1]} : vector<8x48xf32> to vector<8x16xf32>
    %1447 = arith.addf %1445, %1446 : vector<8x16xf32>
    %1448 = arith.negf %1447 : vector<8x16xf32>
    %1449 = math.exp %1448 : vector<8x16xf32>
    %cst_379 = arith.constant 1.000000e+00 : f32
    %1450 = vector.broadcast %cst_379 : f32 to vector<8x16xf32>
    %1451 = arith.addf %1450, %1449 : vector<8x16xf32>
    %1452 = arith.divf %1450, %1451 : vector<8x16xf32>
    %1453 = vector.extract_strided_slice %1436 {offsets = [0, 32], sizes = [8, 16], strides = [1, 1]} : vector<8x48xf32> to vector<8x16xf32>
    %1454 = vector.extract_strided_slice %1435 {offsets = [0, 32], sizes = [8, 16], strides = [1, 1]} : vector<8x48xf32> to vector<8x16xf32>
    %1455 = arith.addf %1454, %975 : vector<8x16xf32>
    %1456 = arith.mulf %1444, %1455 : vector<8x16xf32>
    %1457 = arith.addf %1453, %1456 : vector<8x16xf32>
    %1458 = math.tanh %1457 : vector<8x16xf32>
    %cst_380 = arith.constant 1.000000e+00 : f32
    %1459 = vector.broadcast %cst_380 : f32 to vector<8x16xf32>
    %1460 = arith.subf %1459, %1452 : vector<8x16xf32>
    %1461 = arith.mulf %1460, %1458 : vector<8x16xf32>
    %1462 = arith.mulf %1452, %1373 : vector<8x16xf32>
    %1463 = arith.addf %1461, %1462 : vector<8x16xf32>
    %1464 = arith.truncf %1405 : vector<8x32xf32> to vector<8x32xbf16>
    %cst_381 = arith.constant dense<0.000000e+00> : vector<8x96xf32>
    %1465 = tpu.matmul %1464, %957, %cst_381 {dimension_numbers = #tpu.dot_dimension_numbers<[1], [0], [0], [1], [0, 0, 1, 1], [], []>} : vector<8x32xbf16>, vector<32x96xbf16>, vector<8x96xf32> -> vector<8x96xf32>
    %1466 = arith.truncf %1433 : vector<8x32xf32> to vector<8x32xbf16>
    %cst_382 = arith.constant dense<0.000000e+00> : vector<8x96xf32>
    %1467 = tpu.matmul %1466, %959, %cst_382 {dimension_numbers = #tpu.dot_dimension_numbers<[1], [0], [0], [1], [0, 0, 1, 1], [], []>} : vector<8x32xbf16>, vector<32x96xbf16>, vector<8x96xf32> -> vector<8x96xf32>
    %1468 = vector.extract_strided_slice %932 {offsets = [40, 0], sizes = [8, 96], strides = [1, 1]} : vector<64x96xf32> to vector<8x96xf32>
    %1469 = vector.extract_strided_slice %1468 {offsets = [0, 0], sizes = [8, 32], strides = [1, 1]} : vector<8x96xf32> to vector<8x32xf32>
    %1470 = vector.extract_strided_slice %1465 {offsets = [0, 0], sizes = [8, 32], strides = [1, 1]} : vector<8x96xf32> to vector<8x32xf32>
    %1471 = arith.addf %1469, %1470 : vector<8x32xf32>
    %1472 = arith.negf %1471 : vector<8x32xf32>
    %1473 = math.exp %1472 : vector<8x32xf32>
    %cst_383 = arith.constant 1.000000e+00 : f32
    %1474 = vector.broadcast %cst_383 : f32 to vector<8x32xf32>
    %1475 = arith.addf %1474, %1473 : vector<8x32xf32>
    %1476 = arith.divf %1474, %1475 : vector<8x32xf32>
    %1477 = vector.extract_strided_slice %1468 {offsets = [0, 32], sizes = [8, 32], strides = [1, 1]} : vector<8x96xf32> to vector<8x32xf32>
    %1478 = vector.extract_strided_slice %1465 {offsets = [0, 32], sizes = [8, 32], strides = [1, 1]} : vector<8x96xf32> to vector<8x32xf32>
    %1479 = arith.addf %1477, %1478 : vector<8x32xf32>
    %1480 = arith.negf %1479 : vector<8x32xf32>
    %1481 = math.exp %1480 : vector<8x32xf32>
    %cst_384 = arith.constant 1.000000e+00 : f32
    %1482 = vector.broadcast %cst_384 : f32 to vector<8x32xf32>
    %1483 = arith.addf %1482, %1481 : vector<8x32xf32>
    %1484 = arith.divf %1482, %1483 : vector<8x32xf32>
    %1485 = vector.extract_strided_slice %1468 {offsets = [0, 64], sizes = [8, 32], strides = [1, 1]} : vector<8x96xf32> to vector<8x32xf32>
    %1486 = vector.extract_strided_slice %1465 {offsets = [0, 64], sizes = [8, 32], strides = [1, 1]} : vector<8x96xf32> to vector<8x32xf32>
    %1487 = arith.addf %1486, %967 : vector<8x32xf32>
    %1488 = arith.mulf %1476, %1487 : vector<8x32xf32>
    %1489 = arith.addf %1485, %1488 : vector<8x32xf32>
    %1490 = math.tanh %1489 : vector<8x32xf32>
    %cst_385 = arith.constant 1.000000e+00 : f32
    %1491 = vector.broadcast %cst_385 : f32 to vector<8x32xf32>
    %1492 = arith.subf %1491, %1484 : vector<8x32xf32>
    %1493 = arith.mulf %1492, %1490 : vector<8x32xf32>
    %1494 = arith.mulf %1484, %1405 : vector<8x32xf32>
    %1495 = arith.addf %1493, %1494 : vector<8x32xf32>
    %1496 = vector.extract_strided_slice %939 {offsets = [16, 0], sizes = [8, 96], strides = [1, 1]} : vector<64x96xf32> to vector<8x96xf32>
    %1497 = vector.extract_strided_slice %1496 {offsets = [0, 0], sizes = [8, 32], strides = [1, 1]} : vector<8x96xf32> to vector<8x32xf32>
    %1498 = vector.extract_strided_slice %1467 {offsets = [0, 0], sizes = [8, 32], strides = [1, 1]} : vector<8x96xf32> to vector<8x32xf32>
    %1499 = arith.addf %1497, %1498 : vector<8x32xf32>
    %1500 = arith.negf %1499 : vector<8x32xf32>
    %1501 = math.exp %1500 : vector<8x32xf32>
    %cst_386 = arith.constant 1.000000e+00 : f32
    %1502 = vector.broadcast %cst_386 : f32 to vector<8x32xf32>
    %1503 = arith.addf %1502, %1501 : vector<8x32xf32>
    %1504 = arith.divf %1502, %1503 : vector<8x32xf32>
    %1505 = vector.extract_strided_slice %1496 {offsets = [0, 32], sizes = [8, 32], strides = [1, 1]} : vector<8x96xf32> to vector<8x32xf32>
    %1506 = vector.extract_strided_slice %1467 {offsets = [0, 32], sizes = [8, 32], strides = [1, 1]} : vector<8x96xf32> to vector<8x32xf32>
    %1507 = arith.addf %1505, %1506 : vector<8x32xf32>
    %1508 = arith.negf %1507 : vector<8x32xf32>
    %1509 = math.exp %1508 : vector<8x32xf32>
    %cst_387 = arith.constant 1.000000e+00 : f32
    %1510 = vector.broadcast %cst_387 : f32 to vector<8x32xf32>
    %1511 = arith.addf %1510, %1509 : vector<8x32xf32>
    %1512 = arith.divf %1510, %1511 : vector<8x32xf32>
    %1513 = vector.extract_strided_slice %1496 {offsets = [0, 64], sizes = [8, 32], strides = [1, 1]} : vector<8x96xf32> to vector<8x32xf32>
    %1514 = vector.extract_strided_slice %1467 {offsets = [0, 64], sizes = [8, 32], strides = [1, 1]} : vector<8x96xf32> to vector<8x32xf32>
    %1515 = arith.addf %1514, %971 : vector<8x32xf32>
    %1516 = arith.mulf %1504, %1515 : vector<8x32xf32>
    %1517 = arith.addf %1513, %1516 : vector<8x32xf32>
    %1518 = math.tanh %1517 : vector<8x32xf32>
    %cst_388 = arith.constant 1.000000e+00 : f32
    %1519 = vector.broadcast %cst_388 : f32 to vector<8x32xf32>
    %1520 = arith.subf %1519, %1512 : vector<8x32xf32>
    %1521 = arith.mulf %1520, %1518 : vector<8x32xf32>
    %1522 = arith.mulf %1512, %1433 : vector<8x32xf32>
    %1523 = arith.addf %1521, %1522 : vector<8x32xf32>
    %1524 = arith.truncf %1463 : vector<8x16xf32> to vector<8x16xbf16>
    %cst_389 = arith.constant dense<0.000000e+00> : vector<8x48xf32>
    %1525 = tpu.matmul %1524, %961, %cst_389 {dimension_numbers = #tpu.dot_dimension_numbers<[1], [0], [0], [1], [0, 0, 1, 1], [], []>} : vector<8x16xbf16>, vector<16x48xbf16>, vector<8x48xf32> -> vector<8x48xf32>
    %1526 = vector.extract_strided_slice %948 {offsets = [40, 0], sizes = [8, 48], strides = [1, 1]} : vector<48x48xf32> to vector<8x48xf32>
    %1527 = vector.extract_strided_slice %1526 {offsets = [0, 0], sizes = [8, 16], strides = [1, 1]} : vector<8x48xf32> to vector<8x16xf32>
    %1528 = vector.extract_strided_slice %1525 {offsets = [0, 0], sizes = [8, 16], strides = [1, 1]} : vector<8x48xf32> to vector<8x16xf32>
    %1529 = arith.addf %1527, %1528 : vector<8x16xf32>
    %1530 = arith.negf %1529 : vector<8x16xf32>
    %1531 = math.exp %1530 : vector<8x16xf32>
    %cst_390 = arith.constant 1.000000e+00 : f32
    %1532 = vector.broadcast %cst_390 : f32 to vector<8x16xf32>
    %1533 = arith.addf %1532, %1531 : vector<8x16xf32>
    %1534 = arith.divf %1532, %1533 : vector<8x16xf32>
    %1535 = vector.extract_strided_slice %1526 {offsets = [0, 16], sizes = [8, 16], strides = [1, 1]} : vector<8x48xf32> to vector<8x16xf32>
    %1536 = vector.extract_strided_slice %1525 {offsets = [0, 16], sizes = [8, 16], strides = [1, 1]} : vector<8x48xf32> to vector<8x16xf32>
    %1537 = arith.addf %1535, %1536 : vector<8x16xf32>
    %1538 = arith.negf %1537 : vector<8x16xf32>
    %1539 = math.exp %1538 : vector<8x16xf32>
    %cst_391 = arith.constant 1.000000e+00 : f32
    %1540 = vector.broadcast %cst_391 : f32 to vector<8x16xf32>
    %1541 = arith.addf %1540, %1539 : vector<8x16xf32>
    %1542 = arith.divf %1540, %1541 : vector<8x16xf32>
    %1543 = vector.extract_strided_slice %1526 {offsets = [0, 32], sizes = [8, 16], strides = [1, 1]} : vector<8x48xf32> to vector<8x16xf32>
    %1544 = vector.extract_strided_slice %1525 {offsets = [0, 32], sizes = [8, 16], strides = [1, 1]} : vector<8x48xf32> to vector<8x16xf32>
    %1545 = arith.addf %1544, %975 : vector<8x16xf32>
    %1546 = arith.mulf %1534, %1545 : vector<8x16xf32>
    %1547 = arith.addf %1543, %1546 : vector<8x16xf32>
    %1548 = math.tanh %1547 : vector<8x16xf32>
    %cst_392 = arith.constant 1.000000e+00 : f32
    %1549 = vector.broadcast %cst_392 : f32 to vector<8x16xf32>
    %1550 = arith.subf %1549, %1542 : vector<8x16xf32>
    %1551 = arith.mulf %1550, %1548 : vector<8x16xf32>
    %1552 = arith.mulf %1542, %1463 : vector<8x16xf32>
    %1553 = arith.addf %1551, %1552 : vector<8x16xf32>
    %1554 = arith.truncf %1495 : vector<8x32xf32> to vector<8x32xbf16>
    %cst_393 = arith.constant dense<0.000000e+00> : vector<8x96xf32>
    %1555 = tpu.matmul %1554, %957, %cst_393 {dimension_numbers = #tpu.dot_dimension_numbers<[1], [0], [0], [1], [0, 0, 1, 1], [], []>} : vector<8x32xbf16>, vector<32x96xbf16>, vector<8x96xf32> -> vector<8x96xf32>
    %1556 = arith.truncf %1523 : vector<8x32xf32> to vector<8x32xbf16>
    %cst_394 = arith.constant dense<0.000000e+00> : vector<8x96xf32>
    %1557 = tpu.matmul %1556, %959, %cst_394 {dimension_numbers = #tpu.dot_dimension_numbers<[1], [0], [0], [1], [0, 0, 1, 1], [], []>} : vector<8x32xbf16>, vector<32x96xbf16>, vector<8x96xf32> -> vector<8x96xf32>
    %1558 = vector.extract_strided_slice %932 {offsets = [48, 0], sizes = [8, 96], strides = [1, 1]} : vector<64x96xf32> to vector<8x96xf32>
    %1559 = vector.extract_strided_slice %1558 {offsets = [0, 0], sizes = [8, 32], strides = [1, 1]} : vector<8x96xf32> to vector<8x32xf32>
    %1560 = vector.extract_strided_slice %1555 {offsets = [0, 0], sizes = [8, 32], strides = [1, 1]} : vector<8x96xf32> to vector<8x32xf32>
    %1561 = arith.addf %1559, %1560 : vector<8x32xf32>
    %1562 = arith.negf %1561 : vector<8x32xf32>
    %1563 = math.exp %1562 : vector<8x32xf32>
    %cst_395 = arith.constant 1.000000e+00 : f32
    %1564 = vector.broadcast %cst_395 : f32 to vector<8x32xf32>
    %1565 = arith.addf %1564, %1563 : vector<8x32xf32>
    %1566 = arith.divf %1564, %1565 : vector<8x32xf32>
    %1567 = vector.extract_strided_slice %1558 {offsets = [0, 32], sizes = [8, 32], strides = [1, 1]} : vector<8x96xf32> to vector<8x32xf32>
    %1568 = vector.extract_strided_slice %1555 {offsets = [0, 32], sizes = [8, 32], strides = [1, 1]} : vector<8x96xf32> to vector<8x32xf32>
    %1569 = arith.addf %1567, %1568 : vector<8x32xf32>
    %1570 = arith.negf %1569 : vector<8x32xf32>
    %1571 = math.exp %1570 : vector<8x32xf32>
    %cst_396 = arith.constant 1.000000e+00 : f32
    %1572 = vector.broadcast %cst_396 : f32 to vector<8x32xf32>
    %1573 = arith.addf %1572, %1571 : vector<8x32xf32>
    %1574 = arith.divf %1572, %1573 : vector<8x32xf32>
    %1575 = vector.extract_strided_slice %1558 {offsets = [0, 64], sizes = [8, 32], strides = [1, 1]} : vector<8x96xf32> to vector<8x32xf32>
    %1576 = vector.extract_strided_slice %1555 {offsets = [0, 64], sizes = [8, 32], strides = [1, 1]} : vector<8x96xf32> to vector<8x32xf32>
    %1577 = arith.addf %1576, %967 : vector<8x32xf32>
    %1578 = arith.mulf %1566, %1577 : vector<8x32xf32>
    %1579 = arith.addf %1575, %1578 : vector<8x32xf32>
    %1580 = math.tanh %1579 : vector<8x32xf32>
    %cst_397 = arith.constant 1.000000e+00 : f32
    %1581 = vector.broadcast %cst_397 : f32 to vector<8x32xf32>
    %1582 = arith.subf %1581, %1574 : vector<8x32xf32>
    %1583 = arith.mulf %1582, %1580 : vector<8x32xf32>
    %1584 = arith.mulf %1574, %1495 : vector<8x32xf32>
    %1585 = arith.addf %1583, %1584 : vector<8x32xf32>
    %1586 = vector.extract_strided_slice %939 {offsets = [8, 0], sizes = [8, 96], strides = [1, 1]} : vector<64x96xf32> to vector<8x96xf32>
    %1587 = vector.extract_strided_slice %1586 {offsets = [0, 0], sizes = [8, 32], strides = [1, 1]} : vector<8x96xf32> to vector<8x32xf32>
    %1588 = vector.extract_strided_slice %1557 {offsets = [0, 0], sizes = [8, 32], strides = [1, 1]} : vector<8x96xf32> to vector<8x32xf32>
    %1589 = arith.addf %1587, %1588 : vector<8x32xf32>
    %1590 = arith.negf %1589 : vector<8x32xf32>
    %1591 = math.exp %1590 : vector<8x32xf32>
    %cst_398 = arith.constant 1.000000e+00 : f32
    %1592 = vector.broadcast %cst_398 : f32 to vector<8x32xf32>
    %1593 = arith.addf %1592, %1591 : vector<8x32xf32>
    %1594 = arith.divf %1592, %1593 : vector<8x32xf32>
    %1595 = vector.extract_strided_slice %1586 {offsets = [0, 32], sizes = [8, 32], strides = [1, 1]} : vector<8x96xf32> to vector<8x32xf32>
    %1596 = vector.extract_strided_slice %1557 {offsets = [0, 32], sizes = [8, 32], strides = [1, 1]} : vector<8x96xf32> to vector<8x32xf32>
    %1597 = arith.addf %1595, %1596 : vector<8x32xf32>
    %1598 = arith.negf %1597 : vector<8x32xf32>
    %1599 = math.exp %1598 : vector<8x32xf32>
    %cst_399 = arith.constant 1.000000e+00 : f32
    %1600 = vector.broadcast %cst_399 : f32 to vector<8x32xf32>
    %1601 = arith.addf %1600, %1599 : vector<8x32xf32>
    %1602 = arith.divf %1600, %1601 : vector<8x32xf32>
    %1603 = vector.extract_strided_slice %1586 {offsets = [0, 64], sizes = [8, 32], strides = [1, 1]} : vector<8x96xf32> to vector<8x32xf32>
    %1604 = vector.extract_strided_slice %1557 {offsets = [0, 64], sizes = [8, 32], strides = [1, 1]} : vector<8x96xf32> to vector<8x32xf32>
    %1605 = arith.addf %1604, %971 : vector<8x32xf32>
    %1606 = arith.mulf %1594, %1605 : vector<8x32xf32>
    %1607 = arith.addf %1603, %1606 : vector<8x32xf32>
    %1608 = math.tanh %1607 : vector<8x32xf32>
    %cst_400 = arith.constant 1.000000e+00 : f32
    %1609 = vector.broadcast %cst_400 : f32 to vector<8x32xf32>
    %1610 = arith.subf %1609, %1602 : vector<8x32xf32>
    %1611 = arith.mulf %1610, %1608 : vector<8x32xf32>
    %1612 = arith.mulf %1602, %1523 : vector<8x32xf32>
    %1613 = arith.addf %1611, %1612 : vector<8x32xf32>
    %1614 = arith.truncf %1585 : vector<8x32xf32> to vector<8x32xbf16>
    %cst_401 = arith.constant dense<0.000000e+00> : vector<8x96xf32>
    %1615 = tpu.matmul %1614, %957, %cst_401 {dimension_numbers = #tpu.dot_dimension_numbers<[1], [0], [0], [1], [0, 0, 1, 1], [], []>} : vector<8x32xbf16>, vector<32x96xbf16>, vector<8x96xf32> -> vector<8x96xf32>
    %1616 = arith.truncf %1613 : vector<8x32xf32> to vector<8x32xbf16>
    %cst_402 = arith.constant dense<0.000000e+00> : vector<8x96xf32>
    %1617 = tpu.matmul %1616, %959, %cst_402 {dimension_numbers = #tpu.dot_dimension_numbers<[1], [0], [0], [1], [0, 0, 1, 1], [], []>} : vector<8x32xbf16>, vector<32x96xbf16>, vector<8x96xf32> -> vector<8x96xf32>
    %1618 = vector.extract_strided_slice %932 {offsets = [56, 0], sizes = [8, 96], strides = [1, 1]} : vector<64x96xf32> to vector<8x96xf32>
    %1619 = vector.extract_strided_slice %1618 {offsets = [0, 0], sizes = [8, 32], strides = [1, 1]} : vector<8x96xf32> to vector<8x32xf32>
    %1620 = vector.extract_strided_slice %1615 {offsets = [0, 0], sizes = [8, 32], strides = [1, 1]} : vector<8x96xf32> to vector<8x32xf32>
    %1621 = arith.addf %1619, %1620 : vector<8x32xf32>
    %1622 = arith.negf %1621 : vector<8x32xf32>
    %1623 = math.exp %1622 : vector<8x32xf32>
    %cst_403 = arith.constant 1.000000e+00 : f32
    %1624 = vector.broadcast %cst_403 : f32 to vector<8x32xf32>
    %1625 = arith.addf %1624, %1623 : vector<8x32xf32>
    %1626 = arith.divf %1624, %1625 : vector<8x32xf32>
    %1627 = vector.extract_strided_slice %1618 {offsets = [0, 32], sizes = [8, 32], strides = [1, 1]} : vector<8x96xf32> to vector<8x32xf32>
    %1628 = vector.extract_strided_slice %1615 {offsets = [0, 32], sizes = [8, 32], strides = [1, 1]} : vector<8x96xf32> to vector<8x32xf32>
    %1629 = arith.addf %1627, %1628 : vector<8x32xf32>
    %1630 = arith.negf %1629 : vector<8x32xf32>
    %1631 = math.exp %1630 : vector<8x32xf32>
    %cst_404 = arith.constant 1.000000e+00 : f32
    %1632 = vector.broadcast %cst_404 : f32 to vector<8x32xf32>
    %1633 = arith.addf %1632, %1631 : vector<8x32xf32>
    %1634 = arith.divf %1632, %1633 : vector<8x32xf32>
    %1635 = vector.extract_strided_slice %1618 {offsets = [0, 64], sizes = [8, 32], strides = [1, 1]} : vector<8x96xf32> to vector<8x32xf32>
    %1636 = vector.extract_strided_slice %1615 {offsets = [0, 64], sizes = [8, 32], strides = [1, 1]} : vector<8x96xf32> to vector<8x32xf32>
    %1637 = arith.addf %1636, %967 : vector<8x32xf32>
    %1638 = arith.mulf %1626, %1637 : vector<8x32xf32>
    %1639 = arith.addf %1635, %1638 : vector<8x32xf32>
    %1640 = math.tanh %1639 : vector<8x32xf32>
    %cst_405 = arith.constant 1.000000e+00 : f32
    %1641 = vector.broadcast %cst_405 : f32 to vector<8x32xf32>
    %1642 = arith.subf %1641, %1634 : vector<8x32xf32>
    %1643 = arith.mulf %1642, %1640 : vector<8x32xf32>
    %1644 = arith.mulf %1634, %1585 : vector<8x32xf32>
    %1645 = arith.addf %1643, %1644 : vector<8x32xf32>
    %1646 = vector.extract_strided_slice %939 {offsets = [0, 0], sizes = [8, 96], strides = [1, 1]} : vector<64x96xf32> to vector<8x96xf32>
    %1647 = vector.extract_strided_slice %1646 {offsets = [0, 0], sizes = [8, 32], strides = [1, 1]} : vector<8x96xf32> to vector<8x32xf32>
    %1648 = vector.extract_strided_slice %1617 {offsets = [0, 0], sizes = [8, 32], strides = [1, 1]} : vector<8x96xf32> to vector<8x32xf32>
    %1649 = arith.addf %1647, %1648 : vector<8x32xf32>
    %1650 = arith.negf %1649 : vector<8x32xf32>
    %1651 = math.exp %1650 : vector<8x32xf32>
    %cst_406 = arith.constant 1.000000e+00 : f32
    %1652 = vector.broadcast %cst_406 : f32 to vector<8x32xf32>
    %1653 = arith.addf %1652, %1651 : vector<8x32xf32>
    %1654 = arith.divf %1652, %1653 : vector<8x32xf32>
    %1655 = vector.extract_strided_slice %1646 {offsets = [0, 32], sizes = [8, 32], strides = [1, 1]} : vector<8x96xf32> to vector<8x32xf32>
    %1656 = vector.extract_strided_slice %1617 {offsets = [0, 32], sizes = [8, 32], strides = [1, 1]} : vector<8x96xf32> to vector<8x32xf32>
    %1657 = arith.addf %1655, %1656 : vector<8x32xf32>
    %1658 = arith.negf %1657 : vector<8x32xf32>
    %1659 = math.exp %1658 : vector<8x32xf32>
    %cst_407 = arith.constant 1.000000e+00 : f32
    %1660 = vector.broadcast %cst_407 : f32 to vector<8x32xf32>
    %1661 = arith.addf %1660, %1659 : vector<8x32xf32>
    %1662 = arith.divf %1660, %1661 : vector<8x32xf32>
    %1663 = vector.extract_strided_slice %1646 {offsets = [0, 64], sizes = [8, 32], strides = [1, 1]} : vector<8x96xf32> to vector<8x32xf32>
    %1664 = vector.extract_strided_slice %1617 {offsets = [0, 64], sizes = [8, 32], strides = [1, 1]} : vector<8x96xf32> to vector<8x32xf32>
    %1665 = arith.addf %1664, %971 : vector<8x32xf32>
    %1666 = arith.mulf %1654, %1665 : vector<8x32xf32>
    %1667 = arith.addf %1663, %1666 : vector<8x32xf32>
    %1668 = math.tanh %1667 : vector<8x32xf32>
    %cst_408 = arith.constant 1.000000e+00 : f32
    %1669 = vector.broadcast %cst_408 : f32 to vector<8x32xf32>
    %1670 = arith.subf %1669, %1662 : vector<8x32xf32>
    %1671 = arith.mulf %1670, %1668 : vector<8x32xf32>
    %1672 = arith.mulf %1662, %1613 : vector<8x32xf32>
    %1673 = arith.addf %1671, %1672 : vector<8x32xf32>
    %c0_409 = arith.constant 0 : index
    %c0_410 = arith.constant 0 : index
    %1674 = vector.load %arg14[%c0_409, %c0_410] : memref<1x64xf32, #tpu.memory_space<vmem>>, vector<1x64xf32>
    %1675 = tpu.concatenate %1015, %1673 in 1 : vector<8x32xf32>, vector<8x32xf32> -> vector<8x64xf32>
    %1676 = math.tanh %1675 : vector<8x64xf32>
    %1677 = vector.broadcast %1674 : vector<1x64xf32> to vector<8x64xf32>
    %1678 = arith.mulf %1676, %1677 : vector<8x64xf32>
    %cst_411 = arith.constant dense<0.000000e+00> : vector<8xf32>
    %1679 = vector.multi_reduction <add>, %1678, %cst_411 [1] : vector<8x64xf32> to vector<8xf32>
    %1680 = vector.shape_cast %1679 : vector<8xf32> to vector<8x1xf32>
    %1681 = tpu.concatenate %1135, %1613 in 1 : vector<8x32xf32>, vector<8x32xf32> -> vector<8x64xf32>
    %1682 = math.tanh %1681 : vector<8x64xf32>
    %1683 = vector.broadcast %1674 : vector<1x64xf32> to vector<8x64xf32>
    %1684 = arith.mulf %1682, %1683 : vector<8x64xf32>
    %cst_412 = arith.constant dense<0.000000e+00> : vector<8xf32>
    %1685 = vector.multi_reduction <add>, %1684, %cst_412 [1] : vector<8x64xf32> to vector<8xf32>
    %1686 = vector.shape_cast %1685 : vector<8xf32> to vector<8x1xf32>
    %1687 = tpu.concatenate %1225, %1523 in 1 : vector<8x32xf32>, vector<8x32xf32> -> vector<8x64xf32>
    %1688 = math.tanh %1687 : vector<8x64xf32>
    %1689 = vector.broadcast %1674 : vector<1x64xf32> to vector<8x64xf32>
    %1690 = arith.mulf %1688, %1689 : vector<8x64xf32>
    %cst_413 = arith.constant dense<0.000000e+00> : vector<8xf32>
    %1691 = vector.multi_reduction <add>, %1690, %cst_413 [1] : vector<8x64xf32> to vector<8xf32>
    %1692 = vector.shape_cast %1691 : vector<8xf32> to vector<8x1xf32>
    %1693 = tpu.concatenate %1315, %1433 in 1 : vector<8x32xf32>, vector<8x32xf32> -> vector<8x64xf32>
    %1694 = math.tanh %1693 : vector<8x64xf32>
    %1695 = vector.broadcast %1674 : vector<1x64xf32> to vector<8x64xf32>
    %1696 = arith.mulf %1694, %1695 : vector<8x64xf32>
    %cst_414 = arith.constant dense<0.000000e+00> : vector<8xf32>
    %1697 = vector.multi_reduction <add>, %1696, %cst_414 [1] : vector<8x64xf32> to vector<8xf32>
    %1698 = vector.shape_cast %1697 : vector<8xf32> to vector<8x1xf32>
    %1699 = tpu.concatenate %1405, %1343 in 1 : vector<8x32xf32>, vector<8x32xf32> -> vector<8x64xf32>
    %1700 = math.tanh %1699 : vector<8x64xf32>
    %1701 = vector.broadcast %1674 : vector<1x64xf32> to vector<8x64xf32>
    %1702 = arith.mulf %1700, %1701 : vector<8x64xf32>
    %cst_415 = arith.constant dense<0.000000e+00> : vector<8xf32>
    %1703 = vector.multi_reduction <add>, %1702, %cst_415 [1] : vector<8x64xf32> to vector<8xf32>
    %1704 = vector.shape_cast %1703 : vector<8xf32> to vector<8x1xf32>
    %1705 = tpu.concatenate %1495, %1253 in 1 : vector<8x32xf32>, vector<8x32xf32> -> vector<8x64xf32>
    %1706 = math.tanh %1705 : vector<8x64xf32>
    %1707 = vector.broadcast %1674 : vector<1x64xf32> to vector<8x64xf32>
    %1708 = arith.mulf %1706, %1707 : vector<8x64xf32>
    %cst_416 = arith.constant dense<0.000000e+00> : vector<8xf32>
    %1709 = vector.multi_reduction <add>, %1708, %cst_416 [1] : vector<8x64xf32> to vector<8xf32>
    %1710 = vector.shape_cast %1709 : vector<8xf32> to vector<8x1xf32>
    %1711 = tpu.concatenate %1585, %1163 in 1 : vector<8x32xf32>, vector<8x32xf32> -> vector<8x64xf32>
    %1712 = math.tanh %1711 : vector<8x64xf32>
    %1713 = vector.broadcast %1674 : vector<1x64xf32> to vector<8x64xf32>
    %1714 = arith.mulf %1712, %1713 : vector<8x64xf32>
    %cst_417 = arith.constant dense<0.000000e+00> : vector<8xf32>
    %1715 = vector.multi_reduction <add>, %1714, %cst_417 [1] : vector<8x64xf32> to vector<8xf32>
    %1716 = vector.shape_cast %1715 : vector<8xf32> to vector<8x1xf32>
    %1717 = tpu.concatenate %1645, %1043 in 1 : vector<8x32xf32>, vector<8x32xf32> -> vector<8x64xf32>
    %1718 = math.tanh %1717 : vector<8x64xf32>
    %1719 = vector.broadcast %1674 : vector<1x64xf32> to vector<8x64xf32>
    %1720 = arith.mulf %1718, %1719 : vector<8x64xf32>
    %cst_418 = arith.constant dense<0.000000e+00> : vector<8xf32>
    %1721 = vector.multi_reduction <add>, %1720, %cst_418 [1] : vector<8x64xf32> to vector<8xf32>
    %1722 = vector.shape_cast %1721 : vector<8xf32> to vector<8x1xf32>
    %1723 = tpu.concatenate %1680, %1686, %1692, %1698, %1704, %1710, %1716, %1722 in 1 : vector<8x1xf32>, vector<8x1xf32>, vector<8x1xf32>, vector<8x1xf32>, vector<8x1xf32>, vector<8x1xf32>, vector<8x1xf32>, vector<8x1xf32> -> vector<8x8xf32>
    %cst_419 = arith.constant dense<0xFF800000> : vector<8xf32>
    %1724 = vector.multi_reduction <maximumf>, %1723, %cst_419 [1] : vector<8x8xf32> to vector<8xf32>
    %1725 = vector.shape_cast %1724 : vector<8xf32> to vector<8x1xf32>
    %1726 = vector.broadcast %1725 : vector<8x1xf32> to vector<8x8xf32>
    %1727 = arith.subf %1723, %1726 : vector<8x8xf32>
    %1728 = math.exp %1727 : vector<8x8xf32>
    %cst_420 = arith.constant dense<0.000000e+00> : vector<8xf32>
    %1729 = vector.multi_reduction <add>, %1728, %cst_420 [1] : vector<8x8xf32> to vector<8xf32>
    %1730 = vector.shape_cast %1729 : vector<8xf32> to vector<8x1xf32>
    %1731 = vector.broadcast %1730 : vector<8x1xf32> to vector<8x8xf32>
    %1732 = arith.divf %1728, %1731 : vector<8x8xf32>
    %cst_421 = arith.constant 0.000000e+00 : f32
    %1733 = vector.broadcast %cst_421 : f32 to vector<8x64xf32>
    %1734 = vector.extract_strided_slice %1732 {offsets = [0, 0], sizes = [8, 1], strides = [1, 1]} : vector<8x8xf32> to vector<8x1xf32>
    %1735 = vector.broadcast %1734 : vector<8x1xf32> to vector<8x64xf32>
    %1736 = arith.mulf %1735, %1675 : vector<8x64xf32>
    %1737 = arith.addf %1733, %1736 : vector<8x64xf32>
    %1738 = vector.extract_strided_slice %1732 {offsets = [0, 1], sizes = [8, 1], strides = [1, 1]} : vector<8x8xf32> to vector<8x1xf32>
    %1739 = vector.broadcast %1738 : vector<8x1xf32> to vector<8x64xf32>
    %1740 = arith.mulf %1739, %1681 : vector<8x64xf32>
    %1741 = arith.addf %1737, %1740 : vector<8x64xf32>
    %1742 = vector.extract_strided_slice %1732 {offsets = [0, 2], sizes = [8, 1], strides = [1, 1]} : vector<8x8xf32> to vector<8x1xf32>
    %1743 = vector.broadcast %1742 : vector<8x1xf32> to vector<8x64xf32>
    %1744 = arith.mulf %1743, %1687 : vector<8x64xf32>
    %1745 = arith.addf %1741, %1744 : vector<8x64xf32>
    %1746 = vector.extract_strided_slice %1732 {offsets = [0, 3], sizes = [8, 1], strides = [1, 1]} : vector<8x8xf32> to vector<8x1xf32>
    %1747 = vector.broadcast %1746 : vector<8x1xf32> to vector<8x64xf32>
    %1748 = arith.mulf %1747, %1693 : vector<8x64xf32>
    %1749 = arith.addf %1745, %1748 : vector<8x64xf32>
    %1750 = vector.extract_strided_slice %1732 {offsets = [0, 4], sizes = [8, 1], strides = [1, 1]} : vector<8x8xf32> to vector<8x1xf32>
    %1751 = vector.broadcast %1750 : vector<8x1xf32> to vector<8x64xf32>
    %1752 = arith.mulf %1751, %1699 : vector<8x64xf32>
    %1753 = arith.addf %1749, %1752 : vector<8x64xf32>
    %1754 = vector.extract_strided_slice %1732 {offsets = [0, 5], sizes = [8, 1], strides = [1, 1]} : vector<8x8xf32> to vector<8x1xf32>
    %1755 = vector.broadcast %1754 : vector<8x1xf32> to vector<8x64xf32>
    %1756 = arith.mulf %1755, %1705 : vector<8x64xf32>
    %1757 = arith.addf %1753, %1756 : vector<8x64xf32>
    %1758 = vector.extract_strided_slice %1732 {offsets = [0, 6], sizes = [8, 1], strides = [1, 1]} : vector<8x8xf32> to vector<8x1xf32>
    %1759 = vector.broadcast %1758 : vector<8x1xf32> to vector<8x64xf32>
    %1760 = arith.mulf %1759, %1711 : vector<8x64xf32>
    %1761 = arith.addf %1757, %1760 : vector<8x64xf32>
    %1762 = vector.extract_strided_slice %1732 {offsets = [0, 7], sizes = [8, 1], strides = [1, 1]} : vector<8x8xf32> to vector<8x1xf32>
    %1763 = vector.broadcast %1762 : vector<8x1xf32> to vector<8x64xf32>
    %1764 = arith.mulf %1763, %1717 : vector<8x64xf32>
    %1765 = arith.addf %1761, %1764 : vector<8x64xf32>
    %cst_422 = arith.constant 0.000000e+00 : f32
    %1766 = vector.broadcast %cst_422 : f32 to vector<8x64xf32>
    %1767 = arith.maximumf %1765, %1766 : vector<8x64xf32>
    %c0_423 = arith.constant 0 : index
    %c0_424 = arith.constant 0 : index
    %1768 = vector.load %arg15[%c0_423, %c0_424] : memref<64x16xf32, #tpu.memory_space<vmem>>, vector<64x16xf32>
    %cst_425 = arith.constant dense<0.000000e+00> : vector<8x16xf32>
    %1769 = tpu.matmul %1767, %1768, %cst_425 {dimension_numbers = #tpu.dot_dimension_numbers<[1], [0], [0], [1], [0, 0, 1, 1], [], []>} : vector<8x64xf32>, vector<64x16xf32>, vector<8x16xf32> -> vector<8x16xf32>
    %c0_426 = arith.constant 0 : index
    %c0_427 = arith.constant 0 : index
    %1770 = vector.load %arg16[%c0_426, %c0_427] : memref<1x16xf32, #tpu.memory_space<vmem>>, vector<1x16xf32>
    %1771 = vector.broadcast %1770 : vector<1x16xf32> to vector<8x16xf32>
    %1772 = arith.addf %1769, %1771 : vector<8x16xf32>
    %1773 = tpu.concatenate %1553, %1103 in 1 : vector<8x16xf32>, vector<8x16xf32> -> vector<8x32xf32>
    %c0_428 = arith.constant 0 : index
    %c0_429 = arith.constant 0 : index
    %1774 = vector.load %arg17[%c0_428, %c0_429] : memref<32x32xf32, #tpu.memory_space<vmem>>, vector<32x32xf32>
    %cst_430 = arith.constant dense<0.000000e+00> : vector<8x32xf32>
    %1775 = tpu.matmul %1773, %1774, %cst_430 {dimension_numbers = #tpu.dot_dimension_numbers<[1], [0], [0], [1], [0, 0, 1, 1], [], []>} : vector<8x32xf32>, vector<32x32xf32>, vector<8x32xf32> -> vector<8x32xf32>
    %c0_431 = arith.constant 0 : index
    %c0_432 = arith.constant 0 : index
    %1776 = vector.load %arg18[%c0_431, %c0_432] : memref<1x32xf32, #tpu.memory_space<vmem>>, vector<1x32xf32>
    %1777 = vector.broadcast %1776 : vector<1x32xf32> to vector<8x32xf32>
    %1778 = arith.addf %1775, %1777 : vector<8x32xf32>
    %1779 = tpu.concatenate %1772, %1778 in 1 : vector<8x16xf32>, vector<8x32xf32> -> vector<8x48xf32>
    %c0_433 = arith.constant 0 : index
    %c0_434 = arith.constant 0 : index
    %1780 = vector.load %arg19[%c0_433, %c0_434] : memref<48x4xf32, #tpu.memory_space<vmem>>, vector<48x4xf32>
    %cst_435 = arith.constant dense<0.000000e+00> : vector<8x4xf32>
    %1781 = tpu.matmul %1779, %1780, %cst_435 {dimension_numbers = #tpu.dot_dimension_numbers<[1], [0], [0], [1], [0, 0, 1, 1], [], []>} : vector<8x48xf32>, vector<48x4xf32>, vector<8x4xf32> -> vector<8x4xf32>
    %c0_436 = arith.constant 0 : index
    %c0_437 = arith.constant 0 : index
    %1782 = vector.load %arg20[%c0_436, %c0_437] : memref<1x4xf32, #tpu.memory_space<vmem>>, vector<1x4xf32>
    %1783 = vector.broadcast %1782 : vector<1x4xf32> to vector<8x4xf32>
    %1784 = arith.addf %1781, %1783 : vector<8x4xf32>
    %c0_438 = arith.constant 0 : index
    %c0_439 = arith.constant 0 : index
    %1785 = vector.load %arg21[%c0_438, %c0_439] : memref<8x4xf32, #tpu.memory_space<vmem>>, vector<8x4xf32>
    tpu.vector_store %arg21[%c0_438, %c0_439], %1784 {strides = array<i32>} : memref<8x4xf32, #tpu.memory_space<vmem>>, vector<8x4xf32>,
    return
  }
}

</mosaic_0001>

<llo_original>
// kernel: model_forward.1
$region0: #{model_forward.1}
  #allocation0 [shape = 'u32[]', space=smem, size = 0x4, offset = 0x4, fixed_abs, tag = 'smem constant byte address 0x4 - core index']
  #allocation1 [shape = 'u32[144,128]{1,0:T(1,128)}', space=vmem, size = 0x12000, scoped, tag = 'internal scratch']
  #allocation2 [shape = 'f32[64,64]{1,0:T(8,128)}', space=vmem, size = 0x8000, scoped, tag = 'scratch operand']
  #allocation3 [shape = 'f32[48,32]{1,0:T(8,128)}', space=vmem, size = 0x6000, scoped, tag = 'scratch operand']
  %s0 = inlined_call_operand.vmem [shape: f32[16,8,96], index: 0, kind: input, shape index: {}]
  %s1 = inlined_call_operand.vmem [shape: f32[12,8,48], index: 1, kind: input, shape index: {}]
  %s2 = inlined_call_operand.vmem [shape: bf16[2,32,96], index: 2, kind: input, shape index: {}]
  %s3 = inlined_call_operand.vmem [shape: f32[2,1,32], index: 3, kind: input, shape index: {}]
  %s4 = inlined_call_operand.vmem [shape: bf16[2,16,48], index: 4, kind: input, shape index: {}]
  %s5 = inlined_call_operand.vmem [shape: f32[2,1,16], index: 5, kind: input, shape index: {}]
  %s6 = inlined_call_operand.vmem [shape: bf16[2,64,96], index: 6, kind: input, shape index: {}]
  %s7 = inlined_call_operand.vmem [shape: f32[2,1,96], index: 7, kind: input, shape index: {}]
  %s8 = inlined_call_operand.vmem [shape: bf16[2,32,96], index: 8, kind: input, shape index: {}]
  %s9 = inlined_call_operand.vmem [shape: f32[2,1,32], index: 9, kind: input, shape index: {}]
  %s10 = inlined_call_operand.vmem [shape: bf16[2,32,48], index: 10, kind: input, shape index: {}]
  %s11 = inlined_call_operand.vmem [shape: f32[2,1,48], index: 11, kind: input, shape index: {}]
  %s12 = inlined_call_operand.vmem [shape: bf16[2,16,48], index: 12, kind: input, shape index: {}]
  %s13 = inlined_call_operand.vmem [shape: f32[2,1,16], index: 13, kind: input, shape index: {}]
  %s14 = inlined_call_operand.vmem [shape: f32[1,64], index: 14, kind: input, shape index: {}]
  %s15 = inlined_call_operand.vmem [shape: f32[64,16], index: 15, kind: input, shape index: {}]
  %s16 = inlined_call_operand.vmem [shape: f32[1,16], index: 16, kind: input, shape index: {}]
  %s17 = inlined_call_operand.vmem [shape: f32[32,32], index: 17, kind: input, shape index: {}]
  %s18 = inlined_call_operand.vmem [shape: f32[1,32], index: 18, kind: input, shape index: {}]
  %s19 = inlined_call_operand.vmem [shape: f32[48,4], index: 19, kind: input, shape index: {}]
  %s20 = inlined_call_operand.vmem [shape: f32[1,4], index: 20, kind: input, shape index: {}]
  %s21 = inlined_call_operand.vmem [shape: f32[8,4], index: 21, kind: output, shape index: {}]
  %s22 = sld [smem:[#allocation0]]
  $region94: #{model_forward.1} parent=0
    _
  %s24 = ssub.s32 1, %s22
  %s25 = scalar_select 0, %s24, %s22
  // Predicated region
  $region2: #{model_forward.1} parent=0 // pred_check
    _
  $region3: #{model_forward.1} parent=0 // pred_check_branch
    %27 = sbr.rel (0) target = $region5
  $region4: #{model_forward.1} parent=0 // pred_region
    _
  $region5: #{model_forward.1} parent=0 // pred_fallthru
    _
  // Predicated region
  $region6: #{model_forward.1} parent=0 // pred_check
    _
  $region7: #{model_forward.1} parent=0 // pred_check_branch
    %29 = sbr.rel (0) target = $region9
  $region8: #{model_forward.1} parent=0 // pred_region
    _
  $region9: #{model_forward.1} parent=0 // pred_fallthru
    _
  // Predicated region
  $region10: #{model_forward.1} parent=0 // pred_check
    _
  $region11: #{model_forward.1} parent=0 // pred_check_branch
    %31 = sbr.rel (0) target = $region13
  $region12: #{model_forward.1} parent=0 // pred_region
    _
  $region13: #{model_forward.1} parent=0 // pred_fallthru
    _
  // Predicated region
  $region14: #{model_forward.1} parent=0 // pred_check
    _
  $region15: #{model_forward.1} parent=0 // pred_check_branch
    %33 = sbr.rel (0) target = $region17
  $region16: #{model_forward.1} parent=0 // pred_region
    _
  $region17: #{model_forward.1} parent=0 // pred_fallthru
    _
  // Predicated region
  $region18: #{model_forward.1} parent=0 // pred_check
    _
  $region19: #{model_forward.1} parent=0 // pred_check_branch
    %35 = sbr.rel (0) target = $region21
  $region20: #{model_forward.1} parent=0 // pred_region
    _
  $region21: #{model_forward.1} parent=0 // pred_fallthru
    _
  // Predicated region
  $region22: #{model_forward.1} parent=0 // pred_check
    _
  $region23: #{model_forward.1} parent=0 // pred_check_branch
    %37 = sbr.rel (0) target = $region25
  $region24: #{model_forward.1} parent=0 // pred_region
    _
  $region25: #{model_forward.1} parent=0 // pred_fallthru
    _
  // Predicated region
  $region26: #{model_forward.1} parent=0 // pred_check
    _
  $region27: #{model_forward.1} parent=0 // pred_check_branch
    %39 = sbr.rel (0) target = $region29
  $region28: #{model_forward.1} parent=0 // pred_region
    _
  $region29: #{model_forward.1} parent=0 // pred_fallthru
    _
  // Predicated region
  $region30: #{model_forward.1} parent=0 // pred_check
    _
  $region31: #{model_forward.1} parent=0 // pred_check_branch
    %41 = sbr.rel (0) target = $region33
  $region32: #{model_forward.1} parent=0 // pred_region
    _
  $region33: #{model_forward.1} parent=0 // pred_fallthru
    _
  // Predicated region
  $region34: #{model_forward.1} parent=0 // pred_check
    _
  $region35: #{model_forward.1} parent=0 // pred_check_branch
    %43 = sbr.rel (0) target = $region37
  $region36: #{model_forward.1} parent=0 // pred_region
    _
  $region37: #{model_forward.1} parent=0 // pred_fallthru
    _
  // Predicated region
  $region38: #{model_forward.1} parent=0 // pred_check
    _
  $region39: #{model_forward.1} parent=0 // pred_check_branch
    %45 = sbr.rel (0) target = $region41
  $region40: #{model_forward.1} parent=0 // pred_region
    _
  $region41: #{model_forward.1} parent=0 // pred_fallthru
    _
  // Predicated region
  $region42: #{model_forward.1} parent=0 // pred_check
    _
  $region43: #{model_forward.1} parent=0 // pred_check_branch
    %47 = sbr.rel (0) target = $region45
  $region44: #{model_forward.1} parent=0 // pred_region
    _
  $region45: #{model_forward.1} parent=0 // pred_fallthru
    _
  // Predicated region
  $region46: #{model_forward.1} parent=0 // pred_check
    _
  $region47: #{model_forward.1} parent=0 // pred_check_branch
    %49 = sbr.rel (0) target = $region49
  $region48: #{model_forward.1} parent=0 // pred_region
    _
  $region49: #{model_forward.1} parent=0 // pred_fallthru
    _
  // Predicated region
  $region50: #{model_forward.1} parent=0 // pred_check
    _
  $region51: #{model_forward.1} parent=0 // pred_check_branch
    %51 = sbr.rel (0) target = $region53
  $region52: #{model_forward.1} parent=0 // pred_region
    _
  $region53: #{model_forward.1} parent=0 // pred_fallthru
    _
  // Predicated region
  $region54: #{model_forward.1} parent=0 // pred_check
    _
  $region55: #{model_forward.1} parent=0 // pred_check_branch
    %53 = sbr.rel (0) target = $region57
  $region56: #{model_forward.1} parent=0 // pred_region
    _
  $region57: #{model_forward.1} parent=0 // pred_fallthru
    _
  // Predicated region
  $region58: #{model_forward.1} parent=0 // pred_check
    _
  $region59: #{model_forward.1} parent=0 // pred_check_branch
    %55 = sbr.rel (0) target = $region61
  $region60: #{model_forward.1} parent=0 // pred_region
    _
  $region61: #{model_forward.1} parent=0 // pred_fallthru
    _
  // Predicated region
  $region62: #{model_forward.1} parent=0 // pred_check
    _
  $region63: #{model_forward.1} parent=0 // pred_check_branch
    %57 = sbr.rel (0) target = $region65
  $region64: #{model_forward.1} parent=0 // pred_region
    _
  $region65: #{model_forward.1} parent=0 // pred_fallthru
    _
  // Predicated region
  $region66: #{model_forward.1} parent=0 // pred_check
    _
  $region67: #{model_forward.1} parent=0 // pred_check_branch
    %59 = sbr.rel (0) target = $region69
  $region68: #{model_forward.1} parent=0 // pred_region
    _
  $region69: #{model_forward.1} parent=0 // pred_fallthru
    _
  // Predicated region
  $region70: #{model_forward.1} parent=0 // pred_check
    _
  $region71: #{model_forward.1} parent=0 // pred_check_branch
    %61 = sbr.rel (0) target = $region73
  $region72: #{model_forward.1} parent=0 // pred_region
    _
  $region73: #{model_forward.1} parent=0 // pred_fallthru
    _
  // Predicated region
  $region74: #{model_forward.1} parent=0 // pred_check
    _
  $region75: #{model_forward.1} parent=0 // pred_check_branch
    %63 = sbr.rel (0) target = $region77
  $region76: #{model_forward.1} parent=0 // pred_region
    _
  $region77: #{model_forward.1} parent=0 // pred_fallthru
    _
  // Predicated region
  $region78: #{model_forward.1} parent=0 // pred_check
    _
  $region79: #{model_forward.1} parent=0 // pred_check_branch
    %65 = sbr.rel (0) target = $region81
  $region80: #{model_forward.1} parent=0 // pred_region
    _
  $region81: #{model_forward.1} parent=0 // pred_fallthru
    _
  // Predicated region
  $region82: #{model_forward.1} parent=0 // pred_check
    _
  $region83: #{model_forward.1} parent=0 // pred_check_branch
    %67 = sbr.rel (0) target = $region85
  $region84: #{model_forward.1} parent=0 // pred_region
    _
  $region85: #{model_forward.1} parent=0 // pred_fallthru
    _
  %v69 = vld [vmem:[%s2] sm:$0xf]
  %v70 = vld [vmem:[%s2 + $0x4] sm:$0xf]
  %v71 = vld [vmem:[%s2 + $0x8] sm:$0xf]
  %v72 = vld [vmem:[%s2 + $0xc] sm:$0xf]
  %s73 = scalar_lea.vmem %s2, 16
  %v74 = vld [vmem:[%s73] sm:$0xf]
  %v75 = vld [vmem:[%s73 + $0x4] sm:$0xf]
  %v76 = vld [vmem:[%s73 + $0x8] sm:$0xf]
  %v77 = vld [vmem:[%s73 + $0xc] sm:$0xf]
  %v78 = vld [vmem:[%s4] sm:$0xf]
  %v79 = vld [vmem:[%s4 + $0x4] sm:$0xf]
  %s80 = scalar_lea.vmem %s4, 8
  %v81 = vld [vmem:[%s80] sm:$0xf]
  %v82 = vld [vmem:[%s80 + $0x4] sm:$0xf]
  %v83 = vld [vmem:[%s3] sm:$0x1]
  %v85 = vlaneseq
  %v86 = vshrl.u32 %v85, 7
  %v87 = vsub.s32 0, %v86
  %v88 = vrot.slane %v83, %v87
  %s89 = scalar_lea.vmem %s3, 1
  %v90 = vld [vmem:[%s89] sm:$0x1]
  %v92 = vlaneseq
  %v93 = vshrl.u32 %v92, 7
  %v94 = vsub.s32 0, %v93
  %v95 = vrot.slane %v90, %v94
  %v96 = vld [vmem:[%s5] sm:$0x1]
  %v98 = vlaneseq
  %v99 = vshrl.u32 %v98, 7
  %v100 = vsub.s32 0, %v99
  %v101 = vrot.slane %v96, %v100
  %s102 = scalar_lea.vmem %s5, 1
  %v103 = vld [vmem:[%s102] sm:$0x1]
  %v105 = vlaneseq
  %v106 = vshrl.u32 %v105, 7
  %v107 = vsub.s32 0, %v106
  %v108 = vrot.slane %v103, %v107
  %v113 = vunpack.c.l.b16 %v69
  %v114 = vunpack.c.l.b16 %v70
  %v115 = vunpack.c.l.b16 %v71
  %v116 = vunpack.c.l.b16 %v72
  %v117 = vpack.c.b16 %v114, %v113
  %v118 = vpack.c.b16 %v116, %v115
  %vm121 = vcmask 261120
  %v123 = vsel %vm121, 0, 0
  %125 = vmatprep.subr.bf16.mxu0 0
  %126 = vmatpush1.bf16.msra.mxu0 %v117
  %127 = vmatprep.subr.bf16.mxu0 0
  %128 = vmatpush1.bf16.msra.mxu0 %v118
  %129 = vmatprep.subr.bf16.mxu0 0
  %130 = vmatpush1.bf16.msra.mxu0 0
  %131 = vmatprep.subr.bf16.mxu0 0
  %132 = vmatpush1.bf16.msra.mxu0 0
  %133 = vmatprep.subr.bf16.mxu0 0
  %134 = vmatpush1.bf16.msra.mxu0 0
  %135 = vmatprep.subr.bf16.mxu0 0
  %136 = vmatpush1.bf16.msra.mxu0 0
  %137 = vmatprep.subr.bf16.mxu0 0
  %138 = vmatpush1.bf16.msra.mxu0 0
  %139 = vmatprep.subr.bf16.mxu0 0
  %140 = vmatpush1.bf16.msra.mxu0 0
  %141 = vmatprep.subr.bf16.mxu0 0
  %142 = vmatpush1.bf16.msra.mxu0 0
  %143 = vmatprep.subr.bf16.mxu0 0
  %144 = vmatpush1.bf16.msra.mxu0 0
  %145 = vmatprep.subr.bf16.mxu0 0
  %146 = vmatpush1.bf16.msra.mxu0 0
  %147 = vmatprep.subr.bf16.mxu0 0
  %148 = vmatpush1.bf16.msra.mxu0 0
  %149 = vmatprep.subr.bf16.mxu0 0
  %150 = vmatpush1.bf16.msra.mxu0 0
  %151 = vmatprep.subr.bf16.mxu0 0
  %152 = vmatpush1.bf16.msra.mxu0 0
  %153 = vmatprep.subr.bf16.mxu0 0
  %154 = vmatpush1.bf16.msra.mxu0 0
  %155 = vmatprep.subr.bf16.mxu0 0
  %156 = vmatpush1.bf16.msra.mxu0 0
  %157 = vmatprep.mubr.bf16.mxu0 0
  %158 = vmatmul.mubr.bf16.gmra.mrb[0].mxu0 %v123
  %v159 = vpop.f32.mrb[0].mxu0
  %v160 = vadd.f32 0.0, %v159
  %v161 = vpop.f32.mrb[0].mxu0
  %v162 = vpop.f32.mrb[0].mxu0
  %v163 = vpop.f32.mrb[0].mxu0
  %164 = vdwg.mxu0
  %v169 = vunpack.c.l.b16 %v74
  %v170 = vunpack.c.l.b16 %v75
  %v171 = vunpack.c.l.b16 %v76
  %v172 = vunpack.c.l.b16 %v77
  %v173 = vpack.c.b16 %v170, %v169
  %v174 = vpack.c.b16 %v172, %v171
  %177 = vmatprep.subr.bf16.mxu0 0
  %178 = vmatpush1.bf16.msra.mxu0 %v173
  %179 = vmatprep.subr.bf16.mxu0 0
  %180 = vmatpush1.bf16.msra.mxu0 %v174
  %181 = vmatprep.subr.bf16.mxu0 0
  %182 = vmatpush1.bf16.msra.mxu0 0
  %183 = vmatprep.subr.bf16.mxu0 0
  %184 = vmatpush1.bf16.msra.mxu0 0
  %185 = vmatprep.subr.bf16.mxu0 0
  %186 = vmatpush1.bf16.msra.mxu0 0
  %187 = vmatprep.subr.bf16.mxu0 0
  %188 = vmatpush1.bf16.msra.mxu0 0
  %189 = vmatprep.subr.bf16.mxu0 0
  %190 = vmatpush1.bf16.msra.mxu0 0
  %191 = vmatprep.subr.bf16.mxu0 0
  %192 = vmatpush1.bf16.msra.mxu0 0
  %193 = vmatprep.subr.bf16.mxu0 0
  %194 = vmatpush1.bf16.msra.mxu0 0
  %195 = vmatprep.subr.bf16.mxu0 0
  %196 = vmatpush1.bf16.msra.mxu0 0
  %197 = vmatprep.subr.bf16.mxu0 0
  %198 = vmatpush1.bf16.msra.mxu0 0
  %199 = vmatprep.subr.bf16.mxu0 0
  %200 = vmatpush1.bf16.msra.mxu0 0
  %201 = vmatprep.subr.bf16.mxu0 0
  %202 = vmatpush1.bf16.msra.mxu0 0
  %203 = vmatprep.subr.bf16.mxu0 0
  %204 = vmatpush1.bf16.msra.mxu0 0
  %205 = vmatprep.subr.bf16.mxu0 0
  %206 = vmatpush1.bf16.msra.mxu0 0
  %207 = vmatprep.subr.bf16.mxu0 0
  %208 = vmatpush1.bf16.msra.mxu0 0
  %209 = vmatprep.mubr.bf16.mxu0 0
  %210 = vmatmul.mubr.bf16.gmra.mrb[0].mxu0 %v123
  %v211 = vpop.f32.mrb[0].mxu0
  %v212 = vadd.f32 0.0, %v211
  %v213 = vpop.f32.mrb[0].mxu0
  %v214 = vpop.f32.mrb[0].mxu0
  %v215 = vpop.f32.mrb[0].mxu0
  %216 = vdwg.mxu0
  %v217 = vld [vmem:[%s0] sm:$0xff]
  %v218 = vadd.f32 %v217, %v160
  %v219 = vxor.u32 %v218, 2147483648
  %v220 = vmul.f32 %v219, 1.442695
  %v221 = vpow.pop %v220
  %v222 = vadd.f32 %v221, 1.0
  %v223 = vrcp.pop %v222
  %v224 = vmul.f32 1.0, %v223
  %225 = vrot.lane.b32.xlu0 %v88, 64
  %v226 = vpop.permute.xlu0 %225
  %v228 = vadd.f32 %v160, %v226
  %230 = vrot.lane.b32.xlu0 %v228, 64
  %v231 = vpop.permute.xlu0 %230
  %v233 = vmul.f32 %v224, %v231
  %235 = vrot.lane.b32.xlu0 %v233, 64
  %v236 = vpop.permute.xlu0 %235
  %v238 = vadd.f32 %v217, %v236
  %v239 = vtanh.pop %v238
  %v240 = vsub.f32 1.0, %v224
  %242 = vrot.lane.b32.xlu0 %v239, 96
  %v243 = vpop.permute.xlu0 %242
  %v245 = vmul.f32 %v240, %v243
  %v246 = vmul.f32 %v224, 0.0
  %v247 = vadd.f32 %v245, %v246
  %s248 = scalar_lea.vmem %s0, 120
  %v249 = vld [vmem:[%s248] sm:$0xff]
  %v250 = vadd.f32 %v249, %v212
  %v251 = vxor.u32 %v250, 2147483648
  %v252 = vmul.f32 %v251, 1.442695
  %v253 = vpow.pop %v252
  %v254 = vadd.f32 %v253, 1.0
  %v255 = vrcp.pop %v254
  %v256 = vmul.f32 1.0, %v255
  %257 = vrot.lane.b32.xlu0 %v95, 64
  %v258 = vpop.permute.xlu0 %257
  %v260 = vadd.f32 %v212, %v258
  %262 = vrot.lane.b32.xlu0 %v260, 64
  %v263 = vpop.permute.xlu0 %262
  %v265 = vmul.f32 %v256, %v263
  %267 = vrot.lane.b32.xlu0 %v265, 64
  %v268 = vpop.permute.xlu0 %267
  %v270 = vadd.f32 %v249, %v268
  %v271 = vtanh.pop %v270
  %v272 = vsub.f32 1.0, %v256
  %274 = vrot.lane.b32.xlu0 %v271, 96
  %v275 = vpop.permute.xlu0 %274
  %v277 = vmul.f32 %v272, %v275
  %v278 = vmul.f32 %v256, 0.0
  %v279 = vadd.f32 %v277, %v278
  %281 = vrot.lane.b32.xlu0 %v247, 96
  %v282 = vpop.permute.xlu0 %281
  %284 = vst.msk [vmem:[#allocation2] sm:$0xff] %vm121, %v282
  %vm285 = vcmask 523520
  %286 = vst.msk [vmem:[#allocation2 + $0x38] sm:$0xff] %vm285, %v279
  %v289 = vunpack.c.l.b16 %v78
  %v290 = vunpack.c.l.b16 %v79
  %v291 = vpack.c.b16 %v290, %v289
  %vm293 = vcmask 130048
  %v294 = vsel %vm293, 0, 0
  %296 = vmatprep.subr.bf16.mxu0 0
  %297 = vmatpush1.bf16.msra.mxu0 %v291
  %298 = vmatprep.subr.bf16.mxu0 0
  %299 = vmatpush1.bf16.msra.mxu0 0
  %300 = vmatprep.subr.bf16.mxu0 0
  %301 = vmatpush1.bf16.msra.mxu0 0
  %302 = vmatprep.subr.bf16.mxu0 0
  %303 = vmatpush1.bf16.msra.mxu0 0
  %304 = vmatprep.subr.bf16.mxu0 0
  %305 = vmatpush1.bf16.msra.mxu0 0
  %306 = vmatprep.subr.bf16.mxu0 0
  %307 = vmatpush1.bf16.msra.mxu0 0
  %308 = vmatprep.subr.bf16.mxu0 0
  %309 = vmatpush1.bf16.msra.mxu0 0
  %310 = vmatprep.subr.bf16.mxu0 0
  %311 = vmatpush1.bf16.msra.mxu0 0
  %312 = vmatprep.subr.bf16.mxu0 0
  %313 = vmatpush1.bf16.msra.mxu0 0
  %314 = vmatprep.subr.bf16.mxu0 0
  %315 = vmatpush1.bf16.msra.mxu0 0
  %316 = vmatprep.subr.bf16.mxu0 0
  %317 = vmatpush1.bf16.msra.mxu0 0
  %318 = vmatprep.subr.bf16.mxu0 0
  %319 = vmatpush1.bf16.msra.mxu0 0
  %320 = vmatprep.subr.bf16.mxu0 0
  %321 = vmatpush1.bf16.msra.mxu0 0
  %322 = vmatprep.subr.bf16.mxu0 0
  %323 = vmatpush1.bf16.msra.mxu0 0
  %324 = vmatprep.subr.bf16.mxu0 0
  %325 = vmatpush1.bf16.msra.mxu0 0
  %326 = vmatprep.subr.bf16.mxu0 0
  %327 = vmatpush1.bf16.msra.mxu0 0
  %328 = vmatprep.mubr.bf16.mxu0 0
  %329 = vmatmul.mubr.bf16.gmra.mrb[0].mxu0 %v294
  %v330 = vpop.f32.mrb[0].mxu0
  %v331 = vadd.f32 0.0, %v330
  %v332 = vpop.f32.mrb[0].mxu0
  %v333 = vpop.f32.mrb[0].mxu0
  %v334 = vpop.f32.mrb[0].mxu0
  %335 = vdwg.mxu0
  %v338 = vunpack.c.l.b16 %v81
  %v339 = vunpack.c.l.b16 %v82
  %v340 = vpack.c.b16 %v339, %v338
  %342 = vmatprep.subr.bf16.mxu0 0
  %343 = vmatpush1.bf16.msra.mxu0 %v340
  %344 = vmatprep.subr.bf16.mxu0 0
  %345 = vmatpush1.bf16.msra.mxu0 0
  %346 = vmatprep.subr.bf16.mxu0 0
  %347 = vmatpush1.bf16.msra.mxu0 0
  %348 = vmatprep.subr.bf16.mxu0 0
  %349 = vmatpush1.bf16.msra.mxu0 0
  %350 = vmatprep.subr.bf16.mxu0 0
  %351 = vmatpush1.bf16.msra.mxu0 0
  %352 = vmatprep.subr.bf16.mxu0 0
  %353 = vmatpush1.bf16.msra.mxu0 0
  %354 = vmatprep.subr.bf16.mxu0 0
  %355 = vmatpush1.bf16.msra.mxu0 0
  %356 = vmatprep.subr.bf16.mxu0 0
  %357 = vmatpush1.bf16.msra.mxu0 0
  %358 = vmatprep.subr.bf16.mxu0 0
  %359 = vmatpush1.bf16.msra.mxu0 0
  %360 = vmatprep.subr.bf16.mxu0 0
  %361 = vmatpush1.bf16.msra.mxu0 0
  %362 = vmatprep.subr.bf16.mxu0 0
  %363 = vmatpush1.bf16.msra.mxu0 0
  %364 = vmatprep.subr.bf16.mxu0 0
  %365 = vmatpush1.bf16.msra.mxu0 0
  %366 = vmatprep.subr.bf16.mxu0 0
  %367 = vmatpush1.bf16.msra.mxu0 0
  %368 = vmatprep.subr.bf16.mxu0 0
  %369 = vmatpush1.bf16.msra.mxu0 0
  %370 = vmatprep.subr.bf16.mxu0 0
  %371 = vmatpush1.bf16.msra.mxu0 0
  %372 = vmatprep.subr.bf16.mxu0 0
  %373 = vmatpush1.bf16.msra.mxu0 0
  %374 = vmatprep.mubr.bf16.mxu0 0
  %375 = vmatmul.mubr.bf16.gmra.mrb[0].mxu0 %v294
  %v376 = vpop.f32.mrb[0].mxu0
  %v377 = vadd.f32 0.0, %v376
  %v378 = vpop.f32.mrb[0].mxu0
  %v379 = vpop.f32.mrb[0].mxu0
  %v380 = vpop.f32.mrb[0].mxu0
  %381 = vdwg.mxu0
  %v382 = vld [vmem:[%s1] sm:$0xff]
  %v383 = vadd.f32 %v382, %v331
  %v384 = vxor.u32 %v383, 2147483648
  %v385 = vmul.f32 %v384, 1.442695
  %v386 = vpow.pop %v385
  %v387 = vadd.f32 %v386, 1.0
  %v388 = vrcp.pop %v387
  %v389 = vmul.f32 1.0, %v388
  %390 = vrot.lane.b32.xlu0 %v101, 32
  %v391 = vpop.permute.xlu0 %390
  %v393 = vadd.f32 %v331, %v391
  %395 = vrot.lane.b32.xlu0 %v393, 96
  %v396 = vpop.permute.xlu0 %395
  %v398 = vmul.f32 %v389, %v396
  %400 = vrot.lane.b32.xlu0 %v398, 32
  %v401 = vpop.permute.xlu0 %400
  %v403 = vadd.f32 %v382, %v401
  %v404 = vtanh.pop %v403
  %v405 = vsub.f32 1.0, %v389
  %407 = vrot.lane.b32.xlu0 %v404, 112
  %v408 = vpop.permute.xlu0 %407
  %v410 = vmul.f32 %v405, %v408
  %v411 = vmul.f32 %v389, 0.0
  %v412 = vadd.f32 %v410, %v411
  %s413 = scalar_lea.vmem %s1, 88
  %v414 = vld [vmem:[%s413] sm:$0xff]
  %v415 = vadd.f32 %v414, %v377
  %v416 = vxor.u32 %v415, 2147483648
  %v417 = vmul.f32 %v416, 1.442695
  %v418 = vpow.pop %v417
  %v419 = vadd.f32 %v418, 1.0
  %v420 = vrcp.pop %v419
  %v421 = vmul.f32 1.0, %v420
  %422 = vrot.lane.b32.xlu0 %v108, 32
  %v423 = vpop.permute.xlu0 %422
  %v425 = vadd.f32 %v377, %v423
  %427 = vrot.lane.b32.xlu0 %v425, 96
  %v428 = vpop.permute.xlu0 %427
  %v430 = vmul.f32 %v421, %v428
  %432 = vrot.lane.b32.xlu0 %v430, 32
  %v433 = vpop.permute.xlu0 %432
  %v435 = vadd.f32 %v414, %v433
  %v436 = vtanh.pop %v435
  %v437 = vsub.f32 1.0, %v421
  %439 = vrot.lane.b32.xlu0 %v436, 112
  %v440 = vpop.permute.xlu0 %439
  %v442 = vmul.f32 %v437, %v440
  %v443 = vmul.f32 %v421, 0.0
  %v444 = vadd.f32 %v442, %v443
  %446 = vrot.lane.b32.xlu0 %v412, 112
  %v447 = vpop.permute.xlu0 %446
  %449 = vst.msk [vmem:[#allocation3] sm:$0xff] %vm293, %v447
  %vm450 = vcmask 261248
  %451 = vst.msk [vmem:[#allocation3 + $0x28] sm:$0xff] %vm450, %v444
  %v452 = vpack.c.bf16 %v247, %v247
  %454 = vrot.lane.b32.xlu0 %v452, 96
  %v455 = vpop.permute.xlu0 %454
  %v457 = vsel %vm121, %v455, 0
  %459 = vmatprep.subr.bf16.mxu0 0
  %460 = vmatpush1.bf16.msra.mxu0 %v117
  %461 = vmatprep.subr.bf16.mxu0 0
  %462 = vmatpush1.bf16.msra.mxu0 %v118
  %463 = vmatprep.subr.bf16.mxu0 0
  %464 = vmatpush1.bf16.msra.mxu0 0
  %465 = vmatprep.subr.bf16.mxu0 0
  %466 = vmatpush1.bf16.msra.mxu0 0
  %467 = vmatprep.subr.bf16.mxu0 0
  %468 = vmatpush1.bf16.msra.mxu0 0
  %469 = vmatprep.subr.bf16.mxu0 0
  %470 = vmatpush1.bf16.msra.mxu0 0
  %471 = vmatprep.subr.bf16.mxu0 0
  %472 = vmatpush1.bf16.msra.mxu0 0
  %473 = vmatprep.subr.bf16.mxu0 0
  %474 = vmatpush1.bf16.msra.mxu0 0
  %475 = vmatprep.subr.bf16.mxu0 0
  %476 = vmatpush1.bf16.msra.mxu0 0
  %477 = vmatprep.subr.bf16.mxu0 0
  %478 = vmatpush1.bf16.msra.mxu0 0
  %479 = vmatprep.subr.bf16.mxu0 0
  %480 = vmatpush1.bf16.msra.mxu0 0
  %481 = vmatprep.subr.bf16.mxu0 0
  %482 = vmatpush1.bf16.msra.mxu0 0
  %483 = vmatprep.subr.bf16.mxu0 0
  %484 = vmatpush1.bf16.msra.mxu0 0
  %485 = vmatprep.subr.bf16.mxu0 0
  %486 = vmatpush1.bf16.msra.mxu0 0
  %487 = vmatprep.subr.bf16.mxu0 0
  %488 = vmatpush1.bf16.msra.mxu0 0
  %489 = vmatprep.subr.bf16.mxu0 0
  %490 = vmatpush1.bf16.msra.mxu0 0
  %491 = vmatprep.mubr.bf16.mxu0 0
  %492 = vmatmul.mubr.bf16.gmra.mrb[0].mxu0 %v457
  %v493 = vpop.f32.mrb[0].mxu0
  %v494 = vadd.f32 0.0, %v493
  %v495 = vpop.f32.mrb[0].mxu0
  %v496 = vpop.f32.mrb[0].mxu0
  %v497 = vpop.f32.mrb[0].mxu0
  %498 = vdwg.mxu0
  %v499 = vpack.c.bf16 %v279, %v279
  %501 = vrot.lane.b32.xlu0 %v499, 96
  %v502 = vpop.permute.xlu0 %501
  %v504 = vsel %vm121, %v502, 0
  %506 = vmatprep.subr.bf16.mxu0 0
  %507 = vmatpush1.bf16.msra.mxu0 %v173
  %508 = vmatprep.subr.bf16.mxu0 0
  %509 = vmatpush1.bf16.msra.mxu0 %v174
  %510 = vmatprep.subr.bf16.mxu0 0
  %511 = vmatpush1.bf16.msra.mxu0 0
  %512 = vmatprep.subr.bf16.mxu0 0
  %513 = vmatpush1.bf16.msra.mxu0 0
  %514 = vmatprep.subr.bf16.mxu0 0
  %515 = vmatpush1.bf16.msra.mxu0 0
  %516 = vmatprep.subr.bf16.mxu0 0
  %517 = vmatpush1.bf16.msra.mxu0 0
  %518 = vmatprep.subr.bf16.mxu0 0
  %519 = vmatpush1.bf16.msra.mxu0 0
  %520 = vmatprep.subr.bf16.mxu0 0
  %521 = vmatpush1.bf16.msra.mxu0 0
  %522 = vmatprep.subr.bf16.mxu0 0
  %523 = vmatpush1.bf16.msra.mxu0 0
  %524 = vmatprep.subr.bf16.mxu0 0
  %525 = vmatpush1.bf16.msra.mxu0 0
  %526 = vmatprep.subr.bf16.mxu0 0
  %527 = vmatpush1.bf16.msra.mxu0 0
  %528 = vmatprep.subr.bf16.mxu0 0
  %529 = vmatpush1.bf16.msra.mxu0 0
  %530 = vmatprep.subr.bf16.mxu0 0
  %531 = vmatpush1.bf16.msra.mxu0 0
  %532 = vmatprep.subr.bf16.mxu0 0
  %533 = vmatpush1.bf16.msra.mxu0 0
  %534 = vmatprep.subr.bf16.mxu0 0
  %535 = vmatpush1.bf16.msra.mxu0 0
  %536 = vmatprep.subr.bf16.mxu0 0
  %537 = vmatpush1.bf16.msra.mxu0 0
  %538 = vmatprep.mubr.bf16.mxu0 0
  %539 = vmatmul.mubr.bf16.gmra.mrb[0].mxu0 %v504
  %v540 = vpop.f32.mrb[0].mxu0
  %v541 = vadd.f32 0.0, %v540
  %v542 = vpop.f32.mrb[0].mxu0
  %v543 = vpop.f32.mrb[0].mxu0
  %v544 = vpop.f32.mrb[0].mxu0
  %545 = vdwg.mxu0
  %s546 = scalar_lea.vmem %s0, 8
  %v547 = vld [vmem:[%s546] sm:$0xff]
  %v548 = vadd.f32 %v547, %v494
  %v549 = vxor.u32 %v548, 2147483648
  %v550 = vmul.f32 %v549, 1.442695
  %v551 = vpow.pop %v550
  %v552 = vadd.f32 %v551, 1.0
  %v553 = vrcp.pop %v552
  %v554 = vmul.f32 1.0, %v553
  %v555 = vadd.f32 %v494, %v226
  %557 = vrot.lane.b32.xlu0 %v555, 64
  %v558 = vpop.permute.xlu0 %557
  %v560 = vmul.f32 %v554, %v558
  %562 = vrot.lane.b32.xlu0 %v560, 64
  %v563 = vpop.permute.xlu0 %562
  %v565 = vadd.f32 %v547, %v563
  %v566 = vtanh.pop %v565
  %v567 = vsub.f32 1.0, %v554
  %569 = vrot.lane.b32.xlu0 %v566, 96
  %v570 = vpop.permute.xlu0 %569
  %v572 = vmul.f32 %v567, %v570
  %v573 = vmul.f32 %v554, %v247
  %v574 = vadd.f32 %v572, %v573
  %s575 = scalar_lea.vmem %s0, 112
  %v576 = vld [vmem:[%s575] sm:$0xff]
  %v577 = vadd.f32 %v576, %v541
  %v578 = vxor.u32 %v577, 2147483648
  %v579 = vmul.f32 %v578, 1.442695
  %v580 = vpow.pop %v579
  %v581 = vadd.f32 %v580, 1.0
  %v582 = vrcp.pop %v581
  %v583 = vmul.f32 1.0, %v582
  %v584 = vadd.f32 %v541, %v258
  %586 = vrot.lane.b32.xlu0 %v584, 64
  %v587 = vpop.permute.xlu0 %586
  %v589 = vmul.f32 %v583, %v587
  %591 = vrot.lane.b32.xlu0 %v589, 64
  %v592 = vpop.permute.xlu0 %591
  %v594 = vadd.f32 %v576, %v592
  %v595 = vtanh.pop %v594
  %v596 = vsub.f32 1.0, %v583
  %598 = vrot.lane.b32.xlu0 %v595, 96
  %v599 = vpop.permute.xlu0 %598
  %v601 = vmul.f32 %v596, %v599
  %v602 = vmul.f32 %v583, %v279
  %v603 = vadd.f32 %v601, %v602
  %605 = vrot.lane.b32.xlu0 %v574, 96
  %v606 = vpop.permute.xlu0 %605
  %608 = vst.msk [vmem:[#allocation2 + $0x8] sm:$0xff] %vm121, %v606
  %609 = vst.msk [vmem:[#allocation2 + $0x30] sm:$0xff] %vm285, %v603
  %v610 = vpack.c.bf16 %v412, %v412
  %612 = vrot.lane.b32.xlu0 %v610, 112
  %v613 = vpop.permute.xlu0 %612
  %v615 = vsel %vm293, %v613, 0
  %617 = vmatprep.subr.bf16.mxu0 0
  %618 = vmatpush1.bf16.msra.mxu0 %v291
  %619 = vmatprep.subr.bf16.mxu0 0
  %620 = vmatpush1.bf16.msra.mxu0 0
  %621 = vmatprep.subr.bf16.mxu0 0
  %622 = vmatpush1.bf16.msra.mxu0 0
  %623 = vmatprep.subr.bf16.mxu0 0
  %624 = vmatpush1.bf16.msra.mxu0 0
  %625 = vmatprep.subr.bf16.mxu0 0
  %626 = vmatpush1.bf16.msra.mxu0 0
  %627 = vmatprep.subr.bf16.mxu0 0
  %628 = vmatpush1.bf16.msra.mxu0 0
  %629 = vmatprep.subr.bf16.mxu0 0
  %630 = vmatpush1.bf16.msra.mxu0 0
  %631 = vmatprep.subr.bf16.mxu0 0
  %632 = vmatpush1.bf16.msra.mxu0 0
  %633 = vmatprep.subr.bf16.mxu0 0
  %634 = vmatpush1.bf16.msra.mxu0 0
  %635 = vmatprep.subr.bf16.mxu0 0
  %636 = vmatpush1.bf16.msra.mxu0 0
  %637 = vmatprep.subr.bf16.mxu0 0
  %638 = vmatpush1.bf16.msra.mxu0 0
  %639 = vmatprep.subr.bf16.mxu0 0
  %640 = vmatpush1.bf16.msra.mxu0 0
  %641 = vmatprep.subr.bf16.mxu0 0
  %642 = vmatpush1.bf16.msra.mxu0 0
  %643 = vmatprep.subr.bf16.mxu0 0
  %644 = vmatpush1.bf16.msra.mxu0 0
  %645 = vmatprep.subr.bf16.mxu0 0
  %646 = vmatpush1.bf16.msra.mxu0 0
  %647 = vmatprep.subr.bf16.mxu0 0
  %648 = vmatpush1.bf16.msra.mxu0 0
  %649 = vmatprep.mubr.bf16.mxu0 0
  %650 = vmatmul.mubr.bf16.gmra.mrb[0].mxu0 %v615
  %v651 = vpop.f32.mrb[0].mxu0
  %v652 = vadd.f32 0.0, %v651
  %v653 = vpop.f32.mrb[0].mxu0
  %v654 = vpop.f32.mrb[0].mxu0
  %v655 = vpop.f32.mrb[0].mxu0
  %656 = vdwg.mxu0
  %v657 = vpack.c.bf16 %v444, %v444
  %659 = vrot.lane.b32.xlu0 %v657, 112
  %v660 = vpop.permute.xlu0 %659
  %v662 = vsel %vm293, %v660, 0
  %664 = vmatprep.subr.bf16.mxu0 0
  %665 = vmatpush1.bf16.msra.mxu0 %v340
  %666 = vmatprep.subr.bf16.mxu0 0
  %667 = vmatpush1.bf16.msra.mxu0 0
  %668 = vmatprep.subr.bf16.mxu0 0
  %669 = vmatpush1.bf16.msra.mxu0 0
  %670 = vmatprep.subr.bf16.mxu0 0
  %671 = vmatpush1.bf16.msra.mxu0 0
  %672 = vmatprep.subr.bf16.mxu0 0
  %673 = vmatpush1.bf16.msra.mxu0 0
  %674 = vmatprep.subr.bf16.mxu0 0
  %675 = vmatpush1.bf16.msra.mxu0 0
  %676 = vmatprep.subr.bf16.mxu0 0
  %677 = vmatpush1.bf16.msra.mxu0 0
  %678 = vmatprep.subr.bf16.mxu0 0
  %679 = vmatpush1.bf16.msra.mxu0 0
  %680 = vmatprep.subr.bf16.mxu0 0
  %681 = vmatpush1.bf16.msra.mxu0 0
  %682 = vmatprep.subr.bf16.mxu0 0
  %683 = vmatpush1.bf16.msra.mxu0 0
  %684 = vmatprep.subr.bf16.mxu0 0
  %685 = vmatpush1.bf16.msra.mxu0 0
  %686 = vmatprep.subr.bf16.mxu0 0
  %687 = vmatpush1.bf16.msra.mxu0 0
  %688 = vmatprep.subr.bf16.mxu0 0
  %689 = vmatpush1.bf16.msra.mxu0 0
  %690 = vmatprep.subr.bf16.mxu0 0
  %691 = vmatpush1.bf16.msra.mxu0 0
  %692 = vmatprep.subr.bf16.mxu0 0
  %693 = vmatpush1.bf16.msra.mxu0 0
  %694 = vmatprep.subr.bf16.mxu0 0
  %695 = vmatpush1.bf16.msra.mxu0 0
  %696 = vmatprep.mubr.bf16.mxu0 0
  %697 = vmatmul.mubr.bf16.gmra.mrb[0].mxu0 %v662
  %v698 = vpop.f32.mrb[0].mxu0
  %v699 = vadd.f32 0.0, %v698
  %v700 = vpop.f32.mrb[0].mxu0
  %v701 = vpop.f32.mrb[0].mxu0
  %v702 = vpop.f32.mrb[0].mxu0
  %703 = vdwg.mxu0
  %s704 = scalar_lea.vmem %s1, 8
  %v705 = vld [vmem:[%s704] sm:$0xff]
  %v706 = vadd.f32 %v705, %v652
  %v707 = vxor.u32 %v706, 2147483648
  %v708 = vmul.f32 %v707, 1.442695
  %v709 = vpow.pop %v708
  %v710 = vadd.f32 %v709, 1.0
  %v711 = vrcp.pop %v710
  %v712 = vmul.f32 1.0, %v711
  %v713 = vadd.f32 %v652, %v391
  %715 = vrot.lane.b32.xlu0 %v713, 96
  %v716 = vpop.permute.xlu0 %715
  %v718 = vmul.f32 %v712, %v716
  %720 = vrot.lane.b32.xlu0 %v718, 32
  %v721 = vpop.permute.xlu0 %720
  %v723 = vadd.f32 %v705, %v721
  %v724 = vtanh.pop %v723
  %v725 = vsub.f32 1.0, %v712
  %727 = vrot.lane.b32.xlu0 %v724, 112
  %v728 = vpop.permute.xlu0 %727
  %v730 = vmul.f32 %v725, %v728
  %v731 = vmul.f32 %v712, %v412
  %v732 = vadd.f32 %v730, %v731
  %s733 = scalar_lea.vmem %s1, 80
  %v734 = vld [vmem:[%s733] sm:$0xff]
  %v735 = vadd.f32 %v734, %v699
  %v736 = vxor.u32 %v735, 2147483648
  %v737 = vmul.f32 %v736, 1.442695
  %v738 = vpow.pop %v737
  %v739 = vadd.f32 %v738, 1.0
  %v740 = vrcp.pop %v739
  %v741 = vmul.f32 1.0, %v740
  %v742 = vadd.f32 %v699, %v423
  %744 = vrot.lane.b32.xlu0 %v742, 96
  %v745 = vpop.permute.xlu0 %744
  %v747 = vmul.f32 %v741, %v745
  %749 = vrot.lane.b32.xlu0 %v747, 32
  %v750 = vpop.permute.xlu0 %749
  %v752 = vadd.f32 %v734, %v750
  %v753 = vtanh.pop %v752
  %v754 = vsub.f32 1.0, %v741
  %756 = vrot.lane.b32.xlu0 %v753, 112
  %v757 = vpop.permute.xlu0 %756
  %v759 = vmul.f32 %v754, %v757
  %v760 = vmul.f32 %v741, %v444
  %v761 = vadd.f32 %v759, %v760
  %763 = vrot.lane.b32.xlu0 %v732, 112
  %v764 = vpop.permute.xlu0 %763
  %766 = vst.msk [vmem:[#allocation3 + $0x8] sm:$0xff] %vm293, %v764
  %767 = vst.msk [vmem:[#allocation3 + $0x20] sm:$0xff] %vm450, %v761
  %v768 = vpack.c.bf16 %v574, %v574
  %770 = vrot.lane.b32.xlu0 %v768, 96
  %v771 = vpop.permute.xlu0 %770
  %v773 = vsel %vm121, %v771, 0
  %775 = vmatprep.subr.bf16.mxu0 0
  %776 = vmatpush1.bf16.msra.mxu0 %v117
  %777 = vmatprep.subr.bf16.mxu0 0
  %778 = vmatpush1.bf16.msra.mxu0 %v118
  %779 = vmatprep.subr.bf16.mxu0 0
  %780 = vmatpush1.bf16.msra.mxu0 0
  %781 = vmatprep.subr.bf16.mxu0 0
  %782 = vmatpush1.bf16.msra.mxu0 0
  %783 = vmatprep.subr.bf16.mxu0 0
  %784 = vmatpush1.bf16.msra.mxu0 0
  %785 = vmatprep.subr.bf16.mxu0 0
  %786 = vmatpush1.bf16.msra.mxu0 0
  %787 = vmatprep.subr.bf16.mxu0 0
  %788 = vmatpush1.bf16.msra.mxu0 0
  %789 = vmatprep.subr.bf16.mxu0 0
  %790 = vmatpush1.bf16.msra.mxu0 0
  %791 = vmatprep.subr.bf16.mxu0 0
  %792 = vmatpush1.bf16.msra.mxu0 0
  %793 = vmatprep.subr.bf16.mxu0 0
  %794 = vmatpush1.bf16.msra.mxu0 0
  %795 = vmatprep.subr.bf16.mxu0 0
  %796 = vmatpush1.bf16.msra.mxu0 0
  %797 = vmatprep.subr.bf16.mxu0 0
  %798 = vmatpush1.bf16.msra.mxu0 0
  %799 = vmatprep.subr.bf16.mxu0 0
  %800 = vmatpush1.bf16.msra.mxu0 0
  %801 = vmatprep.subr.bf16.mxu0 0
  %802 = vmatpush1.bf16.msra.mxu0 0
  %803 = vmatprep.subr.bf16.mxu0 0
  %804 = vmatpush1.bf16.msra.mxu0 0
  %805 = vmatprep.subr.bf16.mxu0 0
  %806 = vmatpush1.bf16.msra.mxu0 0
  %807 = vmatprep.mubr.bf16.mxu0 0
  %808 = vmatmul.mubr.bf16.gmra.mrb[0].mxu0 %v773
  %v809 = vpop.f32.mrb[0].mxu0
  %v810 = vadd.f32 0.0, %v809
  %v811 = vpop.f32.mrb[0].mxu0
  %v812 = vpop.f32.mrb[0].mxu0
  %v813 = vpop.f32.mrb[0].mxu0
  %814 = vdwg.mxu0
  %v815 = vpack.c.bf16 %v603, %v603
  %817 = vrot.lane.b32.xlu0 %v815, 96
  %v818 = vpop.permute.xlu0 %817
  %v820 = vsel %vm121, %v818, 0
  %822 = vmatprep.subr.bf16.mxu0 0
  %823 = vmatpush1.bf16.msra.mxu0 %v173
  %824 = vmatprep.subr.bf16.mxu0 0
  %825 = vmatpush1.bf16.msra.mxu0 %v174
  %826 = vmatprep.subr.bf16.mxu0 0
  %827 = vmatpush1.bf16.msra.mxu0 0
  %828 = vmatprep.subr.bf16.mxu0 0
  %829 = vmatpush1.bf16.msra.mxu0 0
  %830 = vmatprep.subr.bf16.mxu0 0
  %831 = vmatpush1.bf16.msra.mxu0 0
  %832 = vmatprep.subr.bf16.mxu0 0
  %833 = vmatpush1.bf16.msra.mxu0 0
  %834 = vmatprep.subr.bf16.mxu0 0
  %835 = vmatpush1.bf16.msra.mxu0 0
  %836 = vmatprep.subr.bf16.mxu0 0
  %837 = vmatpush1.bf16.msra.mxu0 0
  %838 = vmatprep.subr.bf16.mxu0 0
  %839 = vmatpush1.bf16.msra.mxu0 0
  %840 = vmatprep.subr.bf16.mxu0 0
  %841 = vmatpush1.bf16.msra.mxu0 0
  %842 = vmatprep.subr.bf16.mxu0 0
  %843 = vmatpush1.bf16.msra.mxu0 0
  %844 = vmatprep.subr.bf16.mxu0 0
  %845 = vmatpush1.bf16.msra.mxu0 0
  %846 = vmatprep.subr.bf16.mxu0 0
  %847 = vmatpush1.bf16.msra.mxu0 0
  %848 = vmatprep.subr.bf16.mxu0 0
  %849 = vmatpush1.bf16.msra.mxu0 0
  %850 = vmatprep.subr.bf16.mxu0 0
  %851 = vmatpush1.bf16.msra.mxu0 0
  %852 = vmatprep.subr.bf16.mxu0 0
  %853 = vmatpush1.bf16.msra.mxu0 0
  %854 = vmatprep.mubr.bf16.mxu0 0
  %855 = vmatmul.mubr.bf16.gmra.mrb[0].mxu0 %v820
  %v856 = vpop.f32.mrb[0].mxu0
  %v857 = vadd.f32 0.0, %v856
  %v858 = vpop.f32.mrb[0].mxu0
  %v859 = vpop.f32.mrb[0].mxu0
  %v860 = vpop.f32.mrb[0].mxu0
  %861 = vdwg.mxu0
  %s862 = scalar_lea.vmem %s0, 16
  %v863 = vld [vmem:[%s862] sm:$0xff]
  %v864 = vadd.f32 %v863, %v810
  %v865 = vxor.u32 %v864, 2147483648
  %v866 = vmul.f32 %v865, 1.442695
  %v867 = vpow.pop %v866
  %v868 = vadd.f32 %v867, 1.0
  %v869 = vrcp.pop %v868
  %v870 = vmul.f32 1.0, %v869
  %v871 = vadd.f32 %v810, %v226
  %873 = vrot.lane.b32.xlu0 %v871, 64
  %v874 = vpop.permute.xlu0 %873
  %v876 = vmul.f32 %v870, %v874
  %878 = vrot.lane.b32.xlu0 %v876, 64
  %v879 = vpop.permute.xlu0 %878
  %v881 = vadd.f32 %v863, %v879
  %v882 = vtanh.pop %v881
  %v883 = vsub.f32 1.0, %v870
  %885 = vrot.lane.b32.xlu0 %v882, 96
  %v886 = vpop.permute.xlu0 %885
  %v888 = vmul.f32 %v883, %v886
  %v889 = vmul.f32 %v870, %v574
  %v890 = vadd.f32 %v888, %v889
  %s891 = scalar_lea.vmem %s0, 104
  %v892 = vld [vmem:[%s891] sm:$0xff]
  %v893 = vadd.f32 %v892, %v857
  %v894 = vxor.u32 %v893, 2147483648
  %v895 = vmul.f32 %v894, 1.442695
  %v896 = vpow.pop %v895
  %v897 = vadd.f32 %v896, 1.0
  %v898 = vrcp.pop %v897
  %v899 = vmul.f32 1.0, %v898
  %v900 = vadd.f32 %v857, %v258
  %902 = vrot.lane.b32.xlu0 %v900, 64
  %v903 = vpop.permute.xlu0 %902
  %v905 = vmul.f32 %v899, %v903
  %907 = vrot.lane.b32.xlu0 %v905, 64
  %v908 = vpop.permute.xlu0 %907
  %v910 = vadd.f32 %v892, %v908
  %v911 = vtanh.pop %v910
  %v912 = vsub.f32 1.0, %v899
  %914 = vrot.lane.b32.xlu0 %v911, 96
  %v915 = vpop.permute.xlu0 %914
  %v917 = vmul.f32 %v912, %v915
  %v918 = vmul.f32 %v899, %v603
  %v919 = vadd.f32 %v917, %v918
  %921 = vrot.lane.b32.xlu0 %v890, 96
  %v922 = vpop.permute.xlu0 %921
  %924 = vst.msk [vmem:[#allocation2 + $0x10] sm:$0xff] %vm121, %v922
  %925 = vst.msk [vmem:[#allocation2 + $0x28] sm:$0xff] %vm285, %v919
  %v926 = vpack.c.bf16 %v732, %v732
  %928 = vrot.lane.b32.xlu0 %v926, 112
  %v929 = vpop.permute.xlu0 %928
  %v931 = vsel %vm293, %v929, 0
  %933 = vmatprep.subr.bf16.mxu0 0
  %934 = vmatpush1.bf16.msra.mxu0 %v291
  %935 = vmatprep.subr.bf16.mxu0 0
  %936 = vmatpush1.bf16.msra.mxu0 0
  %937 = vmatprep.subr.bf16.mxu0 0
  %938 = vmatpush1.bf16.msra.mxu0 0
  %939 = vmatprep.subr.bf16.mxu0 0
  %940 = vmatpush1.bf16.msra.mxu0 0
  %941 = vmatprep.subr.bf16.mxu0 0
  %942 = vmatpush1.bf16.msra.mxu0 0
  %943 = vmatprep.subr.bf16.mxu0 0
  %944 = vmatpush1.bf16.msra.mxu0 0
  %945 = vmatprep.subr.bf16.mxu0 0
  %946 = vmatpush1.bf16.msra.mxu0 0
  %947 = vmatprep.subr.bf16.mxu0 0
  %948 = vmatpush1.bf16.msra.mxu0 0
  %949 = vmatprep.subr.bf16.mxu0 0
  %950 = vmatpush1.bf16.msra.mxu0 0
  %951 = vmatprep.subr.bf16.mxu0 0
  %952 = vmatpush1.bf16.msra.mxu0 0
  %953 = vmatprep.subr.bf16.mxu0 0
  %954 = vmatpush1.bf16.msra.mxu0 0
  %955 = vmatprep.subr.bf16.mxu0 0
  %956 = vmatpush1.bf16.msra.mxu0 0
  %957 = vmatprep.subr.bf16.mxu0 0
  %958 = vmatpush1.bf16.msra.mxu0 0
  %959 = vmatprep.subr.bf16.mxu0 0
  %960 = vmatpush1.bf16.msra.mxu0 0
  %961 = vmatprep.subr.bf16.mxu0 0
  %962 = vmatpush1.bf16.msra.mxu0 0
  %963 = vmatprep.subr.bf16.mxu0 0
  %964 = vmatpush1.bf16.msra.mxu0 0
  %965 = vmatprep.mubr.bf16.mxu0 0
  %966 = vmatmul.mubr.bf16.gmra.mrb[0].mxu0 %v931
  %v967 = vpop.f32.mrb[0].mxu0
  %v968 = vadd.f32 0.0, %v967
  %v969 = vpop.f32.mrb[0].mxu0
  %v970 = vpop.f32.mrb[0].mxu0
  %v971 = vpop.f32.mrb[0].mxu0
  %972 = vdwg.mxu0
  %v973 = vpack.c.bf16 %v761, %v761
  %975 = vrot.lane.b32.xlu0 %v973, 112
  %v976 = vpop.permute.xlu0 %975
  %v978 = vsel %vm293, %v976, 0
  %980 = vmatprep.subr.bf16.mxu0 0
  %981 = vmatpush1.bf16.msra.mxu0 %v340
  %982 = vmatprep.subr.bf16.mxu0 0
  %983 = vmatpush1.bf16.msra.mxu0 0
  %984 = vmatprep.subr.bf16.mxu0 0
  %985 = vmatpush1.bf16.msra.mxu0 0
  %986 = vmatprep.subr.bf16.mxu0 0
  %987 = vmatpush1.bf16.msra.mxu0 0
  %988 = vmatprep.subr.bf16.mxu0 0
  %989 = vmatpush1.bf16.msra.mxu0 0
  %990 = vmatprep.subr.bf16.mxu0 0
  %991 = vmatpush1.bf16.msra.mxu0 0
  %992 = vmatprep.subr.bf16.mxu0 0
  %993 = vmatpush1.bf16.msra.mxu0 0
  %994 = vmatprep.subr.bf16.mxu0 0
  %995 = vmatpush1.bf16.msra.mxu0 0
  %996 = vmatprep.subr.bf16.mxu0 0
  %997 = vmatpush1.bf16.msra.mxu0 0
  %998 = vmatprep.subr.bf16.mxu0 0
  %999 = vmatpush1.bf16.msra.mxu0 0
  %1000 = vmatprep.subr.bf16.mxu0 0
  %1001 = vmatpush1.bf16.msra.mxu0 0
  %1002 = vmatprep.subr.bf16.mxu0 0
  %1003 = vmatpush1.bf16.msra.mxu0 0
  %1004 = vmatprep.subr.bf16.mxu0 0
  %1005 = vmatpush1.bf16.msra.mxu0 0
  %1006 = vmatprep.subr.bf16.mxu0 0
  %1007 = vmatpush1.bf16.msra.mxu0 0
  %1008 = vmatprep.subr.bf16.mxu0 0
  %1009 = vmatpush1.bf16.msra.mxu0 0
  %1010 = vmatprep.subr.bf16.mxu0 0
  %1011 = vmatpush1.bf16.msra.mxu0 0
  %1012 = vmatprep.mubr.bf16.mxu0 0
  %1013 = vmatmul.mubr.bf16.gmra.mrb[0].mxu0 %v978
  %v1014 = vpop.f32.mrb[0].mxu0
  %v1015 = vadd.f32 0.0, %v1014
  %v1016 = vpop.f32.mrb[0].mxu0
  %v1017 = vpop.f32.mrb[0].mxu0
  %v1018 = vpop.f32.mrb[0].mxu0
  %1019 = vdwg.mxu0
  %s1020 = scalar_lea.vmem %s1, 16
  %v1021 = vld [vmem:[%s1020] sm:$0xff]
  %v1022 = vadd.f32 %v1021, %v968
  %v1023 = vxor.u32 %v1022, 2147483648
  %v1024 = vmul.f32 %v1023, 1.442695
  %v1025 = vpow.pop %v1024
  %v1026 = vadd.f32 %v1025, 1.0
  %v1027 = vrcp.pop %v1026
  %v1028 = vmul.f32 1.0, %v1027
  %v1029 = vadd.f32 %v968, %v391
  %1031 = vrot.lane.b32.xlu0 %v1029, 96
  %v1032 = vpop.permute.xlu0 %1031
  %v1034 = vmul.f32 %v1028, %v1032
  %1036 = vrot.lane.b32.xlu0 %v1034, 32
  %v1037 = vpop.permute.xlu0 %1036
  %v1039 = vadd.f32 %v1021, %v1037
  %v1040 = vtanh.pop %v1039
  %v1041 = vsub.f32 1.0, %v1028
  %1043 = vrot.lane.b32.xlu0 %v1040, 112
  %v1044 = vpop.permute.xlu0 %1043
  %v1046 = vmul.f32 %v1041, %v1044
  %v1047 = vmul.f32 %v1028, %v732
  %v1048 = vadd.f32 %v1046, %v1047
  %s1049 = scalar_lea.vmem %s1, 72
  %v1050 = vld [vmem:[%s1049] sm:$0xff]
  %v1051 = vadd.f32 %v1050, %v1015
  %v1052 = vxor.u32 %v1051, 2147483648
  %v1053 = vmul.f32 %v1052, 1.442695
  %v1054 = vpow.pop %v1053
  %v1055 = vadd.f32 %v1054, 1.0
  %v1056 = vrcp.pop %v1055
  %v1057 = vmul.f32 1.0, %v1056
  %v1058 = vadd.f32 %v1015, %v423
  %1060 = vrot.lane.b32.xlu0 %v1058, 96
  %v1061 = vpop.permute.xlu0 %1060
  %v1063 = vmul.f32 %v1057, %v1061
  %1065 = vrot.lane.b32.xlu0 %v1063, 32
  %v1066 = vpop.permute.xlu0 %1065
  %v1068 = vadd.f32 %v1050, %v1066
  %v1069 = vtanh.pop %v1068
  %v1070 = vsub.f32 1.0, %v1057
  %1072 = vrot.lane.b32.xlu0 %v1069, 112
  %v1073 = vpop.permute.xlu0 %1072
  %v1075 = vmul.f32 %v1070, %v1073
  %v1076 = vmul.f32 %v1057, %v761
  %v1077 = vadd.f32 %v1075, %v1076
  %1079 = vrot.lane.b32.xlu0 %v1048, 112
  %v1080 = vpop.permute.xlu0 %1079
  %1082 = vst.msk [vmem:[#allocation3 + $0x10] sm:$0xff] %vm293, %v1080
  %1083 = vst.msk [vmem:[#allocation3 + $0x18] sm:$0xff] %vm450, %v1077
  %v1084 = vpack.c.bf16 %v890, %v890
  %1086 = vrot.lane.b32.xlu0 %v1084, 96
  %v1087 = vpop.permute.xlu0 %1086
  %v1089 = vsel %vm121, %v1087, 0
  %1091 = vmatprep.subr.bf16.mxu0 0
  %1092 = vmatpush1.bf16.msra.mxu0 %v117
  %1093 = vmatprep.subr.bf16.mxu0 0
  %1094 = vmatpush1.bf16.msra.mxu0 %v118
  %1095 = vmatprep.subr.bf16.mxu0 0
  %1096 = vmatpush1.bf16.msra.mxu0 0
  %1097 = vmatprep.subr.bf16.mxu0 0
  %1098 = vmatpush1.bf16.msra.mxu0 0
  %1099 = vmatprep.subr.bf16.mxu0 0
  %1100 = vmatpush1.bf16.msra.mxu0 0
  %1101 = vmatprep.subr.bf16.mxu0 0
  %1102 = vmatpush1.bf16.msra.mxu0 0
  %1103 = vmatprep.subr.bf16.mxu0 0
  %1104 = vmatpush1.bf16.msra.mxu0 0
  %1105 = vmatprep.subr.bf16.mxu0 0
  %1106 = vmatpush1.bf16.msra.mxu0 0
  %1107 = vmatprep.subr.bf16.mxu0 0
  %1108 = vmatpush1.bf16.msra.mxu0 0
  %1109 = vmatprep.subr.bf16.mxu0 0
  %1110 = vmatpush1.bf16.msra.mxu0 0
  %1111 = vmatprep.subr.bf16.mxu0 0
  %1112 = vmatpush1.bf16.msra.mxu0 0
  %1113 = vmatprep.subr.bf16.mxu0 0
  %1114 = vmatpush1.bf16.msra.mxu0 0
  %1115 = vmatprep.subr.bf16.mxu0 0
  %1116 = vmatpush1.bf16.msra.mxu0 0
  %1117 = vmatprep.subr.bf16.mxu0 0
  %1118 = vmatpush1.bf16.msra.mxu0 0
  %1119 = vmatprep.subr.bf16.mxu0 0
  %1120 = vmatpush1.bf16.msra.mxu0 0
  %1121 = vmatprep.subr.bf16.mxu0 0
  %1122 = vmatpush1.bf16.msra.mxu0 0
  %1123 = vmatprep.mubr.bf16.mxu0 0
  %1124 = vmatmul.mubr.bf16.gmra.mrb[0].mxu0 %v1089
  %v1125 = vpop.f32.mrb[0].mxu0
  %v1126 = vadd.f32 0.0, %v1125
  %v1127 = vpop.f32.mrb[0].mxu0
  %v1128 = vpop.f32.mrb[0].mxu0
  %v1129 = vpop.f32.mrb[0].mxu0
  %1130 = vdwg.mxu0
  %v1131 = vpack.c.bf16 %v919, %v919
  %1133 = vrot.lane.b32.xlu0 %v1131, 96
  %v1134 = vpop.permute.xlu0 %1133
  %v1136 = vsel %vm121, %v1134, 0
  %1138 = vmatprep.subr.bf16.mxu0 0
  %1139 = vmatpush1.bf16.msra.mxu0 %v173
  %1140 = vmatprep.subr.bf16.mxu0 0
  %1141 = vmatpush1.bf16.msra.mxu0 %v174
  %1142 = vmatprep.subr.bf16.mxu0 0
  %1143 = vmatpush1.bf16.msra.mxu0 0
  %1144 = vmatprep.subr.bf16.mxu0 0
  %1145 = vmatpush1.bf16.msra.mxu0 0
  %1146 = vmatprep.subr.bf16.mxu0 0
  %1147 = vmatpush1.bf16.msra.mxu0 0
  %1148 = vmatprep.subr.bf16.mxu0 0
  %1149 = vmatpush1.bf16.msra.mxu0 0
  %1150 = vmatprep.subr.bf16.mxu0 0
  %1151 = vmatpush1.bf16.msra.mxu0 0
  %1152 = vmatprep.subr.bf16.mxu0 0
  %1153 = vmatpush1.bf16.msra.mxu0 0
  %1154 = vmatprep.subr.bf16.mxu0 0
  %1155 = vmatpush1.bf16.msra.mxu0 0
  %1156 = vmatprep.subr.bf16.mxu0 0
  %1157 = vmatpush1.bf16.msra.mxu0 0
  %1158 = vmatprep.subr.bf16.mxu0 0
  %1159 = vmatpush1.bf16.msra.mxu0 0
  %1160 = vmatprep.subr.bf16.mxu0 0
  %1161 = vmatpush1.bf16.msra.mxu0 0
  %1162 = vmatprep.subr.bf16.mxu0 0
  %1163 = vmatpush1.bf16.msra.mxu0 0
  %1164 = vmatprep.subr.bf16.mxu0 0
  %1165 = vmatpush1.bf16.msra.mxu0 0
  %1166 = vmatprep.subr.bf16.mxu0 0
  %1167 = vmatpush1.bf16.msra.mxu0 0
  %1168 = vmatprep.subr.bf16.mxu0 0
  %1169 = vmatpush1.bf16.msra.mxu0 0
  %1170 = vmatprep.mubr.bf16.mxu0 0
  %1171 = vmatmul.mubr.bf16.gmra.mrb[0].mxu0 %v1136
  %v1172 = vpop.f32.mrb[0].mxu0
  %v1173 = vadd.f32 0.0, %v1172
  %v1174 = vpop.f32.mrb[0].mxu0
  %v1175 = vpop.f32.mrb[0].mxu0
  %v1176 = vpop.f32.mrb[0].mxu0
  %1177 = vdwg.mxu0
  %s1178 = scalar_lea.vmem %s0, 24
  %v1179 = vld [vmem:[%s1178] sm:$0xff]
  %v1180 = vadd.f32 %v1179, %v1126
  %v1181 = vxor.u32 %v1180, 2147483648
  %v1182 = vmul.f32 %v1181, 1.442695
  %v1183 = vpow.pop %v1182
  %v1184 = vadd.f32 %v1183, 1.0
  %v1185 = vrcp.pop %v1184
  %v1186 = vmul.f32 1.0, %v1185
  %v1187 = vadd.f32 %v1126, %v226
  %1189 = vrot.lane.b32.xlu0 %v1187, 64
  %v1190 = vpop.permute.xlu0 %1189
  %v1192 = vmul.f32 %v1186, %v1190
  %1194 = vrot.lane.b32.xlu0 %v1192, 64
  %v1195 = vpop.permute.xlu0 %1194
  %v1197 = vadd.f32 %v1179, %v1195
  %v1198 = vtanh.pop %v1197
  %v1199 = vsub.f32 1.0, %v1186
  %1201 = vrot.lane.b32.xlu0 %v1198, 96
  %v1202 = vpop.permute.xlu0 %1201
  %v1204 = vmul.f32 %v1199, %v1202
  %v1205 = vmul.f32 %v1186, %v890
  %v1206 = vadd.f32 %v1204, %v1205
  %s1207 = scalar_lea.vmem %s0, 96
  %v1208 = vld [vmem:[%s1207] sm:$0xff]
  %v1209 = vadd.f32 %v1208, %v1173
  %v1210 = vxor.u32 %v1209, 2147483648
  %v1211 = vmul.f32 %v1210, 1.442695
  %v1212 = vpow.pop %v1211
  %v1213 = vadd.f32 %v1212, 1.0
  %v1214 = vrcp.pop %v1213
  %v1215 = vmul.f32 1.0, %v1214
  %v1216 = vadd.f32 %v1173, %v258
  %1218 = vrot.lane.b32.xlu0 %v1216, 64
  %v1219 = vpop.permute.xlu0 %1218
  %v1221 = vmul.f32 %v1215, %v1219
  %1223 = vrot.lane.b32.xlu0 %v1221, 64
  %v1224 = vpop.permute.xlu0 %1223
  %v1226 = vadd.f32 %v1208, %v1224
  %v1227 = vtanh.pop %v1226
  %v1228 = vsub.f32 1.0, %v1215
  %1230 = vrot.lane.b32.xlu0 %v1227, 96
  %v1231 = vpop.permute.xlu0 %1230
  %v1233 = vmul.f32 %v1228, %v1231
  %v1234 = vmul.f32 %v1215, %v919
  %v1235 = vadd.f32 %v1233, %v1234
  %1237 = vrot.lane.b32.xlu0 %v1206, 96
  %v1238 = vpop.permute.xlu0 %1237
  %1240 = vst.msk [vmem:[#allocation2 + $0x18] sm:$0xff] %vm121, %v1238
  %1241 = vst.msk [vmem:[#allocation2 + $0x20] sm:$0xff] %vm285, %v1235
  %v1242 = vpack.c.bf16 %v1048, %v1048
  %1244 = vrot.lane.b32.xlu0 %v1242, 112
  %v1245 = vpop.permute.xlu0 %1244
  %v1247 = vsel %vm293, %v1245, 0
  %1249 = vmatprep.subr.bf16.mxu0 0
  %1250 = vmatpush1.bf16.msra.mxu0 %v291
  %1251 = vmatprep.subr.bf16.mxu0 0
  %1252 = vmatpush1.bf16.msra.mxu0 0
  %1253 = vmatprep.subr.bf16.mxu0 0
  %1254 = vmatpush1.bf16.msra.mxu0 0
  %1255 = vmatprep.subr.bf16.mxu0 0
  %1256 = vmatpush1.bf16.msra.mxu0 0
  %1257 = vmatprep.subr.bf16.mxu0 0
  %1258 = vmatpush1.bf16.msra.mxu0 0
  %1259 = vmatprep.subr.bf16.mxu0 0
  %1260 = vmatpush1.bf16.msra.mxu0 0
  %1261 = vmatprep.subr.bf16.mxu0 0
  %1262 = vmatpush1.bf16.msra.mxu0 0
  %1263 = vmatprep.subr.bf16.mxu0 0
  %1264 = vmatpush1.bf16.msra.mxu0 0
  %1265 = vmatprep.subr.bf16.mxu0 0
  %1266 = vmatpush1.bf16.msra.mxu0 0
  %1267 = vmatprep.subr.bf16.mxu0 0
  %1268 = vmatpush1.bf16.msra.mxu0 0
  %1269 = vmatprep.subr.bf16.mxu0 0
  %1270 = vmatpush1.bf16.msra.mxu0 0
  %1271 = vmatprep.subr.bf16.mxu0 0
  %1272 = vmatpush1.bf16.msra.mxu0 0
  %1273 = vmatprep.subr.bf16.mxu0 0
  %1274 = vmatpush1.bf16.msra.mxu0 0
  %1275 = vmatprep.subr.bf16.mxu0 0
  %1276 = vmatpush1.bf16.msra.mxu0 0
  %1277 = vmatprep.subr.bf16.mxu0 0
  %1278 = vmatpush1.bf16.msra.mxu0 0
  %1279 = vmatprep.subr.bf16.mxu0 0
  %1280 = vmatpush1.bf16.msra.mxu0 0
  %1281 = vmatprep.mubr.bf16.mxu0 0
  %1282 = vmatmul.mubr.bf16.gmra.mrb[0].mxu0 %v1247
  %v1283 = vpop.f32.mrb[0].mxu0
  %v1284 = vadd.f32 0.0, %v1283
  %v1285 = vpop.f32.mrb[0].mxu0
  %v1286 = vpop.f32.mrb[0].mxu0
  %v1287 = vpop.f32.mrb[0].mxu0
  %1288 = vdwg.mxu0
  %v1289 = vpack.c.bf16 %v1077, %v1077
  %1291 = vrot.lane.b32.xlu0 %v1289, 112
  %v1292 = vpop.permute.xlu0 %1291
  %v1294 = vsel %vm293, %v1292, 0
  %1296 = vmatprep.subr.bf16.mxu0 0
  %1297 = vmatpush1.bf16.msra.mxu0 %v340
  %1298 = vmatprep.subr.bf16.mxu0 0
  %1299 = vmatpush1.bf16.msra.mxu0 0
  %1300 = vmatprep.subr.bf16.mxu0 0
  %1301 = vmatpush1.bf16.msra.mxu0 0
  %1302 = vmatprep.subr.bf16.mxu0 0
  %1303 = vmatpush1.bf16.msra.mxu0 0
  %1304 = vmatprep.subr.bf16.mxu0 0
  %1305 = vmatpush1.bf16.msra.mxu0 0
  %1306 = vmatprep.subr.bf16.mxu0 0
  %1307 = vmatpush1.bf16.msra.mxu0 0
  %1308 = vmatprep.subr.bf16.mxu0 0
  %1309 = vmatpush1.bf16.msra.mxu0 0
  %1310 = vmatprep.subr.bf16.mxu0 0
  %1311 = vmatpush1.bf16.msra.mxu0 0
  %1312 = vmatprep.subr.bf16.mxu0 0
  %1313 = vmatpush1.bf16.msra.mxu0 0
  %1314 = vmatprep.subr.bf16.mxu0 0
  %1315 = vmatpush1.bf16.msra.mxu0 0
  %1316 = vmatprep.subr.bf16.mxu0 0
  %1317 = vmatpush1.bf16.msra.mxu0 0
  %1318 = vmatprep.subr.bf16.mxu0 0
  %1319 = vmatpush1.bf16.msra.mxu0 0
  %1320 = vmatprep.subr.bf16.mxu0 0
  %1321 = vmatpush1.bf16.msra.mxu0 0
  %1322 = vmatprep.subr.bf16.mxu0 0
  %1323 = vmatpush1.bf16.msra.mxu0 0
  %1324 = vmatprep.subr.bf16.mxu0 0
  %1325 = vmatpush1.bf16.msra.mxu0 0
  %1326 = vmatprep.subr.bf16.mxu0 0
  %1327 = vmatpush1.bf16.msra.mxu0 0
  %1328 = vmatprep.mubr.bf16.mxu0 0
  %1329 = vmatmul.mubr.bf16.gmra.mrb[0].mxu0 %v1294
  %v1330 = vpop.f32.mrb[0].mxu0
  %v1331 = vadd.f32 0.0, %v1330
  %v1332 = vpop.f32.mrb[0].mxu0
  %v1333 = vpop.f32.mrb[0].mxu0
  %v1334 = vpop.f32.mrb[0].mxu0
  %1335 = vdwg.mxu0
  %s1336 = scalar_lea.vmem %s1, 24
  %v1337 = vld [vmem:[%s1336] sm:$0xff]
  %v1338 = vadd.f32 %v1337, %v1284
  %v1339 = vxor.u32 %v1338, 2147483648
  %v1340 = vmul.f32 %v1339, 1.442695
  %v1341 = vpow.pop %v1340
  %v1342 = vadd.f32 %v1341, 1.0
  %v1343 = vrcp.pop %v1342
  %v1344 = vmul.f32 1.0, %v1343
  %v1345 = vadd.f32 %v1284, %v391
  %1347 = vrot.lane.b32.xlu0 %v1345, 96
  %v1348 = vpop.permute.xlu0 %1347
  %v1350 = vmul.f32 %v1344, %v1348
  %1352 = vrot.lane.b32.xlu0 %v1350, 32
  %v1353 = vpop.permute.xlu0 %1352
  %v1355 = vadd.f32 %v1337, %v1353
  %v1356 = vtanh.pop %v1355
  %v1357 = vsub.f32 1.0, %v1344
  %1359 = vrot.lane.b32.xlu0 %v1356, 112
  %v1360 = vpop.permute.xlu0 %1359
  %v1362 = vmul.f32 %v1357, %v1360
  %v1363 = vmul.f32 %v1344, %v1048
  %v1364 = vadd.f32 %v1362, %v1363
  %s1365 = scalar_lea.vmem %s1, 64
  %v1366 = vld [vmem:[%s1365] sm:$0xff]
  %v1367 = vadd.f32 %v1366, %v1331
  %v1368 = vxor.u32 %v1367, 2147483648
  %v1369 = vmul.f32 %v1368, 1.442695
  %v1370 = vpow.pop %v1369
  %v1371 = vadd.f32 %v1370, 1.0
  %v1372 = vrcp.pop %v1371
  %v1373 = vmul.f32 1.0, %v1372
  %v1374 = vadd.f32 %v1331, %v423
  %1376 = vrot.lane.b32.xlu0 %v1374, 96
  %v1377 = vpop.permute.xlu0 %1376
  %v1379 = vmul.f32 %v1373, %v1377
  %1381 = vrot.lane.b32.xlu0 %v1379, 32
  %v1382 = vpop.permute.xlu0 %1381
  %v1384 = vadd.f32 %v1366, %v1382
  %v1385 = vtanh.pop %v1384
  %v1386 = vsub.f32 1.0, %v1373
  %1388 = vrot.lane.b32.xlu0 %v1385, 112
  %v1389 = vpop.permute.xlu0 %1388
  %v1391 = vmul.f32 %v1386, %v1389
  %v1392 = vmul.f32 %v1373, %v1077
  %v1393 = vadd.f32 %v1391, %v1392
  %1395 = vrot.lane.b32.xlu0 %v1364, 112
  %v1396 = vpop.permute.xlu0 %1395
  %1398 = vst.msk [vmem:[#allocation3 + $0x18] sm:$0xff] %vm293, %v1396
  %1399 = vst.msk [vmem:[#allocation3 + $0x10] sm:$0xff] %vm450, %v1393
  %v1400 = vpack.c.bf16 %v1206, %v1206
  %1402 = vrot.lane.b32.xlu0 %v1400, 96
  %v1403 = vpop.permute.xlu0 %1402
  %v1405 = vsel %vm121, %v1403, 0
  %1407 = vmatprep.subr.bf16.mxu0 0
  %1408 = vmatpush1.bf16.msra.mxu0 %v117
  %1409 = vmatprep.subr.bf16.mxu0 0
  %1410 = vmatpush1.bf16.msra.mxu0 %v118
  %1411 = vmatprep.subr.bf16.mxu0 0
  %1412 = vmatpush1.bf16.msra.mxu0 0
  %1413 = vmatprep.subr.bf16.mxu0 0
  %1414 = vmatpush1.bf16.msra.mxu0 0
  %1415 = vmatprep.subr.bf16.mxu0 0
  %1416 = vmatpush1.bf16.msra.mxu0 0
  %1417 = vmatprep.subr.bf16.mxu0 0
  %1418 = vmatpush1.bf16.msra.mxu0 0
  %1419 = vmatprep.subr.bf16.mxu0 0
  %1420 = vmatpush1.bf16.msra.mxu0 0
  %1421 = vmatprep.subr.bf16.mxu0 0
  %1422 = vmatpush1.bf16.msra.mxu0 0
  %1423 = vmatprep.subr.bf16.mxu0 0
  %1424 = vmatpush1.bf16.msra.mxu0 0
  %1425 = vmatprep.subr.bf16.mxu0 0
  %1426 = vmatpush1.bf16.msra.mxu0 0
  %1427 = vmatprep.subr.bf16.mxu0 0
  %1428 = vmatpush1.bf16.msra.mxu0 0
  %1429 = vmatprep.subr.bf16.mxu0 0
  %1430 = vmatpush1.bf16.msra.mxu0 0
  %1431 = vmatprep.subr.bf16.mxu0 0
  %1432 = vmatpush1.bf16.msra.mxu0 0
  %1433 = vmatprep.subr.bf16.mxu0 0
  %1434 = vmatpush1.bf16.msra.mxu0 0
  %1435 = vmatprep.subr.bf16.mxu0 0
  %1436 = vmatpush1.bf16.msra.mxu0 0
  %1437 = vmatprep.subr.bf16.mxu0 0
  %1438 = vmatpush1.bf16.msra.mxu0 0
  %1439 = vmatprep.mubr.bf16.mxu0 0
  %1440 = vmatmul.mubr.bf16.gmra.mrb[0].mxu0 %v1405
  %v1441 = vpop.f32.mrb[0].mxu0
  %v1442 = vadd.f32 0.0, %v1441
  %v1443 = vpop.f32.mrb[0].mxu0
  %v1444 = vpop.f32.mrb[0].mxu0
  %v1445 = vpop.f32.mrb[0].mxu0
  %1446 = vdwg.mxu0
  %v1447 = vpack.c.bf16 %v1235, %v1235
  %1449 = vrot.lane.b32.xlu0 %v1447, 96
  %v1450 = vpop.permute.xlu0 %1449
  %v1452 = vsel %vm121, %v1450, 0
  %1454 = vmatprep.subr.bf16.mxu0 0
  %1455 = vmatpush1.bf16.msra.mxu0 %v173
  %1456 = vmatprep.subr.bf16.mxu0 0
  %1457 = vmatpush1.bf16.msra.mxu0 %v174
  %1458 = vmatprep.subr.bf16.mxu0 0
  %1459 = vmatpush1.bf16.msra.mxu0 0
  %1460 = vmatprep.subr.bf16.mxu0 0
  %1461 = vmatpush1.bf16.msra.mxu0 0
  %1462 = vmatprep.subr.bf16.mxu0 0
  %1463 = vmatpush1.bf16.msra.mxu0 0
  %1464 = vmatprep.subr.bf16.mxu0 0
  %1465 = vmatpush1.bf16.msra.mxu0 0
  %1466 = vmatprep.subr.bf16.mxu0 0
  %1467 = vmatpush1.bf16.msra.mxu0 0
  %1468 = vmatprep.subr.bf16.mxu0 0
  %1469 = vmatpush1.bf16.msra.mxu0 0
  %1470 = vmatprep.subr.bf16.mxu0 0
  %1471 = vmatpush1.bf16.msra.mxu0 0
  %1472 = vmatprep.subr.bf16.mxu0 0
  %1473 = vmatpush1.bf16.msra.mxu0 0
  %1474 = vmatprep.subr.bf16.mxu0 0
  %1475 = vmatpush1.bf16.msra.mxu0 0
  %1476 = vmatprep.subr.bf16.mxu0 0
  %1477 = vmatpush1.bf16.msra.mxu0 0
  %1478 = vmatprep.subr.bf16.mxu0 0
  %1479 = vmatpush1.bf16.msra.mxu0 0
  %1480 = vmatprep.subr.bf16.mxu0 0
  %1481 = vmatpush1.bf16.msra.mxu0 0
  %1482 = vmatprep.subr.bf16.mxu0 0
  %1483 = vmatpush1.bf16.msra.mxu0 0
  %1484 = vmatprep.subr.bf16.mxu0 0
  %1485 = vmatpush1.bf16.msra.mxu0 0
  %1486 = vmatprep.mubr.bf16.mxu0 0
  %1487 = vmatmul.mubr.bf16.gmra.mrb[0].mxu0 %v1452
  %v1488 = vpop.f32.mrb[0].mxu0
  %v1489 = vadd.f32 0.0, %v1488
  %v1490 = vpop.f32.mrb[0].mxu0
  %v1491 = vpop.f32.mrb[0].mxu0
  %v1492 = vpop.f32.mrb[0].mxu0
  %1493 = vdwg.mxu0
  %s1494 = scalar_lea.vmem %s0, 32
  %v1495 = vld [vmem:[%s1494] sm:$0xff]
  %v1496 = vadd.f32 %v1495, %v1442
  %v1497 = vxor.u32 %v1496, 2147483648
  %v1498 = vmul.f32 %v1497, 1.442695
  %v1499 = vpow.pop %v1498
  %v1500 = vadd.f32 %v1499, 1.0
  %v1501 = vrcp.pop %v1500
  %v1502 = vmul.f32 1.0, %v1501
  %v1503 = vadd.f32 %v1442, %v226
  %1505 = vrot.lane.b32.xlu0 %v1503, 64
  %v1506 = vpop.permute.xlu0 %1505
  %v1508 = vmul.f32 %v1502, %v1506
  %1510 = vrot.lane.b32.xlu0 %v1508, 64
  %v1511 = vpop.permute.xlu0 %1510
  %v1513 = vadd.f32 %v1495, %v1511
  %v1514 = vtanh.pop %v1513
  %v1515 = vsub.f32 1.0, %v1502
  %1517 = vrot.lane.b32.xlu0 %v1514, 96
  %v1518 = vpop.permute.xlu0 %1517
  %v1520 = vmul.f32 %v1515, %v1518
  %v1521 = vmul.f32 %v1502, %v1206
  %v1522 = vadd.f32 %v1520, %v1521
  %s1523 = scalar_lea.vmem %s0, 88
  %v1524 = vld [vmem:[%s1523] sm:$0xff]
  %v1525 = vadd.f32 %v1524, %v1489
  %v1526 = vxor.u32 %v1525, 2147483648
  %v1527 = vmul.f32 %v1526, 1.442695
  %v1528 = vpow.pop %v1527
  %v1529 = vadd.f32 %v1528, 1.0
  %v1530 = vrcp.pop %v1529
  %v1531 = vmul.f32 1.0, %v1530
  %v1532 = vadd.f32 %v1489, %v258
  %1534 = vrot.lane.b32.xlu0 %v1532, 64
  %v1535 = vpop.permute.xlu0 %1534
  %v1537 = vmul.f32 %v1531, %v1535
  %1539 = vrot.lane.b32.xlu0 %v1537, 64
  %v1540 = vpop.permute.xlu0 %1539
  %v1542 = vadd.f32 %v1524, %v1540
  %v1543 = vtanh.pop %v1542
  %v1544 = vsub.f32 1.0, %v1531
  %1546 = vrot.lane.b32.xlu0 %v1543, 96
  %v1547 = vpop.permute.xlu0 %1546
  %v1549 = vmul.f32 %v1544, %v1547
  %v1550 = vmul.f32 %v1531, %v1235
  %v1551 = vadd.f32 %v1549, %v1550
  %1553 = vrot.lane.b32.xlu0 %v1522, 96
  %v1554 = vpop.permute.xlu0 %1553
  %1556 = vst.msk [vmem:[#allocation2 + $0x20] sm:$0xff] %vm121, %v1554
  %1557 = vst.msk [vmem:[#allocation2 + $0x18] sm:$0xff] %vm285, %v1551
  %v1558 = vpack.c.bf16 %v1364, %v1364
  %1560 = vrot.lane.b32.xlu0 %v1558, 112
  %v1561 = vpop.permute.xlu0 %1560
  %v1563 = vsel %vm293, %v1561, 0
  %1565 = vmatprep.subr.bf16.mxu0 0
  %1566 = vmatpush1.bf16.msra.mxu0 %v291
  %1567 = vmatprep.subr.bf16.mxu0 0
  %1568 = vmatpush1.bf16.msra.mxu0 0
  %1569 = vmatprep.subr.bf16.mxu0 0
  %1570 = vmatpush1.bf16.msra.mxu0 0
  %1571 = vmatprep.subr.bf16.mxu0 0
  %1572 = vmatpush1.bf16.msra.mxu0 0
  %1573 = vmatprep.subr.bf16.mxu0 0
  %1574 = vmatpush1.bf16.msra.mxu0 0
  %1575 = vmatprep.subr.bf16.mxu0 0
  %1576 = vmatpush1.bf16.msra.mxu0 0
  %1577 = vmatprep.subr.bf16.mxu0 0
  %1578 = vmatpush1.bf16.msra.mxu0 0
  %1579 = vmatprep.subr.bf16.mxu0 0
  %1580 = vmatpush1.bf16.msra.mxu0 0
  %1581 = vmatprep.subr.bf16.mxu0 0
  %1582 = vmatpush1.bf16.msra.mxu0 0
  %1583 = vmatprep.subr.bf16.mxu0 0
  %1584 = vmatpush1.bf16.msra.mxu0 0
  %1585 = vmatprep.subr.bf16.mxu0 0
  %1586 = vmatpush1.bf16.msra.mxu0 0
  %1587 = vmatprep.subr.bf16.mxu0 0
  %1588 = vmatpush1.bf16.msra.mxu0 0
  %1589 = vmatprep.subr.bf16.mxu0 0
  %1590 = vmatpush1.bf16.msra.mxu0 0
  %1591 = vmatprep.subr.bf16.mxu0 0
  %1592 = vmatpush1.bf16.msra.mxu0 0
  %1593 = vmatprep.subr.bf16.mxu0 0
  %1594 = vmatpush1.bf16.msra.mxu0 0
  %1595 = vmatprep.subr.bf16.mxu0 0
  %1596 = vmatpush1.bf16.msra.mxu0 0
  %1597 = vmatprep.mubr.bf16.mxu0 0
  %1598 = vmatmul.mubr.bf16.gmra.mrb[0].mxu0 %v1563
  %v1599 = vpop.f32.mrb[0].mxu0
  %v1600 = vadd.f32 0.0, %v1599
  %v1601 = vpop.f32.mrb[0].mxu0
  %v1602 = vpop.f32.mrb[0].mxu0
  %v1603 = vpop.f32.mrb[0].mxu0
  %1604 = vdwg.mxu0
  %v1605 = vpack.c.bf16 %v1393, %v1393
  %1607 = vrot.lane.b32.xlu0 %v1605, 112
  %v1608 = vpop.permute.xlu0 %1607
  %v1610 = vsel %vm293, %v1608, 0
  %1612 = vmatprep.subr.bf16.mxu0 0
  %1613 = vmatpush1.bf16.msra.mxu0 %v340
  %1614 = vmatprep.subr.bf16.mxu0 0
  %1615 = vmatpush1.bf16.msra.mxu0 0
  %1616 = vmatprep.subr.bf16.mxu0 0
  %1617 = vmatpush1.bf16.msra.mxu0 0
  %1618 = vmatprep.subr.bf16.mxu0 0
  %1619 = vmatpush1.bf16.msra.mxu0 0
  %1620 = vmatprep.subr.bf16.mxu0 0
  %1621 = vmatpush1.bf16.msra.mxu0 0
  %1622 = vmatprep.subr.bf16.mxu0 0
  %1623 = vmatpush1.bf16.msra.mxu0 0
  %1624 = vmatprep.subr.bf16.mxu0 0
  %1625 = vmatpush1.bf16.msra.mxu0 0
  %1626 = vmatprep.subr.bf16.mxu0 0
  %1627 = vmatpush1.bf16.msra.mxu0 0
  %1628 = vmatprep.subr.bf16.mxu0 0
  %1629 = vmatpush1.bf16.msra.mxu0 0
  %1630 = vmatprep.subr.bf16.mxu0 0
  %1631 = vmatpush1.bf16.msra.mxu0 0
  %1632 = vmatprep.subr.bf16.mxu0 0
  %1633 = vmatpush1.bf16.msra.mxu0 0
  %1634 = vmatprep.subr.bf16.mxu0 0
  %1635 = vmatpush1.bf16.msra.mxu0 0
  %1636 = vmatprep.subr.bf16.mxu0 0
  %1637 = vmatpush1.bf16.msra.mxu0 0
  %1638 = vmatprep.subr.bf16.mxu0 0
  %1639 = vmatpush1.bf16.msra.mxu0 0
  %1640 = vmatprep.subr.bf16.mxu0 0
  %1641 = vmatpush1.bf16.msra.mxu0 0
  %1642 = vmatprep.subr.bf16.mxu0 0
  %1643 = vmatpush1.bf16.msra.mxu0 0
  %1644 = vmatprep.mubr.bf16.mxu0 0
  %1645 = vmatmul.mubr.bf16.gmra.mrb[0].mxu0 %v1610
  %v1646 = vpop.f32.mrb[0].mxu0
  %v1647 = vadd.f32 0.0, %v1646
  %v1648 = vpop.f32.mrb[0].mxu0
  %v1649 = vpop.f32.mrb[0].mxu0
  %v1650 = vpop.f32.mrb[0].mxu0
  %1651 = vdwg.mxu0
  %s1652 = scalar_lea.vmem %s1, 32
  %v1653 = vld [vmem:[%s1652] sm:$0xff]
  %v1654 = vadd.f32 %v1653, %v1600
  %v1655 = vxor.u32 %v1654, 2147483648
  %v1656 = vmul.f32 %v1655, 1.442695
  %v1657 = vpow.pop %v1656
  %v1658 = vadd.f32 %v1657, 1.0
  %v1659 = vrcp.pop %v1658
  %v1660 = vmul.f32 1.0, %v1659
  %v1661 = vadd.f32 %v1600, %v391
  %1663 = vrot.lane.b32.xlu0 %v1661, 96
  %v1664 = vpop.permute.xlu0 %1663
  %v1666 = vmul.f32 %v1660, %v1664
  %1668 = vrot.lane.b32.xlu0 %v1666, 32
  %v1669 = vpop.permute.xlu0 %1668
  %v1671 = vadd.f32 %v1653, %v1669
  %v1672 = vtanh.pop %v1671
  %v1673 = vsub.f32 1.0, %v1660
  %1675 = vrot.lane.b32.xlu0 %v1672, 112
  %v1676 = vpop.permute.xlu0 %1675
  %v1678 = vmul.f32 %v1673, %v1676
  %v1679 = vmul.f32 %v1660, %v1364
  %v1680 = vadd.f32 %v1678, %v1679
  %s1681 = scalar_lea.vmem %s1, 56
  %v1682 = vld [vmem:[%s1681] sm:$0xff]
  %v1683 = vadd.f32 %v1682, %v1647
  %v1684 = vxor.u32 %v1683, 2147483648
  %v1685 = vmul.f32 %v1684, 1.442695
  %v1686 = vpow.pop %v1685
  %v1687 = vadd.f32 %v1686, 1.0
  %v1688 = vrcp.pop %v1687
  %v1689 = vmul.f32 1.0, %v1688
  %v1690 = vadd.f32 %v1647, %v423
  %1692 = vrot.lane.b32.xlu0 %v1690, 96
  %v1693 = vpop.permute.xlu0 %1692
  %v1695 = vmul.f32 %v1689, %v1693
  %1697 = vrot.lane.b32.xlu0 %v1695, 32
  %v1698 = vpop.permute.xlu0 %1697
  %v1700 = vadd.f32 %v1682, %v1698
  %v1701 = vtanh.pop %v1700
  %v1702 = vsub.f32 1.0, %v1689
  %1704 = vrot.lane.b32.xlu0 %v1701, 112
  %v1705 = vpop.permute.xlu0 %1704
  %v1707 = vmul.f32 %v1702, %v1705
  %v1708 = vmul.f32 %v1689, %v1393
  %v1709 = vadd.f32 %v1707, %v1708
  %1711 = vrot.lane.b32.xlu0 %v1680, 112
  %v1712 = vpop.permute.xlu0 %1711
  %1714 = vst.msk [vmem:[#allocation3 + $0x20] sm:$0xff] %vm293, %v1712
  %1715 = vst.msk [vmem:[#allocation3 + $0x8] sm:$0xff] %vm450, %v1709
  %v1716 = vpack.c.bf16 %v1522, %v1522
  %1718 = vrot.lane.b32.xlu0 %v1716, 96
  %v1719 = vpop.permute.xlu0 %1718
  %v1721 = vsel %vm121, %v1719, 0
  %1723 = vmatprep.subr.bf16.mxu0 0
  %1724 = vmatpush1.bf16.msra.mxu0 %v117
  %1725 = vmatprep.subr.bf16.mxu0 0
  %1726 = vmatpush1.bf16.msra.mxu0 %v118
  %1727 = vmatprep.subr.bf16.mxu0 0
  %1728 = vmatpush1.bf16.msra.mxu0 0
  %1729 = vmatprep.subr.bf16.mxu0 0
  %1730 = vmatpush1.bf16.msra.mxu0 0
  %1731 = vmatprep.subr.bf16.mxu0 0
  %1732 = vmatpush1.bf16.msra.mxu0 0
  %1733 = vmatprep.subr.bf16.mxu0 0
  %1734 = vmatpush1.bf16.msra.mxu0 0
  %1735 = vmatprep.subr.bf16.mxu0 0
  %1736 = vmatpush1.bf16.msra.mxu0 0
  %1737 = vmatprep.subr.bf16.mxu0 0
  %1738 = vmatpush1.bf16.msra.mxu0 0
  %1739 = vmatprep.subr.bf16.mxu0 0
  %1740 = vmatpush1.bf16.msra.mxu0 0
  %1741 = vmatprep.subr.bf16.mxu0 0
  %1742 = vmatpush1.bf16.msra.mxu0 0
  %1743 = vmatprep.subr.bf16.mxu0 0
  %1744 = vmatpush1.bf16.msra.mxu0 0
  %1745 = vmatprep.subr.bf16.mxu0 0
  %1746 = vmatpush1.bf16.msra.mxu0 0
  %1747 = vmatprep.subr.bf16.mxu0 0
  %1748 = vmatpush1.bf16.msra.mxu0 0
  %1749 = vmatprep.subr.bf16.mxu0 0
  %1750 = vmatpush1.bf16.msra.mxu0 0
  %1751 = vmatprep.subr.bf16.mxu0 0
  %1752 = vmatpush1.bf16.msra.mxu0 0
  %1753 = vmatprep.subr.bf16.mxu0 0
  %1754 = vmatpush1.bf16.msra.mxu0 0
  %1755 = vmatprep.mubr.bf16.mxu0 0
  %1756 = vmatmul.mubr.bf16.gmra.mrb[0].mxu0 %v1721
  %v1757 = vpop.f32.mrb[0].mxu0
  %v1758 = vadd.f32 0.0, %v1757
  %v1759 = vpop.f32.mrb[0].mxu0
  %v1760 = vpop.f32.mrb[0].mxu0
  %v1761 = vpop.f32.mrb[0].mxu0
  %1762 = vdwg.mxu0
  %v1763 = vpack.c.bf16 %v1551, %v1551
  %1765 = vrot.lane.b32.xlu0 %v1763, 96
  %v1766 = vpop.permute.xlu0 %1765
  %v1768 = vsel %vm121, %v1766, 0
  %1770 = vmatprep.subr.bf16.mxu0 0
  %1771 = vmatpush1.bf16.msra.mxu0 %v173
  %1772 = vmatprep.subr.bf16.mxu0 0
  %1773 = vmatpush1.bf16.msra.mxu0 %v174
  %1774 = vmatprep.subr.bf16.mxu0 0
  %1775 = vmatpush1.bf16.msra.mxu0 0
  %1776 = vmatprep.subr.bf16.mxu0 0
  %1777 = vmatpush1.bf16.msra.mxu0 0
  %1778 = vmatprep.subr.bf16.mxu0 0
  %1779 = vmatpush1.bf16.msra.mxu0 0
  %1780 = vmatprep.subr.bf16.mxu0 0
  %1781 = vmatpush1.bf16.msra.mxu0 0
  %1782 = vmatprep.subr.bf16.mxu0 0
  %1783 = vmatpush1.bf16.msra.mxu0 0
  %1784 = vmatprep.subr.bf16.mxu0 0
  %1785 = vmatpush1.bf16.msra.mxu0 0
  %1786 = vmatprep.subr.bf16.mxu0 0
  %1787 = vmatpush1.bf16.msra.mxu0 0
  %1788 = vmatprep.subr.bf16.mxu0 0
  %1789 = vmatpush1.bf16.msra.mxu0 0
  %1790 = vmatprep.subr.bf16.mxu0 0
  %1791 = vmatpush1.bf16.msra.mxu0 0
  %1792 = vmatprep.subr.bf16.mxu0 0
  %1793 = vmatpush1.bf16.msra.mxu0 0
  %1794 = vmatprep.subr.bf16.mxu0 0
  %1795 = vmatpush1.bf16.msra.mxu0 0
  %1796 = vmatprep.subr.bf16.mxu0 0
  %1797 = vmatpush1.bf16.msra.mxu0 0
  %1798 = vmatprep.subr.bf16.mxu0 0
  %1799 = vmatpush1.bf16.msra.mxu0 0
  %1800 = vmatprep.subr.bf16.mxu0 0
  %1801 = vmatpush1.bf16.msra.mxu0 0
  %1802 = vmatprep.mubr.bf16.mxu0 0
  %1803 = vmatmul.mubr.bf16.gmra.mrb[0].mxu0 %v1768
  %v1804 = vpop.f32.mrb[0].mxu0
  %v1805 = vadd.f32 0.0, %v1804
  %v1806 = vpop.f32.mrb[0].mxu0
  %v1807 = vpop.f32.mrb[0].mxu0
  %v1808 = vpop.f32.mrb[0].mxu0
  %1809 = vdwg.mxu0
  %s1810 = scalar_lea.vmem %s0, 40
  %v1811 = vld [vmem:[%s1810] sm:$0xff]
  %v1812 = vadd.f32 %v1811, %v1758
  %v1813 = vxor.u32 %v1812, 2147483648
  %v1814 = vmul.f32 %v1813, 1.442695
  %v1815 = vpow.pop %v1814
  %v1816 = vadd.f32 %v1815, 1.0
  %v1817 = vrcp.pop %v1816
  %v1818 = vmul.f32 1.0, %v1817
  %v1819 = vadd.f32 %v1758, %v226
  %1821 = vrot.lane.b32.xlu0 %v1819, 64
  %v1822 = vpop.permute.xlu0 %1821
  %v1824 = vmul.f32 %v1818, %v1822
  %1826 = vrot.lane.b32.xlu0 %v1824, 64
  %v1827 = vpop.permute.xlu0 %1826
  %v1829 = vadd.f32 %v1811, %v1827
  %v1830 = vtanh.pop %v1829
  %v1831 = vsub.f32 1.0, %v1818
  %1833 = vrot.lane.b32.xlu0 %v1830, 96
  %v1834 = vpop.permute.xlu0 %1833
  %v1836 = vmul.f32 %v1831, %v1834
  %v1837 = vmul.f32 %v1818, %v1522
  %v1838 = vadd.f32 %v1836, %v1837
  %s1839 = scalar_lea.vmem %s0, 80
  %v1840 = vld [vmem:[%s1839] sm:$0xff]
  %v1841 = vadd.f32 %v1840, %v1805
  %v1842 = vxor.u32 %v1841, 2147483648
  %v1843 = vmul.f32 %v1842, 1.442695
  %v1844 = vpow.pop %v1843
  %v1845 = vadd.f32 %v1844, 1.0
  %v1846 = vrcp.pop %v1845
  %v1847 = vmul.f32 1.0, %v1846
  %v1848 = vadd.f32 %v1805, %v258
  %1850 = vrot.lane.b32.xlu0 %v1848, 64
  %v1851 = vpop.permute.xlu0 %1850
  %v1853 = vmul.f32 %v1847, %v1851
  %1855 = vrot.lane.b32.xlu0 %v1853, 64
  %v1856 = vpop.permute.xlu0 %1855
  %v1858 = vadd.f32 %v1840, %v1856
  %v1859 = vtanh.pop %v1858
  %v1860 = vsub.f32 1.0, %v1847
  %1862 = vrot.lane.b32.xlu0 %v1859, 96
  %v1863 = vpop.permute.xlu0 %1862
  %v1865 = vmul.f32 %v1860, %v1863
  %v1866 = vmul.f32 %v1847, %v1551
  %v1867 = vadd.f32 %v1865, %v1866
  %1869 = vrot.lane.b32.xlu0 %v1838, 96
  %v1870 = vpop.permute.xlu0 %1869
  %1872 = vst.msk [vmem:[#allocation2 + $0x28] sm:$0xff] %vm121, %v1870
  %1873 = vst.msk [vmem:[#allocation2 + $0x10] sm:$0xff] %vm285, %v1867
  %v1874 = vpack.c.bf16 %v1680, %v1680
  %1876 = vrot.lane.b32.xlu0 %v1874, 112
  %v1877 = vpop.permute.xlu0 %1876
  %v1879 = vsel %vm293, %v1877, 0
  %1881 = vmatprep.subr.bf16.mxu0 0
  %1882 = vmatpush1.bf16.msra.mxu0 %v291
  %1883 = vmatprep.subr.bf16.mxu0 0
  %1884 = vmatpush1.bf16.msra.mxu0 0
  %1885 = vmatprep.subr.bf16.mxu0 0
  %1886 = vmatpush1.bf16.msra.mxu0 0
  %1887 = vmatprep.subr.bf16.mxu0 0
  %1888 = vmatpush1.bf16.msra.mxu0 0
  %1889 = vmatprep.subr.bf16.mxu0 0
  %1890 = vmatpush1.bf16.msra.mxu0 0
  %1891 = vmatprep.subr.bf16.mxu0 0
  %1892 = vmatpush1.bf16.msra.mxu0 0
  %1893 = vmatprep.subr.bf16.mxu0 0
  %1894 = vmatpush1.bf16.msra.mxu0 0
  %1895 = vmatprep.subr.bf16.mxu0 0
  %1896 = vmatpush1.bf16.msra.mxu0 0
  %1897 = vmatprep.subr.bf16.mxu0 0
  %1898 = vmatpush1.bf16.msra.mxu0 0
  %1899 = vmatprep.subr.bf16.mxu0 0
  %1900 = vmatpush1.bf16.msra.mxu0 0
  %1901 = vmatprep.subr.bf16.mxu0 0
  %1902 = vmatpush1.bf16.msra.mxu0 0
  %1903 = vmatprep.subr.bf16.mxu0 0
  %1904 = vmatpush1.bf16.msra.mxu0 0
  %1905 = vmatprep.subr.bf16.mxu0 0
  %1906 = vmatpush1.bf16.msra.mxu0 0
  %1907 = vmatprep.subr.bf16.mxu0 0
  %1908 = vmatpush1.bf16.msra.mxu0 0
  %1909 = vmatprep.subr.bf16.mxu0 0
  %1910 = vmatpush1.bf16.msra.mxu0 0
  %1911 = vmatprep.subr.bf16.mxu0 0
  %1912 = vmatpush1.bf16.msra.mxu0 0
  %1913 = vmatprep.mubr.bf16.mxu0 0
  %1914 = vmatmul.mubr.bf16.gmra.mrb[0].mxu0 %v1879
  %v1915 = vpop.f32.mrb[0].mxu0
  %v1916 = vadd.f32 0.0, %v1915
  %v1917 = vpop.f32.mrb[0].mxu0
  %v1918 = vpop.f32.mrb[0].mxu0
  %v1919 = vpop.f32.mrb[0].mxu0
  %1920 = vdwg.mxu0
  %v1921 = vpack.c.bf16 %v1709, %v1709
  %1923 = vrot.lane.b32.xlu0 %v1921, 112
  %v1924 = vpop.permute.xlu0 %1923
  %v1926 = vsel %vm293, %v1924, 0
  %1928 = vmatprep.subr.bf16.mxu0 0
  %1929 = vmatpush1.bf16.msra.mxu0 %v340
  %1930 = vmatprep.subr.bf16.mxu0 0
  %1931 = vmatpush1.bf16.msra.mxu0 0
  %1932 = vmatprep.subr.bf16.mxu0 0
  %1933 = vmatpush1.bf16.msra.mxu0 0
  %1934 = vmatprep.subr.bf16.mxu0 0
  %1935 = vmatpush1.bf16.msra.mxu0 0
  %1936 = vmatprep.subr.bf16.mxu0 0
  %1937 = vmatpush1.bf16.msra.mxu0 0
  %1938 = vmatprep.subr.bf16.mxu0 0
  %1939 = vmatpush1.bf16.msra.mxu0 0
  %1940 = vmatprep.subr.bf16.mxu0 0
  %1941 = vmatpush1.bf16.msra.mxu0 0
  %1942 = vmatprep.subr.bf16.mxu0 0
  %1943 = vmatpush1.bf16.msra.mxu0 0
  %1944 = vmatprep.subr.bf16.mxu0 0
  %1945 = vmatpush1.bf16.msra.mxu0 0
  %1946 = vmatprep.subr.bf16.mxu0 0
  %1947 = vmatpush1.bf16.msra.mxu0 0
  %1948 = vmatprep.subr.bf16.mxu0 0
  %1949 = vmatpush1.bf16.msra.mxu0 0
  %1950 = vmatprep.subr.bf16.mxu0 0
  %1951 = vmatpush1.bf16.msra.mxu0 0
  %1952 = vmatprep.subr.bf16.mxu0 0
  %1953 = vmatpush1.bf16.msra.mxu0 0
  %1954 = vmatprep.subr.bf16.mxu0 0
  %1955 = vmatpush1.bf16.msra.mxu0 0
  %1956 = vmatprep.subr.bf16.mxu0 0
  %1957 = vmatpush1.bf16.msra.mxu0 0
  %1958 = vmatprep.subr.bf16.mxu0 0
  %1959 = vmatpush1.bf16.msra.mxu0 0
  %1960 = vmatprep.mubr.bf16.mxu0 0
  %1961 = vmatmul.mubr.bf16.gmra.mrb[0].mxu0 %v1926
  %v1962 = vpop.f32.mrb[0].mxu0
  %v1963 = vadd.f32 0.0, %v1962
  %v1964 = vpop.f32.mrb[0].mxu0
  %v1965 = vpop.f32.mrb[0].mxu0
  %v1966 = vpop.f32.mrb[0].mxu0
  %1967 = vdwg.mxu0
  %s1968 = scalar_lea.vmem %s1, 40
  %v1969 = vld [vmem:[%s1968] sm:$0xff]
  %v1970 = vadd.f32 %v1969, %v1916
  %v1971 = vxor.u32 %v1970, 2147483648
  %v1972 = vmul.f32 %v1971, 1.442695
  %v1973 = vpow.pop %v1972
  %v1974 = vadd.f32 %v1973, 1.0
  %v1975 = vrcp.pop %v1974
  %v1976 = vmul.f32 1.0, %v1975
  %v1977 = vadd.f32 %v1916, %v391
  %1979 = vrot.lane.b32.xlu0 %v1977, 96
  %v1980 = vpop.permute.xlu0 %1979
  %v1982 = vmul.f32 %v1976, %v1980
  %1984 = vrot.lane.b32.xlu0 %v1982, 32
  %v1985 = vpop.permute.xlu0 %1984
  %v1987 = vadd.f32 %v1969, %v1985
  %v1988 = vtanh.pop %v1987
  %v1989 = vsub.f32 1.0, %v1976
  %1991 = vrot.lane.b32.xlu0 %v1988, 112
  %v1992 = vpop.permute.xlu0 %1991
  %v1994 = vmul.f32 %v1989, %v1992
  %v1995 = vmul.f32 %v1976, %v1680
  %v1996 = vadd.f32 %v1994, %v1995
  %s1997 = scalar_lea.vmem %s1, 48
  %v1998 = vld [vmem:[%s1997] sm:$0xff]
  %v1999 = vadd.f32 %v1998, %v1963
  %v2000 = vxor.u32 %v1999, 2147483648
  %v2001 = vmul.f32 %v2000, 1.442695
  %v2002 = vpow.pop %v2001
  %v2003 = vadd.f32 %v2002, 1.0
  %v2004 = vrcp.pop %v2003
  %v2005 = vmul.f32 1.0, %v2004
  %v2006 = vadd.f32 %v1963, %v423
  %2008 = vrot.lane.b32.xlu0 %v2006, 96
  %v2009 = vpop.permute.xlu0 %2008
  %v2011 = vmul.f32 %v2005, %v2009
  %2013 = vrot.lane.b32.xlu0 %v2011, 32
  %v2014 = vpop.permute.xlu0 %2013
  %v2016 = vadd.f32 %v1998, %v2014
  %v2017 = vtanh.pop %v2016
  %v2018 = vsub.f32 1.0, %v2005
  %2020 = vrot.lane.b32.xlu0 %v2017, 112
  %v2021 = vpop.permute.xlu0 %2020
  %v2023 = vmul.f32 %v2018, %v2021
  %v2024 = vmul.f32 %v2005, %v1709
  %v2025 = vadd.f32 %v2023, %v2024
  %2027 = vrot.lane.b32.xlu0 %v1996, 112
  %v2028 = vpop.permute.xlu0 %2027
  %2030 = vst.msk [vmem:[#allocation3 + $0x28] sm:$0xff] %vm293, %v2028
  %2031 = vst.msk [vmem:[#allocation3] sm:$0xff] %vm450, %v2025
  %v2032 = vpack.c.bf16 %v1838, %v1838
  %2034 = vrot.lane.b32.xlu0 %v2032, 96
  %v2035 = vpop.permute.xlu0 %2034
  %v2037 = vsel %vm121, %v2035, 0
  %2039 = vmatprep.subr.bf16.mxu0 0
  %2040 = vmatpush1.bf16.msra.mxu0 %v117
  %2041 = vmatprep.subr.bf16.mxu0 0
  %2042 = vmatpush1.bf16.msra.mxu0 %v118
  %2043 = vmatprep.subr.bf16.mxu0 0
  %2044 = vmatpush1.bf16.msra.mxu0 0
  %2045 = vmatprep.subr.bf16.mxu0 0
  %2046 = vmatpush1.bf16.msra.mxu0 0
  %2047 = vmatprep.subr.bf16.mxu0 0
  %2048 = vmatpush1.bf16.msra.mxu0 0
  %2049 = vmatprep.subr.bf16.mxu0 0
  %2050 = vmatpush1.bf16.msra.mxu0 0
  %2051 = vmatprep.subr.bf16.mxu0 0
  %2052 = vmatpush1.bf16.msra.mxu0 0
  %2053 = vmatprep.subr.bf16.mxu0 0
  %2054 = vmatpush1.bf16.msra.mxu0 0
  %2055 = vmatprep.subr.bf16.mxu0 0
  %2056 = vmatpush1.bf16.msra.mxu0 0
  %2057 = vmatprep.subr.bf16.mxu0 0
  %2058 = vmatpush1.bf16.msra.mxu0 0
  %2059 = vmatprep.subr.bf16.mxu0 0
  %2060 = vmatpush1.bf16.msra.mxu0 0
  %2061 = vmatprep.subr.bf16.mxu0 0
  %2062 = vmatpush1.bf16.msra.mxu0 0
  %2063 = vmatprep.subr.bf16.mxu0 0
  %2064 = vmatpush1.bf16.msra.mxu0 0
  %2065 = vmatprep.subr.bf16.mxu0 0
  %2066 = vmatpush1.bf16.msra.mxu0 0
  %2067 = vmatprep.subr.bf16.mxu0 0
  %2068 = vmatpush1.bf16.msra.mxu0 0
  %2069 = vmatprep.subr.bf16.mxu0 0
  %2070 = vmatpush1.bf16.msra.mxu0 0
  %2071 = vmatprep.mubr.bf16.mxu0 0
  %2072 = vmatmul.mubr.bf16.gmra.mrb[0].mxu0 %v2037
  %v2073 = vpop.f32.mrb[0].mxu0
  %v2074 = vadd.f32 0.0, %v2073
  %v2075 = vpop.f32.mrb[0].mxu0
  %v2076 = vpop.f32.mrb[0].mxu0
  %v2077 = vpop.f32.mrb[0].mxu0
  %2078 = vdwg.mxu0
  %v2079 = vpack.c.bf16 %v1867, %v1867
  %2081 = vrot.lane.b32.xlu0 %v2079, 96
  %v2082 = vpop.permute.xlu0 %2081
  %v2084 = vsel %vm121, %v2082, 0
  %2086 = vmatprep.subr.bf16.mxu0 0
  %2087 = vmatpush1.bf16.msra.mxu0 %v173
  %2088 = vmatprep.subr.bf16.mxu0 0
  %2089 = vmatpush1.bf16.msra.mxu0 %v174
  %2090 = vmatprep.subr.bf16.mxu0 0
  %2091 = vmatpush1.bf16.msra.mxu0 0
  %2092 = vmatprep.subr.bf16.mxu0 0
  %2093 = vmatpush1.bf16.msra.mxu0 0
  %2094 = vmatprep.subr.bf16.mxu0 0
  %2095 = vmatpush1.bf16.msra.mxu0 0
  %2096 = vmatprep.subr.bf16.mxu0 0
  %2097 = vmatpush1.bf16.msra.mxu0 0
  %2098 = vmatprep.subr.bf16.mxu0 0
  %2099 = vmatpush1.bf16.msra.mxu0 0
  %2100 = vmatprep.subr.bf16.mxu0 0
  %2101 = vmatpush1.bf16.msra.mxu0 0
  %2102 = vmatprep.subr.bf16.mxu0 0
  %2103 = vmatpush1.bf16.msra.mxu0 0
  %2104 = vmatprep.subr.bf16.mxu0 0
  %2105 = vmatpush1.bf16.msra.mxu0 0
  %2106 = vmatprep.subr.bf16.mxu0 0
  %2107 = vmatpush1.bf16.msra.mxu0 0
  %2108 = vmatprep.subr.bf16.mxu0 0
  %2109 = vmatpush1.bf16.msra.mxu0 0
  %2110 = vmatprep.subr.bf16.mxu0 0
  %2111 = vmatpush1.bf16.msra.mxu0 0
  %2112 = vmatprep.subr.bf16.mxu0 0
  %2113 = vmatpush1.bf16.msra.mxu0 0
  %2114 = vmatprep.subr.bf16.mxu0 0
  %2115 = vmatpush1.bf16.msra.mxu0 0
  %2116 = vmatprep.subr.bf16.mxu0 0
  %2117 = vmatpush1.bf16.msra.mxu0 0
  %2118 = vmatprep.mubr.bf16.mxu0 0
  %2119 = vmatmul.mubr.bf16.gmra.mrb[0].mxu0 %v2084
  %v2120 = vpop.f32.mrb[0].mxu0
  %v2121 = vadd.f32 0.0, %v2120
  %v2122 = vpop.f32.mrb[0].mxu0
  %v2123 = vpop.f32.mrb[0].mxu0
  %v2124 = vpop.f32.mrb[0].mxu0
  %2125 = vdwg.mxu0
  %s2126 = scalar_lea.vmem %s0, 48
  %v2127 = vld [vmem:[%s2126] sm:$0xff]
  %v2128 = vadd.f32 %v2127, %v2074
  %v2129 = vxor.u32 %v2128, 2147483648
  %v2130 = vmul.f32 %v2129, 1.442695
  %v2131 = vpow.pop %v2130
  %v2132 = vadd.f32 %v2131, 1.0
  %v2133 = vrcp.pop %v2132
  %v2134 = vmul.f32 1.0, %v2133
  %v2135 = vadd.f32 %v2074, %v226
  %2137 = vrot.lane.b32.xlu0 %v2135, 64
  %v2138 = vpop.permute.xlu0 %2137
  %v2140 = vmul.f32 %v2134, %v2138
  %2142 = vrot.lane.b32.xlu0 %v2140, 64
  %v2143 = vpop.permute.xlu0 %2142
  %v2145 = vadd.f32 %v2127, %v2143
  %v2146 = vtanh.pop %v2145
  %v2147 = vsub.f32 1.0, %v2134
  %2149 = vrot.lane.b32.xlu0 %v2146, 96
  %v2150 = vpop.permute.xlu0 %2149
  %v2152 = vmul.f32 %v2147, %v2150
  %v2153 = vmul.f32 %v2134, %v1838
  %v2154 = vadd.f32 %v2152, %v2153
  %s2155 = scalar_lea.vmem %s0, 72
  %v2156 = vld [vmem:[%s2155] sm:$0xff]
  %v2157 = vadd.f32 %v2156, %v2121
  %v2158 = vxor.u32 %v2157, 2147483648
  %v2159 = vmul.f32 %v2158, 1.442695
  %v2160 = vpow.pop %v2159
  %v2161 = vadd.f32 %v2160, 1.0
  %v2162 = vrcp.pop %v2161
  %v2163 = vmul.f32 1.0, %v2162
  %v2164 = vadd.f32 %v2121, %v258
  %2166 = vrot.lane.b32.xlu0 %v2164, 64
  %v2167 = vpop.permute.xlu0 %2166
  %v2169 = vmul.f32 %v2163, %v2167
  %2171 = vrot.lane.b32.xlu0 %v2169, 64
  %v2172 = vpop.permute.xlu0 %2171
  %v2174 = vadd.f32 %v2156, %v2172
  %v2175 = vtanh.pop %v2174
  %v2176 = vsub.f32 1.0, %v2163
  %2178 = vrot.lane.b32.xlu0 %v2175, 96
  %v2179 = vpop.permute.xlu0 %2178
  %v2181 = vmul.f32 %v2176, %v2179
  %v2182 = vmul.f32 %v2163, %v1867
  %v2183 = vadd.f32 %v2181, %v2182
  %2185 = vrot.lane.b32.xlu0 %v2154, 96
  %v2186 = vpop.permute.xlu0 %2185
  %2188 = vst.msk [vmem:[#allocation2 + $0x30] sm:$0xff] %vm121, %v2186
  %2189 = vst.msk [vmem:[#allocation2 + $0x8] sm:$0xff] %vm285, %v2183
  %v2190 = vpack.c.bf16 %v2154, %v2154
  %2192 = vrot.lane.b32.xlu0 %v2190, 96
  %v2193 = vpop.permute.xlu0 %2192
  %v2195 = vsel %vm121, %v2193, 0
  %2197 = vmatprep.subr.bf16.mxu0 0
  %2198 = vmatpush1.bf16.msra.mxu0 %v117
  %2199 = vmatprep.subr.bf16.mxu0 0
  %2200 = vmatpush1.bf16.msra.mxu0 %v118
  %2201 = vmatprep.subr.bf16.mxu0 0
  %2202 = vmatpush1.bf16.msra.mxu0 0
  %2203 = vmatprep.subr.bf16.mxu0 0
  %2204 = vmatpush1.bf16.msra.mxu0 0
  %2205 = vmatprep.subr.bf16.mxu0 0
  %2206 = vmatpush1.bf16.msra.mxu0 0
  %2207 = vmatprep.subr.bf16.mxu0 0
  %2208 = vmatpush1.bf16.msra.mxu0 0
  %2209 = vmatprep.subr.bf16.mxu0 0
  %2210 = vmatpush1.bf16.msra.mxu0 0
  %2211 = vmatprep.subr.bf16.mxu0 0
  %2212 = vmatpush1.bf16.msra.mxu0 0
  %2213 = vmatprep.subr.bf16.mxu0 0
  %2214 = vmatpush1.bf16.msra.mxu0 0
  %2215 = vmatprep.subr.bf16.mxu0 0
  %2216 = vmatpush1.bf16.msra.mxu0 0
  %2217 = vmatprep.subr.bf16.mxu0 0
  %2218 = vmatpush1.bf16.msra.mxu0 0
  %2219 = vmatprep.subr.bf16.mxu0 0
  %2220 = vmatpush1.bf16.msra.mxu0 0
  %2221 = vmatprep.subr.bf16.mxu0 0
  %2222 = vmatpush1.bf16.msra.mxu0 0
  %2223 = vmatprep.subr.bf16.mxu0 0
  %2224 = vmatpush1.bf16.msra.mxu0 0
  %2225 = vmatprep.subr.bf16.mxu0 0
  %2226 = vmatpush1.bf16.msra.mxu0 0
  %2227 = vmatprep.subr.bf16.mxu0 0
  %2228 = vmatpush1.bf16.msra.mxu0 0
  %2229 = vmatprep.mubr.bf16.mxu0 0
  %2230 = vmatmul.mubr.bf16.gmra.mrb[0].mxu0 %v2195
  %v2231 = vpop.f32.mrb[0].mxu0
  %v2232 = vadd.f32 0.0, %v2231
  %v2233 = vpop.f32.mrb[0].mxu0
  %v2234 = vpop.f32.mrb[0].mxu0
  %v2235 = vpop.f32.mrb[0].mxu0
  %2236 = vdwg.mxu0
  %v2237 = vpack.c.bf16 %v2183, %v2183
  %2239 = vrot.lane.b32.xlu0 %v2237, 96
  %v2240 = vpop.permute.xlu0 %2239
  %v2242 = vsel %vm121, %v2240, 0
  %2244 = vmatprep.subr.bf16.mxu0 0
  %2245 = vmatpush1.bf16.msra.mxu0 %v173
  %2246 = vmatprep.subr.bf16.mxu0 0
  %2247 = vmatpush1.bf16.msra.mxu0 %v174
  %2248 = vmatprep.subr.bf16.mxu0 0
  %2249 = vmatpush1.bf16.msra.mxu0 0
  %2250 = vmatprep.subr.bf16.mxu0 0
  %2251 = vmatpush1.bf16.msra.mxu0 0
  %2252 = vmatprep.subr.bf16.mxu0 0
  %2253 = vmatpush1.bf16.msra.mxu0 0
  %2254 = vmatprep.subr.bf16.mxu0 0
  %2255 = vmatpush1.bf16.msra.mxu0 0
  %2256 = vmatprep.subr.bf16.mxu0 0
  %2257 = vmatpush1.bf16.msra.mxu0 0
  %2258 = vmatprep.subr.bf16.mxu0 0
  %2259 = vmatpush1.bf16.msra.mxu0 0
  %2260 = vmatprep.subr.bf16.mxu0 0
  %2261 = vmatpush1.bf16.msra.mxu0 0
  %2262 = vmatprep.subr.bf16.mxu0 0
  %2263 = vmatpush1.bf16.msra.mxu0 0
  %2264 = vmatprep.subr.bf16.mxu0 0
  %2265 = vmatpush1.bf16.msra.mxu0 0
  %2266 = vmatprep.subr.bf16.mxu0 0
  %2267 = vmatpush1.bf16.msra.mxu0 0
  %2268 = vmatprep.subr.bf16.mxu0 0
  %2269 = vmatpush1.bf16.msra.mxu0 0
  %2270 = vmatprep.subr.bf16.mxu0 0
  %2271 = vmatpush1.bf16.msra.mxu0 0
  %2272 = vmatprep.subr.bf16.mxu0 0
  %2273 = vmatpush1.bf16.msra.mxu0 0
  %2274 = vmatprep.subr.bf16.mxu0 0
  %2275 = vmatpush1.bf16.msra.mxu0 0
  %2276 = vmatprep.mubr.bf16.mxu0 0
  %2277 = vmatmul.mubr.bf16.gmra.mrb[0].mxu0 %v2242
  %v2278 = vpop.f32.mrb[0].mxu0
  %v2279 = vadd.f32 0.0, %v2278
  %v2280 = vpop.f32.mrb[0].mxu0
  %v2281 = vpop.f32.mrb[0].mxu0
  %v2282 = vpop.f32.mrb[0].mxu0
  %2283 = vdwg.mxu0
  %s2284 = scalar_lea.vmem %s0, 56
  %v2285 = vld [vmem:[%s2284] sm:$0xff]
  %v2286 = vadd.f32 %v2285, %v2232
  %v2287 = vxor.u32 %v2286, 2147483648
  %v2288 = vmul.f32 %v2287, 1.442695
  %v2289 = vpow.pop %v2288
  %v2290 = vadd.f32 %v2289, 1.0
  %v2291 = vrcp.pop %v2290
  %v2292 = vmul.f32 1.0, %v2291
  %v2293 = vadd.f32 %v2232, %v226
  %2295 = vrot.lane.b32.xlu0 %v2293, 64
  %v2296 = vpop.permute.xlu0 %2295
  %v2298 = vmul.f32 %v2292, %v2296
  %2300 = vrot.lane.b32.xlu0 %v2298, 64
  %v2301 = vpop.permute.xlu0 %2300
  %v2303 = vadd.f32 %v2285, %v2301
  %v2304 = vtanh.pop %v2303
  %v2305 = vsub.f32 1.0, %v2292
  %2307 = vrot.lane.b32.xlu0 %v2304, 96
  %v2308 = vpop.permute.xlu0 %2307
  %v2310 = vmul.f32 %v2305, %v2308
  %v2311 = vmul.f32 %v2292, %v2154
  %v2312 = vadd.f32 %v2310, %v2311
  %s2313 = scalar_lea.vmem %s0, 64
  %v2314 = vld [vmem:[%s2313] sm:$0xff]
  %v2315 = vadd.f32 %v2314, %v2279
  %v2316 = vxor.u32 %v2315, 2147483648
  %v2317 = vmul.f32 %v2316, 1.442695
  %v2318 = vpow.pop %v2317
  %v2319 = vadd.f32 %v2318, 1.0
  %v2320 = vrcp.pop %v2319
  %v2321 = vmul.f32 1.0, %v2320
  %v2322 = vadd.f32 %v2279, %v258
  %2324 = vrot.lane.b32.xlu0 %v2322, 64
  %v2325 = vpop.permute.xlu0 %2324
  %v2327 = vmul.f32 %v2321, %v2325
  %2329 = vrot.lane.b32.xlu0 %v2327, 64
  %v2330 = vpop.permute.xlu0 %2329
  %v2332 = vadd.f32 %v2314, %v2330
  %v2333 = vtanh.pop %v2332
  %v2334 = vsub.f32 1.0, %v2321
  %2336 = vrot.lane.b32.xlu0 %v2333, 96
  %v2337 = vpop.permute.xlu0 %2336
  %v2339 = vmul.f32 %v2334, %v2337
  %v2340 = vmul.f32 %v2321, %v2183
  %v2341 = vadd.f32 %v2339, %v2340
  %2343 = vrot.lane.b32.xlu0 %v2312, 96
  %v2344 = vpop.permute.xlu0 %2343
  %2346 = vst.msk [vmem:[#allocation2 + $0x38] sm:$0xff] %vm121, %v2344
  %2347 = vst.msk [vmem:[#allocation2] sm:$0xff] %vm285, %v2341
  %v2348 = vld [vmem:[#allocation2] sm:$0xff]
  %v2349 = vld [vmem:[#allocation2 + $0x8] sm:$0xff]
  %v2350 = vld [vmem:[#allocation2 + $0x10] sm:$0xff]
  %v2351 = vld [vmem:[#allocation2 + $0x18] sm:$0xff]
  %v2352 = vld [vmem:[#allocation2 + $0x20] sm:$0xff]
  %v2353 = vld [vmem:[#allocation2 + $0x28] sm:$0xff]
  %v2354 = vld [vmem:[#allocation2 + $0x30] sm:$0xff]
  %v2355 = vld [vmem:[#allocation2 + $0x38] sm:$0xff]
  %v2356 = vpack.c.bf16 %v2349, %v2348
  %v2357 = vpack.c.bf16 %v2351, %v2350
  %v2358 = vpack.c.bf16 %v2353, %v2352
  %v2359 = vpack.c.bf16 %v2355, %v2354
  %v2360 = vld [vmem:[%s6] sm:$0xf]
  %v2361 = vld [vmem:[%s6 + $0x4] sm:$0xf]
  %v2362 = vld [vmem:[%s6 + $0x8] sm:$0xf]
  %v2363 = vld [vmem:[%s6 + $0xc] sm:$0xf]
  %v2364 = vld [vmem:[%s6 + $0x10] sm:$0xf]
  %v2365 = vld [vmem:[%s6 + $0x14] sm:$0xf]
  %v2366 = vld [vmem:[%s6 + $0x18] sm:$0xf]
  %v2367 = vld [vmem:[%s6 + $0x1c] sm:$0xf]
  %v2368 = vld [vmem:[%s7] sm:$0x1]
  %v2370 = vlaneseq
  %v2371 = vshrl.u32 %v2370, 7
  %v2372 = vsub.s32 0, %v2371
  %v2373 = vrot.slane %v2368, %v2372
  %v2383 = vunpack.c.l.b16 %v2360
  %v2384 = vunpack.c.l.b16 %v2361
  %v2385 = vunpack.c.l.b16 %v2362
  %v2386 = vunpack.c.l.b16 %v2363
  %v2387 = vunpack.c.l.b16 %v2364
  %v2388 = vunpack.c.l.b16 %v2365
  %v2389 = vunpack.c.l.b16 %v2366
  %v2390 = vunpack.c.l.b16 %v2367
  %v2391 = vpack.c.b16 %v2384, %v2383
  %v2392 = vpack.c.b16 %v2386, %v2385
  %v2393 = vpack.c.b16 %v2388, %v2387
  %v2394 = vpack.c.b16 %v2390, %v2389
  %vm2399 = vcmask 523264
  %v2401 = vsel %vm2399, %v2356, 0
  %v2404 = vsel %vm2399, %v2357, 0
  %v2407 = vsel %vm2399, %v2358, 0
  %v2410 = vsel %vm2399, %v2359, 0
  %2412 = vmatprep.subr.bf16.mxu0 0
  %2413 = vmatpush1.bf16.msra.mxu0 %v2391
  %2414 = vmatprep.subr.bf16.mxu0 0
  %2415 = vmatpush1.bf16.msra.mxu0 %v2392
  %2416 = vmatprep.subr.bf16.mxu0 0
  %2417 = vmatpush1.bf16.msra.mxu0 %v2393
  %2418 = vmatprep.subr.bf16.mxu0 0
  %2419 = vmatpush1.bf16.msra.mxu0 %v2394
  %2420 = vmatprep.subr.bf16.mxu0 0
  %2421 = vmatpush1.bf16.msra.mxu0 0
  %2422 = vmatprep.subr.bf16.mxu0 0
  %2423 = vmatpush1.bf16.msra.mxu0 0
  %2424 = vmatprep.subr.bf16.mxu0 0
  %2425 = vmatpush1.bf16.msra.mxu0 0
  %2426 = vmatprep.subr.bf16.mxu0 0
  %2427 = vmatpush1.bf16.msra.mxu0 0
  %2428 = vmatprep.subr.bf16.mxu0 0
  %2429 = vmatpush1.bf16.msra.mxu0 0
  %2430 = vmatprep.subr.bf16.mxu0 0
  %2431 = vmatpush1.bf16.msra.mxu0 0
  %2432 = vmatprep.subr.bf16.mxu0 0
  %2433 = vmatpush1.bf16.msra.mxu0 0
  %2434 = vmatprep.subr.bf16.mxu0 0
  %2435 = vmatpush1.bf16.msra.mxu0 0
  %2436 = vmatprep.subr.bf16.mxu0 0
  %2437 = vmatpush1.bf16.msra.mxu0 0
  %2438 = vmatprep.subr.bf16.mxu0 0
  %2439 = vmatpush1.bf16.msra.mxu0 0
  %2440 = vmatprep.subr.bf16.mxu0 0
  %2441 = vmatpush1.bf16.msra.mxu0 0
  %2442 = vmatprep.subr.bf16.mxu0 0
  %2443 = vmatpush1.bf16.msra.mxu0 0
  %2444 = vmatprep.mubr.bf16.mxu0 0
  %2445 = vmatmul.mubr.bf16.gmra.mrb[0].mxu0 %v2401
  %v2446 = vpop.f32.mrb[0].mxu0
  %v2447 = vadd.f32 %v2373, %v2446
  %v2448 = vpop.f32.mrb[0].mxu0
  %v2449 = vpop.f32.mrb[0].mxu0
  %v2450 = vadd.f32 %v2373, %v2449
  %v2451 = vpop.f32.mrb[0].mxu0
  %2452 = vmatprep.mubr.bf16.mxu0 0
  %2453 = vmatmul.mubr.bf16.gmra.mrb[0].mxu0 %v2404
  %v2454 = vpop.f32.mrb[0].mxu0
  %v2455 = vadd.f32 %v2373, %v2454
  %v2456 = vpop.f32.mrb[0].mxu0
  %v2457 = vpop.f32.mrb[0].mxu0
  %v2458 = vadd.f32 %v2373, %v2457
  %v2459 = vpop.f32.mrb[0].mxu0
  %2460 = vmatprep.mubr.bf16.mxu0 0
  %2461 = vmatmul.mubr.bf16.gmra.mrb[0].mxu0 %v2407
  %v2462 = vpop.f32.mrb[0].mxu0
  %v2463 = vadd.f32 %v2373, %v2462
  %v2464 = vpop.f32.mrb[0].mxu0
  %v2465 = vpop.f32.mrb[0].mxu0
  %v2466 = vadd.f32 %v2373, %v2465
  %v2467 = vpop.f32.mrb[0].mxu0
  %2468 = vmatprep.mubr.bf16.mxu0 0
  %2469 = vmatmul.mubr.bf16.gmra.mrb[0].mxu0 %v2410
  %v2470 = vpop.f32.mrb[0].mxu0
  %v2471 = vadd.f32 %v2373, %v2470
  %v2472 = vpop.f32.mrb[0].mxu0
  %v2473 = vpop.f32.mrb[0].mxu0
  %v2474 = vadd.f32 %v2373, %v2473
  %v2475 = vpop.f32.mrb[0].mxu0
  %2476 = vdwg.mxu0
  %s2477 = scalar_lea.vmem %s6, 32
  %v2478 = vld [vmem:[%s2477] sm:$0xf]
  %v2479 = vld [vmem:[%s2477 + $0x4] sm:$0xf]
  %v2480 = vld [vmem:[%s2477 + $0x8] sm:$0xf]
  %v2481 = vld [vmem:[%s2477 + $0xc] sm:$0xf]
  %v2482 = vld [vmem:[%s2477 + $0x10] sm:$0xf]
  %v2483 = vld [vmem:[%s2477 + $0x14] sm:$0xf]
  %v2484 = vld [vmem:[%s2477 + $0x18] sm:$0xf]
  %v2485 = vld [vmem:[%s2477 + $0x1c] sm:$0xf]
  %s2486 = scalar_lea.vmem %s7, 1
  %v2487 = vld [vmem:[%s2486] sm:$0x1]
  %v2489 = vlaneseq
  %v2490 = vshrl.u32 %v2489, 7
  %v2491 = vsub.s32 0, %v2490
  %v2492 = vrot.slane %v2487, %v2491
  %v2502 = vunpack.c.l.b16 %v2478
  %v2503 = vunpack.c.l.b16 %v2479
  %v2504 = vunpack.c.l.b16 %v2480
  %v2505 = vunpack.c.l.b16 %v2481
  %v2506 = vunpack.c.l.b16 %v2482
  %v2507 = vunpack.c.l.b16 %v2483
  %v2508 = vunpack.c.l.b16 %v2484
  %v2509 = vunpack.c.l.b16 %v2485
  %v2510 = vpack.c.b16 %v2503, %v2502
  %v2511 = vpack.c.b16 %v2505, %v2504
  %v2512 = vpack.c.b16 %v2507, %v2506
  %v2513 = vpack.c.b16 %v2509, %v2508
  %2518 = vmatprep.subr.bf16.mxu0 0
  %2519 = vmatpush1.bf16.msra.mxu0 %v2510
  %2520 = vmatprep.subr.bf16.mxu0 0
  %2521 = vmatpush1.bf16.msra.mxu0 %v2511
  %2522 = vmatprep.subr.bf16.mxu0 0
  %2523 = vmatpush1.bf16.msra.mxu0 %v2512
  %2524 = vmatprep.subr.bf16.mxu0 0
  %2525 = vmatpush1.bf16.msra.mxu0 %v2513
  %2526 = vmatprep.subr.bf16.mxu0 0
  %2527 = vmatpush1.bf16.msra.mxu0 0
  %2528 = vmatprep.subr.bf16.mxu0 0
  %2529 = vmatpush1.bf16.msra.mxu0 0
  %2530 = vmatprep.subr.bf16.mxu0 0
  %2531 = vmatpush1.bf16.msra.mxu0 0
  %2532 = vmatprep.subr.bf16.mxu0 0
  %2533 = vmatpush1.bf16.msra.mxu0 0
  %2534 = vmatprep.subr.bf16.mxu0 0
  %2535 = vmatpush1.bf16.msra.mxu0 0
  %2536 = vmatprep.subr.bf16.mxu0 0
  %2537 = vmatpush1.bf16.msra.mxu0 0
  %2538 = vmatprep.subr.bf16.mxu0 0
  %2539 = vmatpush1.bf16.msra.mxu0 0
  %2540 = vmatprep.subr.bf16.mxu0 0
  %2541 = vmatpush1.bf16.msra.mxu0 0
  %2542 = vmatprep.subr.bf16.mxu0 0
  %2543 = vmatpush1.bf16.msra.mxu0 0
  %2544 = vmatprep.subr.bf16.mxu0 0
  %2545 = vmatpush1.bf16.msra.mxu0 0
  %2546 = vmatprep.subr.bf16.mxu0 0
  %2547 = vmatpush1.bf16.msra.mxu0 0
  %2548 = vmatprep.subr.bf16.mxu0 0
  %2549 = vmatpush1.bf16.msra.mxu0 0
  %2550 = vmatprep.mubr.bf16.mxu0 0
  %2551 = vmatmul.mubr.bf16.gmra.mrb[0].mxu0 %v2401
  %v2552 = vpop.f32.mrb[0].mxu0
  %v2553 = vadd.f32 %v2492, %v2552
  %v2554 = vpop.f32.mrb[0].mxu0
  %v2555 = vpop.f32.mrb[0].mxu0
  %v2556 = vadd.f32 %v2492, %v2555
  %v2557 = vpop.f32.mrb[0].mxu0
  %2558 = vmatprep.mubr.bf16.mxu0 0
  %2559 = vmatmul.mubr.bf16.gmra.mrb[0].mxu0 %v2404
  %v2560 = vpop.f32.mrb[0].mxu0
  %v2561 = vadd.f32 %v2492, %v2560
  %v2562 = vpop.f32.mrb[0].mxu0
  %v2563 = vpop.f32.mrb[0].mxu0
  %v2564 = vadd.f32 %v2492, %v2563
  %v2565 = vpop.f32.mrb[0].mxu0
  %2566 = vmatprep.mubr.bf16.mxu0 0
  %2567 = vmatmul.mubr.bf16.gmra.mrb[0].mxu0 %v2407
  %v2568 = vpop.f32.mrb[0].mxu0
  %v2569 = vadd.f32 %v2492, %v2568
  %v2570 = vpop.f32.mrb[0].mxu0
  %v2571 = vpop.f32.mrb[0].mxu0
  %v2572 = vadd.f32 %v2492, %v2571
  %v2573 = vpop.f32.mrb[0].mxu0
  %2574 = vmatprep.mubr.bf16.mxu0 0
  %2575 = vmatmul.mubr.bf16.gmra.mrb[0].mxu0 %v2410
  %v2576 = vpop.f32.mrb[0].mxu0
  %v2577 = vadd.f32 %v2492, %v2576
  %v2578 = vpop.f32.mrb[0].mxu0
  %v2579 = vpop.f32.mrb[0].mxu0
  %v2580 = vadd.f32 %v2492, %v2579
  %v2581 = vpop.f32.mrb[0].mxu0
  %2582 = vdwg.mxu0
  %v2583 = vld [vmem:[#allocation3] sm:$0xff]
  %v2584 = vld [vmem:[#allocation3 + $0x8] sm:$0xff]
  %v2585 = vld [vmem:[#allocation3 + $0x10] sm:$0xff]
  %v2586 = vld [vmem:[#allocation3 + $0x18] sm:$0xff]
  %v2587 = vld [vmem:[#allocation3 + $0x20] sm:$0xff]
  %v2588 = vld [vmem:[#allocation3 + $0x28] sm:$0xff]
  %v2589 = vpack.c.bf16 %v2584, %v2583
  %v2590 = vpack.c.bf16 %v2586, %v2585
  %v2591 = vpack.c.bf16 %v2588, %v2587
  %v2592 = vld [vmem:[%s10] sm:$0xf]
  %v2593 = vld [vmem:[%s10 + $0x4] sm:$0xf]
  %v2594 = vld [vmem:[%s10 + $0x8] sm:$0xf]
  %v2595 = vld [vmem:[%s10 + $0xc] sm:$0xf]
  %v2596 = vld [vmem:[%s11] sm:$0x1]
  %v2598 = vlaneseq
  %v2599 = vshrl.u32 %v2598, 7
  %v2600 = vsub.s32 0, %v2599
  %v2601 = vrot.slane %v2596, %v2600
  %v2607 = vunpack.c.l.b16 %v2592
  %v2608 = vunpack.c.l.b16 %v2593
  %v2609 = vunpack.c.l.b16 %v2594
  %v2610 = vunpack.c.l.b16 %v2595
  %v2611 = vpack.c.b16 %v2608, %v2607
  %v2612 = vpack.c.b16 %v2610, %v2609
  %v2616 = vsel %vm121, %v2589, 0
  %v2619 = vsel %vm121, %v2590, 0
  %v2622 = vsel %vm121, %v2591, 0
  %2624 = vmatprep.subr.bf16.mxu0 0
  %2625 = vmatpush1.bf16.msra.mxu0 %v2611
  %2626 = vmatprep.subr.bf16.mxu0 0
  %2627 = vmatpush1.bf16.msra.mxu0 %v2612
  %2628 = vmatprep.subr.bf16.mxu0 0
  %2629 = vmatpush1.bf16.msra.mxu0 0
  %2630 = vmatprep.subr.bf16.mxu0 0
  %2631 = vmatpush1.bf16.msra.mxu0 0
  %2632 = vmatprep.subr.bf16.mxu0 0
  %2633 = vmatpush1.bf16.msra.mxu0 0
  %2634 = vmatprep.subr.bf16.mxu0 0
  %2635 = vmatpush1.bf16.msra.mxu0 0
  %2636 = vmatprep.subr.bf16.mxu0 0
  %2637 = vmatpush1.bf16.msra.mxu0 0
  %2638 = vmatprep.subr.bf16.mxu0 0
  %2639 = vmatpush1.bf16.msra.mxu0 0
  %2640 = vmatprep.subr.bf16.mxu0 0
  %2641 = vmatpush1.bf16.msra.mxu0 0
  %2642 = vmatprep.subr.bf16.mxu0 0
  %2643 = vmatpush1.bf16.msra.mxu0 0
  %2644 = vmatprep.subr.bf16.mxu0 0
  %2645 = vmatpush1.bf16.msra.mxu0 0
  %2646 = vmatprep.subr.bf16.mxu0 0
  %2647 = vmatpush1.bf16.msra.mxu0 0
  %2648 = vmatprep.subr.bf16.mxu0 0
  %2649 = vmatpush1.bf16.msra.mxu0 0
  %2650 = vmatprep.subr.bf16.mxu0 0
  %2651 = vmatpush1.bf16.msra.mxu0 0
  %2652 = vmatprep.subr.bf16.mxu0 0
  %2653 = vmatpush1.bf16.msra.mxu0 0
  %2654 = vmatprep.subr.bf16.mxu0 0
  %2655 = vmatpush1.bf16.msra.mxu0 0
  %2656 = vmatprep.mubr.bf16.mxu0 0
  %2657 = vmatmul.mubr.bf16.gmra.mrb[0].mxu0 %v2616
  %v2658 = vpop.f32.mrb[0].mxu0
  %v2659 = vadd.f32 %v2601, %v2658
  %v2660 = vpop.f32.mrb[0].mxu0
  %v2661 = vpop.f32.mrb[0].mxu0
  %v2662 = vadd.f32 %v2601, %v2661
  %v2663 = vpop.f32.mrb[0].mxu0
  %2664 = vmatprep.mubr.bf16.mxu0 0
  %2665 = vmatmul.mubr.bf16.gmra.mrb[0].mxu0 %v2619
  %v2666 = vpop.f32.mrb[0].mxu0
  %v2667 = vadd.f32 %v2601, %v2666
  %v2668 = vpop.f32.mrb[0].mxu0
  %v2669 = vpop.f32.mrb[0].mxu0
  %v2670 = vadd.f32 %v2601, %v2669
  %v2671 = vpop.f32.mrb[0].mxu0
  %2672 = vmatprep.mubr.bf16.mxu0 0
  %2673 = vmatmul.mubr.bf16.gmra.mrb[0].mxu0 %v2622
  %v2674 = vpop.f32.mrb[0].mxu0
  %v2675 = vadd.f32 %v2601, %v2674
  %v2676 = vpop.f32.mrb[0].mxu0
  %v2677 = vpop.f32.mrb[0].mxu0
  %v2678 = vadd.f32 %v2601, %v2677
  %v2679 = vpop.f32.mrb[0].mxu0
  %2680 = vdwg.mxu0
  %s2681 = scalar_lea.vmem %s10, 16
  %v2682 = vld [vmem:[%s2681] sm:$0xf]
  %v2683 = vld [vmem:[%s2681 + $0x4] sm:$0xf]
  %v2684 = vld [vmem:[%s2681 + $0x8] sm:$0xf]
  %v2685 = vld [vmem:[%s2681 + $0xc] sm:$0xf]
  %s2686 = scalar_lea.vmem %s11, 1
  %v2687 = vld [vmem:[%s2686] sm:$0x1]
  %v2689 = vlaneseq
  %v2690 = vshrl.u32 %v2689, 7
  %v2691 = vsub.s32 0, %v2690
  %v2692 = vrot.slane %v2687, %v2691
  %v2698 = vunpack.c.l.b16 %v2682
  %v2699 = vunpack.c.l.b16 %v2683
  %v2700 = vunpack.c.l.b16 %v2684
  %v2701 = vunpack.c.l.b16 %v2685
  %v2702 = vpack.c.b16 %v2699, %v2698
  %v2703 = vpack.c.b16 %v2701, %v2700
  %2706 = vmatprep.subr.bf16.mxu0 0
  %2707 = vmatpush1.bf16.msra.mxu0 %v2702
  %2708 = vmatprep.subr.bf16.mxu0 0
  %2709 = vmatpush1.bf16.msra.mxu0 %v2703
  %2710 = vmatprep.subr.bf16.mxu0 0
  %2711 = vmatpush1.bf16.msra.mxu0 0
  %2712 = vmatprep.subr.bf16.mxu0 0
  %2713 = vmatpush1.bf16.msra.mxu0 0
  %2714 = vmatprep.subr.bf16.mxu0 0
  %2715 = vmatpush1.bf16.msra.mxu0 0
  %2716 = vmatprep.subr.bf16.mxu0 0
  %2717 = vmatpush1.bf16.msra.mxu0 0
  %2718 = vmatprep.subr.bf16.mxu0 0
  %2719 = vmatpush1.bf16.msra.mxu0 0
  %2720 = vmatprep.subr.bf16.mxu0 0
  %2721 = vmatpush1.bf16.msra.mxu0 0
  %2722 = vmatprep.subr.bf16.mxu0 0
  %2723 = vmatpush1.bf16.msra.mxu0 0
  %2724 = vmatprep.subr.bf16.mxu0 0
  %2725 = vmatpush1.bf16.msra.mxu0 0
  %2726 = vmatprep.subr.bf16.mxu0 0
  %2727 = vmatpush1.bf16.msra.mxu0 0
  %2728 = vmatprep.subr.bf16.mxu0 0
  %2729 = vmatpush1.bf16.msra.mxu0 0
  %2730 = vmatprep.subr.bf16.mxu0 0
  %2731 = vmatpush1.bf16.msra.mxu0 0
  %2732 = vmatprep.subr.bf16.mxu0 0
  %2733 = vmatpush1.bf16.msra.mxu0 0
  %2734 = vmatprep.subr.bf16.mxu0 0
  %2735 = vmatpush1.bf16.msra.mxu0 0
  %2736 = vmatprep.subr.bf16.mxu0 0
  %2737 = vmatpush1.bf16.msra.mxu0 0
  %2738 = vmatprep.mubr.bf16.mxu0 0
  %2739 = vmatmul.mubr.bf16.gmra.mrb[0].mxu0 %v2616
  %v2740 = vpop.f32.mrb[0].mxu0
  %v2741 = vpop.f32.mrb[0].mxu0
  %v2742 = vpop.f32.mrb[0].mxu0
  %v2743 = vpop.f32.mrb[0].mxu0
  %2744 = vmatprep.mubr.bf16.mxu0 0
  %2745 = vmatmul.mubr.bf16.gmra.mrb[0].mxu0 %v2619
  %v2746 = vpop.f32.mrb[0].mxu0
  %v2747 = vpop.f32.mrb[0].mxu0
  %v2748 = vpop.f32.mrb[0].mxu0
  %v2749 = vpop.f32.mrb[0].mxu0
  %2750 = vmatprep.mubr.bf16.mxu0 0
  %2751 = vmatmul.mubr.bf16.gmra.mrb[0].mxu0 %v2622
  %v2752 = vpop.f32.mrb[0].mxu0
  %v2753 = vpop.f32.mrb[0].mxu0
  %v2754 = vpop.f32.mrb[0].mxu0
  %v2755 = vadd.f32 %v2692, %v2754
  %v2756 = vpop.f32.mrb[0].mxu0
  %2757 = vdwg.mxu0
  %v2758 = vld [vmem:[%s8] sm:$0xf]
  %v2759 = vld [vmem:[%s8 + $0x4] sm:$0xf]
  %v2760 = vld [vmem:[%s8 + $0x8] sm:$0xf]
  %v2761 = vld [vmem:[%s8 + $0xc] sm:$0xf]
  %s2762 = scalar_lea.vmem %s8, 16
  %v2763 = vld [vmem:[%s2762] sm:$0xf]
  %v2764 = vld [vmem:[%s2762 + $0x4] sm:$0xf]
  %v2765 = vld [vmem:[%s2762 + $0x8] sm:$0xf]
  %v2766 = vld [vmem:[%s2762 + $0xc] sm:$0xf]
  %v2767 = vld [vmem:[%s12] sm:$0xf]
  %v2768 = vld [vmem:[%s12 + $0x4] sm:$0xf]
  %s2769 = scalar_lea.vmem %s12, 8
  %v2770 = vld [vmem:[%s2769] sm:$0xf]
  %v2771 = vld [vmem:[%s2769 + $0x4] sm:$0xf]
  %v2772 = vld [vmem:[%s9] sm:$0x1]
  %v2774 = vlaneseq
  %v2775 = vshrl.u32 %v2774, 7
  %v2776 = vsub.s32 0, %v2775
  %v2777 = vrot.slane %v2772, %v2776
  %s2778 = scalar_lea.vmem %s9, 1
  %v2779 = vld [vmem:[%s2778] sm:$0x1]
  %v2781 = vlaneseq
  %v2782 = vshrl.u32 %v2781, 7
  %v2783 = vsub.s32 0, %v2782
  %v2784 = vrot.slane %v2779, %v2783
  %v2785 = vld [vmem:[%s13] sm:$0x1]
  %v2787 = vlaneseq
  %v2788 = vshrl.u32 %v2787, 7
  %v2789 = vsub.s32 0, %v2788
  %v2790 = vrot.slane %v2785, %v2789
  %s2791 = scalar_lea.vmem %s13, 1
  %v2792 = vld [vmem:[%s2791] sm:$0x1]
  %v2794 = vlaneseq
  %v2795 = vshrl.u32 %v2794, 7
  %v2796 = vsub.s32 0, %v2795
  %v2797 = vrot.slane %v2792, %v2796
  %v2802 = vunpack.c.l.b16 %v2758
  %v2803 = vunpack.c.l.b16 %v2759
  %v2804 = vunpack.c.l.b16 %v2760
  %v2805 = vunpack.c.l.b16 %v2761
  %v2806 = vpack.c.b16 %v2803, %v2802
  %v2807 = vpack.c.b16 %v2805, %v2804
  %2810 = vmatprep.subr.bf16.mxu0 0
  %2811 = vmatpush1.bf16.msra.mxu0 %v2806
  %2812 = vmatprep.subr.bf16.mxu0 0
  %2813 = vmatpush1.bf16.msra.mxu0 %v2807
  %2814 = vmatprep.subr.bf16.mxu0 0
  %2815 = vmatpush1.bf16.msra.mxu0 0
  %2816 = vmatprep.subr.bf16.mxu0 0
  %2817 = vmatpush1.bf16.msra.mxu0 0
  %2818 = vmatprep.subr.bf16.mxu0 0
  %2819 = vmatpush1.bf16.msra.mxu0 0
  %2820 = vmatprep.subr.bf16.mxu0 0
  %2821 = vmatpush1.bf16.msra.mxu0 0
  %2822 = vmatprep.subr.bf16.mxu0 0
  %2823 = vmatpush1.bf16.msra.mxu0 0
  %2824 = vmatprep.subr.bf16.mxu0 0
  %2825 = vmatpush1.bf16.msra.mxu0 0
  %2826 = vmatprep.subr.bf16.mxu0 0
  %2827 = vmatpush1.bf16.msra.mxu0 0
  %2828 = vmatprep.subr.bf16.mxu0 0
  %2829 = vmatpush1.bf16.msra.mxu0 0
  %2830 = vmatprep.subr.bf16.mxu0 0
  %2831 = vmatpush1.bf16.msra.mxu0 0
  %2832 = vmatprep.subr.bf16.mxu0 0
  %2833 = vmatpush1.bf16.msra.mxu0 0
  %2834 = vmatprep.subr.bf16.mxu0 0
  %2835 = vmatpush1.bf16.msra.mxu0 0
  %2836 = vmatprep.subr.bf16.mxu0 0
  %2837 = vmatpush1.bf16.msra.mxu0 0
  %2838 = vmatprep.subr.bf16.mxu0 0
  %2839 = vmatpush1.bf16.msra.mxu0 0
  %2840 = vmatprep.subr.bf16.mxu0 0
  %2841 = vmatpush1.bf16.msra.mxu0 0
  %2842 = vmatprep.mubr.bf16.mxu0 0
  %2843 = vmatmul.mubr.bf16.gmra.mrb[0].mxu0 %v123
  %v2844 = vpop.f32.mrb[0].mxu0
  %v2845 = vadd.f32 0.0, %v2844
  %v2846 = vpop.f32.mrb[0].mxu0
  %v2847 = vpop.f32.mrb[0].mxu0
  %v2848 = vpop.f32.mrb[0].mxu0
  %2849 = vdwg.mxu0
  %v2854 = vunpack.c.l.b16 %v2763
  %v2855 = vunpack.c.l.b16 %v2764
  %v2856 = vunpack.c.l.b16 %v2765
  %v2857 = vunpack.c.l.b16 %v2766
  %v2858 = vpack.c.b16 %v2855, %v2854
  %v2859 = vpack.c.b16 %v2857, %v2856
  %2862 = vmatprep.subr.bf16.mxu0 0
  %2863 = vmatpush1.bf16.msra.mxu0 %v2858
  %2864 = vmatprep.subr.bf16.mxu0 0
  %2865 = vmatpush1.bf16.msra.mxu0 %v2859
  %2866 = vmatprep.subr.bf16.mxu0 0
  %2867 = vmatpush1.bf16.msra.mxu0 0
  %2868 = vmatprep.subr.bf16.mxu0 0
  %2869 = vmatpush1.bf16.msra.mxu0 0
  %2870 = vmatprep.subr.bf16.mxu0 0
  %2871 = vmatpush1.bf16.msra.mxu0 0
  %2872 = vmatprep.subr.bf16.mxu0 0
  %2873 = vmatpush1.bf16.msra.mxu0 0
  %2874 = vmatprep.subr.bf16.mxu0 0
  %2875 = vmatpush1.bf16.msra.mxu0 0
  %2876 = vmatprep.subr.bf16.mxu0 0
  %2877 = vmatpush1.bf16.msra.mxu0 0
  %2878 = vmatprep.subr.bf16.mxu0 0
  %2879 = vmatpush1.bf16.msra.mxu0 0
  %2880 = vmatprep.subr.bf16.mxu0 0
  %2881 = vmatpush1.bf16.msra.mxu0 0
  %2882 = vmatprep.subr.bf16.mxu0 0
  %2883 = vmatpush1.bf16.msra.mxu0 0
  %2884 = vmatprep.subr.bf16.mxu0 0
  %2885 = vmatpush1.bf16.msra.mxu0 0
  %2886 = vmatprep.subr.bf16.mxu0 0
  %2887 = vmatpush1.bf16.msra.mxu0 0
  %2888 = vmatprep.subr.bf16.mxu0 0
  %2889 = vmatpush1.bf16.msra.mxu0 0
  %2890 = vmatprep.subr.bf16.mxu0 0
  %2891 = vmatpush1.bf16.msra.mxu0 0
  %2892 = vmatprep.subr.bf16.mxu0 0
  %2893 = vmatpush1.bf16.msra.mxu0 0
  %2894 = vmatprep.mubr.bf16.mxu0 0
  %2895 = vmatmul.mubr.bf16.gmra.mrb[0].mxu0 %v123
  %v2896 = vpop.f32.mrb[0].mxu0
  %v2897 = vadd.f32 0.0, %v2896
  %v2898 = vpop.f32.mrb[0].mxu0
  %v2899 = vpop.f32.mrb[0].mxu0
  %v2900 = vpop.f32.mrb[0].mxu0
  %2901 = vdwg.mxu0
  %v2902 = vadd.f32 %v2447, %v2845
  %v2903 = vxor.u32 %v2902, 2147483648
  %v2904 = vmul.f32 %v2903, 1.442695
  %v2905 = vpow.pop %v2904
  %v2906 = vadd.f32 %v2905, 1.0
  %v2907 = vrcp.pop %v2906
  %v2908 = vmul.f32 1.0, %v2907
  %2909 = vrot.lane.b32.xlu0 %v2777, 64
  %v2910 = vpop.permute.xlu0 %2909
  %v2912 = vadd.f32 %v2845, %v2910
  %2914 = vrot.lane.b32.xlu0 %v2912, 64
  %v2915 = vpop.permute.xlu0 %2914
  %v2917 = vmul.f32 %v2908, %v2915
  %2919 = vrot.lane.b32.xlu0 %v2917, 64
  %v2920 = vpop.permute.xlu0 %2919
  %v2922 = vadd.f32 %v2447, %v2920
  %v2923 = vtanh.pop %v2922
  %v2924 = vsub.f32 1.0, %v2908
  %2926 = vrot.lane.b32.xlu0 %v2923, 96
  %v2927 = vpop.permute.xlu0 %2926
  %v2929 = vmul.f32 %v2924, %v2927
  %v2930 = vmul.f32 %v2908, 0.0
  %v2931 = vadd.f32 %v2929, %v2930
  %v2932 = vadd.f32 %v2580, %v2897
  %v2933 = vxor.u32 %v2932, 2147483648
  %v2934 = vmul.f32 %v2933, 1.442695
  %v2935 = vpow.pop %v2934
  %v2936 = vadd.f32 %v2935, 1.0
  %v2937 = vrcp.pop %v2936
  %v2938 = vmul.f32 1.0, %v2937
  %2939 = vrot.lane.b32.xlu0 %v2784, 64
  %v2940 = vpop.permute.xlu0 %2939
  %v2942 = vadd.f32 %v2897, %v2940
  %2944 = vrot.lane.b32.xlu0 %v2942, 64
  %v2945 = vpop.permute.xlu0 %2944
  %v2947 = vmul.f32 %v2938, %v2945
  %2949 = vrot.lane.b32.xlu0 %v2947, 64
  %v2950 = vpop.permute.xlu0 %2949
  %v2952 = vadd.f32 %v2580, %v2950
  %v2953 = vtanh.pop %v2952
  %v2954 = vsub.f32 1.0, %v2938
  %2956 = vrot.lane.b32.xlu0 %v2953, 96
  %v2957 = vpop.permute.xlu0 %2956
  %v2959 = vmul.f32 %v2954, %v2957
  %v2960 = vmul.f32 %v2938, 0.0
  %v2961 = vadd.f32 %v2959, %v2960
  %v2964 = vunpack.c.l.b16 %v2767
  %v2965 = vunpack.c.l.b16 %v2768
  %v2966 = vpack.c.b16 %v2965, %v2964
  %2968 = vmatprep.subr.bf16.mxu0 0
  %2969 = vmatpush1.bf16.msra.mxu0 %v2966
  %2970 = vmatprep.subr.bf16.mxu0 0
  %2971 = vmatpush1.bf16.msra.mxu0 0
  %2972 = vmatprep.subr.bf16.mxu0 0
  %2973 = vmatpush1.bf16.msra.mxu0 0
  %2974 = vmatprep.subr.bf16.mxu0 0
  %2975 = vmatpush1.bf16.msra.mxu0 0
  %2976 = vmatprep.subr.bf16.mxu0 0
  %2977 = vmatpush1.bf16.msra.mxu0 0
  %2978 = vmatprep.subr.bf16.mxu0 0
  %2979 = vmatpush1.bf16.msra.mxu0 0
  %2980 = vmatprep.subr.bf16.mxu0 0
  %2981 = vmatpush1.bf16.msra.mxu0 0
  %2982 = vmatprep.subr.bf16.mxu0 0
  %2983 = vmatpush1.bf16.msra.mxu0 0
  %2984 = vmatprep.subr.bf16.mxu0 0
  %2985 = vmatpush1.bf16.msra.mxu0 0
  %2986 = vmatprep.subr.bf16.mxu0 0
  %2987 = vmatpush1.bf16.msra.mxu0 0
  %2988 = vmatprep.subr.bf16.mxu0 0
  %2989 = vmatpush1.bf16.msra.mxu0 0
  %2990 = vmatprep.subr.bf16.mxu0 0
  %2991 = vmatpush1.bf16.msra.mxu0 0
  %2992 = vmatprep.subr.bf16.mxu0 0
  %2993 = vmatpush1.bf16.msra.mxu0 0
  %2994 = vmatprep.subr.bf16.mxu0 0
  %2995 = vmatpush1.bf16.msra.mxu0 0
  %2996 = vmatprep.subr.bf16.mxu0 0
  %2997 = vmatpush1.bf16.msra.mxu0 0
  %2998 = vmatprep.subr.bf16.mxu0 0
  %2999 = vmatpush1.bf16.msra.mxu0 0
  %3000 = vmatprep.mubr.bf16.mxu0 0
  %3001 = vmatmul.mubr.bf16.gmra.mrb[0].mxu0 %v294
  %v3002 = vpop.f32.mrb[0].mxu0
  %v3003 = vadd.f32 0.0, %v3002
  %v3004 = vpop.f32.mrb[0].mxu0
  %v3005 = vpop.f32.mrb[0].mxu0
  %v3006 = vpop.f32.mrb[0].mxu0
  %3007 = vdwg.mxu0
  %v3008 = vadd.f32 %v2659, %v3003
  %v3009 = vxor.u32 %v3008, 2147483648
  %v3010 = vmul.f32 %v3009, 1.442695
  %v3011 = vpow.pop %v3010
  %v3012 = vadd.f32 %v3011, 1.0
  %v3013 = vrcp.pop %v3012
  %v3014 = vmul.f32 1.0, %v3013
  %3015 = vrot.lane.b32.xlu0 %v2790, 32
  %v3016 = vpop.permute.xlu0 %3015
  %v3018 = vadd.f32 %v3003, %v3016
  %3020 = vrot.lane.b32.xlu0 %v3018, 96
  %v3021 = vpop.permute.xlu0 %3020
  %v3023 = vmul.f32 %v3014, %v3021
  %3025 = vrot.lane.b32.xlu0 %v3023, 32
  %v3026 = vpop.permute.xlu0 %3025
  %v3028 = vadd.f32 %v2659, %v3026
  %v3029 = vtanh.pop %v3028
  %v3030 = vsub.f32 1.0, %v3014
  %3032 = vrot.lane.b32.xlu0 %v3029, 112
  %v3033 = vpop.permute.xlu0 %3032
  %v3035 = vmul.f32 %v3030, %v3033
  %v3036 = vmul.f32 %v3014, 0.0
  %v3037 = vadd.f32 %v3035, %v3036
  %v3040 = vunpack.c.l.b16 %v2770
  %v3041 = vunpack.c.l.b16 %v2771
  %v3042 = vpack.c.b16 %v3041, %v3040
  %3044 = vmatprep.subr.bf16.mxu0 0
  %3045 = vmatpush1.bf16.msra.mxu0 %v3042
  %3046 = vmatprep.subr.bf16.mxu0 0
  %3047 = vmatpush1.bf16.msra.mxu0 0
  %3048 = vmatprep.subr.bf16.mxu0 0
  %3049 = vmatpush1.bf16.msra.mxu0 0
  %3050 = vmatprep.subr.bf16.mxu0 0
  %3051 = vmatpush1.bf16.msra.mxu0 0
  %3052 = vmatprep.subr.bf16.mxu0 0
  %3053 = vmatpush1.bf16.msra.mxu0 0
  %3054 = vmatprep.subr.bf16.mxu0 0
  %3055 = vmatpush1.bf16.msra.mxu0 0
  %3056 = vmatprep.subr.bf16.mxu0 0
  %3057 = vmatpush1.bf16.msra.mxu0 0
  %3058 = vmatprep.subr.bf16.mxu0 0
  %3059 = vmatpush1.bf16.msra.mxu0 0
  %3060 = vmatprep.subr.bf16.mxu0 0
  %3061 = vmatpush1.bf16.msra.mxu0 0
  %3062 = vmatprep.subr.bf16.mxu0 0
  %3063 = vmatpush1.bf16.msra.mxu0 0
  %3064 = vmatprep.subr.bf16.mxu0 0
  %3065 = vmatpush1.bf16.msra.mxu0 0
  %3066 = vmatprep.subr.bf16.mxu0 0
  %3067 = vmatpush1.bf16.msra.mxu0 0
  %3068 = vmatprep.subr.bf16.mxu0 0
  %3069 = vmatpush1.bf16.msra.mxu0 0
  %3070 = vmatprep.subr.bf16.mxu0 0
  %3071 = vmatpush1.bf16.msra.mxu0 0
  %3072 = vmatprep.subr.bf16.mxu0 0
  %3073 = vmatpush1.bf16.msra.mxu0 0
  %3074 = vmatprep.subr.bf16.mxu0 0
  %3075 = vmatpush1.bf16.msra.mxu0 0
  %3076 = vmatprep.mubr.bf16.mxu0 0
  %3077 = vmatmul.mubr.bf16.gmra.mrb[0].mxu0 %v294
  %v3078 = vpop.f32.mrb[0].mxu0
  %v3079 = vadd.f32 0.0, %v3078
  %v3080 = vpop.f32.mrb[0].mxu0
  %v3081 = vpop.f32.mrb[0].mxu0
  %v3082 = vpop.f32.mrb[0].mxu0
  %3083 = vdwg.mxu0
  %v3084 = vadd.f32 %v2755, %v3079
  %v3085 = vxor.u32 %v3084, 2147483648
  %v3086 = vmul.f32 %v3085, 1.442695
  %v3087 = vpow.pop %v3086
  %v3088 = vadd.f32 %v3087, 1.0
  %v3089 = vrcp.pop %v3088
  %v3090 = vmul.f32 1.0, %v3089
  %3091 = vrot.lane.b32.xlu0 %v2797, 32
  %v3092 = vpop.permute.xlu0 %3091
  %v3094 = vadd.f32 %v3079, %v3092
  %3096 = vrot.lane.b32.xlu0 %v3094, 96
  %v3097 = vpop.permute.xlu0 %3096
  %v3099 = vmul.f32 %v3090, %v3097
  %3101 = vrot.lane.b32.xlu0 %v3099, 32
  %v3102 = vpop.permute.xlu0 %3101
  %v3104 = vadd.f32 %v2755, %v3102
  %v3105 = vtanh.pop %v3104
  %v3106 = vsub.f32 1.0, %v3090
  %3108 = vrot.lane.b32.xlu0 %v3105, 112
  %v3109 = vpop.permute.xlu0 %3108
  %v3111 = vmul.f32 %v3106, %v3109
  %v3112 = vmul.f32 %v3090, 0.0
  %v3113 = vadd.f32 %v3111, %v3112
  %v3114 = vpack.c.bf16 %v2931, %v2931
  %3116 = vrot.lane.b32.xlu0 %v3114, 96
  %v3117 = vpop.permute.xlu0 %3116
  %v3119 = vsel %vm121, %v3117, 0
  %3121 = vmatprep.subr.bf16.mxu0 0
  %3122 = vmatpush1.bf16.msra.mxu0 %v2806
  %3123 = vmatprep.subr.bf16.mxu0 0
  %3124 = vmatpush1.bf16.msra.mxu0 %v2807
  %3125 = vmatprep.subr.bf16.mxu0 0
  %3126 = vmatpush1.bf16.msra.mxu0 0
  %3127 = vmatprep.subr.bf16.mxu0 0
  %3128 = vmatpush1.bf16.msra.mxu0 0
  %3129 = vmatprep.subr.bf16.mxu0 0
  %3130 = vmatpush1.bf16.msra.mxu0 0
  %3131 = vmatprep.subr.bf16.mxu0 0
  %3132 = vmatpush1.bf16.msra.mxu0 0
  %3133 = vmatprep.subr.bf16.mxu0 0
  %3134 = vmatpush1.bf16.msra.mxu0 0
  %3135 = vmatprep.subr.bf16.mxu0 0
  %3136 = vmatpush1.bf16.msra.mxu0 0
  %3137 = vmatprep.subr.bf16.mxu0 0
  %3138 = vmatpush1.bf16.msra.mxu0 0
  %3139 = vmatprep.subr.bf16.mxu0 0
  %3140 = vmatpush1.bf16.msra.mxu0 0
  %3141 = vmatprep.subr.bf16.mxu0 0
  %3142 = vmatpush1.bf16.msra.mxu0 0
  %3143 = vmatprep.subr.bf16.mxu0 0
  %3144 = vmatpush1.bf16.msra.mxu0 0
  %3145 = vmatprep.subr.bf16.mxu0 0
  %3146 = vmatpush1.bf16.msra.mxu0 0
  %3147 = vmatprep.subr.bf16.mxu0 0
  %3148 = vmatpush1.bf16.msra.mxu0 0
  %3149 = vmatprep.subr.bf16.mxu0 0
  %3150 = vmatpush1.bf16.msra.mxu0 0
  %3151 = vmatprep.subr.bf16.mxu0 0
  %3152 = vmatpush1.bf16.msra.mxu0 0
  %3153 = vmatprep.mubr.bf16.mxu0 0
  %3154 = vmatmul.mubr.bf16.gmra.mrb[0].mxu0 %v3119
  %v3155 = vpop.f32.mrb[0].mxu0
  %v3156 = vadd.f32 0.0, %v3155
  %v3157 = vpop.f32.mrb[0].mxu0
  %v3158 = vpop.f32.mrb[0].mxu0
  %v3159 = vpop.f32.mrb[0].mxu0
  %3160 = vdwg.mxu0
  %v3161 = vpack.c.bf16 %v2961, %v2961
  %3163 = vrot.lane.b32.xlu0 %v3161, 96
  %v3164 = vpop.permute.xlu0 %3163
  %v3166 = vsel %vm121, %v3164, 0
  %3168 = vmatprep.subr.bf16.mxu0 0
  %3169 = vmatpush1.bf16.msra.mxu0 %v2858
  %3170 = vmatprep.subr.bf16.mxu0 0
  %3171 = vmatpush1.bf16.msra.mxu0 %v2859
  %3172 = vmatprep.subr.bf16.mxu0 0
  %3173 = vmatpush1.bf16.msra.mxu0 0
  %3174 = vmatprep.subr.bf16.mxu0 0
  %3175 = vmatpush1.bf16.msra.mxu0 0
  %3176 = vmatprep.subr.bf16.mxu0 0
  %3177 = vmatpush1.bf16.msra.mxu0 0
  %3178 = vmatprep.subr.bf16.mxu0 0
  %3179 = vmatpush1.bf16.msra.mxu0 0
  %3180 = vmatprep.subr.bf16.mxu0 0
  %3181 = vmatpush1.bf16.msra.mxu0 0
  %3182 = vmatprep.subr.bf16.mxu0 0
  %3183 = vmatpush1.bf16.msra.mxu0 0
  %3184 = vmatprep.subr.bf16.mxu0 0
  %3185 = vmatpush1.bf16.msra.mxu0 0
  %3186 = vmatprep.subr.bf16.mxu0 0
  %3187 = vmatpush1.bf16.msra.mxu0 0
  %3188 = vmatprep.subr.bf16.mxu0 0
  %3189 = vmatpush1.bf16.msra.mxu0 0
  %3190 = vmatprep.subr.bf16.mxu0 0
  %3191 = vmatpush1.bf16.msra.mxu0 0
  %3192 = vmatprep.subr.bf16.mxu0 0
  %3193 = vmatpush1.bf16.msra.mxu0 0
  %3194 = vmatprep.subr.bf16.mxu0 0
  %3195 = vmatpush1.bf16.msra.mxu0 0
  %3196 = vmatprep.subr.bf16.mxu0 0
  %3197 = vmatpush1.bf16.msra.mxu0 0
  %3198 = vmatprep.subr.bf16.mxu0 0
  %3199 = vmatpush1.bf16.msra.mxu0 0
  %3200 = vmatprep.mubr.bf16.mxu0 0
  %3201 = vmatmul.mubr.bf16.gmra.mrb[0].mxu0 %v3166
  %v3202 = vpop.f32.mrb[0].mxu0
  %v3203 = vadd.f32 0.0, %v3202
  %v3204 = vpop.f32.mrb[0].mxu0
  %v3205 = vpop.f32.mrb[0].mxu0
  %v3206 = vpop.f32.mrb[0].mxu0
  %3207 = vdwg.mxu0
  %v3208 = vadd.f32 %v2450, %v3156
  %v3209 = vxor.u32 %v3208, 2147483648
  %v3210 = vmul.f32 %v3209, 1.442695
  %v3211 = vpow.pop %v3210
  %v3212 = vadd.f32 %v3211, 1.0
  %v3213 = vrcp.pop %v3212
  %v3214 = vmul.f32 1.0, %v3213
  %v3215 = vadd.f32 %v3156, %v2910
  %3217 = vrot.lane.b32.xlu0 %v3215, 64
  %v3218 = vpop.permute.xlu0 %3217
  %v3220 = vmul.f32 %v3214, %v3218
  %3222 = vrot.lane.b32.xlu0 %v3220, 64
  %v3223 = vpop.permute.xlu0 %3222
  %v3225 = vadd.f32 %v2450, %v3223
  %v3226 = vtanh.pop %v3225
  %v3227 = vsub.f32 1.0, %v3214
  %3229 = vrot.lane.b32.xlu0 %v3226, 96
  %v3230 = vpop.permute.xlu0 %3229
  %v3232 = vmul.f32 %v3227, %v3230
  %v3233 = vmul.f32 %v3214, %v2931
  %v3234 = vadd.f32 %v3232, %v3233
  %v3235 = vadd.f32 %v2577, %v3203
  %v3236 = vxor.u32 %v3235, 2147483648
  %v3237 = vmul.f32 %v3236, 1.442695
  %v3238 = vpow.pop %v3237
  %v3239 = vadd.f32 %v3238, 1.0
  %v3240 = vrcp.pop %v3239
  %v3241 = vmul.f32 1.0, %v3240
  %v3242 = vadd.f32 %v3203, %v2940
  %3244 = vrot.lane.b32.xlu0 %v3242, 64
  %v3245 = vpop.permute.xlu0 %3244
  %v3247 = vmul.f32 %v3241, %v3245
  %3249 = vrot.lane.b32.xlu0 %v3247, 64
  %v3250 = vpop.permute.xlu0 %3249
  %v3252 = vadd.f32 %v2577, %v3250
  %v3253 = vtanh.pop %v3252
  %v3254 = vsub.f32 1.0, %v3241
  %3256 = vrot.lane.b32.xlu0 %v3253, 96
  %v3257 = vpop.permute.xlu0 %3256
  %v3259 = vmul.f32 %v3254, %v3257
  %v3260 = vmul.f32 %v3241, %v2961
  %v3261 = vadd.f32 %v3259, %v3260
  %v3262 = vpack.c.bf16 %v3037, %v3037
  %3264 = vrot.lane.b32.xlu0 %v3262, 112
  %v3265 = vpop.permute.xlu0 %3264
  %v3267 = vsel %vm293, %v3265, 0
  %3269 = vmatprep.subr.bf16.mxu0 0
  %3270 = vmatpush1.bf16.msra.mxu0 %v2966
  %3271 = vmatprep.subr.bf16.mxu0 0
  %3272 = vmatpush1.bf16.msra.mxu0 0
  %3273 = vmatprep.subr.bf16.mxu0 0
  %3274 = vmatpush1.bf16.msra.mxu0 0
  %3275 = vmatprep.subr.bf16.mxu0 0
  %3276 = vmatpush1.bf16.msra.mxu0 0
  %3277 = vmatprep.subr.bf16.mxu0 0
  %3278 = vmatpush1.bf16.msra.mxu0 0
  %3279 = vmatprep.subr.bf16.mxu0 0
  %3280 = vmatpush1.bf16.msra.mxu0 0
  %3281 = vmatprep.subr.bf16.mxu0 0
  %3282 = vmatpush1.bf16.msra.mxu0 0
  %3283 = vmatprep.subr.bf16.mxu0 0
  %3284 = vmatpush1.bf16.msra.mxu0 0
  %3285 = vmatprep.subr.bf16.mxu0 0
  %3286 = vmatpush1.bf16.msra.mxu0 0
  %3287 = vmatprep.subr.bf16.mxu0 0
  %3288 = vmatpush1.bf16.msra.mxu0 0
  %3289 = vmatprep.subr.bf16.mxu0 0
  %3290 = vmatpush1.bf16.msra.mxu0 0
  %3291 = vmatprep.subr.bf16.mxu0 0
  %3292 = vmatpush1.bf16.msra.mxu0 0
  %3293 = vmatprep.subr.bf16.mxu0 0
  %3294 = vmatpush1.bf16.msra.mxu0 0
  %3295 = vmatprep.subr.bf16.mxu0 0
  %3296 = vmatpush1.bf16.msra.mxu0 0
  %3297 = vmatprep.subr.bf16.mxu0 0
  %3298 = vmatpush1.bf16.msra.mxu0 0
  %3299 = vmatprep.subr.bf16.mxu0 0
  %3300 = vmatpush1.bf16.msra.mxu0 0
  %3301 = vmatprep.mubr.bf16.mxu0 0
  %3302 = vmatmul.mubr.bf16.gmra.mrb[0].mxu0 %v3267
  %v3303 = vpop.f32.mrb[0].mxu0
  %v3304 = vadd.f32 0.0, %v3303
  %v3305 = vpop.f32.mrb[0].mxu0
  %v3306 = vpop.f32.mrb[0].mxu0
  %v3307 = vpop.f32.mrb[0].mxu0
  %3308 = vdwg.mxu0
  %v3309 = vadd.f32 %v2662, %v3304
  %v3310 = vxor.u32 %v3309, 2147483648
  %v3311 = vmul.f32 %v3310, 1.442695
  %v3312 = vpow.pop %v3311
  %v3313 = vadd.f32 %v3312, 1.0
  %v3314 = vrcp.pop %v3313
  %v3315 = vmul.f32 1.0, %v3314
  %v3316 = vadd.f32 %v3304, %v3016
  %3318 = vrot.lane.b32.xlu0 %v3316, 96
  %v3319 = vpop.permute.xlu0 %3318
  %v3321 = vmul.f32 %v3315, %v3319
  %3323 = vrot.lane.b32.xlu0 %v3321, 32
  %v3324 = vpop.permute.xlu0 %3323
  %v3326 = vadd.f32 %v2662, %v3324
  %v3327 = vtanh.pop %v3326
  %v3328 = vsub.f32 1.0, %v3315
  %3330 = vrot.lane.b32.xlu0 %v3327, 112
  %v3331 = vpop.permute.xlu0 %3330
  %v3333 = vmul.f32 %v3328, %v3331
  %v3334 = vmul.f32 %v3315, %v3037
  %v3335 = vadd.f32 %v3333, %v3334
  %v3336 = vpack.c.bf16 %v3234, %v3234
  %3338 = vrot.lane.b32.xlu0 %v3336, 96
  %v3339 = vpop.permute.xlu0 %3338
  %v3341 = vsel %vm121, %v3339, 0
  %3343 = vmatprep.subr.bf16.mxu0 0
  %3344 = vmatpush1.bf16.msra.mxu0 %v2806
  %3345 = vmatprep.subr.bf16.mxu0 0
  %3346 = vmatpush1.bf16.msra.mxu0 %v2807
  %3347 = vmatprep.subr.bf16.mxu0 0
  %3348 = vmatpush1.bf16.msra.mxu0 0
  %3349 = vmatprep.subr.bf16.mxu0 0
  %3350 = vmatpush1.bf16.msra.mxu0 0
  %3351 = vmatprep.subr.bf16.mxu0 0
  %3352 = vmatpush1.bf16.msra.mxu0 0
  %3353 = vmatprep.subr.bf16.mxu0 0
  %3354 = vmatpush1.bf16.msra.mxu0 0
  %3355 = vmatprep.subr.bf16.mxu0 0
  %3356 = vmatpush1.bf16.msra.mxu0 0
  %3357 = vmatprep.subr.bf16.mxu0 0
  %3358 = vmatpush1.bf16.msra.mxu0 0
  %3359 = vmatprep.subr.bf16.mxu0 0
  %3360 = vmatpush1.bf16.msra.mxu0 0
  %3361 = vmatprep.subr.bf16.mxu0 0
  %3362 = vmatpush1.bf16.msra.mxu0 0
  %3363 = vmatprep.subr.bf16.mxu0 0
  %3364 = vmatpush1.bf16.msra.mxu0 0
  %3365 = vmatprep.subr.bf16.mxu0 0
  %3366 = vmatpush1.bf16.msra.mxu0 0
  %3367 = vmatprep.subr.bf16.mxu0 0
  %3368 = vmatpush1.bf16.msra.mxu0 0
  %3369 = vmatprep.subr.bf16.mxu0 0
  %3370 = vmatpush1.bf16.msra.mxu0 0
  %3371 = vmatprep.subr.bf16.mxu0 0
  %3372 = vmatpush1.bf16.msra.mxu0 0
  %3373 = vmatprep.subr.bf16.mxu0 0
  %3374 = vmatpush1.bf16.msra.mxu0 0
  %3375 = vmatprep.mubr.bf16.mxu0 0
  %3376 = vmatmul.mubr.bf16.gmra.mrb[0].mxu0 %v3341
  %v3377 = vpop.f32.mrb[0].mxu0
  %v3378 = vadd.f32 0.0, %v3377
  %v3379 = vpop.f32.mrb[0].mxu0
  %v3380 = vpop.f32.mrb[0].mxu0
  %v3381 = vpop.f32.mrb[0].mxu0
  %3382 = vdwg.mxu0
  %v3383 = vpack.c.bf16 %v3261, %v3261
  %3385 = vrot.lane.b32.xlu0 %v3383, 96
  %v3386 = vpop.permute.xlu0 %3385
  %v3388 = vsel %vm121, %v3386, 0
  %3390 = vmatprep.subr.bf16.mxu0 0
  %3391 = vmatpush1.bf16.msra.mxu0 %v2858
  %3392 = vmatprep.subr.bf16.mxu0 0
  %3393 = vmatpush1.bf16.msra.mxu0 %v2859
  %3394 = vmatprep.subr.bf16.mxu0 0
  %3395 = vmatpush1.bf16.msra.mxu0 0
  %3396 = vmatprep.subr.bf16.mxu0 0
  %3397 = vmatpush1.bf16.msra.mxu0 0
  %3398 = vmatprep.subr.bf16.mxu0 0
  %3399 = vmatpush1.bf16.msra.mxu0 0
  %3400 = vmatprep.subr.bf16.mxu0 0
  %3401 = vmatpush1.bf16.msra.mxu0 0
  %3402 = vmatprep.subr.bf16.mxu0 0
  %3403 = vmatpush1.bf16.msra.mxu0 0
  %3404 = vmatprep.subr.bf16.mxu0 0
  %3405 = vmatpush1.bf16.msra.mxu0 0
  %3406 = vmatprep.subr.bf16.mxu0 0
  %3407 = vmatpush1.bf16.msra.mxu0 0
  %3408 = vmatprep.subr.bf16.mxu0 0
  %3409 = vmatpush1.bf16.msra.mxu0 0
  %3410 = vmatprep.subr.bf16.mxu0 0
  %3411 = vmatpush1.bf16.msra.mxu0 0
  %3412 = vmatprep.subr.bf16.mxu0 0
  %3413 = vmatpush1.bf16.msra.mxu0 0
  %3414 = vmatprep.subr.bf16.mxu0 0
  %3415 = vmatpush1.bf16.msra.mxu0 0
  %3416 = vmatprep.subr.bf16.mxu0 0
  %3417 = vmatpush1.bf16.msra.mxu0 0
  %3418 = vmatprep.subr.bf16.mxu0 0
  %3419 = vmatpush1.bf16.msra.mxu0 0
  %3420 = vmatprep.subr.bf16.mxu0 0
  %3421 = vmatpush1.bf16.msra.mxu0 0
  %3422 = vmatprep.mubr.bf16.mxu0 0
  %3423 = vmatmul.mubr.bf16.gmra.mrb[0].mxu0 %v3388
  %v3424 = vpop.f32.mrb[0].mxu0
  %v3425 = vadd.f32 0.0, %v3424
  %v3426 = vpop.f32.mrb[0].mxu0
  %v3427 = vpop.f32.mrb[0].mxu0
  %v3428 = vpop.f32.mrb[0].mxu0
  %3429 = vdwg.mxu0
  %v3430 = vadd.f32 %v2455, %v3378
  %v3431 = vxor.u32 %v3430, 2147483648
  %v3432 = vmul.f32 %v3431, 1.442695
  %v3433 = vpow.pop %v3432
  %v3434 = vadd.f32 %v3433, 1.0
  %v3435 = vrcp.pop %v3434
  %v3436 = vmul.f32 1.0, %v3435
  %v3437 = vadd.f32 %v3378, %v2910
  %3439 = vrot.lane.b32.xlu0 %v3437, 64
  %v3440 = vpop.permute.xlu0 %3439
  %v3442 = vmul.f32 %v3436, %v3440
  %3444 = vrot.lane.b32.xlu0 %v3442, 64
  %v3445 = vpop.permute.xlu0 %3444
  %v3447 = vadd.f32 %v2455, %v3445
  %v3448 = vtanh.pop %v3447
  %v3449 = vsub.f32 1.0, %v3436
  %3451 = vrot.lane.b32.xlu0 %v3448, 96
  %v3452 = vpop.permute.xlu0 %3451
  %v3454 = vmul.f32 %v3449, %v3452
  %v3455 = vmul.f32 %v3436, %v3234
  %v3456 = vadd.f32 %v3454, %v3455
  %v3457 = vadd.f32 %v2572, %v3425
  %v3458 = vxor.u32 %v3457, 2147483648
  %v3459 = vmul.f32 %v3458, 1.442695
  %v3460 = vpow.pop %v3459
  %v3461 = vadd.f32 %v3460, 1.0
  %v3462 = vrcp.pop %v3461
  %v3463 = vmul.f32 1.0, %v3462
  %v3464 = vadd.f32 %v3425, %v2940
  %3466 = vrot.lane.b32.xlu0 %v3464, 64
  %v3467 = vpop.permute.xlu0 %3466
  %v3469 = vmul.f32 %v3463, %v3467
  %3471 = vrot.lane.b32.xlu0 %v3469, 64
  %v3472 = vpop.permute.xlu0 %3471
  %v3474 = vadd.f32 %v2572, %v3472
  %v3475 = vtanh.pop %v3474
  %v3476 = vsub.f32 1.0, %v3463
  %3478 = vrot.lane.b32.xlu0 %v3475, 96
  %v3479 = vpop.permute.xlu0 %3478
  %v3481 = vmul.f32 %v3476, %v3479
  %v3482 = vmul.f32 %v3463, %v3261
  %v3483 = vadd.f32 %v3481, %v3482
  %v3484 = vpack.c.bf16 %v3335, %v3335
  %3486 = vrot.lane.b32.xlu0 %v3484, 112
  %v3487 = vpop.permute.xlu0 %3486
  %v3489 = vsel %vm293, %v3487, 0
  %3491 = vmatprep.subr.bf16.mxu0 0
  %3492 = vmatpush1.bf16.msra.mxu0 %v2966
  %3493 = vmatprep.subr.bf16.mxu0 0
  %3494 = vmatpush1.bf16.msra.mxu0 0
  %3495 = vmatprep.subr.bf16.mxu0 0
  %3496 = vmatpush1.bf16.msra.mxu0 0
  %3497 = vmatprep.subr.bf16.mxu0 0
  %3498 = vmatpush1.bf16.msra.mxu0 0
  %3499 = vmatprep.subr.bf16.mxu0 0
  %3500 = vmatpush1.bf16.msra.mxu0 0
  %3501 = vmatprep.subr.bf16.mxu0 0
  %3502 = vmatpush1.bf16.msra.mxu0 0
  %3503 = vmatprep.subr.bf16.mxu0 0
  %3504 = vmatpush1.bf16.msra.mxu0 0
  %3505 = vmatprep.subr.bf16.mxu0 0
  %3506 = vmatpush1.bf16.msra.mxu0 0
  %3507 = vmatprep.subr.bf16.mxu0 0
  %3508 = vmatpush1.bf16.msra.mxu0 0
  %3509 = vmatprep.subr.bf16.mxu0 0
  %3510 = vmatpush1.bf16.msra.mxu0 0
  %3511 = vmatprep.subr.bf16.mxu0 0
  %3512 = vmatpush1.bf16.msra.mxu0 0
  %3513 = vmatprep.subr.bf16.mxu0 0
  %3514 = vmatpush1.bf16.msra.mxu0 0
  %3515 = vmatprep.subr.bf16.mxu0 0
  %3516 = vmatpush1.bf16.msra.mxu0 0
  %3517 = vmatprep.subr.bf16.mxu0 0
  %3518 = vmatpush1.bf16.msra.mxu0 0
  %3519 = vmatprep.subr.bf16.mxu0 0
  %3520 = vmatpush1.bf16.msra.mxu0 0
  %3521 = vmatprep.subr.bf16.mxu0 0
  %3522 = vmatpush1.bf16.msra.mxu0 0
  %3523 = vmatprep.mubr.bf16.mxu0 0
  %3524 = vmatmul.mubr.bf16.gmra.mrb[0].mxu0 %v3489
  %v3525 = vpop.f32.mrb[0].mxu0
  %v3526 = vadd.f32 0.0, %v3525
  %v3527 = vpop.f32.mrb[0].mxu0
  %v3528 = vpop.f32.mrb[0].mxu0
  %v3529 = vpop.f32.mrb[0].mxu0
  %3530 = vdwg.mxu0
  %v3531 = vadd.f32 %v2667, %v3526
  %v3532 = vxor.u32 %v3531, 2147483648
  %v3533 = vmul.f32 %v3532, 1.442695
  %v3534 = vpow.pop %v3533
  %v3535 = vadd.f32 %v3534, 1.0
  %v3536 = vrcp.pop %v3535
  %v3537 = vmul.f32 1.0, %v3536
  %v3538 = vadd.f32 %v3526, %v3016
  %3540 = vrot.lane.b32.xlu0 %v3538, 96
  %v3541 = vpop.permute.xlu0 %3540
  %v3543 = vmul.f32 %v3537, %v3541
  %3545 = vrot.lane.b32.xlu0 %v3543, 32
  %v3546 = vpop.permute.xlu0 %3545
  %v3548 = vadd.f32 %v2667, %v3546
  %v3549 = vtanh.pop %v3548
  %v3550 = vsub.f32 1.0, %v3537
  %3552 = vrot.lane.b32.xlu0 %v3549, 112
  %v3553 = vpop.permute.xlu0 %3552
  %v3555 = vmul.f32 %v3550, %v3553
  %v3556 = vmul.f32 %v3537, %v3335
  %v3557 = vadd.f32 %v3555, %v3556
  %v3558 = vpack.c.bf16 %v3456, %v3456
  %3560 = vrot.lane.b32.xlu0 %v3558, 96
  %v3561 = vpop.permute.xlu0 %3560
  %v3563 = vsel %vm121, %v3561, 0
  %3565 = vmatprep.subr.bf16.mxu0 0
  %3566 = vmatpush1.bf16.msra.mxu0 %v2806
  %3567 = vmatprep.subr.bf16.mxu0 0
  %3568 = vmatpush1.bf16.msra.mxu0 %v2807
  %3569 = vmatprep.subr.bf16.mxu0 0
  %3570 = vmatpush1.bf16.msra.mxu0 0
  %3571 = vmatprep.subr.bf16.mxu0 0
  %3572 = vmatpush1.bf16.msra.mxu0 0
  %3573 = vmatprep.subr.bf16.mxu0 0
  %3574 = vmatpush1.bf16.msra.mxu0 0
  %3575 = vmatprep.subr.bf16.mxu0 0
  %3576 = vmatpush1.bf16.msra.mxu0 0
  %3577 = vmatprep.subr.bf16.mxu0 0
  %3578 = vmatpush1.bf16.msra.mxu0 0
  %3579 = vmatprep.subr.bf16.mxu0 0
  %3580 = vmatpush1.bf16.msra.mxu0 0
  %3581 = vmatprep.subr.bf16.mxu0 0
  %3582 = vmatpush1.bf16.msra.mxu0 0
  %3583 = vmatprep.subr.bf16.mxu0 0
  %3584 = vmatpush1.bf16.msra.mxu0 0
  %3585 = vmatprep.subr.bf16.mxu0 0
  %3586 = vmatpush1.bf16.msra.mxu0 0
  %3587 = vmatprep.subr.bf16.mxu0 0
  %3588 = vmatpush1.bf16.msra.mxu0 0
  %3589 = vmatprep.subr.bf16.mxu0 0
  %3590 = vmatpush1.bf16.msra.mxu0 0
  %3591 = vmatprep.subr.bf16.mxu0 0
  %3592 = vmatpush1.bf16.msra.mxu0 0
  %3593 = vmatprep.subr.bf16.mxu0 0
  %3594 = vmatpush1.bf16.msra.mxu0 0
  %3595 = vmatprep.subr.bf16.mxu0 0
  %3596 = vmatpush1.bf16.msra.mxu0 0
  %3597 = vmatprep.mubr.bf16.mxu0 0
  %3598 = vmatmul.mubr.bf16.gmra.mrb[0].mxu0 %v3563
  %v3599 = vpop.f32.mrb[0].mxu0
  %v3600 = vadd.f32 0.0, %v3599
  %v3601 = vpop.f32.mrb[0].mxu0
  %v3602 = vpop.f32.mrb[0].mxu0
  %v3603 = vpop.f32.mrb[0].mxu0
  %3604 = vdwg.mxu0
  %v3605 = vpack.c.bf16 %v3483, %v3483
  %3607 = vrot.lane.b32.xlu0 %v3605, 96
  %v3608 = vpop.permute.xlu0 %3607
  %v3610 = vsel %vm121, %v3608, 0
  %3612 = vmatprep.subr.bf16.mxu0 0
  %3613 = vmatpush1.bf16.msra.mxu0 %v2858
  %3614 = vmatprep.subr.bf16.mxu0 0
  %3615 = vmatpush1.bf16.msra.mxu0 %v2859
  %3616 = vmatprep.subr.bf16.mxu0 0
  %3617 = vmatpush1.bf16.msra.mxu0 0
  %3618 = vmatprep.subr.bf16.mxu0 0
  %3619 = vmatpush1.bf16.msra.mxu0 0
  %3620 = vmatprep.subr.bf16.mxu0 0
  %3621 = vmatpush1.bf16.msra.mxu0 0
  %3622 = vmatprep.subr.bf16.mxu0 0
  %3623 = vmatpush1.bf16.msra.mxu0 0
  %3624 = vmatprep.subr.bf16.mxu0 0
  %3625 = vmatpush1.bf16.msra.mxu0 0
  %3626 = vmatprep.subr.bf16.mxu0 0
  %3627 = vmatpush1.bf16.msra.mxu0 0
  %3628 = vmatprep.subr.bf16.mxu0 0
  %3629 = vmatpush1.bf16.msra.mxu0 0
  %3630 = vmatprep.subr.bf16.mxu0 0
  %3631 = vmatpush1.bf16.msra.mxu0 0
  %3632 = vmatprep.subr.bf16.mxu0 0
  %3633 = vmatpush1.bf16.msra.mxu0 0
  %3634 = vmatprep.subr.bf16.mxu0 0
  %3635 = vmatpush1.bf16.msra.mxu0 0
  %3636 = vmatprep.subr.bf16.mxu0 0
  %3637 = vmatpush1.bf16.msra.mxu0 0
  %3638 = vmatprep.subr.bf16.mxu0 0
  %3639 = vmatpush1.bf16.msra.mxu0 0
  %3640 = vmatprep.subr.bf16.mxu0 0
  %3641 = vmatpush1.bf16.msra.mxu0 0
  %3642 = vmatprep.subr.bf16.mxu0 0
  %3643 = vmatpush1.bf16.msra.mxu0 0
  %3644 = vmatprep.mubr.bf16.mxu0 0
  %3645 = vmatmul.mubr.bf16.gmra.mrb[0].mxu0 %v3610
  %v3646 = vpop.f32.mrb[0].mxu0
  %v3647 = vadd.f32 0.0, %v3646
  %v3648 = vpop.f32.mrb[0].mxu0
  %v3649 = vpop.f32.mrb[0].mxu0
  %v3650 = vpop.f32.mrb[0].mxu0
  %3651 = vdwg.mxu0
  %v3652 = vadd.f32 %v2458, %v3600
  %v3653 = vxor.u32 %v3652, 2147483648
  %v3654 = vmul.f32 %v3653, 1.442695
  %v3655 = vpow.pop %v3654
  %v3656 = vadd.f32 %v3655, 1.0
  %v3657 = vrcp.pop %v3656
  %v3658 = vmul.f32 1.0, %v3657
  %v3659 = vadd.f32 %v3600, %v2910
  %3661 = vrot.lane.b32.xlu0 %v3659, 64
  %v3662 = vpop.permute.xlu0 %3661
  %v3664 = vmul.f32 %v3658, %v3662
  %3666 = vrot.lane.b32.xlu0 %v3664, 64
  %v3667 = vpop.permute.xlu0 %3666
  %v3669 = vadd.f32 %v2458, %v3667
  %v3670 = vtanh.pop %v3669
  %v3671 = vsub.f32 1.0, %v3658
  %3673 = vrot.lane.b32.xlu0 %v3670, 96
  %v3674 = vpop.permute.xlu0 %3673
  %v3676 = vmul.f32 %v3671, %v3674
  %v3677 = vmul.f32 %v3658, %v3456
  %v3678 = vadd.f32 %v3676, %v3677
  %v3679 = vadd.f32 %v2569, %v3647
  %v3680 = vxor.u32 %v3679, 2147483648
  %v3681 = vmul.f32 %v3680, 1.442695
  %v3682 = vpow.pop %v3681
  %v3683 = vadd.f32 %v3682, 1.0
  %v3684 = vrcp.pop %v3683
  %v3685 = vmul.f32 1.0, %v3684
  %v3686 = vadd.f32 %v3647, %v2940
  %3688 = vrot.lane.b32.xlu0 %v3686, 64
  %v3689 = vpop.permute.xlu0 %3688
  %v3691 = vmul.f32 %v3685, %v3689
  %3693 = vrot.lane.b32.xlu0 %v3691, 64
  %v3694 = vpop.permute.xlu0 %3693
  %v3696 = vadd.f32 %v2569, %v3694
  %v3697 = vtanh.pop %v3696
  %v3698 = vsub.f32 1.0, %v3685
  %3700 = vrot.lane.b32.xlu0 %v3697, 96
  %v3701 = vpop.permute.xlu0 %3700
  %v3703 = vmul.f32 %v3698, %v3701
  %v3704 = vmul.f32 %v3685, %v3483
  %v3705 = vadd.f32 %v3703, %v3704
  %v3706 = vpack.c.bf16 %v3557, %v3557
  %3708 = vrot.lane.b32.xlu0 %v3706, 112
  %v3709 = vpop.permute.xlu0 %3708
  %v3711 = vsel %vm293, %v3709, 0
  %3713 = vmatprep.subr.bf16.mxu0 0
  %3714 = vmatpush1.bf16.msra.mxu0 %v2966
  %3715 = vmatprep.subr.bf16.mxu0 0
  %3716 = vmatpush1.bf16.msra.mxu0 0
  %3717 = vmatprep.subr.bf16.mxu0 0
  %3718 = vmatpush1.bf16.msra.mxu0 0
  %3719 = vmatprep.subr.bf16.mxu0 0
  %3720 = vmatpush1.bf16.msra.mxu0 0
  %3721 = vmatprep.subr.bf16.mxu0 0
  %3722 = vmatpush1.bf16.msra.mxu0 0
  %3723 = vmatprep.subr.bf16.mxu0 0
  %3724 = vmatpush1.bf16.msra.mxu0 0
  %3725 = vmatprep.subr.bf16.mxu0 0
  %3726 = vmatpush1.bf16.msra.mxu0 0
  %3727 = vmatprep.subr.bf16.mxu0 0
  %3728 = vmatpush1.bf16.msra.mxu0 0
  %3729 = vmatprep.subr.bf16.mxu0 0
  %3730 = vmatpush1.bf16.msra.mxu0 0
  %3731 = vmatprep.subr.bf16.mxu0 0
  %3732 = vmatpush1.bf16.msra.mxu0 0
  %3733 = vmatprep.subr.bf16.mxu0 0
  %3734 = vmatpush1.bf16.msra.mxu0 0
  %3735 = vmatprep.subr.bf16.mxu0 0
  %3736 = vmatpush1.bf16.msra.mxu0 0
  %3737 = vmatprep.subr.bf16.mxu0 0
  %3738 = vmatpush1.bf16.msra.mxu0 0
  %3739 = vmatprep.subr.bf16.mxu0 0
  %3740 = vmatpush1.bf16.msra.mxu0 0
  %3741 = vmatprep.subr.bf16.mxu0 0
  %3742 = vmatpush1.bf16.msra.mxu0 0
  %3743 = vmatprep.subr.bf16.mxu0 0
  %3744 = vmatpush1.bf16.msra.mxu0 0
  %3745 = vmatprep.mubr.bf16.mxu0 0
  %3746 = vmatmul.mubr.bf16.gmra.mrb[0].mxu0 %v3711
  %v3747 = vpop.f32.mrb[0].mxu0
  %v3748 = vadd.f32 0.0, %v3747
  %v3749 = vpop.f32.mrb[0].mxu0
  %v3750 = vpop.f32.mrb[0].mxu0
  %v3751 = vpop.f32.mrb[0].mxu0
  %3752 = vdwg.mxu0
  %v3753 = vadd.f32 %v2670, %v3748
  %v3754 = vxor.u32 %v3753, 2147483648
  %v3755 = vmul.f32 %v3754, 1.442695
  %v3756 = vpow.pop %v3755
  %v3757 = vadd.f32 %v3756, 1.0
  %v3758 = vrcp.pop %v3757
  %v3759 = vmul.f32 1.0, %v3758
  %v3760 = vadd.f32 %v3748, %v3016
  %3762 = vrot.lane.b32.xlu0 %v3760, 96
  %v3763 = vpop.permute.xlu0 %3762
  %v3765 = vmul.f32 %v3759, %v3763
  %3767 = vrot.lane.b32.xlu0 %v3765, 32
  %v3768 = vpop.permute.xlu0 %3767
  %v3770 = vadd.f32 %v2670, %v3768
  %v3771 = vtanh.pop %v3770
  %v3772 = vsub.f32 1.0, %v3759
  %3774 = vrot.lane.b32.xlu0 %v3771, 112
  %v3775 = vpop.permute.xlu0 %3774
  %v3777 = vmul.f32 %v3772, %v3775
  %v3778 = vmul.f32 %v3759, %v3557
  %v3779 = vadd.f32 %v3777, %v3778
  %v3780 = vpack.c.bf16 %v3678, %v3678
  %3782 = vrot.lane.b32.xlu0 %v3780, 96
  %v3783 = vpop.permute.xlu0 %3782
  %v3785 = vsel %vm121, %v3783, 0
  %3787 = vmatprep.subr.bf16.mxu0 0
  %3788 = vmatpush1.bf16.msra.mxu0 %v2806
  %3789 = vmatprep.subr.bf16.mxu0 0
  %3790 = vmatpush1.bf16.msra.mxu0 %v2807
  %3791 = vmatprep.subr.bf16.mxu0 0
  %3792 = vmatpush1.bf16.msra.mxu0 0
  %3793 = vmatprep.subr.bf16.mxu0 0
  %3794 = vmatpush1.bf16.msra.mxu0 0
  %3795 = vmatprep.subr.bf16.mxu0 0
  %3796 = vmatpush1.bf16.msra.mxu0 0
  %3797 = vmatprep.subr.bf16.mxu0 0
  %3798 = vmatpush1.bf16.msra.mxu0 0
  %3799 = vmatprep.subr.bf16.mxu0 0
  %3800 = vmatpush1.bf16.msra.mxu0 0
  %3801 = vmatprep.subr.bf16.mxu0 0
  %3802 = vmatpush1.bf16.msra.mxu0 0
  %3803 = vmatprep.subr.bf16.mxu0 0
  %3804 = vmatpush1.bf16.msra.mxu0 0
  %3805 = vmatprep.subr.bf16.mxu0 0
  %3806 = vmatpush1.bf16.msra.mxu0 0
  %3807 = vmatprep.subr.bf16.mxu0 0
  %3808 = vmatpush1.bf16.msra.mxu0 0
  %3809 = vmatprep.subr.bf16.mxu0 0
  %3810 = vmatpush1.bf16.msra.mxu0 0
  %3811 = vmatprep.subr.bf16.mxu0 0
  %3812 = vmatpush1.bf16.msra.mxu0 0
  %3813 = vmatprep.subr.bf16.mxu0 0
  %3814 = vmatpush1.bf16.msra.mxu0 0
  %3815 = vmatprep.subr.bf16.mxu0 0
  %3816 = vmatpush1.bf16.msra.mxu0 0
  %3817 = vmatprep.subr.bf16.mxu0 0
  %3818 = vmatpush1.bf16.msra.mxu0 0
  %3819 = vmatprep.mubr.bf16.mxu0 0
  %3820 = vmatmul.mubr.bf16.gmra.mrb[0].mxu0 %v3785
  %v3821 = vpop.f32.mrb[0].mxu0
  %v3822 = vadd.f32 0.0, %v3821
  %v3823 = vpop.f32.mrb[0].mxu0
  %v3824 = vpop.f32.mrb[0].mxu0
  %v3825 = vpop.f32.mrb[0].mxu0
  %3826 = vdwg.mxu0
  %v3827 = vpack.c.bf16 %v3705, %v3705
  %3829 = vrot.lane.b32.xlu0 %v3827, 96
  %v3830 = vpop.permute.xlu0 %3829
  %v3832 = vsel %vm121, %v3830, 0
  %3834 = vmatprep.subr.bf16.mxu0 0
  %3835 = vmatpush1.bf16.msra.mxu0 %v2858
  %3836 = vmatprep.subr.bf16.mxu0 0
  %3837 = vmatpush1.bf16.msra.mxu0 %v2859
  %3838 = vmatprep.subr.bf16.mxu0 0
  %3839 = vmatpush1.bf16.msra.mxu0 0
  %3840 = vmatprep.subr.bf16.mxu0 0
  %3841 = vmatpush1.bf16.msra.mxu0 0
  %3842 = vmatprep.subr.bf16.mxu0 0
  %3843 = vmatpush1.bf16.msra.mxu0 0
  %3844 = vmatprep.subr.bf16.mxu0 0
  %3845 = vmatpush1.bf16.msra.mxu0 0
  %3846 = vmatprep.subr.bf16.mxu0 0
  %3847 = vmatpush1.bf16.msra.mxu0 0
  %3848 = vmatprep.subr.bf16.mxu0 0
  %3849 = vmatpush1.bf16.msra.mxu0 0
  %3850 = vmatprep.subr.bf16.mxu0 0
  %3851 = vmatpush1.bf16.msra.mxu0 0
  %3852 = vmatprep.subr.bf16.mxu0 0
  %3853 = vmatpush1.bf16.msra.mxu0 0
  %3854 = vmatprep.subr.bf16.mxu0 0
  %3855 = vmatpush1.bf16.msra.mxu0 0
  %3856 = vmatprep.subr.bf16.mxu0 0
  %3857 = vmatpush1.bf16.msra.mxu0 0
  %3858 = vmatprep.subr.bf16.mxu0 0
  %3859 = vmatpush1.bf16.msra.mxu0 0
  %3860 = vmatprep.subr.bf16.mxu0 0
  %3861 = vmatpush1.bf16.msra.mxu0 0
  %3862 = vmatprep.subr.bf16.mxu0 0
  %3863 = vmatpush1.bf16.msra.mxu0 0
  %3864 = vmatprep.subr.bf16.mxu0 0
  %3865 = vmatpush1.bf16.msra.mxu0 0
  %3866 = vmatprep.mubr.bf16.mxu0 0
  %3867 = vmatmul.mubr.bf16.gmra.mrb[0].mxu0 %v3832
  %v3868 = vpop.f32.mrb[0].mxu0
  %v3869 = vadd.f32 0.0, %v3868
  %v3870 = vpop.f32.mrb[0].mxu0
  %v3871 = vpop.f32.mrb[0].mxu0
  %v3872 = vpop.f32.mrb[0].mxu0
  %3873 = vdwg.mxu0
  %v3874 = vadd.f32 %v2463, %v3822
  %v3875 = vxor.u32 %v3874, 2147483648
  %v3876 = vmul.f32 %v3875, 1.442695
  %v3877 = vpow.pop %v3876
  %v3878 = vadd.f32 %v3877, 1.0
  %v3879 = vrcp.pop %v3878
  %v3880 = vmul.f32 1.0, %v3879
  %v3881 = vadd.f32 %v3822, %v2910
  %3883 = vrot.lane.b32.xlu0 %v3881, 64
  %v3884 = vpop.permute.xlu0 %3883
  %v3886 = vmul.f32 %v3880, %v3884
  %3888 = vrot.lane.b32.xlu0 %v3886, 64
  %v3889 = vpop.permute.xlu0 %3888
  %v3891 = vadd.f32 %v2463, %v3889
  %v3892 = vtanh.pop %v3891
  %v3893 = vsub.f32 1.0, %v3880
  %3895 = vrot.lane.b32.xlu0 %v3892, 96
  %v3896 = vpop.permute.xlu0 %3895
  %v3898 = vmul.f32 %v3893, %v3896
  %v3899 = vmul.f32 %v3880, %v3678
  %v3900 = vadd.f32 %v3898, %v3899
  %v3901 = vadd.f32 %v2564, %v3869
  %v3902 = vxor.u32 %v3901, 2147483648
  %v3903 = vmul.f32 %v3902, 1.442695
  %v3904 = vpow.pop %v3903
  %v3905 = vadd.f32 %v3904, 1.0
  %v3906 = vrcp.pop %v3905
  %v3907 = vmul.f32 1.0, %v3906
  %v3908 = vadd.f32 %v3869, %v2940
  %3910 = vrot.lane.b32.xlu0 %v3908, 64
  %v3911 = vpop.permute.xlu0 %3910
  %v3913 = vmul.f32 %v3907, %v3911
  %3915 = vrot.lane.b32.xlu0 %v3913, 64
  %v3916 = vpop.permute.xlu0 %3915
  %v3918 = vadd.f32 %v2564, %v3916
  %v3919 = vtanh.pop %v3918
  %v3920 = vsub.f32 1.0, %v3907
  %3922 = vrot.lane.b32.xlu0 %v3919, 96
  %v3923 = vpop.permute.xlu0 %3922
  %v3925 = vmul.f32 %v3920, %v3923
  %v3926 = vmul.f32 %v3907, %v3705
  %v3927 = vadd.f32 %v3925, %v3926
  %v3928 = vpack.c.bf16 %v3779, %v3779
  %3930 = vrot.lane.b32.xlu0 %v3928, 112
  %v3931 = vpop.permute.xlu0 %3930
  %v3933 = vsel %vm293, %v3931, 0
  %3935 = vmatprep.subr.bf16.mxu0 0
  %3936 = vmatpush1.bf16.msra.mxu0 %v2966
  %3937 = vmatprep.subr.bf16.mxu0 0
  %3938 = vmatpush1.bf16.msra.mxu0 0
  %3939 = vmatprep.subr.bf16.mxu0 0
  %3940 = vmatpush1.bf16.msra.mxu0 0
  %3941 = vmatprep.subr.bf16.mxu0 0
  %3942 = vmatpush1.bf16.msra.mxu0 0
  %3943 = vmatprep.subr.bf16.mxu0 0
  %3944 = vmatpush1.bf16.msra.mxu0 0
  %3945 = vmatprep.subr.bf16.mxu0 0
  %3946 = vmatpush1.bf16.msra.mxu0 0
  %3947 = vmatprep.subr.bf16.mxu0 0
  %3948 = vmatpush1.bf16.msra.mxu0 0
  %3949 = vmatprep.subr.bf16.mxu0 0
  %3950 = vmatpush1.bf16.msra.mxu0 0
  %3951 = vmatprep.subr.bf16.mxu0 0
  %3952 = vmatpush1.bf16.msra.mxu0 0
  %3953 = vmatprep.subr.bf16.mxu0 0
  %3954 = vmatpush1.bf16.msra.mxu0 0
  %3955 = vmatprep.subr.bf16.mxu0 0
  %3956 = vmatpush1.bf16.msra.mxu0 0
  %3957 = vmatprep.subr.bf16.mxu0 0
  %3958 = vmatpush1.bf16.msra.mxu0 0
  %3959 = vmatprep.subr.bf16.mxu0 0
  %3960 = vmatpush1.bf16.msra.mxu0 0
  %3961 = vmatprep.subr.bf16.mxu0 0
  %3962 = vmatpush1.bf16.msra.mxu0 0
  %3963 = vmatprep.subr.bf16.mxu0 0
  %3964 = vmatpush1.bf16.msra.mxu0 0
  %3965 = vmatprep.subr.bf16.mxu0 0
  %3966 = vmatpush1.bf16.msra.mxu0 0
  %3967 = vmatprep.mubr.bf16.mxu0 0
  %3968 = vmatmul.mubr.bf16.gmra.mrb[0].mxu0 %v3933
  %v3969 = vpop.f32.mrb[0].mxu0
  %v3970 = vadd.f32 0.0, %v3969
  %v3971 = vpop.f32.mrb[0].mxu0
  %v3972 = vpop.f32.mrb[0].mxu0
  %v3973 = vpop.f32.mrb[0].mxu0
  %3974 = vdwg.mxu0
  %v3975 = vadd.f32 %v2675, %v3970
  %v3976 = vxor.u32 %v3975, 2147483648
  %v3977 = vmul.f32 %v3976, 1.442695
  %v3978 = vpow.pop %v3977
  %v3979 = vadd.f32 %v3978, 1.0
  %v3980 = vrcp.pop %v3979
  %v3981 = vmul.f32 1.0, %v3980
  %v3982 = vadd.f32 %v3970, %v3016
  %3984 = vrot.lane.b32.xlu0 %v3982, 96
  %v3985 = vpop.permute.xlu0 %3984
  %v3987 = vmul.f32 %v3981, %v3985
  %3989 = vrot.lane.b32.xlu0 %v3987, 32
  %v3990 = vpop.permute.xlu0 %3989
  %v3992 = vadd.f32 %v2675, %v3990
  %v3993 = vtanh.pop %v3992
  %v3994 = vsub.f32 1.0, %v3981
  %3996 = vrot.lane.b32.xlu0 %v3993, 112
  %v3997 = vpop.permute.xlu0 %3996
  %v3999 = vmul.f32 %v3994, %v3997
  %v4000 = vmul.f32 %v3981, %v3779
  %v4001 = vadd.f32 %v3999, %v4000
  %v4002 = vpack.c.bf16 %v3900, %v3900
  %4004 = vrot.lane.b32.xlu0 %v4002, 96
  %v4005 = vpop.permute.xlu0 %4004
  %v4007 = vsel %vm121, %v4005, 0
  %4009 = vmatprep.subr.bf16.mxu0 0
  %4010 = vmatpush1.bf16.msra.mxu0 %v2806
  %4011 = vmatprep.subr.bf16.mxu0 0
  %4012 = vmatpush1.bf16.msra.mxu0 %v2807
  %4013 = vmatprep.subr.bf16.mxu0 0
  %4014 = vmatpush1.bf16.msra.mxu0 0
  %4015 = vmatprep.subr.bf16.mxu0 0
  %4016 = vmatpush1.bf16.msra.mxu0 0
  %4017 = vmatprep.subr.bf16.mxu0 0
  %4018 = vmatpush1.bf16.msra.mxu0 0
  %4019 = vmatprep.subr.bf16.mxu0 0
  %4020 = vmatpush1.bf16.msra.mxu0 0
  %4021 = vmatprep.subr.bf16.mxu0 0
  %4022 = vmatpush1.bf16.msra.mxu0 0
  %4023 = vmatprep.subr.bf16.mxu0 0
  %4024 = vmatpush1.bf16.msra.mxu0 0
  %4025 = vmatprep.subr.bf16.mxu0 0
  %4026 = vmatpush1.bf16.msra.mxu0 0
  %4027 = vmatprep.subr.bf16.mxu0 0
  %4028 = vmatpush1.bf16.msra.mxu0 0
  %4029 = vmatprep.subr.bf16.mxu0 0
  %4030 = vmatpush1.bf16.msra.mxu0 0
  %4031 = vmatprep.subr.bf16.mxu0 0
  %4032 = vmatpush1.bf16.msra.mxu0 0
  %4033 = vmatprep.subr.bf16.mxu0 0
  %4034 = vmatpush1.bf16.msra.mxu0 0
  %4035 = vmatprep.subr.bf16.mxu0 0
  %4036 = vmatpush1.bf16.msra.mxu0 0
  %4037 = vmatprep.subr.bf16.mxu0 0
  %4038 = vmatpush1.bf16.msra.mxu0 0
  %4039 = vmatprep.subr.bf16.mxu0 0
  %4040 = vmatpush1.bf16.msra.mxu0 0
  %4041 = vmatprep.mubr.bf16.mxu0 0
  %4042 = vmatmul.mubr.bf16.gmra.mrb[0].mxu0 %v4007
  %v4043 = vpop.f32.mrb[0].mxu0
  %v4044 = vadd.f32 0.0, %v4043
  %v4045 = vpop.f32.mrb[0].mxu0
  %v4046 = vpop.f32.mrb[0].mxu0
  %v4047 = vpop.f32.mrb[0].mxu0
  %4048 = vdwg.mxu0
  %v4049 = vpack.c.bf16 %v3927, %v3927
  %4051 = vrot.lane.b32.xlu0 %v4049, 96
  %v4052 = vpop.permute.xlu0 %4051
  %v4054 = vsel %vm121, %v4052, 0
  %4056 = vmatprep.subr.bf16.mxu0 0
  %4057 = vmatpush1.bf16.msra.mxu0 %v2858
  %4058 = vmatprep.subr.bf16.mxu0 0
  %4059 = vmatpush1.bf16.msra.mxu0 %v2859
  %4060 = vmatprep.subr.bf16.mxu0 0
  %4061 = vmatpush1.bf16.msra.mxu0 0
  %4062 = vmatprep.subr.bf16.mxu0 0
  %4063 = vmatpush1.bf16.msra.mxu0 0
  %4064 = vmatprep.subr.bf16.mxu0 0
  %4065 = vmatpush1.bf16.msra.mxu0 0
  %4066 = vmatprep.subr.bf16.mxu0 0
  %4067 = vmatpush1.bf16.msra.mxu0 0
  %4068 = vmatprep.subr.bf16.mxu0 0
  %4069 = vmatpush1.bf16.msra.mxu0 0
  %4070 = vmatprep.subr.bf16.mxu0 0
  %4071 = vmatpush1.bf16.msra.mxu0 0
  %4072 = vmatprep.subr.bf16.mxu0 0
  %4073 = vmatpush1.bf16.msra.mxu0 0
  %4074 = vmatprep.subr.bf16.mxu0 0
  %4075 = vmatpush1.bf16.msra.mxu0 0
  %4076 = vmatprep.subr.bf16.mxu0 0
  %4077 = vmatpush1.bf16.msra.mxu0 0
  %4078 = vmatprep.subr.bf16.mxu0 0
  %4079 = vmatpush1.bf16.msra.mxu0 0
  %4080 = vmatprep.subr.bf16.mxu0 0
  %4081 = vmatpush1.bf16.msra.mxu0 0
  %4082 = vmatprep.subr.bf16.mxu0 0
  %4083 = vmatpush1.bf16.msra.mxu0 0
  %4084 = vmatprep.subr.bf16.mxu0 0
  %4085 = vmatpush1.bf16.msra.mxu0 0
  %4086 = vmatprep.subr.bf16.mxu0 0
  %4087 = vmatpush1.bf16.msra.mxu0 0
  %4088 = vmatprep.mubr.bf16.mxu0 0
  %4089 = vmatmul.mubr.bf16.gmra.mrb[0].mxu0 %v4054
  %v4090 = vpop.f32.mrb[0].mxu0
  %v4091 = vadd.f32 0.0, %v4090
  %v4092 = vpop.f32.mrb[0].mxu0
  %v4093 = vpop.f32.mrb[0].mxu0
  %v4094 = vpop.f32.mrb[0].mxu0
  %4095 = vdwg.mxu0
  %v4096 = vadd.f32 %v2466, %v4044
  %v4097 = vxor.u32 %v4096, 2147483648
  %v4098 = vmul.f32 %v4097, 1.442695
  %v4099 = vpow.pop %v4098
  %v4100 = vadd.f32 %v4099, 1.0
  %v4101 = vrcp.pop %v4100
  %v4102 = vmul.f32 1.0, %v4101
  %v4103 = vadd.f32 %v4044, %v2910
  %4105 = vrot.lane.b32.xlu0 %v4103, 64
  %v4106 = vpop.permute.xlu0 %4105
  %v4108 = vmul.f32 %v4102, %v4106
  %4110 = vrot.lane.b32.xlu0 %v4108, 64
  %v4111 = vpop.permute.xlu0 %4110
  %v4113 = vadd.f32 %v2466, %v4111
  %v4114 = vtanh.pop %v4113
  %v4115 = vsub.f32 1.0, %v4102
  %4117 = vrot.lane.b32.xlu0 %v4114, 96
  %v4118 = vpop.permute.xlu0 %4117
  %v4120 = vmul.f32 %v4115, %v4118
  %v4121 = vmul.f32 %v4102, %v3900
  %v4122 = vadd.f32 %v4120, %v4121
  %v4123 = vadd.f32 %v2561, %v4091
  %v4124 = vxor.u32 %v4123, 2147483648
  %v4125 = vmul.f32 %v4124, 1.442695
  %v4126 = vpow.pop %v4125
  %v4127 = vadd.f32 %v4126, 1.0
  %v4128 = vrcp.pop %v4127
  %v4129 = vmul.f32 1.0, %v4128
  %v4130 = vadd.f32 %v4091, %v2940
  %4132 = vrot.lane.b32.xlu0 %v4130, 64
  %v4133 = vpop.permute.xlu0 %4132
  %v4135 = vmul.f32 %v4129, %v4133
  %4137 = vrot.lane.b32.xlu0 %v4135, 64
  %v4138 = vpop.permute.xlu0 %4137
  %v4140 = vadd.f32 %v2561, %v4138
  %v4141 = vtanh.pop %v4140
  %v4142 = vsub.f32 1.0, %v4129
  %4144 = vrot.lane.b32.xlu0 %v4141, 96
  %v4145 = vpop.permute.xlu0 %4144
  %v4147 = vmul.f32 %v4142, %v4145
  %v4148 = vmul.f32 %v4129, %v3927
  %v4149 = vadd.f32 %v4147, %v4148
  %v4150 = vpack.c.bf16 %v4001, %v4001
  %4152 = vrot.lane.b32.xlu0 %v4150, 112
  %v4153 = vpop.permute.xlu0 %4152
  %v4155 = vsel %vm293, %v4153, 0
  %4157 = vmatprep.subr.bf16.mxu0 0
  %4158 = vmatpush1.bf16.msra.mxu0 %v2966
  %4159 = vmatprep.subr.bf16.mxu0 0
  %4160 = vmatpush1.bf16.msra.mxu0 0
  %4161 = vmatprep.subr.bf16.mxu0 0
  %4162 = vmatpush1.bf16.msra.mxu0 0
  %4163 = vmatprep.subr.bf16.mxu0 0
  %4164 = vmatpush1.bf16.msra.mxu0 0
  %4165 = vmatprep.subr.bf16.mxu0 0
  %4166 = vmatpush1.bf16.msra.mxu0 0
  %4167 = vmatprep.subr.bf16.mxu0 0
  %4168 = vmatpush1.bf16.msra.mxu0 0
  %4169 = vmatprep.subr.bf16.mxu0 0
  %4170 = vmatpush1.bf16.msra.mxu0 0
  %4171 = vmatprep.subr.bf16.mxu0 0
  %4172 = vmatpush1.bf16.msra.mxu0 0
  %4173 = vmatprep.subr.bf16.mxu0 0
  %4174 = vmatpush1.bf16.msra.mxu0 0
  %4175 = vmatprep.subr.bf16.mxu0 0
  %4176 = vmatpush1.bf16.msra.mxu0 0
  %4177 = vmatprep.subr.bf16.mxu0 0
  %4178 = vmatpush1.bf16.msra.mxu0 0
  %4179 = vmatprep.subr.bf16.mxu0 0
  %4180 = vmatpush1.bf16.msra.mxu0 0
  %4181 = vmatprep.subr.bf16.mxu0 0
  %4182 = vmatpush1.bf16.msra.mxu0 0
  %4183 = vmatprep.subr.bf16.mxu0 0
  %4184 = vmatpush1.bf16.msra.mxu0 0
  %4185 = vmatprep.subr.bf16.mxu0 0
  %4186 = vmatpush1.bf16.msra.mxu0 0
  %4187 = vmatprep.subr.bf16.mxu0 0
  %4188 = vmatpush1.bf16.msra.mxu0 0
  %4189 = vmatprep.mubr.bf16.mxu0 0
  %4190 = vmatmul.mubr.bf16.gmra.mrb[0].mxu0 %v4155
  %v4191 = vpop.f32.mrb[0].mxu0
  %v4192 = vadd.f32 0.0, %v4191
  %v4193 = vpop.f32.mrb[0].mxu0
  %v4194 = vpop.f32.mrb[0].mxu0
  %v4195 = vpop.f32.mrb[0].mxu0
  %4196 = vdwg.mxu0
  %v4197 = vadd.f32 %v2678, %v4192
  %v4198 = vxor.u32 %v4197, 2147483648
  %v4199 = vmul.f32 %v4198, 1.442695
  %v4200 = vpow.pop %v4199
  %v4201 = vadd.f32 %v4200, 1.0
  %v4202 = vrcp.pop %v4201
  %v4203 = vmul.f32 1.0, %v4202
  %v4204 = vadd.f32 %v4192, %v3016
  %4206 = vrot.lane.b32.xlu0 %v4204, 96
  %v4207 = vpop.permute.xlu0 %4206
  %v4209 = vmul.f32 %v4203, %v4207
  %4211 = vrot.lane.b32.xlu0 %v4209, 32
  %v4212 = vpop.permute.xlu0 %4211
  %v4214 = vadd.f32 %v2678, %v4212
  %v4215 = vtanh.pop %v4214
  %v4216 = vsub.f32 1.0, %v4203
  %4218 = vrot.lane.b32.xlu0 %v4215, 112
  %v4219 = vpop.permute.xlu0 %4218
  %v4221 = vmul.f32 %v4216, %v4219
  %v4222 = vmul.f32 %v4203, %v4001
  %v4223 = vadd.f32 %v4221, %v4222
  %v4224 = vpack.c.bf16 %v4122, %v4122
  %4226 = vrot.lane.b32.xlu0 %v4224, 96
  %v4227 = vpop.permute.xlu0 %4226
  %v4229 = vsel %vm121, %v4227, 0
  %4231 = vmatprep.subr.bf16.mxu0 0
  %4232 = vmatpush1.bf16.msra.mxu0 %v2806
  %4233 = vmatprep.subr.bf16.mxu0 0
  %4234 = vmatpush1.bf16.msra.mxu0 %v2807
  %4235 = vmatprep.subr.bf16.mxu0 0
  %4236 = vmatpush1.bf16.msra.mxu0 0
  %4237 = vmatprep.subr.bf16.mxu0 0
  %4238 = vmatpush1.bf16.msra.mxu0 0
  %4239 = vmatprep.subr.bf16.mxu0 0
  %4240 = vmatpush1.bf16.msra.mxu0 0
  %4241 = vmatprep.subr.bf16.mxu0 0
  %4242 = vmatpush1.bf16.msra.mxu0 0
  %4243 = vmatprep.subr.bf16.mxu0 0
  %4244 = vmatpush1.bf16.msra.mxu0 0
  %4245 = vmatprep.subr.bf16.mxu0 0
  %4246 = vmatpush1.bf16.msra.mxu0 0
  %4247 = vmatprep.subr.bf16.mxu0 0
  %4248 = vmatpush1.bf16.msra.mxu0 0
  %4249 = vmatprep.subr.bf16.mxu0 0
  %4250 = vmatpush1.bf16.msra.mxu0 0
  %4251 = vmatprep.subr.bf16.mxu0 0
  %4252 = vmatpush1.bf16.msra.mxu0 0
  %4253 = vmatprep.subr.bf16.mxu0 0
  %4254 = vmatpush1.bf16.msra.mxu0 0
  %4255 = vmatprep.subr.bf16.mxu0 0
  %4256 = vmatpush1.bf16.msra.mxu0 0
  %4257 = vmatprep.subr.bf16.mxu0 0
  %4258 = vmatpush1.bf16.msra.mxu0 0
  %4259 = vmatprep.subr.bf16.mxu0 0
  %4260 = vmatpush1.bf16.msra.mxu0 0
  %4261 = vmatprep.subr.bf16.mxu0 0
  %4262 = vmatpush1.bf16.msra.mxu0 0
  %4263 = vmatprep.mubr.bf16.mxu0 0
  %4264 = vmatmul.mubr.bf16.gmra.mrb[0].mxu0 %v4229
  %v4265 = vpop.f32.mrb[0].mxu0
  %v4266 = vadd.f32 0.0, %v4265
  %v4267 = vpop.f32.mrb[0].mxu0
  %v4268 = vpop.f32.mrb[0].mxu0
  %v4269 = vpop.f32.mrb[0].mxu0
  %4270 = vdwg.mxu0
  %v4271 = vpack.c.bf16 %v4149, %v4149
  %4273 = vrot.lane.b32.xlu0 %v4271, 96
  %v4274 = vpop.permute.xlu0 %4273
  %v4276 = vsel %vm121, %v4274, 0
  %4278 = vmatprep.subr.bf16.mxu0 0
  %4279 = vmatpush1.bf16.msra.mxu0 %v2858
  %4280 = vmatprep.subr.bf16.mxu0 0
  %4281 = vmatpush1.bf16.msra.mxu0 %v2859
  %4282 = vmatprep.subr.bf16.mxu0 0
  %4283 = vmatpush1.bf16.msra.mxu0 0
  %4284 = vmatprep.subr.bf16.mxu0 0
  %4285 = vmatpush1.bf16.msra.mxu0 0
  %4286 = vmatprep.subr.bf16.mxu0 0
  %4287 = vmatpush1.bf16.msra.mxu0 0
  %4288 = vmatprep.subr.bf16.mxu0 0
  %4289 = vmatpush1.bf16.msra.mxu0 0
  %4290 = vmatprep.subr.bf16.mxu0 0
  %4291 = vmatpush1.bf16.msra.mxu0 0
  %4292 = vmatprep.subr.bf16.mxu0 0
  %4293 = vmatpush1.bf16.msra.mxu0 0
  %4294 = vmatprep.subr.bf16.mxu0 0
  %4295 = vmatpush1.bf16.msra.mxu0 0
  %4296 = vmatprep.subr.bf16.mxu0 0
  %4297 = vmatpush1.bf16.msra.mxu0 0
  %4298 = vmatprep.subr.bf16.mxu0 0
  %4299 = vmatpush1.bf16.msra.mxu0 0
  %4300 = vmatprep.subr.bf16.mxu0 0
  %4301 = vmatpush1.bf16.msra.mxu0 0
  %4302 = vmatprep.subr.bf16.mxu0 0
  %4303 = vmatpush1.bf16.msra.mxu0 0
  %4304 = vmatprep.subr.bf16.mxu0 0
  %4305 = vmatpush1.bf16.msra.mxu0 0
  %4306 = vmatprep.subr.bf16.mxu0 0
  %4307 = vmatpush1.bf16.msra.mxu0 0
  %4308 = vmatprep.subr.bf16.mxu0 0
  %4309 = vmatpush1.bf16.msra.mxu0 0
  %4310 = vmatprep.mubr.bf16.mxu0 0
  %4311 = vmatmul.mubr.bf16.gmra.mrb[0].mxu0 %v4276
  %v4312 = vpop.f32.mrb[0].mxu0
  %v4313 = vadd.f32 0.0, %v4312
  %v4314 = vpop.f32.mrb[0].mxu0
  %v4315 = vpop.f32.mrb[0].mxu0
  %v4316 = vpop.f32.mrb[0].mxu0
  %4317 = vdwg.mxu0
  %v4318 = vadd.f32 %v2471, %v4266
  %v4319 = vxor.u32 %v4318, 2147483648
  %v4320 = vmul.f32 %v4319, 1.442695
  %v4321 = vpow.pop %v4320
  %v4322 = vadd.f32 %v4321, 1.0
  %v4323 = vrcp.pop %v4322
  %v4324 = vmul.f32 1.0, %v4323
  %v4325 = vadd.f32 %v4266, %v2910
  %4327 = vrot.lane.b32.xlu0 %v4325, 64
  %v4328 = vpop.permute.xlu0 %4327
  %v4330 = vmul.f32 %v4324, %v4328
  %4332 = vrot.lane.b32.xlu0 %v4330, 64
  %v4333 = vpop.permute.xlu0 %4332
  %v4335 = vadd.f32 %v2471, %v4333
  %v4336 = vtanh.pop %v4335
  %v4337 = vsub.f32 1.0, %v4324
  %4339 = vrot.lane.b32.xlu0 %v4336, 96
  %v4340 = vpop.permute.xlu0 %4339
  %v4342 = vmul.f32 %v4337, %v4340
  %v4343 = vmul.f32 %v4324, %v4122
  %v4344 = vadd.f32 %v4342, %v4343
  %v4345 = vadd.f32 %v2556, %v4313
  %v4346 = vxor.u32 %v4345, 2147483648
  %v4347 = vmul.f32 %v4346, 1.442695
  %v4348 = vpow.pop %v4347
  %v4349 = vadd.f32 %v4348, 1.0
  %v4350 = vrcp.pop %v4349
  %v4351 = vmul.f32 1.0, %v4350
  %v4352 = vadd.f32 %v4313, %v2940
  %4354 = vrot.lane.b32.xlu0 %v4352, 64
  %v4355 = vpop.permute.xlu0 %4354
  %v4357 = vmul.f32 %v4351, %v4355
  %4359 = vrot.lane.b32.xlu0 %v4357, 64
  %v4360 = vpop.permute.xlu0 %4359
  %v4362 = vadd.f32 %v2556, %v4360
  %v4363 = vtanh.pop %v4362
  %v4364 = vsub.f32 1.0, %v4351
  %4366 = vrot.lane.b32.xlu0 %v4363, 96
  %v4367 = vpop.permute.xlu0 %4366
  %v4369 = vmul.f32 %v4364, %v4367
  %v4370 = vmul.f32 %v4351, %v4149
  %v4371 = vadd.f32 %v4369, %v4370
  %v4372 = vpack.c.bf16 %v4344, %v4344
  %4374 = vrot.lane.b32.xlu0 %v4372, 96
  %v4375 = vpop.permute.xlu0 %4374
  %v4377 = vsel %vm121, %v4375, 0
  %4379 = vmatprep.subr.bf16.mxu0 0
  %4380 = vmatpush1.bf16.msra.mxu0 %v2806
  %4381 = vmatprep.subr.bf16.mxu0 0
  %4382 = vmatpush1.bf16.msra.mxu0 %v2807
  %4383 = vmatprep.subr.bf16.mxu0 0
  %4384 = vmatpush1.bf16.msra.mxu0 0
  %4385 = vmatprep.subr.bf16.mxu0 0
  %4386 = vmatpush1.bf16.msra.mxu0 0
  %4387 = vmatprep.subr.bf16.mxu0 0
  %4388 = vmatpush1.bf16.msra.mxu0 0
  %4389 = vmatprep.subr.bf16.mxu0 0
  %4390 = vmatpush1.bf16.msra.mxu0 0
  %4391 = vmatprep.subr.bf16.mxu0 0
  %4392 = vmatpush1.bf16.msra.mxu0 0
  %4393 = vmatprep.subr.bf16.mxu0 0
  %4394 = vmatpush1.bf16.msra.mxu0 0
  %4395 = vmatprep.subr.bf16.mxu0 0
  %4396 = vmatpush1.bf16.msra.mxu0 0
  %4397 = vmatprep.subr.bf16.mxu0 0
  %4398 = vmatpush1.bf16.msra.mxu0 0
  %4399 = vmatprep.subr.bf16.mxu0 0
  %4400 = vmatpush1.bf16.msra.mxu0 0
  %4401 = vmatprep.subr.bf16.mxu0 0
  %4402 = vmatpush1.bf16.msra.mxu0 0
  %4403 = vmatprep.subr.bf16.mxu0 0
  %4404 = vmatpush1.bf16.msra.mxu0 0
  %4405 = vmatprep.subr.bf16.mxu0 0
  %4406 = vmatpush1.bf16.msra.mxu0 0
  %4407 = vmatprep.subr.bf16.mxu0 0
  %4408 = vmatpush1.bf16.msra.mxu0 0
  %4409 = vmatprep.subr.bf16.mxu0 0
  %4410 = vmatpush1.bf16.msra.mxu0 0
  %4411 = vmatprep.mubr.bf16.mxu0 0
  %4412 = vmatmul.mubr.bf16.gmra.mrb[0].mxu0 %v4377
  %v4413 = vpop.f32.mrb[0].mxu0
  %v4414 = vadd.f32 0.0, %v4413
  %v4415 = vpop.f32.mrb[0].mxu0
  %v4416 = vpop.f32.mrb[0].mxu0
  %v4417 = vpop.f32.mrb[0].mxu0
  %4418 = vdwg.mxu0
  %v4419 = vpack.c.bf16 %v4371, %v4371
  %4421 = vrot.lane.b32.xlu0 %v4419, 96
  %v4422 = vpop.permute.xlu0 %4421
  %v4424 = vsel %vm121, %v4422, 0
  %4426 = vmatprep.subr.bf16.mxu0 0
  %4427 = vmatpush1.bf16.msra.mxu0 %v2858
  %4428 = vmatprep.subr.bf16.mxu0 0
  %4429 = vmatpush1.bf16.msra.mxu0 %v2859
  %4430 = vmatprep.subr.bf16.mxu0 0
  %4431 = vmatpush1.bf16.msra.mxu0 0
  %4432 = vmatprep.subr.bf16.mxu0 0
  %4433 = vmatpush1.bf16.msra.mxu0 0
  %4434 = vmatprep.subr.bf16.mxu0 0
  %4435 = vmatpush1.bf16.msra.mxu0 0
  %4436 = vmatprep.subr.bf16.mxu0 0
  %4437 = vmatpush1.bf16.msra.mxu0 0
  %4438 = vmatprep.subr.bf16.mxu0 0
  %4439 = vmatpush1.bf16.msra.mxu0 0
  %4440 = vmatprep.subr.bf16.mxu0 0
  %4441 = vmatpush1.bf16.msra.mxu0 0
  %4442 = vmatprep.subr.bf16.mxu0 0
  %4443 = vmatpush1.bf16.msra.mxu0 0
  %4444 = vmatprep.subr.bf16.mxu0 0
  %4445 = vmatpush1.bf16.msra.mxu0 0
  %4446 = vmatprep.subr.bf16.mxu0 0
  %4447 = vmatpush1.bf16.msra.mxu0 0
  %4448 = vmatprep.subr.bf16.mxu0 0
  %4449 = vmatpush1.bf16.msra.mxu0 0
  %4450 = vmatprep.subr.bf16.mxu0 0
  %4451 = vmatpush1.bf16.msra.mxu0 0
  %4452 = vmatprep.subr.bf16.mxu0 0
  %4453 = vmatpush1.bf16.msra.mxu0 0
  %4454 = vmatprep.subr.bf16.mxu0 0
  %4455 = vmatpush1.bf16.msra.mxu0 0
  %4456 = vmatprep.subr.bf16.mxu0 0
  %4457 = vmatpush1.bf16.msra.mxu0 0
  %4458 = vmatprep.mubr.bf16.mxu0 0
  %4459 = vmatmul.mubr.bf16.gmra.mrb[0].mxu0 %v4424
  %v4460 = vpop.f32.mrb[0].mxu0
  %v4461 = vadd.f32 0.0, %v4460
  %v4462 = vpop.f32.mrb[0].mxu0
  %v4463 = vpop.f32.mrb[0].mxu0
  %v4464 = vpop.f32.mrb[0].mxu0
  %4465 = vdwg.mxu0
  %v4466 = vadd.f32 %v2474, %v4414
  %v4467 = vxor.u32 %v4466, 2147483648
  %v4468 = vmul.f32 %v4467, 1.442695
  %v4469 = vpow.pop %v4468
  %v4470 = vadd.f32 %v4469, 1.0
  %v4471 = vrcp.pop %v4470
  %v4472 = vmul.f32 1.0, %v4471
  %v4473 = vadd.f32 %v4414, %v2910
  %4475 = vrot.lane.b32.xlu0 %v4473, 64
  %v4476 = vpop.permute.xlu0 %4475
  %v4478 = vmul.f32 %v4472, %v4476
  %4480 = vrot.lane.b32.xlu0 %v4478, 64
  %v4481 = vpop.permute.xlu0 %4480
  %v4483 = vadd.f32 %v2474, %v4481
  %v4484 = vtanh.pop %v4483
  %v4485 = vsub.f32 1.0, %v4472
  %4487 = vrot.lane.b32.xlu0 %v4484, 96
  %v4488 = vpop.permute.xlu0 %4487
  %v4490 = vmul.f32 %v4485, %v4488
  %v4491 = vmul.f32 %v4472, %v4344
  %v4492 = vadd.f32 %v4490, %v4491
  %v4493 = vadd.f32 %v2553, %v4461
  %v4494 = vxor.u32 %v4493, 2147483648
  %v4495 = vmul.f32 %v4494, 1.442695
  %v4496 = vpow.pop %v4495
  %v4497 = vadd.f32 %v4496, 1.0
  %v4498 = vrcp.pop %v4497
  %v4499 = vmul.f32 1.0, %v4498
  %v4500 = vadd.f32 %v4461, %v2940
  %4502 = vrot.lane.b32.xlu0 %v4500, 64
  %v4503 = vpop.permute.xlu0 %4502
  %v4505 = vmul.f32 %v4499, %v4503
  %4507 = vrot.lane.b32.xlu0 %v4505, 64
  %v4508 = vpop.permute.xlu0 %4507
  %v4510 = vadd.f32 %v2553, %v4508
  %v4511 = vtanh.pop %v4510
  %v4512 = vsub.f32 1.0, %v4499
  %4514 = vrot.lane.b32.xlu0 %v4511, 96
  %v4515 = vpop.permute.xlu0 %4514
  %v4517 = vmul.f32 %v4512, %v4515
  %v4518 = vmul.f32 %v4499, %v4371
  %v4519 = vadd.f32 %v4517, %v4518
  %v4520 = vld [vmem:[%s14] sm:$0x1]
  %4522 = vrot.lane.b32.xlu0 %v2931, 96
  %v4523 = vpop.permute.xlu0 %4522
  %v4525 = vsel %vm121, %v4523, %v4519
  %v4526 = vtanh.pop %v4525
  %v4528 = vlaneseq
  %v4529 = vshrl.u32 %v4528, 7
  %v4530 = vsub.s32 0, %v4529
  %v4531 = vrot.slane %v4520, %v4530
  %v4533 = vmul.f32 %v4526, %v4531
  %v4534 = vsel %vm2399, %v4533, 0.0
  %4535 = vadd.xlane.f32.xlu0 %v4534
  %v4536 = vpop.xlane.xlu0 %4535
  %4538 = vrot.lane.b32.xlu0 %v3234, 96
  %v4539 = vpop.permute.xlu0 %4538
  %v4541 = vsel %vm121, %v4539, %v4371
  %v4542 = vtanh.pop %v4541
  %v4543 = vmul.f32 %v4542, %v4531
  %v4544 = vsel %vm2399, %v4543, 0.0
  %4545 = vadd.xlane.f32.xlu0 %v4544
  %v4546 = vpop.xlane.xlu0 %4545
  %4548 = vrot.lane.b32.xlu0 %v3456, 96
  %v4549 = vpop.permute.xlu0 %4548
  %v4551 = vsel %vm121, %v4549, %v4149
  %v4552 = vtanh.pop %v4551
  %v4553 = vmul.f32 %v4552, %v4531
  %v4554 = vsel %vm2399, %v4553, 0.0
  %4555 = vadd.xlane.f32.xlu0 %v4554
  %v4556 = vpop.xlane.xlu0 %4555
  %4558 = vrot.lane.b32.xlu0 %v3678, 96
  %v4559 = vpop.permute.xlu0 %4558
  %v4561 = vsel %vm121, %v4559, %v3927
  %v4562 = vtanh.pop %v4561
  %v4563 = vmul.f32 %v4562, %v4531
  %v4564 = vsel %vm2399, %v4563, 0.0
  %4565 = vadd.xlane.f32.xlu0 %v4564
  %v4566 = vpop.xlane.xlu0 %4565
  %4568 = vrot.lane.b32.xlu0 %v3900, 96
  %v4569 = vpop.permute.xlu0 %4568
  %v4571 = vsel %vm121, %v4569, %v3705
  %v4572 = vtanh.pop %v4571
  %v4573 = vmul.f32 %v4572, %v4531
  %v4574 = vsel %vm2399, %v4573, 0.0
  %4575 = vadd.xlane.f32.xlu0 %v4574
  %v4576 = vpop.xlane.xlu0 %4575
  %4578 = vrot.lane.b32.xlu0 %v4122, 96
  %v4579 = vpop.permute.xlu0 %4578
  %v4581 = vsel %vm121, %v4579, %v3483
  %v4582 = vtanh.pop %v4581
  %v4583 = vmul.f32 %v4582, %v4531
  %v4584 = vsel %vm2399, %v4583, 0.0
  %4585 = vadd.xlane.f32.xlu0 %v4584
  %v4586 = vpop.xlane.xlu0 %4585
  %4588 = vrot.lane.b32.xlu0 %v4344, 96
  %v4589 = vpop.permute.xlu0 %4588
  %v4591 = vsel %vm121, %v4589, %v3261
  %v4592 = vtanh.pop %v4591
  %v4593 = vmul.f32 %v4592, %v4531
  %v4594 = vsel %vm2399, %v4593, 0.0
  %4595 = vadd.xlane.f32.xlu0 %v4594
  %v4596 = vpop.xlane.xlu0 %4595
  %4598 = vrot.lane.b32.xlu0 %v4492, 96
  %v4599 = vpop.permute.xlu0 %4598
  %v4601 = vsel %vm121, %v4599, %v2961
  %v4602 = vtanh.pop %v4601
  %v4603 = vmul.f32 %v4602, %v4531
  %v4604 = vsel %vm2399, %v4603, 0.0
  %4605 = vadd.xlane.f32.xlu0 %v4604
  %v4606 = vpop.xlane.xlu0 %4605
  %vm4607 = vcmask 7168
  %v4608 = vsel %vm4607, %v4536, %v4546
  %vm4609 = vcmask 15360
  %v4610 = vsel %vm4609, %v4608, %v4556
  %vm4611 = vcmask 23552
  %v4612 = vsel %vm4611, %v4610, %v4566
  %vm4613 = vcmask 31744
  %v4614 = vsel %vm4613, %v4612, %v4576
  %vm4615 = vcmask 39936
  %v4616 = vsel %vm4615, %v4614, %v4586
  %vm4617 = vcmask 48128
  %v4618 = vsel %vm4617, %v4616, %v4596
  %vm4619 = vcmask 56320
  %v4620 = vsel %vm4619, %v4618, %v4606
  %vm4621 = vcmask 64512
  %v4622 = vsel %vm4621, %v4620, -inf
  %4623 = vmax.xlane.f32.xlu0 %v4622
  %v4624 = vpop.xlane.xlu0 %4623
  %v4625 = vsub.f32 %v4620, %v4624
  %v4626 = vmul.f32 %v4625, 1.442695
  %v4627 = vpow.pop %v4626
  %v4628 = vsel %vm4621, %v4627, 0.0
  %4629 = vadd.xlane.f32.xlu0 %v4628
  %v4630 = vpop.xlane.xlu0 %4629
  %v4631 = vrcp.pop %v4630
  %v4632 = vmul.f32 %v4627, %v4631
  %4634 = vset.pattern.permute.xlu0 0
  %4635 = vperm.xlu0 %4634, %v4632
  %v4636 = vpop.permute.xlu0 %4635
  %v4638 = vmul.f32 %v4636, %v4525
  %v4639 = vadd.f32 %v4638, 0.0
  %4640 = vset.pattern.permute.xlu0 1
  %4641 = vperm.xlu0 %4640, %v4632
  %v4642 = vpop.permute.xlu0 %4641
  %v4644 = vmul.f32 %v4642, %v4541
  %v4645 = vadd.f32 %v4639, %v4644
  %4646 = vset.pattern.permute.xlu0 2
  %4647 = vperm.xlu0 %4646, %v4632
  %v4648 = vpop.permute.xlu0 %4647
  %v4650 = vmul.f32 %v4648, %v4551
  %v4651 = vadd.f32 %v4645, %v4650
  %4652 = vset.pattern.permute.xlu0 3
  %4653 = vperm.xlu0 %4652, %v4632
  %v4654 = vpop.permute.xlu0 %4653
  %v4656 = vmul.f32 %v4654, %v4561
  %v4657 = vadd.f32 %v4651, %v4656
  %4658 = vset.pattern.permute.xlu0 4
  %4659 = vperm.xlu0 %4658, %v4632
  %v4660 = vpop.permute.xlu0 %4659
  %v4662 = vmul.f32 %v4660, %v4571
  %v4663 = vadd.f32 %v4657, %v4662
  %4664 = vset.pattern.permute.xlu0 5
  %4665 = vperm.xlu0 %4664, %v4632
  %v4666 = vpop.permute.xlu0 %4665
  %v4668 = vmul.f32 %v4666, %v4581
  %v4669 = vadd.f32 %v4663, %v4668
  %4670 = vset.pattern.permute.xlu0 6
  %4671 = vperm.xlu0 %4670, %v4632
  %v4672 = vpop.permute.xlu0 %4671
  %v4674 = vmul.f32 %v4672, %v4591
  %v4675 = vadd.f32 %v4669, %v4674
  %4676 = vset.pattern.permute.xlu0 7
  %4677 = vperm.xlu0 %4676, %v4632
  %v4678 = vpop.permute.xlu0 %4677
  %v4680 = vmul.f32 %v4678, %v4601
  %v4681 = vadd.f32 %v4675, %v4680
  %v4682 = vmax.f32 %v4681, 0.0
  %v4683 = vld [vmem:[%s15] sm:$0xff]
  %v4684 = vld [vmem:[%s15 + $0x8] sm:$0xff]
  %v4685 = vld [vmem:[%s15 + $0x10] sm:$0xff]
  %v4686 = vld [vmem:[%s15 + $0x18] sm:$0xff]
  %v4687 = vld [vmem:[%s15 + $0x20] sm:$0xff]
  %v4688 = vld [vmem:[%s15 + $0x28] sm:$0xff]
  %v4689 = vld [vmem:[%s15 + $0x30] sm:$0xff]
  %v4690 = vld [vmem:[%s15 + $0x38] sm:$0xff]
  %v4691 = vld [vmem:[%s16] sm:$0x1]
  %v4693 = vlaneseq
  %v4694 = vshrl.u32 %v4693, 7
  %v4695 = vsub.s32 0, %v4694
  %v4696 = vrot.slane %v4691, %v4695
  %v4699 = vsel %vm2399, %v4682, 0
  %4701 = vmatprep.subr.mxu0 0.0
  %4702 = vmatpush1.msra.mxu0 %v4683
  %4703 = vmatprep.subr.mxu0 0.0
  %4704 = vmatpush1.msra.mxu0 %v4684
  %4705 = vmatprep.subr.mxu0 0.0
  %4706 = vmatpush1.msra.mxu0 %v4685
  %4707 = vmatprep.subr.mxu0 0.0
  %4708 = vmatpush1.msra.mxu0 %v4686
  %4709 = vmatprep.subr.mxu0 0.0
  %4710 = vmatpush1.msra.mxu0 %v4687
  %4711 = vmatprep.subr.mxu0 0.0
  %4712 = vmatpush1.msra.mxu0 %v4688
  %4713 = vmatprep.subr.mxu0 0.0
  %4714 = vmatpush1.msra.mxu0 %v4689
  %4715 = vmatprep.subr.mxu0 0.0
  %4716 = vmatpush1.msra.mxu0 %v4690
  %4717 = vmatprep.subr.mxu0 0.0
  %4718 = vmatpush1.msra.mxu0 0.0
  %4719 = vmatprep.subr.mxu0 0.0
  %4720 = vmatpush1.msra.mxu0 0.0
  %4721 = vmatprep.subr.mxu0 0.0
  %4722 = vmatpush1.msra.mxu0 0.0
  %4723 = vmatprep.subr.mxu0 0.0
  %4724 = vmatpush1.msra.mxu0 0.0
  %4725 = vmatprep.subr.mxu0 0.0
  %4726 = vmatpush1.msra.mxu0 0.0
  %4727 = vmatprep.subr.mxu0 0.0
  %4728 = vmatpush1.msra.mxu0 0.0
  %4729 = vmatprep.subr.mxu0 0.0
  %4730 = vmatpush1.msra.mxu0 0.0
  %4731 = vmatprep.subr.mxu0 0.0
  %4732 = vmatpush1.msra.mxu0 0.0
  %4733 = vmatprep.subr.mxu0 0.0
  %4734 = vmatpush1.msra.mxu0 0.0
  %4735 = vmatprep.subr.mxu0 0.0
  %4736 = vmatpush1.msra.mxu0 0.0
  %4737 = vmatprep.subr.mxu0 0.0
  %4738 = vmatpush1.msra.mxu0 0.0
  %4739 = vmatprep.subr.mxu0 0.0
  %4740 = vmatpush1.msra.mxu0 0.0
  %4741 = vmatprep.subr.mxu0 0.0
  %4742 = vmatpush1.msra.mxu0 0.0
  %4743 = vmatprep.subr.mxu0 0.0
  %4744 = vmatpush1.msra.mxu0 0.0
  %4745 = vmatprep.subr.mxu0 0.0
  %4746 = vmatpush1.msra.mxu0 0.0
  %4747 = vmatprep.subr.mxu0 0.0
  %4748 = vmatpush1.msra.mxu0 0.0
  %4749 = vmatprep.subr.mxu0 0.0
  %4750 = vmatpush1.msra.mxu0 0.0
  %4751 = vmatprep.subr.mxu0 0.0
  %4752 = vmatpush1.msra.mxu0 0.0
  %4753 = vmatprep.subr.mxu0 0.0
  %4754 = vmatpush1.msra.mxu0 0.0
  %4755 = vmatprep.subr.mxu0 0.0
  %4756 = vmatpush1.msra.mxu0 0.0
  %4757 = vmatprep.subr.mxu0 0.0
  %4758 = vmatpush1.msra.mxu0 0.0
  %4759 = vmatprep.subr.mxu0 0.0
  %4760 = vmatpush1.msra.mxu0 0.0
  %4761 = vmatprep.subr.mxu0 0.0
  %4762 = vmatpush1.msra.mxu0 0.0
  %4763 = vmatprep.subr.mxu0 0.0
  %4764 = vmatpush1.msra.mxu0 0.0
  %4765 = vmatprep.mubr.f32.mxu0 0.0
  %4766 = vmatmul.mubr.f32.gmra.mrb[0].mxu0 %v4699
  %v4767 = vpop.f32.mrb[0].mxu0
  %v4768 = vadd.f32 %v4696, %v4767
  %v4769 = vpop.f32.mrb[0].mxu0
  %4770 = vdwg.mxu0
  %4772 = vrot.lane.b32.xlu0 %v4223, 112
  %v4773 = vpop.permute.xlu0 %4772
  %v4775 = vsel %vm293, %v4773, %v3113
  %v4776 = vld [vmem:[%s17] sm:$0xff]
  %v4777 = vld [vmem:[%s17 + $0x8] sm:$0xff]
  %v4778 = vld [vmem:[%s17 + $0x10] sm:$0xff]
  %v4779 = vld [vmem:[%s17 + $0x18] sm:$0xff]
  %v4780 = vld [vmem:[%s18] sm:$0x1]
  %v4782 = vlaneseq
  %v4783 = vshrl.u32 %v4782, 7
  %v4784 = vsub.s32 0, %v4783
  %v4785 = vrot.slane %v4780, %v4784
  %v4788 = vsel %vm121, %v4775, 0
  %4790 = vmatprep.subr.mxu0 0.0
  %4791 = vmatpush1.msra.mxu0 %v4776
  %4792 = vmatprep.subr.mxu0 0.0
  %4793 = vmatpush1.msra.mxu0 %v4777
  %4794 = vmatprep.subr.mxu0 0.0
  %4795 = vmatpush1.msra.mxu0 %v4778
  %4796 = vmatprep.subr.mxu0 0.0
  %4797 = vmatpush1.msra.mxu0 %v4779
  %4798 = vmatprep.subr.mxu0 0.0
  %4799 = vmatpush1.msra.mxu0 0.0
  %4800 = vmatprep.subr.mxu0 0.0
  %4801 = vmatpush1.msra.mxu0 0.0
  %4802 = vmatprep.subr.mxu0 0.0
  %4803 = vmatpush1.msra.mxu0 0.0
  %4804 = vmatprep.subr.mxu0 0.0
  %4805 = vmatpush1.msra.mxu0 0.0
  %4806 = vmatprep.subr.mxu0 0.0
  %4807 = vmatpush1.msra.mxu0 0.0
  %4808 = vmatprep.subr.mxu0 0.0
  %4809 = vmatpush1.msra.mxu0 0.0
  %4810 = vmatprep.subr.mxu0 0.0
  %4811 = vmatpush1.msra.mxu0 0.0
  %4812 = vmatprep.subr.mxu0 0.0
  %4813 = vmatpush1.msra.mxu0 0.0
  %4814 = vmatprep.subr.mxu0 0.0
  %4815 = vmatpush1.msra.mxu0 0.0
  %4816 = vmatprep.subr.mxu0 0.0
  %4817 = vmatpush1.msra.mxu0 0.0
  %4818 = vmatprep.subr.mxu0 0.0
  %4819 = vmatpush1.msra.mxu0 0.0
  %4820 = vmatprep.subr.mxu0 0.0
  %4821 = vmatpush1.msra.mxu0 0.0
  %4822 = vmatprep.subr.mxu0 0.0
  %4823 = vmatpush1.msra.mxu0 0.0
  %4824 = vmatprep.subr.mxu0 0.0
  %4825 = vmatpush1.msra.mxu0 0.0
  %4826 = vmatprep.subr.mxu0 0.0
  %4827 = vmatpush1.msra.mxu0 0.0
  %4828 = vmatprep.subr.mxu0 0.0
  %4829 = vmatpush1.msra.mxu0 0.0
  %4830 = vmatprep.subr.mxu0 0.0
  %4831 = vmatpush1.msra.mxu0 0.0
  %4832 = vmatprep.subr.mxu0 0.0
  %4833 = vmatpush1.msra.mxu0 0.0
  %4834 = vmatprep.subr.mxu0 0.0
  %4835 = vmatpush1.msra.mxu0 0.0
  %4836 = vmatprep.subr.mxu0 0.0
  %4837 = vmatpush1.msra.mxu0 0.0
  %4838 = vmatprep.subr.mxu0 0.0
  %4839 = vmatpush1.msra.mxu0 0.0
  %4840 = vmatprep.subr.mxu0 0.0
  %4841 = vmatpush1.msra.mxu0 0.0
  %4842 = vmatprep.subr.mxu0 0.0
  %4843 = vmatpush1.msra.mxu0 0.0
  %4844 = vmatprep.subr.mxu0 0.0
  %4845 = vmatpush1.msra.mxu0 0.0
  %4846 = vmatprep.subr.mxu0 0.0
  %4847 = vmatpush1.msra.mxu0 0.0
  %4848 = vmatprep.subr.mxu0 0.0
  %4849 = vmatpush1.msra.mxu0 0.0
  %4850 = vmatprep.subr.mxu0 0.0
  %4851 = vmatpush1.msra.mxu0 0.0
  %4852 = vmatprep.subr.mxu0 0.0
  %4853 = vmatpush1.msra.mxu0 0.0
  %4854 = vmatprep.mubr.f32.mxu0 0.0
  %4855 = vmatmul.mubr.f32.gmra.mrb[0].mxu0 %v4788
  %v4856 = vpop.f32.mrb[0].mxu0
  %v4857 = vadd.f32 %v4785, %v4856
  %v4858 = vpop.f32.mrb[0].mxu0
  %4859 = vdwg.mxu0
  %4861 = vrot.lane.b32.xlu0 %v4857, 16
  %v4862 = vpop.permute.xlu0 %4861
  %v4864 = vsel %vm293, %v4768, %v4862
  %v4865 = vld [vmem:[%s19] sm:$0xff]
  %v4866 = vld [vmem:[%s19 + $0x8] sm:$0xff]
  %v4867 = vld [vmem:[%s19 + $0x10] sm:$0xff]
  %v4868 = vld [vmem:[%s19 + $0x18] sm:$0xff]
  %v4869 = vld [vmem:[%s19 + $0x20] sm:$0xff]
  %v4870 = vld [vmem:[%s19 + $0x28] sm:$0xff]
  %v4871 = vld [vmem:[%s20] sm:$0x1]
  %v4873 = vlaneseq
  %v4874 = vshrl.u32 %v4873, 7
  %v4875 = vsub.s32 0, %v4874
  %v4876 = vrot.slane %v4871, %v4875
  %vm4878 = vcmask 392192
  %v4880 = vsel %vm4878, %v4864, 0
  %4882 = vmatprep.subr.mxu0 0.0
  %4883 = vmatpush1.msra.mxu0 %v4865
  %4884 = vmatprep.subr.mxu0 0.0
  %4885 = vmatpush1.msra.mxu0 %v4866
  %4886 = vmatprep.subr.mxu0 0.0
  %4887 = vmatpush1.msra.mxu0 %v4867
  %4888 = vmatprep.subr.mxu0 0.0
  %4889 = vmatpush1.msra.mxu0 %v4868
  %4890 = vmatprep.subr.mxu0 0.0
  %4891 = vmatpush1.msra.mxu0 %v4869
  %4892 = vmatprep.subr.mxu0 0.0
  %4893 = vmatpush1.msra.mxu0 %v4870
  %4894 = vmatprep.subr.mxu0 0.0
  %4895 = vmatpush1.msra.mxu0 0.0
  %4896 = vmatprep.subr.mxu0 0.0
  %4897 = vmatpush1.msra.mxu0 0.0
  %4898 = vmatprep.subr.mxu0 0.0
  %4899 = vmatpush1.msra.mxu0 0.0
  %4900 = vmatprep.subr.mxu0 0.0
  %4901 = vmatpush1.msra.mxu0 0.0
  %4902 = vmatprep.subr.mxu0 0.0
  %4903 = vmatpush1.msra.mxu0 0.0
  %4904 = vmatprep.subr.mxu0 0.0
  %4905 = vmatpush1.msra.mxu0 0.0
  %4906 = vmatprep.subr.mxu0 0.0
  %4907 = vmatpush1.msra.mxu0 0.0
  %4908 = vmatprep.subr.mxu0 0.0
  %4909 = vmatpush1.msra.mxu0 0.0
  %4910 = vmatprep.subr.mxu0 0.0
  %4911 = vmatpush1.msra.mxu0 0.0
  %4912 = vmatprep.subr.mxu0 0.0
  %4913 = vmatpush1.msra.mxu0 0.0
  %4914 = vmatprep.subr.mxu0 0.0
  %4915 = vmatpush1.msra.mxu0 0.0
  %4916 = vmatprep.subr.mxu0 0.0
  %4917 = vmatpush1.msra.mxu0 0.0
  %4918 = vmatprep.subr.mxu0 0.0
  %4919 = vmatpush1.msra.mxu0 0.0
  %4920 = vmatprep.subr.mxu0 0.0
  %4921 = vmatpush1.msra.mxu0 0.0
  %4922 = vmatprep.subr.mxu0 0.0
  %4923 = vmatpush1.msra.mxu0 0.0
  %4924 = vmatprep.subr.mxu0 0.0
  %4925 = vmatpush1.msra.mxu0 0.0
  %4926 = vmatprep.subr.mxu0 0.0
  %4927 = vmatpush1.msra.mxu0 0.0
  %4928 = vmatprep.subr.mxu0 0.0
  %4929 = vmatpush1.msra.mxu0 0.0
  %4930 = vmatprep.subr.mxu0 0.0
  %4931 = vmatpush1.msra.mxu0 0.0
  %4932 = vmatprep.subr.mxu0 0.0
  %4933 = vmatpush1.msra.mxu0 0.0
  %4934 = vmatprep.subr.mxu0 0.0
  %4935 = vmatpush1.msra.mxu0 0.0
  %4936 = vmatprep.subr.mxu0 0.0
  %4937 = vmatpush1.msra.mxu0 0.0
  %4938 = vmatprep.subr.mxu0 0.0
  %4939 = vmatpush1.msra.mxu0 0.0
  %4940 = vmatprep.subr.mxu0 0.0
  %4941 = vmatpush1.msra.mxu0 0.0
  %4942 = vmatprep.subr.mxu0 0.0
  %4943 = vmatpush1.msra.mxu0 0.0
  %4944 = vmatprep.subr.mxu0 0.0
  %4945 = vmatpush1.msra.mxu0 0.0
  %4946 = vmatprep.mubr.f32.mxu0 0.0
  %4947 = vmatmul.mubr.f32.gmra.mrb[0].mxu0 %v4880
  %v4948 = vpop.f32.mrb[0].mxu0
  %v4949 = vadd.f32 %v4876, %v4948
  %v4950 = vpop.f32.mrb[0].mxu0
  %4951 = vdwg.mxu0
  %4952 = vst.msk [vmem:[%s21] sm:$0xff] %vm4613, %v4949
  // Predicated region
  $region86: #{model_forward.1} parent=0 // pred_check
    _
  $region87: #{model_forward.1} parent=0 // pred_check_branch
    %4954 = sbr.rel (0) target = $region89
  $region88: #{model_forward.1} parent=0 // pred_region
    _
  $region89: #{model_forward.1} parent=0 // pred_fallthru
    _
  // Predicated region
  $region90: #{model_forward.1} parent=0 // pred_check
    _
  $region91: #{model_forward.1} parent=0 // pred_check_branch
    %4956 = sbr.rel (0) target = $region93
  $region92: #{model_forward.1} parent=0 // pred_region
    _
  $region93: #{model_forward.1} parent=0 // pred_fallthru
    _

</llo_original>
